<compile_context>
chip_gen: v6e
topology: v6e:2x2x1
jax: 0.10.0
libtpu: 0.0.40
codegen_flags: <defaults>
</compile_context>

<pallas_src>
import functools

import jax
import jax.numpy as jnp
from jax.experimental import pallas as pl
from jax.experimental.pallas import tpu as pltpu


# ----------------------------- fused Pallas kernel ----------------------------

def _temporal_block(x, w_cat_ref, b_cat_ref, Kt, O):
    """Gated temporal conv for one batch element.

    x:          (C, N, T) f32
    w_cat_ref:  (2*O, Kt*C)  -- rows [0:O] = conv1 weights WITH the residual
                identity folded in at tap k=Kt-1; rows [O:2O] = conv2 (gate).
                Column index = k*C + c (matches the im2col stack below).
    b_cat_ref:  (1, 2*O)
    returns     (O, N, T - Kt + 1)
    """
    C, N, T = x.shape
    T_out = T - Kt + 1
    # im2col: stack the Kt time-shifted views along the channel axis.
    x_col = jnp.concatenate([x[:, :, k:k + T_out] for k in range(Kt)],
                            axis=0)                              # (Kt*C, N, T_out)
    w = w_cat_ref[...].astype(jnp.float32)                       # (2O, Kt*C)
    conv = jnp.einsum('oc,cnt->ont', w, x_col,
                      preferred_element_type=jnp.float32)        # (2O, N, T_out)
    conv = conv + b_cat_ref[0][:, None, None]
    # conv[:O] already contains conv1(x) + channel-padded residual.
    return conv[:O] * jax.nn.sigmoid(conv[O:])


def _st_layer_kernel(x_ref, wt1_ref, bt1_ref, s_ref, wg_ref, bg_ref,
                     wt2_ref, bt2_ref, g_ref, beta_ref, o_ref, *,
                     Kt, K, O_t, O_g, eps):
    """Full STLayer forward for one batch element, fully resident in VMEM."""
    x = x_ref[0].astype(jnp.float32)                             # (C_in, N, T)

    # ---- temporal layer 1 (gated conv, residual folded into weights) ----
    y = _temporal_block(x, wt1_ref, bt1_ref, Kt, O_t)            # (O_t, N, T1)

    # ---- graph conv + ReLU ----
    # Feature contraction for all K supports at once:
    #   p[k*O_g + o, n, t] = sum_f W[k, f, o] * y[f, n, t]
    p = jnp.einsum('of,fnt->ont', wg_ref[...].astype(jnp.float32), y,
                   preferred_element_type=jnp.float32)           # (K*O_g, N, T1)
    s = s_ref[...].astype(jnp.float32)                           # (K, N, N)
    N = s.shape[1]
    T1 = y.shape[-1]
    z = jnp.zeros((O_g, N, T1), jnp.float32)
    for k in range(K):                                           # K is static
        z = z + jnp.einsum('hw,owt->oht', s[k], p[k * O_g:(k + 1) * O_g],
                           preferred_element_type=jnp.float32)
    y = jnp.maximum(z + bg_ref[0][:, None, None], 0.0)           # (O_g, N, T1)

    # ---- temporal layer 2 ----
    y = _temporal_block(y, wt2_ref, bt2_ref, Kt, O_t)            # (O_t, N, T2)

    # ---- LayerNorm over (C, N, T2), elementwise affine; lane-dense epilogue ----
    T2 = y.shape[-1]
    y2 = y.reshape(O_t, N * T2)                                  # (O_t, N*T2)
    mean = jnp.mean(y2)
    var = jnp.mean(jnp.square(y2 - mean))
    y2 = (y2 - mean) * jax.lax.rsqrt(var + eps)
    y2 = y2 * g_ref[...].astype(jnp.float32) + beta_ref[...].astype(jnp.float32)

    # TODO(synk): F.dropout with training=True (stochastic mask) not implemented;
    # eval-mode dropout is identity, which is what we reproduce here.
    o_ref[0] = y2.astype(o_ref.dtype)                            # unmasked lane-dense store


# ------------------------- wrapper / parameter packing -------------------------

def _pack_temporal(w1, b1, w2, b2, Kt):
    """Fold residual path into w1 and flatten (w1|w2) for the im2col matmul."""
    O, C, _ = w1.shape
    # residual: + x[c, n, t + Kt - 1] on channel o == c (truncated/padded to O)
    w1r = w1.at[:, :, Kt - 1].add(jnp.eye(O, C, dtype=w1.dtype))
    w_cat = jnp.concatenate([w1r, w2], axis=0)                    # (2O, C, Kt)
    # column ordering k*C + c, matching the kernel's im2col stack.
    w_cat = jnp.transpose(w_cat, (0, 2, 1)).reshape(2 * O, Kt * C)
    b_cat = jnp.concatenate([b1, b2], axis=0).reshape(1, 2 * O)
    return w_cat, b_cat


def _pack_gcn(w, b):
    """Stack the K graph-conv weights so the feature contraction is one matmul."""
    K, F_, O = w.shape
    w_stack = jnp.transpose(w, (0, 2, 1)).reshape(K * O, F_)      # [k*O + o, f]
    return w_stack, b.reshape(1, O)


def st_layer_forward(x, supports, params, Kt, *, eps=1e-5):
    """STLayer.forward (eval mode) — single fused pallas_call."""
    B, C_in, N, T = x.shape
    K = supports.shape[0]
    O_t = params['t1_w1'].shape[0]          # tcn_size
    O_g = params['gcn_w'].shape[2]          # gcn_size
    T2 = T - 2 * (Kt - 1)

    wt1, bt1 = _pack_temporal(params['t1_w1'], params['t1_b1'],
                              params['t1_w2'], params['t1_b2'], Kt)
    wt2, bt2 = _pack_temporal(params['t2_w1'], params['t2_b1'],
                              params['t2_w2'], params['t2_b2'], Kt)
    wg, bg = _pack_gcn(params['gcn_w'], params['gcn_b'])

    # LayerNorm affine params flattened to the kernel's lane-dense (O_t, N*T2) view.
    ln_g = params['ln_g'].reshape(O_t, N * T2)
    ln_b = params['ln_b'].reshape(O_t, N * T2)

    kernel = functools.partial(_st_layer_kernel, Kt=Kt, K=K,
                               O_t=O_t, O_g=O_g, eps=eps)

    def rep(*shape):   # replicated (grid-invariant) full-array block
        return pl.BlockSpec(shape, lambda b, _s=shape: (0,) * len(_s))

    out = pl.pallas_call(
        kernel,
        out_shape=jax.ShapeDtypeStruct((B, O_t, N * T2), x.dtype),
        grid=(B,),
        in_specs=[
            pl.BlockSpec((1, C_in, N, T), lambda b: (b, 0, 0, 0)),   # x
            rep(2 * O_t, Kt * C_in),                                 # wt1 (packed)
            rep(1, 2 * O_t),                                         # bt1
            rep(K, N, N),                                            # supports
            rep(K * O_g, O_t),                                       # gcn weight
            rep(1, O_g),                                             # gcn bias
            rep(2 * O_t, Kt * O_g),                                  # wt2 (packed)
            rep(1, 2 * O_t),                                         # bt2
            rep(O_t, N * T2),                                        # ln gamma (flat)
            rep(O_t, N * T2),                                        # ln beta  (flat)
        ],
        out_specs=pl.BlockSpec((1, O_t, N * T2), lambda b: (b, 0, 0)),
        compiler_params=pltpu.CompilerParams(dimension_semantics=("parallel",)),
    )(x, wt1, bt1, supports, wg, bg, wt2, bt2, ln_g, ln_b)

    return out.reshape(B, O_t, N, T2)


# -------------------------- params & pure-JAX reference -----------------------

def init_params(key, *, input_size, tcn_size, gcn_size, Kt, K, num_nodes,
                t_output_len):
    keys = jax.random.split(key, 10)

    def conv_wb(kw, kb, out_c, in_c):
        fan_in = in_c * Kt
        bound = 1.0 / jnp.sqrt(jnp.float32(fan_in))
        w = jax.random.uniform(kw, (out_c, in_c, Kt), jnp.float32, -bound, bound)
        b = jax.random.uniform(kb, (out_c,), jnp.float32, -bound, bound)
        return w, b

    t1_w1, t1_b1 = conv_wb(keys[0], keys[1], tcn_size, input_size)
    t1_w2, t1_b2 = conv_wb(keys[2], keys[3], tcn_size, input_size)
    t2_w1, t2_b1 = conv_wb(keys[4], keys[5], tcn_size, gcn_size)
    t2_w2, t2_b2 = conv_wb(keys[6], keys[7], tcn_size, gcn_size)

    # GraphConv weight: xavier_normal_ with gain=1.414 on shape (K, tcn, gcn)
    fan_in = tcn_size * gcn_size
    fan_out = K * gcn_size
    std = 1.414 * jnp.sqrt(2.0 / (fan_in + fan_out))
    gcn_w = std * jax.random.normal(keys[8], (K, tcn_size, gcn_size), jnp.float32)
    gcn_b = jnp.zeros((gcn_size,), jnp.float32)

    ln_g = jnp.ones((tcn_size, num_nodes, t_output_len), jnp.float32)
    ln_b = jnp.zeros((tcn_size, num_nodes, t_output_len), jnp.float32)

    return dict(t1_w1=t1_w1, t1_b1=t1_b1, t1_w2=t1_w2, t1_b2=t1_b2,
                t2_w1=t2_w1, t2_b1=t2_b1, t2_w2=t2_w2, t2_b2=t2_b2,
                gcn_w=gcn_w, gcn_b=gcn_b, ln_g=ln_g, ln_b=ln_b)


def _ref_temporal(x, w1, b1, w2, b2, Kt):
    B, C, N, T = x.shape
    O = w1.shape[0]
    T_out = T - Kt + 1
    c1 = jnp.zeros((B, O, N, T_out), jnp.float32)
    c2 = jnp.zeros((B, O, N, T_out), jnp.float32)
    for k in range(Kt):
        xs = x[:, :, :, k:k + T_out]
        c1 = c1 + jnp.einsum('oc,bcnt->bont', w1[:, :, k], xs)
        c2 = c2 + jnp.einsum('oc,bcnt->bont', w2[:, :, k], xs)
    c1 = c1 + b1[None, :, None, None]
    c2 = c2 + b2[None, :, None, None]
    c_keep = min(C, O)
    res = x[:, :c_keep, :, Kt - 1:]
    if O > c_keep:
        res = jnp.pad(res, ((0, 0), (0, O - c_keep), (0, 0), (0, 0)))
    return (c1 + res) * jax.nn.sigmoid(c2)


def ref_forward(x, supports, params, Kt):
    x = _ref_temporal(x, params['t1_w1'], params['t1_b1'],
                      params['t1_w2'], params['t1_b2'], Kt)
    aggr = jnp.einsum('khw,bfwt->bkfht', supports, x)
    x = jnp.einsum('bkfht,kfo->boht', aggr, params['gcn_w'])
    x = x + params['gcn_b'][None, :, None, None]
    x = jax.nn.relu(x)
    x = _ref_temporal(x, params['t2_w1'], params['t2_b1'],
                      params['t2_w2'], params['t2_b2'], Kt)
    mean = jnp.mean(x, axis=(1, 2, 3), keepdims=True)
    var = jnp.mean(jnp.square(x - mean), axis=(1, 2, 3), keepdims=True)
    x = (x - mean) * jax.lax.rsqrt(var + 1e-5)
    return x * params['ln_g'][None] + params['ln_b'][None]


# ---------------------------------- main --------------------------------------

if __name__ == "__main__":
    key = jax.random.PRNGKey(0)
    B, input_size, N, T = 2, 4, 16, 12
    Kt, K = 3, 2
    tcn_size, gcn_size = 16, 8
    t_output_len = T - 2 * (Kt - 1)   # time shrinks by Kt-1 in each temporal layer

    k_x, k_s, k_p = jax.random.split(key, 3)
    x = jax.random.normal(k_x, (B, input_size, N, T), dtype=jnp.float32)
    supports = 0.1 * jax.random.normal(k_s, (K, N, N), dtype=jnp.float32)

    params = init_params(k_p, input_size=input_size, tcn_size=tcn_size,
                         gcn_size=gcn_size, Kt=Kt, K=K, num_nodes=N,
                         t_output_len=t_output_len)

    out = st_layer_forward(x, supports, params, Kt)
    out = jax.block_until_ready(out)

    assert out.shape == (B, tcn_size, N, t_output_len), out.shape
    ref = ref_forward(x, supports, params, Kt)
    assert jnp.allclose(out, ref, atol=1e-4, rtol=1e-4), \
        float(jnp.max(jnp.abs(out - ref)))
    print("KERNEL_OK")
</pallas_src>

<mosaic_0001>
module attributes {stable_mosaic.version = 11 : i64} {
  func.func @_st_layer_kernel(%arg0: i32, %arg1: memref<1x4x16x12xf32, #tpu.memory_space<vmem>>, %arg2: memref<32x12xf32, #tpu.memory_space<vmem>>, %arg3: memref<1x32xf32, #tpu.memory_space<vmem>>, %arg4: memref<2x16x16xf32, #tpu.memory_space<vmem>>, %arg5: memref<16x16xf32, #tpu.memory_space<vmem>>, %arg6: memref<1x8xf32, #tpu.memory_space<vmem>>, %arg7: memref<32x24xf32, #tpu.memory_space<vmem>>, %arg8: memref<1x32xf32, #tpu.memory_space<vmem>>, %arg9: memref<16x128xf32, #tpu.memory_space<vmem>>, %arg10: memref<16x128xf32, #tpu.memory_space<vmem>>, %arg11: memref<1x16x128xf32, #tpu.memory_space<vmem>>) attributes {dimension_semantics = [#tpu.dimension_semantics<parallel>], iteration_bounds = array<i64: 2>, scalar_prefetch = 0 : i64, scratch_operands = 0 : i64, tpu.core_type = #tpu.core_type<tc>, window_params = [{transform_indices = @transform_0, window_bounds = array<i64: 1, 4, 16, 12>}, {pipeline_mode = #tpu.pipeline_mode<synchronous>, transform_indices = @transform_1, window_bounds = array<i64: 32, 12>}, {pipeline_mode = #tpu.pipeline_mode<synchronous>, transform_indices = @transform_2, window_bounds = array<i64: 1, 32>}, {pipeline_mode = #tpu.pipeline_mode<synchronous>, transform_indices = @transform_3, window_bounds = array<i64: 2, 16, 16>}, {pipeline_mode = #tpu.pipeline_mode<synchronous>, transform_indices = @transform_4, window_bounds = array<i64: 16, 16>}, {pipeline_mode = #tpu.pipeline_mode<synchronous>, transform_indices = @transform_5, window_bounds = array<i64: 1, 8>}, {pipeline_mode = #tpu.pipeline_mode<synchronous>, transform_indices = @transform_6, window_bounds = array<i64: 32, 24>}, {pipeline_mode = #tpu.pipeline_mode<synchronous>, transform_indices = @transform_7, window_bounds = array<i64: 1, 32>}, {pipeline_mode = #tpu.pipeline_mode<synchronous>, transform_indices = @transform_8, window_bounds = array<i64: 16, 128>}, {pipeline_mode = #tpu.pipeline_mode<synchronous>, transform_indices = @transform_9, window_bounds = array<i64: 16, 128>}, {transform_indices = @transform_10, window_bounds = array<i64: 1, 16, 128>}]} {
    %c0 = arith.constant 0 : index
    %c0_0 = arith.constant 0 : index
    %c0_1 = arith.constant 0 : index
    %c0_2 = arith.constant 0 : index
    %0 = vector.load %arg1[%c0, %c0_0, %c0_1, %c0_2] : memref<1x4x16x12xf32, #tpu.memory_space<vmem>>, vector<1x4x16x12xf32>
    %1 = vector.shape_cast %0 : vector<1x4x16x12xf32> to vector<4x16x12xf32>
    %2 = vector.extract_strided_slice %1 {offsets = [0, 0, 0], sizes = [4, 16, 10], strides = [1, 1, 1]} : vector<4x16x12xf32> to vector<4x16x10xf32>
    %3 = vector.extract_strided_slice %1 {offsets = [0, 0, 1], sizes = [4, 16, 10], strides = [1, 1, 1]} : vector<4x16x12xf32> to vector<4x16x10xf32>
    %4 = vector.extract_strided_slice %1 {offsets = [0, 0, 2], sizes = [4, 16, 10], strides = [1, 1, 1]} : vector<4x16x12xf32> to vector<4x16x10xf32>
    %5 = tpu.concatenate %2, %3, %4 in 0 : vector<4x16x10xf32>, vector<4x16x10xf32>, vector<4x16x10xf32> -> vector<12x16x10xf32>
    %c0_3 = arith.constant 0 : index
    %c0_4 = arith.constant 0 : index
    %6 = vector.load %arg2[%c0_3, %c0_4] : memref<32x12xf32, #tpu.memory_space<vmem>>, vector<32x12xf32>
    "tpu.trace_start"() <{level = 10 : i32, message = "oc,cnt->ont"}> : () -> ()
    %cst = arith.constant dense<0.000000e+00> : vector<32x16x10xf32>
    %7 = tpu.matmul %6, %5, %cst {dimension_numbers = #tpu.dot_dimension_numbers<[1], [0], [0], [1, 2], [0, 0, 1, 1, 1, 2], [], []>} : vector<32x12xf32>, vector<12x16x10xf32>, vector<32x16x10xf32> -> vector<32x16x10xf32>
    "tpu.trace_stop"() : () -> ()
    %c0_5 = arith.constant 0 : index
    %c0_6 = arith.constant 0 : index
    %8 = vector.load %arg3[%c0_5, %c0_6] : memref<1x32xf32, #tpu.memory_space<vmem>>, vector<1x32xf32>
    %9 = vector.shape_cast %8 : vector<1x32xf32> to vector<32xf32>
    %10 = vector.shape_cast %9 : vector<32xf32> to vector<32x1x1xf32>
    %11 = vector.broadcast %10 : vector<32x1x1xf32> to vector<32x16x10xf32>
    %12 = arith.addf %7, %11 : vector<32x16x10xf32>
    %13 = vector.extract_strided_slice %12 {offsets = [0, 0, 0], sizes = [16, 16, 10], strides = [1, 1, 1]} : vector<32x16x10xf32> to vector<16x16x10xf32>
    %14 = vector.extract_strided_slice %12 {offsets = [16, 0, 0], sizes = [16, 16, 10], strides = [1, 1, 1]} : vector<32x16x10xf32> to vector<16x16x10xf32>
    %15 = arith.negf %14 : vector<16x16x10xf32>
    %16 = math.exp %15 : vector<16x16x10xf32>
    %cst_7 = arith.constant 1.000000e+00 : f32
    %17 = vector.broadcast %cst_7 : f32 to vector<16x16x10xf32>
    %18 = arith.addf %17, %16 : vector<16x16x10xf32>
    %19 = arith.divf %17, %18 : vector<16x16x10xf32>
    %20 = arith.mulf %13, %19 : vector<16x16x10xf32>
    %c0_8 = arith.constant 0 : index
    %c0_9 = arith.constant 0 : index
    %21 = vector.load %arg5[%c0_8, %c0_9] : memref<16x16xf32, #tpu.memory_space<vmem>>, vector<16x16xf32>
    "tpu.trace_start"() <{level = 10 : i32, message = "of,fnt->ont"}> : () -> ()
    %cst_10 = arith.constant dense<0.000000e+00> : vector<16x16x10xf32>
    %22 = tpu.matmul %21, %20, %cst_10 {dimension_numbers = #tpu.dot_dimension_numbers<[1], [0], [0], [1, 2], [0, 0, 1, 1, 1, 2], [], []>} : vector<16x16xf32>, vector<16x16x10xf32>, vector<16x16x10xf32> -> vector<16x16x10xf32>
    "tpu.trace_stop"() : () -> ()
    %c0_11 = arith.constant 0 : index
    %c0_12 = arith.constant 0 : index
    %c0_13 = arith.constant 0 : index
    %23 = vector.load %arg4[%c0_11, %c0_12, %c0_13] : memref<2x16x16xf32, #tpu.memory_space<vmem>>, vector<2x16x16xf32>
    %cst_14 = arith.constant 0.000000e+00 : f32
    %24 = vector.broadcast %cst_14 : f32 to vector<8x16x10xf32>
    %25 = vector.extract_strided_slice %23 {offsets = [0, 0, 0], sizes = [1, 16, 16], strides = [1, 1, 1]} : vector<2x16x16xf32> to vector<1x16x16xf32>
    %26 = vector.shape_cast %25 : vector<1x16x16xf32> to vector<16x16xf32>
    %27 = vector.extract_strided_slice %22 {offsets = [0, 0, 0], sizes = [8, 16, 10], strides = [1, 1, 1]} : vector<16x16x10xf32> to vector<8x16x10xf32>
    "tpu.trace_start"() <{level = 10 : i32, message = "hw,owt->oht"}> : () -> ()
    %cst_15 = arith.constant dense<0.000000e+00> : vector<8x10x16xf32>
    %28 = tpu.matmul %27, %26, %cst_15 {dimension_numbers = #tpu.dot_dimension_numbers<[1], [1], [0, 2], [0], [0, 0, 0, 2, 1, 0], [], []>} : vector<8x16x10xf32>, vector<16x16xf32>, vector<8x10x16xf32> -> vector<8x10x16xf32>
    %29 = tpu.transpose %28, [0, 2, 1] : vector<8x10x16xf32> -> vector<8x16x10xf32>
    "tpu.trace_stop"() : () -> ()
    %30 = arith.addf %24, %29 : vector<8x16x10xf32>
    %31 = vector.extract_strided_slice %23 {offsets = [1, 0, 0], sizes = [1, 16, 16], strides = [1, 1, 1]} : vector<2x16x16xf32> to vector<1x16x16xf32>
    %32 = vector.shape_cast %31 : vector<1x16x16xf32> to vector<16x16xf32>
    %33 = vector.extract_strided_slice %22 {offsets = [8, 0, 0], sizes = [8, 16, 10], strides = [1, 1, 1]} : vector<16x16x10xf32> to vector<8x16x10xf32>
    "tpu.trace_start"() <{level = 10 : i32, message = "hw,owt->oht"}> : () -> ()
    %cst_16 = arith.constant dense<0.000000e+00> : vector<8x10x16xf32>
    %34 = tpu.matmul %33, %32, %cst_16 {dimension_numbers = #tpu.dot_dimension_numbers<[1], [1], [0, 2], [0], [0, 0, 0, 2, 1, 0], [], []>} : vector<8x16x10xf32>, vector<16x16xf32>, vector<8x10x16xf32> -> vector<8x10x16xf32>
    %35 = tpu.transpose %34, [0, 2, 1] : vector<8x10x16xf32> -> vector<8x16x10xf32>
    "tpu.trace_stop"() : () -> ()
    %36 = arith.addf %30, %35 : vector<8x16x10xf32>
    %c0_17 = arith.constant 0 : index
    %c0_18 = arith.constant 0 : index
    %37 = vector.load %arg6[%c0_17, %c0_18] : memref<1x8xf32, #tpu.memory_space<vmem>>, vector<1x8xf32>
    %38 = vector.shape_cast %37 : vector<1x8xf32> to vector<8xf32>
    %39 = vector.shape_cast %38 : vector<8xf32> to vector<8x1x1xf32>
    %40 = vector.broadcast %39 : vector<8x1x1xf32> to vector<8x16x10xf32>
    %41 = arith.addf %36, %40 : vector<8x16x10xf32>
    %cst_19 = arith.constant 0.000000e+00 : f32
    %42 = vector.broadcast %cst_19 : f32 to vector<8x16x10xf32>
    %43 = arith.maximumf %41, %42 : vector<8x16x10xf32>
    %44 = vector.extract_strided_slice %43 {offsets = [0, 0, 0], sizes = [8, 16, 8], strides = [1, 1, 1]} : vector<8x16x10xf32> to vector<8x16x8xf32>
    %45 = vector.extract_strided_slice %43 {offsets = [0, 0, 1], sizes = [8, 16, 8], strides = [1, 1, 1]} : vector<8x16x10xf32> to vector<8x16x8xf32>
    %46 = vector.extract_strided_slice %43 {offsets = [0, 0, 2], sizes = [8, 16, 8], strides = [1, 1, 1]} : vector<8x16x10xf32> to vector<8x16x8xf32>
    %47 = tpu.concatenate %44, %45, %46 in 0 : vector<8x16x8xf32>, vector<8x16x8xf32>, vector<8x16x8xf32> -> vector<24x16x8xf32>
    %c0_20 = arith.constant 0 : index
    %c0_21 = arith.constant 0 : index
    %48 = vector.load %arg7[%c0_20, %c0_21] : memref<32x24xf32, #tpu.memory_space<vmem>>, vector<32x24xf32>
    "tpu.trace_start"() <{level = 10 : i32, message = "oc,cnt->ont"}> : () -> ()
    %cst_22 = arith.constant dense<0.000000e+00> : vector<32x16x8xf32>
    %49 = tpu.matmul %48, %47, %cst_22 {dimension_numbers = #tpu.dot_dimension_numbers<[1], [0], [0], [1, 2], [0, 0, 1, 1, 1, 2], [], []>} : vector<32x24xf32>, vector<24x16x8xf32>, vector<32x16x8xf32> -> vector<32x16x8xf32>
    "tpu.trace_stop"() : () -> ()
    %c0_23 = arith.constant 0 : index
    %c0_24 = arith.constant 0 : index
    %50 = vector.load %arg8[%c0_23, %c0_24] : memref<1x32xf32, #tpu.memory_space<vmem>>, vector<1x32xf32>
    %51 = vector.shape_cast %50 : vector<1x32xf32> to vector<32xf32>
    %52 = vector.shape_cast %51 : vector<32xf32> to vector<32x1x1xf32>
    %53 = vector.broadcast %52 : vector<32x1x1xf32> to vector<32x16x8xf32>
    %54 = arith.addf %49, %53 : vector<32x16x8xf32>
    %55 = vector.extract_strided_slice %54 {offsets = [0, 0, 0], sizes = [16, 16, 8], strides = [1, 1, 1]} : vector<32x16x8xf32> to vector<16x16x8xf32>
    %56 = vector.extract_strided_slice %54 {offsets = [16, 0, 0], sizes = [16, 16, 8], strides = [1, 1, 1]} : vector<32x16x8xf32> to vector<16x16x8xf32>
    %57 = arith.negf %56 : vector<16x16x8xf32>
    %58 = math.exp %57 : vector<16x16x8xf32>
    %cst_25 = arith.constant 1.000000e+00 : f32
    %59 = vector.broadcast %cst_25 : f32 to vector<16x16x8xf32>
    %60 = arith.addf %59, %58 : vector<16x16x8xf32>
    %61 = arith.divf %59, %60 : vector<16x16x8xf32>
    %62 = arith.mulf %55, %61 : vector<16x16x8xf32>
    %63 = vector.shape_cast %62 : vector<16x16x8xf32> to vector<16x128xf32>
    %64 = vector.shape_cast %63 : vector<16x128xf32> to vector<1x16x128xf32>
    %cst_26 = arith.constant dense<0.000000e+00> : vector<1xf32>
    %65 = vector.multi_reduction <add>, %64, %cst_26 [1, 2] : vector<1x16x128xf32> to vector<1xf32>
    %66 = vector.shape_cast %65 : vector<1xf32> to vector<1x1x1xf32>
    %67 = vector.extract %66[0, 0, 0] : f32 from vector<1x1x1xf32>
    %cst_27 = arith.constant 2.048000e+03 : f32
    %68 = arith.divf %67, %cst_27 : f32
    %69 = vector.broadcast %68 : f32 to vector<16x128xf32>
    %70 = arith.subf %63, %69 : vector<16x128xf32>
    %71 = arith.mulf %70, %70 : vector<16x128xf32>
    %72 = vector.shape_cast %71 : vector<16x128xf32> to vector<1x16x128xf32>
    %cst_28 = arith.constant dense<0.000000e+00> : vector<1xf32>
    %73 = vector.multi_reduction <add>, %72, %cst_28 [1, 2] : vector<1x16x128xf32> to vector<1xf32>
    %74 = vector.shape_cast %73 : vector<1xf32> to vector<1x1x1xf32>
    %75 = vector.extract %74[0, 0, 0] : f32 from vector<1x1x1xf32>
    %cst_29 = arith.constant 2.048000e+03 : f32
    %76 = arith.divf %75, %cst_29 : f32
    %77 = vector.broadcast %68 : f32 to vector<16x128xf32>
    %78 = arith.subf %63, %77 : vector<16x128xf32>
    %cst_30 = arith.constant 9.99999974E-6 : f32
    %79 = arith.addf %76, %cst_30 : f32
    %80 = math.rsqrt %79 : f32
    %81 = vector.broadcast %80 : f32 to vector<16x128xf32>
    %82 = arith.mulf %78, %81 : vector<16x128xf32>
    %c0_31 = arith.constant 0 : index
    %c0_32 = arith.constant 0 : index
    %83 = vector.load %arg9[%c0_31, %c0_32] : memref<16x128xf32, #tpu.memory_space<vmem>>, vector<16x128xf32>
    %84 = arith.mulf %82, %83 : vector<16x128xf32>
    %c0_33 = arith.constant 0 : index
    %c0_34 = arith.constant 0 : index
    %85 = vector.load %arg10[%c0_33, %c0_34] : memref<16x128xf32, #tpu.memory_space<vmem>>, vector<16x128xf32>
    %86 = arith.addf %84, %85 : vector<16x128xf32>
    %c0_35 = arith.constant 0 : index
    %c0_36 = arith.constant 0 : index
    %c0_37 = arith.constant 0 : index
    %87 = vector.load %arg11[%c0_35, %c0_36, %c0_37] : memref<1x16x128xf32, #tpu.memory_space<vmem>>, vector<1x16x128xf32>
    %88 = vector.shape_cast %87 : vector<1x16x128xf32> to vector<16x128xf32>
    %89 = vector.shape_cast %86 : vector<16x128xf32> to vector<1x16x128xf32>
    tpu.vector_store %arg11[%c0_35, %c0_36, %c0_37], %89 {strides = array<i32>} : memref<1x16x128xf32, #tpu.memory_space<vmem>>, vector<1x16x128xf32>,
    return
  }
  func.func @transform_0(%arg0: i32) -> (i32, i32, i32, i32) {
    %c0_i32 = arith.constant 0 : i32
    %c0_i32_0 = arith.constant 0 : i32
    %c0_i32_1 = arith.constant 0 : i32
    %c0_i32_2 = arith.constant 0 : i32
    return %arg0, %c0_i32, %c0_i32_0, %c0_i32_1 : i32, i32, i32, i32
  }
  func.func @transform_1(%arg0: i32) -> (i32, i32) {
    %c0_i32 = arith.constant 0 : i32
    %c0_i32_0 = arith.constant 0 : i32
    %c0_i32_1 = arith.constant 0 : i32
    return %c0_i32, %c0_i32_0 : i32, i32
  }
  func.func @transform_2(%arg0: i32) -> (i32, i32) {
    %c0_i32 = arith.constant 0 : i32
    %c0_i32_0 = arith.constant 0 : i32
    %c0_i32_1 = arith.constant 0 : i32
    return %c0_i32, %c0_i32_0 : i32, i32
  }
  func.func @transform_3(%arg0: i32) -> (i32, i32, i32) {
    %c0_i32 = arith.constant 0 : i32
    %c0_i32_0 = arith.constant 0 : i32
    %c0_i32_1 = arith.constant 0 : i32
    %c0_i32_2 = arith.constant 0 : i32
    return %c0_i32, %c0_i32_0, %c0_i32_1 : i32, i32, i32
  }
  func.func @transform_4(%arg0: i32) -> (i32, i32) {
    %c0_i32 = arith.constant 0 : i32
    %c0_i32_0 = arith.constant 0 : i32
    %c0_i32_1 = arith.constant 0 : i32
    return %c0_i32, %c0_i32_0 : i32, i32
  }
  func.func @transform_5(%arg0: i32) -> (i32, i32) {
    %c0_i32 = arith.constant 0 : i32
    %c0_i32_0 = arith.constant 0 : i32
    %c0_i32_1 = arith.constant 0 : i32
    return %c0_i32, %c0_i32_0 : i32, i32
  }
  func.func @transform_6(%arg0: i32) -> (i32, i32) {
    %c0_i32 = arith.constant 0 : i32
    %c0_i32_0 = arith.constant 0 : i32
    %c0_i32_1 = arith.constant 0 : i32
    return %c0_i32, %c0_i32_0 : i32, i32
  }
  func.func @transform_7(%arg0: i32) -> (i32, i32) {
    %c0_i32 = arith.constant 0 : i32
    %c0_i32_0 = arith.constant 0 : i32
    %c0_i32_1 = arith.constant 0 : i32
    return %c0_i32, %c0_i32_0 : i32, i32
  }
  func.func @transform_8(%arg0: i32) -> (i32, i32) {
    %c0_i32 = arith.constant 0 : i32
    %c0_i32_0 = arith.constant 0 : i32
    %c0_i32_1 = arith.constant 0 : i32
    return %c0_i32, %c0_i32_0 : i32, i32
  }
  func.func @transform_9(%arg0: i32) -> (i32, i32) {
    %c0_i32 = arith.constant 0 : i32
    %c0_i32_0 = arith.constant 0 : i32
    %c0_i32_1 = arith.constant 0 : i32
    return %c0_i32, %c0_i32_0 : i32, i32
  }
  func.func @transform_10(%arg0: i32) -> (i32, i32, i32) {
    %c0_i32 = arith.constant 0 : i32
    %c0_i32_0 = arith.constant 0 : i32
    %c0_i32_1 = arith.constant 0 : i32
    return %arg0, %c0_i32, %c0_i32_0 : i32, i32, i32
  }
}

</mosaic_0001>

<llo_original>
// kernel: tpu_custom_call.1
$region0: #{tpu_custom_call.1}
  #allocation0 [shape = 'u32[]', space=smem, size = 0x4, offset = 0x4, fixed_abs, tag = 'smem constant byte address 0x4 - core index']
  #allocation1 [shape = 'u32[144,128]{1,0:T(1,128)}', space=vmem, size = 0x12000, scoped, tag = 'internal scratch']
  %s0 = inlined_call_operand.vmem [shape: f32[2,4,16,12], index: 0, kind: input, shape index: {}]
  %s1 = inlined_call_operand.vmem [shape: f32[32,12], index: 1, kind: input, shape index: {}]
  %s2 = inlined_call_operand.vmem [shape: f32[1,32], index: 2, kind: input, shape index: {}]
  %s3 = inlined_call_operand.vmem [shape: f32[2,16,16], index: 3, kind: input, shape index: {}]
  %s4 = inlined_call_operand.vmem [shape: f32[16,16], index: 4, kind: input, shape index: {}]
  %s5 = inlined_call_operand.vmem [shape: f32[1,8], index: 5, kind: input, shape index: {}]
  %s6 = inlined_call_operand.vmem [shape: f32[32,24], index: 6, kind: input, shape index: {}]
  %s7 = inlined_call_operand.vmem [shape: f32[1,32], index: 7, kind: input, shape index: {}]
  %s8 = inlined_call_operand.vmem [shape: f32[16,128], index: 8, kind: input, shape index: {}]
  %s9 = inlined_call_operand.vmem [shape: f32[16,128], index: 9, kind: input, shape index: {}]
  %s10 = inlined_call_operand.hbm [shape: f32[2,16,128], index: 10, kind: output, shape index: {}]
  %s11 = sld [smem:[#allocation0]]
  $region73: #{tpu_custom_call.1} parent=0
    _
  %s13 = ssub.s32 1, %s11
  %s14 = scalar_select 0, %s13, %s11
  $region1: #{tpu_custom_call.1} parent=0
    #allocation2 [shape = 'u8[16384]{0}', space=vmem, size = 0x4000, scoped, tag = 'output window, operand 0']
    #allocation3 [shape = 's32[2]{0}', space=sflag, size = 0x8, scoped, tag = 'scoped memory for tpu_custom_call.1']
    %15 = vsyncpa [#allocation3], 0
    %s16 = scalar_lea.sflag [#allocation3], 1
    %17 = vsyncpa %s16, 0
    loop: start=0, step=1, limit=4
    $region2: #{tpu_custom_call.1} parent=1 // loop_pre_header
      _
    $region3: #{tpu_custom_call.1} parent=1 // loop_header
      %s19 = sphi 0, %s23
      %p20 = scmp.ge.s32.totalorder %s19, 4
      %s29 = sphi 0, %s31
      %s32 = sphi 0, %s29
      %s33 = sphi 0, %s32
      %s49 = sphi 0, %s33
      %s53 = sphi 0, %s53
      %s55 = sphi 0, %s53
      %s56 = sphi 0, %s55
      %s70 = sphi 0, %s56
      %s74 = sphi 0, %s74
      %s76 = sphi 0, %s74
      %s77 = sphi 0, %s76
      %s91 = sphi 0, %s77
      %s95 = sphi 0, %s95
      %s97 = sphi 0, %s95
      %s98 = sphi 0, %s97
      %s112 = sphi 0, %s98
      %s116 = sphi 0, %s116
      %s118 = sphi 0, %s116
      %s119 = sphi 0, %s118
      %s133 = sphi 0, %s119
      %s137 = sphi 0, %s137
      %s139 = sphi 0, %s137
      %s140 = sphi 0, %s139
      %s154 = sphi 0, %s140
      %s158 = sphi 0, %s158
      %s160 = sphi 0, %s158
      %s161 = sphi 0, %s160
      %s175 = sphi 0, %s161
      %s179 = sphi 0, %s179
      %s181 = sphi 0, %s179
      %s182 = sphi 0, %s181
      %s196 = sphi 0, %s182
      %s200 = sphi 0, %s200
      %s202 = sphi 0, %s200
      %s203 = sphi 0, %s202
      %s217 = sphi 0, %s203
      %s221 = sphi 0, %s221
      %s223 = sphi 0, %s221
      %s224 = sphi 0, %s223
      %s238 = sphi 0, %s224
      %s244 = sphi 0, %s246
      %s247 = sphi 0, %s244
      %s248 = sphi 0, %s247
      %s264 = sphi 0, %s248
    $region4: #{tpu_custom_call.1} parent=1 // loop_header_branch
      %22 = sbr.rel (%p20) target = $region8
    $region5: #{tpu_custom_call.1} parent=1 // loop_body
      %s24 = ssub.s32 %s19, 1
      %s25 = ssub.s32 %s19, 2
      %s26 = sadd.s32 %s19, 1
      %s27 = ssub.s32 %s19, %s26
      %p28 = scmp.eq.s32.totalorder %s27, 0
      %s30 = sadd.s32 %s29, 1
      %s31 = scalar_select %p28, %s29, %s30
      %p34 = pneg %p28
      %p35 = scmp.eq.s32.totalorder %s19, 1
      %p36 = por %p34, %p35
      %p37 = scmp.ne.s32.totalorder %s29, %s32
      %p38 = scmp.eq.s32.totalorder %s19, 0
      %p39 = por %p37, %p38
      %p40 = scmp.ne.s32.totalorder %s29, %s32
      %p41 = scmp.eq.s32.totalorder %s24, 1
      %p42 = por %p40, %p41
      %p43 = scmp.ne.s32.totalorder %s32, %s33
      %p44 = scmp.eq.s32.totalorder %s24, 0
      %p45 = por %p43, %p44
      %p46 = scmp.ne.s32.totalorder %s32, %s33
      %p47 = scmp.eq.s32.totalorder %s25, 1
      %p48 = por %p46, %p47
      %p50 = scmp.ne.s32.totalorder %s33, %s49
      %p51 = scmp.eq.s32.totalorder %s25, 0
      %p52 = por %p50, %p51
      %s54 = sadd.s32 %s53, 1
      %p57 = scmp.eq.s32.totalorder %s19, 1
      %p58 = scmp.ne.s32.totalorder %s53, %s55
      %p59 = scmp.eq.s32.totalorder %s19, 0
      %p60 = por %p58, %p59
      %p61 = scmp.ne.s32.totalorder %s53, %s55
      %p62 = scmp.eq.s32.totalorder %s24, 1
      %p63 = por %p61, %p62
      %p64 = scmp.ne.s32.totalorder %s55, %s56
      %p65 = scmp.eq.s32.totalorder %s24, 0
      %p66 = por %p64, %p65
      %p67 = scmp.ne.s32.totalorder %s55, %s56
      %p68 = scmp.eq.s32.totalorder %s25, 1
      %p69 = por %p67, %p68
      %p71 = scmp.ne.s32.totalorder %s56, %s70
      %p72 = scmp.eq.s32.totalorder %s25, 0
      %p73 = por %p71, %p72
      %s75 = sadd.s32 %s74, 1
      %p78 = scmp.eq.s32.totalorder %s19, 1
      %p79 = scmp.ne.s32.totalorder %s74, %s76
      %p80 = scmp.eq.s32.totalorder %s19, 0
      %p81 = por %p79, %p80
      %p82 = scmp.ne.s32.totalorder %s74, %s76
      %p83 = scmp.eq.s32.totalorder %s24, 1
      %p84 = por %p82, %p83
      %p85 = scmp.ne.s32.totalorder %s76, %s77
      %p86 = scmp.eq.s32.totalorder %s24, 0
      %p87 = por %p85, %p86
      %p88 = scmp.ne.s32.totalorder %s76, %s77
      %p89 = scmp.eq.s32.totalorder %s25, 1
      %p90 = por %p88, %p89
      %p92 = scmp.ne.s32.totalorder %s77, %s91
      %p93 = scmp.eq.s32.totalorder %s25, 0
      %p94 = por %p92, %p93
      %s96 = sadd.s32 %s95, 1
      %p99 = scmp.eq.s32.totalorder %s19, 1
      %p100 = scmp.ne.s32.totalorder %s95, %s97
      %p101 = scmp.eq.s32.totalorder %s19, 0
      %p102 = por %p100, %p101
      %p103 = scmp.ne.s32.totalorder %s95, %s97
      %p104 = scmp.eq.s32.totalorder %s24, 1
      %p105 = por %p103, %p104
      %p106 = scmp.ne.s32.totalorder %s97, %s98
      %p107 = scmp.eq.s32.totalorder %s24, 0
      %p108 = por %p106, %p107
      %p109 = scmp.ne.s32.totalorder %s97, %s98
      %p110 = scmp.eq.s32.totalorder %s25, 1
      %p111 = por %p109, %p110
      %p113 = scmp.ne.s32.totalorder %s98, %s112
      %p114 = scmp.eq.s32.totalorder %s25, 0
      %p115 = por %p113, %p114
      %s117 = sadd.s32 %s116, 1
      %p120 = scmp.eq.s32.totalorder %s19, 1
      %p121 = scmp.ne.s32.totalorder %s116, %s118
      %p122 = scmp.eq.s32.totalorder %s19, 0
      %p123 = por %p121, %p122
      %p124 = scmp.ne.s32.totalorder %s116, %s118
      %p125 = scmp.eq.s32.totalorder %s24, 1
      %p126 = por %p124, %p125
      %p127 = scmp.ne.s32.totalorder %s118, %s119
      %p128 = scmp.eq.s32.totalorder %s24, 0
      %p129 = por %p127, %p128
      %p130 = scmp.ne.s32.totalorder %s118, %s119
      %p131 = scmp.eq.s32.totalorder %s25, 1
      %p132 = por %p130, %p131
      %p134 = scmp.ne.s32.totalorder %s119, %s133
      %p135 = scmp.eq.s32.totalorder %s25, 0
      %p136 = por %p134, %p135
      %s138 = sadd.s32 %s137, 1
      %p141 = scmp.eq.s32.totalorder %s19, 1
      %p142 = scmp.ne.s32.totalorder %s137, %s139
      %p143 = scmp.eq.s32.totalorder %s19, 0
      %p144 = por %p142, %p143
      %p145 = scmp.ne.s32.totalorder %s137, %s139
      %p146 = scmp.eq.s32.totalorder %s24, 1
      %p147 = por %p145, %p146
      %p148 = scmp.ne.s32.totalorder %s139, %s140
      %p149 = scmp.eq.s32.totalorder %s24, 0
      %p150 = por %p148, %p149
      %p151 = scmp.ne.s32.totalorder %s139, %s140
      %p152 = scmp.eq.s32.totalorder %s25, 1
      %p153 = por %p151, %p152
      %p155 = scmp.ne.s32.totalorder %s140, %s154
      %p156 = scmp.eq.s32.totalorder %s25, 0
      %p157 = por %p155, %p156
      %s159 = sadd.s32 %s158, 1
      %p162 = scmp.eq.s32.totalorder %s19, 1
      %p163 = scmp.ne.s32.totalorder %s158, %s160
      %p164 = scmp.eq.s32.totalorder %s19, 0
      %p165 = por %p163, %p164
      %p166 = scmp.ne.s32.totalorder %s158, %s160
      %p167 = scmp.eq.s32.totalorder %s24, 1
      %p168 = por %p166, %p167
      %p169 = scmp.ne.s32.totalorder %s160, %s161
      %p170 = scmp.eq.s32.totalorder %s24, 0
      %p171 = por %p169, %p170
      %p172 = scmp.ne.s32.totalorder %s160, %s161
      %p173 = scmp.eq.s32.totalorder %s25, 1
      %p174 = por %p172, %p173
      %p176 = scmp.ne.s32.totalorder %s161, %s175
      %p177 = scmp.eq.s32.totalorder %s25, 0
      %p178 = por %p176, %p177
      %s180 = sadd.s32 %s179, 1
      %p183 = scmp.eq.s32.totalorder %s19, 1
      %p184 = scmp.ne.s32.totalorder %s179, %s181
      %p185 = scmp.eq.s32.totalorder %s19, 0
      %p186 = por %p184, %p185
      %p187 = scmp.ne.s32.totalorder %s179, %s181
      %p188 = scmp.eq.s32.totalorder %s24, 1
      %p189 = por %p187, %p188
      %p190 = scmp.ne.s32.totalorder %s181, %s182
      %p191 = scmp.eq.s32.totalorder %s24, 0
      %p192 = por %p190, %p191
      %p193 = scmp.ne.s32.totalorder %s181, %s182
      %p194 = scmp.eq.s32.totalorder %s25, 1
      %p195 = por %p193, %p194
      %p197 = scmp.ne.s32.totalorder %s182, %s196
      %p198 = scmp.eq.s32.totalorder %s25, 0
      %p199 = por %p197, %p198
      %s201 = sadd.s32 %s200, 1
      %p204 = scmp.eq.s32.totalorder %s19, 1
      %p205 = scmp.ne.s32.totalorder %s200, %s202
      %p206 = scmp.eq.s32.totalorder %s19, 0
      %p207 = por %p205, %p206
      %p208 = scmp.ne.s32.totalorder %s200, %s202
      %p209 = scmp.eq.s32.totalorder %s24, 1
      %p210 = por %p208, %p209
      %p211 = scmp.ne.s32.totalorder %s202, %s203
      %p212 = scmp.eq.s32.totalorder %s24, 0
      %p213 = por %p211, %p212
      %p214 = scmp.ne.s32.totalorder %s202, %s203
      %p215 = scmp.eq.s32.totalorder %s25, 1
      %p216 = por %p214, %p215
      %p218 = scmp.ne.s32.totalorder %s203, %s217
      %p219 = scmp.eq.s32.totalorder %s25, 0
      %p220 = por %p218, %p219
      %s222 = sadd.s32 %s221, 1
      %p225 = scmp.eq.s32.totalorder %s19, 1
      %p226 = scmp.ne.s32.totalorder %s221, %s223
      %p227 = scmp.eq.s32.totalorder %s19, 0
      %p228 = por %p226, %p227
      %p229 = scmp.ne.s32.totalorder %s221, %s223
      %p230 = scmp.eq.s32.totalorder %s24, 1
      %p231 = por %p229, %p230
      %p232 = scmp.ne.s32.totalorder %s223, %s224
      %p233 = scmp.eq.s32.totalorder %s24, 0
      %p234 = por %p232, %p233
      %p235 = scmp.ne.s32.totalorder %s223, %s224
      %p236 = scmp.eq.s32.totalorder %s25, 1
      %p237 = por %p235, %p236
      %p239 = scmp.ne.s32.totalorder %s224, %s238
      %p240 = scmp.eq.s32.totalorder %s25, 0
      %p241 = por %p239, %p240
      %s242 = ssub.s32 %s19, %s26
      %p243 = scmp.eq.s32.totalorder %s242, 0
      %s245 = sadd.s32 %s244, 1
      %s246 = scalar_select %p243, %s244, %s245
      %p249 = pneg %p243
      %p250 = scmp.eq.s32.totalorder %s19, 1
      %p251 = por %p249, %p250
      %p252 = scmp.ne.s32.totalorder %s244, %s247
      %p253 = scmp.eq.s32.totalorder %s19, 0
      %p254 = por %p252, %p253
      %p255 = scmp.ne.s32.totalorder %s244, %s247
      %p256 = scmp.eq.s32.totalorder %s24, 1
      %p257 = por %p255, %p256
      %p258 = scmp.ne.s32.totalorder %s247, %s248
      %p259 = scmp.eq.s32.totalorder %s24, 0
      %p260 = por %p258, %p259
      %p261 = scmp.ne.s32.totalorder %s247, %s248
      %p262 = scmp.eq.s32.totalorder %s25, 1
      %p263 = por %p261, %p262
      %p265 = scmp.ne.s32.totalorder %s248, %s264
      %p266 = scmp.eq.s32.totalorder %s25, 0
      %p267 = por %p265, %p266
      %p268 = scmp.le.s32.totalorder 1, %s19
      %p269 = scmp.lt.s32.totalorder %s19, 3
      %p270 = pnand %p268, %p269
      %p271 = pneg %p270
      // Predicated region
      $region9: #{tpu_custom_call.1} parent=5 // pred_check
        _
      $region10: #{tpu_custom_call.1} parent=5 // pred_check_branch
        %273 = sbr.rel (%p270) target = $region12
      $region11: #{tpu_custom_call.1} parent=5 // pred_region
        %s274 = ssub.s32 %s19, 1
        // Predicated region
        $region13: #{tpu_custom_call.1} parent=11 // pred_check
          %p275 = pneg %p66
        $region14: #{tpu_custom_call.1} parent=11 // pred_check_branch
          %277 = sbr.rel (%p275) target = $region16
        $region15: #{tpu_custom_call.1} parent=11 // pred_region
          _
        $region16: #{tpu_custom_call.1} parent=11 // pred_fallthru
          _
        // Predicated region
        $region17: #{tpu_custom_call.1} parent=11 // pred_check
          %p278 = pneg %p87
        $region18: #{tpu_custom_call.1} parent=11 // pred_check_branch
          %280 = sbr.rel (%p278) target = $region20
        $region19: #{tpu_custom_call.1} parent=11 // pred_region
          _
        $region20: #{tpu_custom_call.1} parent=11 // pred_fallthru
          _
        // Predicated region
        $region21: #{tpu_custom_call.1} parent=11 // pred_check
          %p281 = pneg %p108
        $region22: #{tpu_custom_call.1} parent=11 // pred_check_branch
          %283 = sbr.rel (%p281) target = $region24
        $region23: #{tpu_custom_call.1} parent=11 // pred_region
          _
        $region24: #{tpu_custom_call.1} parent=11 // pred_fallthru
          _
        // Predicated region
        $region25: #{tpu_custom_call.1} parent=11 // pred_check
          %p284 = pneg %p129
        $region26: #{tpu_custom_call.1} parent=11 // pred_check_branch
          %286 = sbr.rel (%p284) target = $region28
        $region27: #{tpu_custom_call.1} parent=11 // pred_region
          _
        $region28: #{tpu_custom_call.1} parent=11 // pred_fallthru
          _
        // Predicated region
        $region29: #{tpu_custom_call.1} parent=11 // pred_check
          %p287 = pneg %p150
        $region30: #{tpu_custom_call.1} parent=11 // pred_check_branch
          %289 = sbr.rel (%p287) target = $region32
        $region31: #{tpu_custom_call.1} parent=11 // pred_region
          _
        $region32: #{tpu_custom_call.1} parent=11 // pred_fallthru
          _
        // Predicated region
        $region33: #{tpu_custom_call.1} parent=11 // pred_check
          %p290 = pneg %p171
        $region34: #{tpu_custom_call.1} parent=11 // pred_check_branch
          %292 = sbr.rel (%p290) target = $region36
        $region35: #{tpu_custom_call.1} parent=11 // pred_region
          _
        $region36: #{tpu_custom_call.1} parent=11 // pred_fallthru
          _
        // Predicated region
        $region37: #{tpu_custom_call.1} parent=11 // pred_check
          %p293 = pneg %p192
        $region38: #{tpu_custom_call.1} parent=11 // pred_check_branch
          %295 = sbr.rel (%p293) target = $region40
        $region39: #{tpu_custom_call.1} parent=11 // pred_region
          _
        $region40: #{tpu_custom_call.1} parent=11 // pred_fallthru
          _
        // Predicated region
        $region41: #{tpu_custom_call.1} parent=11 // pred_check
          %p296 = pneg %p213
        $region42: #{tpu_custom_call.1} parent=11 // pred_check_branch
          %298 = sbr.rel (%p296) target = $region44
        $region43: #{tpu_custom_call.1} parent=11 // pred_region
          _
        $region44: #{tpu_custom_call.1} parent=11 // pred_fallthru
          _
        // Predicated region
        $region45: #{tpu_custom_call.1} parent=11 // pred_check
          %p299 = pneg %p234
        $region46: #{tpu_custom_call.1} parent=11 // pred_check_branch
          %301 = sbr.rel (%p299) target = $region48
        $region47: #{tpu_custom_call.1} parent=11 // pred_region
          _
        $region48: #{tpu_custom_call.1} parent=11 // pred_fallthru
          _
      $region12: #{tpu_custom_call.1} parent=5 // pred_fallthru
        _
      %p302 = scmp.lt.s32.totalorder %s19, 2
      // Predicated region
      $region49: #{tpu_custom_call.1} parent=5 // pred_check
        %p303 = pneg %p302
      $region50: #{tpu_custom_call.1} parent=5 // pred_check_branch
        %305 = sbr.rel (%p303) target = $region52
      $region51: #{tpu_custom_call.1} parent=5 // pred_region
        // Predicated region
        $region53: #{tpu_custom_call.1} parent=51 // pred_check
          %p306 = pneg %p39
        $region54: #{tpu_custom_call.1} parent=51 // pred_check_branch
          %308 = sbr.rel (%p306) target = $region56
        $region55: #{tpu_custom_call.1} parent=51 // pred_region
          %p309 = scmp.lt.s32.totalorder %s19, 1
          %s310 = scalar_select %p309, %s19, 1
          %s311 = smul.addr %s310, 8
          %s312 = smul.addr %s311, 8
          %s313 = scalar_lea.vmem %s0, %s312
        $region56: #{tpu_custom_call.1} parent=51 // pred_fallthru
          _
      $region52: #{tpu_custom_call.1} parent=5 // pred_fallthru
        _
      %p314 = scmp.le.s32.totalorder 1, %s19
      %p315 = scmp.lt.s32.totalorder %s19, 3
      %p316 = pnand %p314, %p315
      %p317 = pneg %p316
      // Predicated region
      $region57: #{tpu_custom_call.1} parent=5 // pred_check
        _
      $region58: #{tpu_custom_call.1} parent=5 // pred_check_branch
        %319 = sbr.rel (%p316) target = $region60
      $region59: #{tpu_custom_call.1} parent=5 // pred_region
        %s320 = ssub.s32 %s19, 1
        %p321 = scmp.lt.s32.totalorder %s24, 1
        %s322 = scalar_select %p321, %s24, 1
        %s323 = smul.addr %s322, 8
        %s324 = smul.addr %s323, 8
        %s325 = scalar_lea.vmem %s0, %s324
        %p326 = pneg %p45
        %p327 = pneg %p42
        %p328 = pneg %p66
        %p329 = pneg %p63
        %p330 = pneg %p87
        %p331 = pneg %p84
        %p332 = pneg %p108
        %p333 = pneg %p105
        %p334 = pneg %p129
        %p335 = pneg %p126
        %p336 = pneg %p150
        %p337 = pneg %p147
        %p338 = pneg %p171
        %p339 = pneg %p168
        %p340 = pneg %p192
        %p341 = pneg %p189
        %p342 = pneg %p213
        %p343 = pneg %p210
        %p344 = pneg %p234
        %p345 = pneg %p231
        %p346 = pneg %p260
        %p347 = pneg %p257
        %s348 = sand.u32 %s247, 1
        %s349 = scalar_lea.sflag [#allocation3], %s348
        %s350 = sand.u32 %s247, 1
        %s351 = smul.addr %s350, 16
        %s352 = scalar_lea.vmem [#allocation2], %s351
        %p353 = scmp.lt.s32.totalorder %s24, 1
        %s354 = scalar_select %p353, %s24, 1
        %s355 = smul.addr %s354, 8
        %s356 = smul.addr %s355, 8
        %s357 = scalar_lea.vmem %s0, %s356
        %v358 = vld [vmem:[%s357] sm:$0xff]
        %v359 = vld [vmem:[%s357 + $0x8] sm:$0xff]
        %v360 = vld [vmem:[%s357 + $0x10] sm:$0xff]
        %v361 = vld [vmem:[%s357 + $0x18] sm:$0xff]
        %v362 = vld [vmem:[%s357 + $0x20] sm:$0xff]
        %v363 = vld [vmem:[%s357 + $0x28] sm:$0xff]
        %v364 = vld [vmem:[%s357 + $0x30] sm:$0xff]
        %v365 = vld [vmem:[%s357 + $0x38] sm:$0xff]
        %374 = vrot.lane.b32.xlu0 %v358, 127
        %v375 = vpop.permute.xlu0 %374
        %376 = vrot.lane.b32.xlu0 %v359, 127
        %v377 = vpop.permute.xlu0 %376
        %378 = vrot.lane.b32.xlu0 %v360, 127
        %v379 = vpop.permute.xlu0 %378
        %380 = vrot.lane.b32.xlu0 %v361, 127
        %v381 = vpop.permute.xlu0 %380
        %382 = vrot.lane.b32.xlu0 %v362, 127
        %v383 = vpop.permute.xlu0 %382
        %384 = vrot.lane.b32.xlu0 %v363, 127
        %v385 = vpop.permute.xlu0 %384
        %386 = vrot.lane.b32.xlu0 %v364, 127
        %v387 = vpop.permute.xlu0 %386
        %388 = vrot.lane.b32.xlu0 %v365, 127
        %v389 = vpop.permute.xlu0 %388
        %398 = vrot.lane.b32.xlu0 %v358, 126
        %v399 = vpop.permute.xlu0 %398
        %400 = vrot.lane.b32.xlu0 %v359, 126
        %v401 = vpop.permute.xlu0 %400
        %402 = vrot.lane.b32.xlu0 %v360, 126
        %v403 = vpop.permute.xlu0 %402
        %404 = vrot.lane.b32.xlu0 %v361, 126
        %v405 = vpop.permute.xlu0 %404
        %406 = vrot.lane.b32.xlu0 %v362, 126
        %v407 = vpop.permute.xlu0 %406
        %408 = vrot.lane.b32.xlu0 %v363, 126
        %v409 = vpop.permute.xlu0 %408
        %410 = vrot.lane.b32.xlu0 %v364, 126
        %v411 = vpop.permute.xlu0 %410
        %412 = vrot.lane.b32.xlu0 %v365, 126
        %v413 = vpop.permute.xlu0 %412
        %v422 = vld [vmem:[%s1] sm:$0xff]
        %v423 = vld [vmem:[%s1 + $0x8] sm:$0xff]
        %v424 = vld [vmem:[%s1 + $0x10] sm:$0xff]
        %v425 = vld [vmem:[%s1 + $0x18] sm:$0xff]
        %v426 = vld [vmem:[%s2] sm:$0x1]
        %v427 = vlaneseq
        %v428 = vshrl.u32 %v427, 7
        %v429 = vsub.s32 0, %v428
        %v430 = vrot.slane %v426, %v429
        %432 = vbcast.lane.b32.xlu0 %v430, 256
        %v433 = vpop.permute.xlu0 %432
        %s435 = sor.u32 256, 8
        %436 = vbcast.lane.b32.xlu0 %v430, %s435
        %v437 = vpop.permute.xlu0 %436
        %s439 = sor.u32 256, 16
        %440 = vbcast.lane.b32.xlu0 %v430, %s439
        %v441 = vpop.permute.xlu0 %440
        %s443 = sor.u32 256, 24
        %444 = vbcast.lane.b32.xlu0 %v430, %s443
        %v445 = vpop.permute.xlu0 %444
        %v446 = vlaneseq
        %v447 = vshrl.u32 %v446, 7
        %v448 = vsub.s32 0, %v447
        %v449 = vrot.slane %v433, %v448
        %v450 = vlaneseq
        %v451 = vshrl.u32 %v450, 7
        %v452 = vsub.s32 1, %v451
        %v453 = vrot.slane %v433, %v452
        %v454 = vlaneseq
        %v455 = vshrl.u32 %v454, 7
        %v456 = vsub.s32 2, %v455
        %v457 = vrot.slane %v433, %v456
        %v458 = vlaneseq
        %v459 = vshrl.u32 %v458, 7
        %v460 = vsub.s32 3, %v459
        %v461 = vrot.slane %v433, %v460
        %v462 = vlaneseq
        %v463 = vshrl.u32 %v462, 7
        %v464 = vsub.s32 4, %v463
        %v465 = vrot.slane %v433, %v464
        %v466 = vlaneseq
        %v467 = vshrl.u32 %v466, 7
        %v468 = vsub.s32 5, %v467
        %v469 = vrot.slane %v433, %v468
        %v470 = vlaneseq
        %v471 = vshrl.u32 %v470, 7
        %v472 = vsub.s32 6, %v471
        %v473 = vrot.slane %v433, %v472
        %v474 = vlaneseq
        %v475 = vshrl.u32 %v474, 7
        %v476 = vsub.s32 7, %v475
        %v477 = vrot.slane %v433, %v476
        %v478 = vlaneseq
        %v479 = vshrl.u32 %v478, 7
        %v480 = vsub.s32 0, %v479
        %v481 = vrot.slane %v437, %v480
        %v482 = vlaneseq
        %v483 = vshrl.u32 %v482, 7
        %v484 = vsub.s32 1, %v483
        %v485 = vrot.slane %v437, %v484
        %v486 = vlaneseq
        %v487 = vshrl.u32 %v486, 7
        %v488 = vsub.s32 2, %v487
        %v489 = vrot.slane %v437, %v488
        %v490 = vlaneseq
        %v491 = vshrl.u32 %v490, 7
        %v492 = vsub.s32 3, %v491
        %v493 = vrot.slane %v437, %v492
        %v494 = vlaneseq
        %v495 = vshrl.u32 %v494, 7
        %v496 = vsub.s32 4, %v495
        %v497 = vrot.slane %v437, %v496
        %v498 = vlaneseq
        %v499 = vshrl.u32 %v498, 7
        %v500 = vsub.s32 5, %v499
        %v501 = vrot.slane %v437, %v500
        %v502 = vlaneseq
        %v503 = vshrl.u32 %v502, 7
        %v504 = vsub.s32 6, %v503
        %v505 = vrot.slane %v437, %v504
        %v506 = vlaneseq
        %v507 = vshrl.u32 %v506, 7
        %v508 = vsub.s32 7, %v507
        %v509 = vrot.slane %v437, %v508
        %v510 = vlaneseq
        %v511 = vshrl.u32 %v510, 7
        %v512 = vsub.s32 0, %v511
        %v513 = vrot.slane %v441, %v512
        %v514 = vlaneseq
        %v515 = vshrl.u32 %v514, 7
        %v516 = vsub.s32 1, %v515
        %v517 = vrot.slane %v441, %v516
        %v518 = vlaneseq
        %v519 = vshrl.u32 %v518, 7
        %v520 = vsub.s32 2, %v519
        %v521 = vrot.slane %v441, %v520
        %v522 = vlaneseq
        %v523 = vshrl.u32 %v522, 7
        %v524 = vsub.s32 3, %v523
        %v525 = vrot.slane %v441, %v524
        %v526 = vlaneseq
        %v527 = vshrl.u32 %v526, 7
        %v528 = vsub.s32 4, %v527
        %v529 = vrot.slane %v441, %v528
        %v530 = vlaneseq
        %v531 = vshrl.u32 %v530, 7
        %v532 = vsub.s32 5, %v531
        %v533 = vrot.slane %v441, %v532
        %v534 = vlaneseq
        %v535 = vshrl.u32 %v534, 7
        %v536 = vsub.s32 6, %v535
        %v537 = vrot.slane %v441, %v536
        %v538 = vlaneseq
        %v539 = vshrl.u32 %v538, 7
        %v540 = vsub.s32 7, %v539
        %v541 = vrot.slane %v441, %v540
        %v542 = vlaneseq
        %v543 = vshrl.u32 %v542, 7
        %v544 = vsub.s32 0, %v543
        %v545 = vrot.slane %v445, %v544
        %v546 = vlaneseq
        %v547 = vshrl.u32 %v546, 7
        %v548 = vsub.s32 1, %v547
        %v549 = vrot.slane %v445, %v548
        %v550 = vlaneseq
        %v551 = vshrl.u32 %v550, 7
        %v552 = vsub.s32 2, %v551
        %v553 = vrot.slane %v445, %v552
        %v554 = vlaneseq
        %v555 = vshrl.u32 %v554, 7
        %v556 = vsub.s32 3, %v555
        %v557 = vrot.slane %v445, %v556
        %v558 = vlaneseq
        %v559 = vshrl.u32 %v558, 7
        %v560 = vsub.s32 4, %v559
        %v561 = vrot.slane %v445, %v560
        %v562 = vlaneseq
        %v563 = vshrl.u32 %v562, 7
        %v564 = vsub.s32 5, %v563
        %v565 = vrot.slane %v445, %v564
        %v566 = vlaneseq
        %v567 = vshrl.u32 %v566, 7
        %v568 = vsub.s32 6, %v567
        %v569 = vrot.slane %v445, %v568
        %v570 = vlaneseq
        %v571 = vshrl.u32 %v570, 7
        %v572 = vsub.s32 7, %v571
        %v573 = vrot.slane %v445, %v572
        %v574 = vcombine.low %v358, %v362
        %v575 = vcombine.high %v358, %v362
        %v577 = vunpack.c.l.s4 1983009808
        %v578 = vunpack.c.0.s8 %v577
        %v579 = vlaneseq
        %v580 = vshrl.u32 %v579, 7
        %v581 = vsub.s32 %v578, %v580
        %v582 = vrot.slane %v574, %v581
        %v584 = vunpack.c.l.s4 1983009808
        %v585 = vunpack.c.0.s8 %v584
        %v586 = vlaneseq
        %v587 = vshrl.u32 %v586, 7
        %v588 = vsub.s32 %v585, %v587
        %v589 = vrot.slane %v575, %v588
        %v590 = vcombine.low %v360, %v364
        %v591 = vcombine.high %v360, %v364
        %v593 = vunpack.c.l.s4 1983009808
        %v594 = vunpack.c.0.s8 %v593
        %v595 = vlaneseq
        %v596 = vshrl.u32 %v595, 7
        %v597 = vsub.s32 %v594, %v596
        %v598 = vrot.slane %v590, %v597
        %v600 = vunpack.c.l.s4 1983009808
        %v601 = vunpack.c.0.s8 %v600
        %v602 = vlaneseq
        %v603 = vshrl.u32 %v602, 7
        %v604 = vsub.s32 %v601, %v603
        %v605 = vrot.slane %v591, %v604
        %v606 = vcombine.low %v375, %v383
        %v607 = vcombine.high %v375, %v383
        %v609 = vunpack.c.l.s4 1983009808
        %v610 = vunpack.c.0.s8 %v609
        %v611 = vlaneseq
        %v612 = vshrl.u32 %v611, 7
        %v613 = vsub.s32 %v610, %v612
        %v614 = vrot.slane %v606, %v613
        %v616 = vunpack.c.l.s4 1983009808
        %v617 = vunpack.c.0.s8 %v616
        %v618 = vlaneseq
        %v619 = vshrl.u32 %v618, 7
        %v620 = vsub.s32 %v617, %v619
        %v621 = vrot.slane %v607, %v620
        %v622 = vcombine.low %v379, %v387
        %v623 = vcombine.high %v379, %v387
        %v625 = vunpack.c.l.s4 1983009808
        %v626 = vunpack.c.0.s8 %v625
        %v627 = vlaneseq
        %v628 = vshrl.u32 %v627, 7
        %v629 = vsub.s32 %v626, %v628
        %v630 = vrot.slane %v622, %v629
        %v632 = vunpack.c.l.s4 1983009808
        %v633 = vunpack.c.0.s8 %v632
        %v634 = vlaneseq
        %v635 = vshrl.u32 %v634, 7
        %v636 = vsub.s32 %v633, %v635
        %v637 = vrot.slane %v623, %v636
        %v638 = vcombine.low %v582, %v598
        %v639 = vcombine.high %v582, %v598
        %v641 = vunpack.c.l.s4 1934713408
        %v642 = vunpack.c.0.s8 %v641
        %v643 = vlaneseq
        %v644 = vshrl.u32 %v643, 7
        %v645 = vsub.s32 %v642, %v644
        %v646 = vrot.slane %v638, %v645
        %v648 = vunpack.c.l.s4 1934713408
        %v649 = vunpack.c.0.s8 %v648
        %v650 = vlaneseq
        %v651 = vshrl.u32 %v650, 7
        %v652 = vsub.s32 %v649, %v651
        %v653 = vrot.slane %v639, %v652
        %v654 = vcombine.low %v589, %v605
        %v655 = vcombine.high %v589, %v605
        %v657 = vunpack.c.l.s4 1934713408
        %v658 = vunpack.c.0.s8 %v657
        %v659 = vlaneseq
        %v660 = vshrl.u32 %v659, 7
        %v661 = vsub.s32 %v658, %v660
        %v662 = vrot.slane %v654, %v661
        %v664 = vunpack.c.l.s4 1934713408
        %v665 = vunpack.c.0.s8 %v664
        %v666 = vlaneseq
        %v667 = vshrl.u32 %v666, 7
        %v668 = vsub.s32 %v665, %v667
        %v669 = vrot.slane %v655, %v668
        %v670 = vcombine.low %v614, %v630
        %v671 = vcombine.high %v614, %v630
        %v673 = vunpack.c.l.s4 1934713408
        %v674 = vunpack.c.0.s8 %v673
        %v675 = vlaneseq
        %v676 = vshrl.u32 %v675, 7
        %v677 = vsub.s32 %v674, %v676
        %v678 = vrot.slane %v670, %v677
        %v680 = vunpack.c.l.s4 1934713408
        %v681 = vunpack.c.0.s8 %v680
        %v682 = vlaneseq
        %v683 = vshrl.u32 %v682, 7
        %v684 = vsub.s32 %v681, %v683
        %v685 = vrot.slane %v671, %v684
        %v686 = vcombine.low %v621, %v637
        %v687 = vcombine.high %v621, %v637
        %v689 = vunpack.c.l.s4 1934713408
        %v690 = vunpack.c.0.s8 %v689
        %v691 = vlaneseq
        %v692 = vshrl.u32 %v691, 7
        %v693 = vsub.s32 %v690, %v692
        %v694 = vrot.slane %v686, %v693
        %v696 = vunpack.c.l.s4 1934713408
        %v697 = vunpack.c.0.s8 %v696
        %v698 = vlaneseq
        %v699 = vshrl.u32 %v698, 7
        %v700 = vsub.s32 %v697, %v699
        %v701 = vrot.slane %v687, %v700
        %v702 = vcombine.low %v646, %v678
        %v703 = vcombine.high %v646, %v678
        %v704 = vcombine.low %v653, %v685
        %v705 = vcombine.high %v653, %v685
        %v706 = vcombine.low %v662, %v694
        %v707 = vcombine.high %v662, %v694
        %v708 = vcombine.low %v669, %v701
        %v709 = vcombine.high %v669, %v701
        %v710 = vcombine.low %v399, %v407
        %v711 = vcombine.high %v399, %v407
        %v713 = vunpack.c.l.s4 1983009808
        %v714 = vunpack.c.0.s8 %v713
        %v715 = vlaneseq
        %v716 = vshrl.u32 %v715, 7
        %v717 = vsub.s32 %v714, %v716
        %v718 = vrot.slane %v710, %v717
        %v720 = vunpack.c.l.s4 1983009808
        %v721 = vunpack.c.0.s8 %v720
        %v722 = vlaneseq
        %v723 = vshrl.u32 %v722, 7
        %v724 = vsub.s32 %v721, %v723
        %v725 = vrot.slane %v711, %v724
        %v726 = vcombine.low %v403, %v411
        %v727 = vcombine.high %v403, %v411
        %v729 = vunpack.c.l.s4 1983009808
        %v730 = vunpack.c.0.s8 %v729
        %v731 = vlaneseq
        %v732 = vshrl.u32 %v731, 7
        %v733 = vsub.s32 %v730, %v732
        %v734 = vrot.slane %v726, %v733
        %v736 = vunpack.c.l.s4 1983009808
        %v737 = vunpack.c.0.s8 %v736
        %v738 = vlaneseq
        %v739 = vshrl.u32 %v738, 7
        %v740 = vsub.s32 %v737, %v739
        %v741 = vrot.slane %v727, %v740
        %v742 = vcombine.low %v718, %v734
        %v743 = vcombine.high %v718, %v734
        %v745 = vunpack.c.l.s4 1934713408
        %v746 = vunpack.c.0.s8 %v745
        %v747 = vlaneseq
        %v748 = vshrl.u32 %v747, 7
        %v749 = vsub.s32 %v746, %v748
        %v750 = vrot.slane %v742, %v749
        %v752 = vunpack.c.l.s4 1934713408
        %v753 = vunpack.c.0.s8 %v752
        %v754 = vlaneseq
        %v755 = vshrl.u32 %v754, 7
        %v756 = vsub.s32 %v753, %v755
        %v757 = vrot.slane %v743, %v756
        %v758 = vcombine.low %v725, %v741
        %v759 = vcombine.high %v725, %v741
        %v761 = vunpack.c.l.s4 1934713408
        %v762 = vunpack.c.0.s8 %v761
        %v763 = vlaneseq
        %v764 = vshrl.u32 %v763, 7
        %v765 = vsub.s32 %v762, %v764
        %v766 = vrot.slane %v758, %v765
        %v768 = vunpack.c.l.s4 1934713408
        %v769 = vunpack.c.0.s8 %v768
        %v770 = vlaneseq
        %v771 = vshrl.u32 %v770, 7
        %v772 = vsub.s32 %v769, %v771
        %v773 = vrot.slane %v759, %v772
        %v774 = vcombine.high %v750, 0.0
        %v775 = vcombine.high %v757, 0.0
        %v776 = vcombine.high %v766, 0.0
        %v777 = vcombine.high %v773, 0.0
        %v778 = vcombine.low %v359, %v363
        %v779 = vcombine.high %v359, %v363
        %v781 = vunpack.c.l.s4 1983009808
        %v782 = vunpack.c.0.s8 %v781
        %v783 = vlaneseq
        %v784 = vshrl.u32 %v783, 7
        %v785 = vsub.s32 %v782, %v784
        %v786 = vrot.slane %v778, %v785
        %v788 = vunpack.c.l.s4 1983009808
        %v789 = vunpack.c.0.s8 %v788
        %v790 = vlaneseq
        %v791 = vshrl.u32 %v790, 7
        %v792 = vsub.s32 %v789, %v791
        %v793 = vrot.slane %v779, %v792
        %v794 = vcombine.low %v361, %v365
        %v795 = vcombine.high %v361, %v365
        %v797 = vunpack.c.l.s4 1983009808
        %v798 = vunpack.c.0.s8 %v797
        %v799 = vlaneseq
        %v800 = vshrl.u32 %v799, 7
        %v801 = vsub.s32 %v798, %v800
        %v802 = vrot.slane %v794, %v801
        %v804 = vunpack.c.l.s4 1983009808
        %v805 = vunpack.c.0.s8 %v804
        %v806 = vlaneseq
        %v807 = vshrl.u32 %v806, 7
        %v808 = vsub.s32 %v805, %v807
        %v809 = vrot.slane %v795, %v808
        %v810 = vcombine.low %v377, %v385
        %v811 = vcombine.high %v377, %v385
        %v813 = vunpack.c.l.s4 1983009808
        %v814 = vunpack.c.0.s8 %v813
        %v815 = vlaneseq
        %v816 = vshrl.u32 %v815, 7
        %v817 = vsub.s32 %v814, %v816
        %v818 = vrot.slane %v810, %v817
        %v820 = vunpack.c.l.s4 1983009808
        %v821 = vunpack.c.0.s8 %v820
        %v822 = vlaneseq
        %v823 = vshrl.u32 %v822, 7
        %v824 = vsub.s32 %v821, %v823
        %v825 = vrot.slane %v811, %v824
        %v826 = vcombine.low %v381, %v389
        %v827 = vcombine.high %v381, %v389
        %v829 = vunpack.c.l.s4 1983009808
        %v830 = vunpack.c.0.s8 %v829
        %v831 = vlaneseq
        %v832 = vshrl.u32 %v831, 7
        %v833 = vsub.s32 %v830, %v832
        %v834 = vrot.slane %v826, %v833
        %v836 = vunpack.c.l.s4 1983009808
        %v837 = vunpack.c.0.s8 %v836
        %v838 = vlaneseq
        %v839 = vshrl.u32 %v838, 7
        %v840 = vsub.s32 %v837, %v839
        %v841 = vrot.slane %v827, %v840
        %v842 = vcombine.low %v786, %v802
        %v843 = vcombine.high %v786, %v802
        %v845 = vunpack.c.l.s4 1934713408
        %v846 = vunpack.c.0.s8 %v845
        %v847 = vlaneseq
        %v848 = vshrl.u32 %v847, 7
        %v849 = vsub.s32 %v846, %v848
        %v850 = vrot.slane %v842, %v849
        %v852 = vunpack.c.l.s4 1934713408
        %v853 = vunpack.c.0.s8 %v852
        %v854 = vlaneseq
        %v855 = vshrl.u32 %v854, 7
        %v856 = vsub.s32 %v853, %v855
        %v857 = vrot.slane %v843, %v856
        %v858 = vcombine.low %v793, %v809
        %v859 = vcombine.high %v793, %v809
        %v861 = vunpack.c.l.s4 1934713408
        %v862 = vunpack.c.0.s8 %v861
        %v863 = vlaneseq
        %v864 = vshrl.u32 %v863, 7
        %v865 = vsub.s32 %v862, %v864
        %v866 = vrot.slane %v858, %v865
        %v868 = vunpack.c.l.s4 1934713408
        %v869 = vunpack.c.0.s8 %v868
        %v870 = vlaneseq
        %v871 = vshrl.u32 %v870, 7
        %v872 = vsub.s32 %v869, %v871
        %v873 = vrot.slane %v859, %v872
        %v874 = vcombine.low %v818, %v834
        %v875 = vcombine.high %v818, %v834
        %v877 = vunpack.c.l.s4 1934713408
        %v878 = vunpack.c.0.s8 %v877
        %v879 = vlaneseq
        %v880 = vshrl.u32 %v879, 7
        %v881 = vsub.s32 %v878, %v880
        %v882 = vrot.slane %v874, %v881
        %v884 = vunpack.c.l.s4 1934713408
        %v885 = vunpack.c.0.s8 %v884
        %v886 = vlaneseq
        %v887 = vshrl.u32 %v886, 7
        %v888 = vsub.s32 %v885, %v887
        %v889 = vrot.slane %v875, %v888
        %v890 = vcombine.low %v825, %v841
        %v891 = vcombine.high %v825, %v841
        %v893 = vunpack.c.l.s4 1934713408
        %v894 = vunpack.c.0.s8 %v893
        %v895 = vlaneseq
        %v896 = vshrl.u32 %v895, 7
        %v897 = vsub.s32 %v894, %v896
        %v898 = vrot.slane %v890, %v897
        %v900 = vunpack.c.l.s4 1934713408
        %v901 = vunpack.c.0.s8 %v900
        %v902 = vlaneseq
        %v903 = vshrl.u32 %v902, 7
        %v904 = vsub.s32 %v901, %v903
        %v905 = vrot.slane %v891, %v904
        %v906 = vcombine.low %v850, %v882
        %v907 = vcombine.high %v850, %v882
        %v908 = vcombine.low %v857, %v889
        %v909 = vcombine.high %v857, %v889
        %v910 = vcombine.low %v866, %v898
        %v911 = vcombine.high %v866, %v898
        %v912 = vcombine.low %v873, %v905
        %v913 = vcombine.high %v873, %v905
        %v914 = vcombine.low %v401, %v409
        %v915 = vcombine.high %v401, %v409
        %v917 = vunpack.c.l.s4 1983009808
        %v918 = vunpack.c.0.s8 %v917
        %v919 = vlaneseq
        %v920 = vshrl.u32 %v919, 7
        %v921 = vsub.s32 %v918, %v920
        %v922 = vrot.slane %v914, %v921
        %v924 = vunpack.c.l.s4 1983009808
        %v925 = vunpack.c.0.s8 %v924
        %v926 = vlaneseq
        %v927 = vshrl.u32 %v926, 7
        %v928 = vsub.s32 %v925, %v927
        %v929 = vrot.slane %v915, %v928
        %v930 = vcombine.low %v405, %v413
        %v931 = vcombine.high %v405, %v413
        %v933 = vunpack.c.l.s4 1983009808
        %v934 = vunpack.c.0.s8 %v933
        %v935 = vlaneseq
        %v936 = vshrl.u32 %v935, 7
        %v937 = vsub.s32 %v934, %v936
        %v938 = vrot.slane %v930, %v937
        %v940 = vunpack.c.l.s4 1983009808
        %v941 = vunpack.c.0.s8 %v940
        %v942 = vlaneseq
        %v943 = vshrl.u32 %v942, 7
        %v944 = vsub.s32 %v941, %v943
        %v945 = vrot.slane %v931, %v944
        %v946 = vcombine.low %v922, %v938
        %v947 = vcombine.high %v922, %v938
        %v949 = vunpack.c.l.s4 1934713408
        %v950 = vunpack.c.0.s8 %v949
        %v951 = vlaneseq
        %v952 = vshrl.u32 %v951, 7
        %v953 = vsub.s32 %v950, %v952
        %v954 = vrot.slane %v946, %v953
        %v956 = vunpack.c.l.s4 1934713408
        %v957 = vunpack.c.0.s8 %v956
        %v958 = vlaneseq
        %v959 = vshrl.u32 %v958, 7
        %v960 = vsub.s32 %v957, %v959
        %v961 = vrot.slane %v947, %v960
        %v962 = vcombine.low %v929, %v945
        %v963 = vcombine.high %v929, %v945
        %v965 = vunpack.c.l.s4 1934713408
        %v966 = vunpack.c.0.s8 %v965
        %v967 = vlaneseq
        %v968 = vshrl.u32 %v967, 7
        %v969 = vsub.s32 %v966, %v968
        %v970 = vrot.slane %v962, %v969
        %v972 = vunpack.c.l.s4 1934713408
        %v973 = vunpack.c.0.s8 %v972
        %v974 = vlaneseq
        %v975 = vshrl.u32 %v974, 7
        %v976 = vsub.s32 %v973, %v975
        %v977 = vrot.slane %v963, %v976
        %v978 = vcombine.high %v954, 0.0
        %v979 = vcombine.high %v961, 0.0
        %v980 = vcombine.high %v970, 0.0
        %v981 = vcombine.high %v977, 0.0
        %984 = vrot.lane.b32.xlu0 %v703, 10
        %v985 = vpop.permute.xlu0 %984
        %986 = vrot.lane.b32.xlu0 %v774, 10
        %v987 = vpop.permute.xlu0 %986
        %992 = vrot.lane.b32.xlu0 %v704, 20
        %v993 = vpop.permute.xlu0 %992
        %994 = vrot.lane.b32.xlu0 %v757, 20
        %v995 = vpop.permute.xlu0 %994
        %1000 = vrot.lane.b32.xlu0 %v705, 30
        %v1001 = vpop.permute.xlu0 %1000
        %1002 = vrot.lane.b32.xlu0 %v775, 30
        %v1003 = vpop.permute.xlu0 %1002
        %1008 = vrot.lane.b32.xlu0 %v706, 40
        %v1009 = vpop.permute.xlu0 %1008
        %1010 = vrot.lane.b32.xlu0 %v766, 40
        %v1011 = vpop.permute.xlu0 %1010
        %1016 = vrot.lane.b32.xlu0 %v707, 50
        %v1017 = vpop.permute.xlu0 %1016
        %1018 = vrot.lane.b32.xlu0 %v776, 50
        %v1019 = vpop.permute.xlu0 %1018
        %1024 = vrot.lane.b32.xlu0 %v708, 60
        %v1025 = vpop.permute.xlu0 %1024
        %1026 = vrot.lane.b32.xlu0 %v773, 60
        %v1027 = vpop.permute.xlu0 %1026
        %1032 = vrot.lane.b32.xlu0 %v709, 70
        %v1033 = vpop.permute.xlu0 %1032
        %1034 = vrot.lane.b32.xlu0 %v777, 70
        %v1035 = vpop.permute.xlu0 %1034
        %1040 = vrot.lane.b32.xlu0 %v906, 80
        %v1041 = vpop.permute.xlu0 %1040
        %1042 = vrot.lane.b32.xlu0 %v954, 80
        %v1043 = vpop.permute.xlu0 %1042
        %1048 = vrot.lane.b32.xlu0 %v907, 90
        %v1049 = vpop.permute.xlu0 %1048
        %1050 = vrot.lane.b32.xlu0 %v978, 90
        %v1051 = vpop.permute.xlu0 %1050
        %1056 = vrot.lane.b32.xlu0 %v908, 100
        %v1057 = vpop.permute.xlu0 %1056
        %1058 = vrot.lane.b32.xlu0 %v961, 100
        %v1059 = vpop.permute.xlu0 %1058
        %1064 = vrot.lane.b32.xlu0 %v909, 110
        %v1065 = vpop.permute.xlu0 %1064
        %1066 = vrot.lane.b32.xlu0 %v979, 110
        %v1067 = vpop.permute.xlu0 %1066
        %1072 = vrot.lane.b32.xlu0 %v910, 120
        %v1073 = vpop.permute.xlu0 %1072
        %1074 = vrot.lane.b32.xlu0 %v970, 120
        %v1075 = vpop.permute.xlu0 %1074
        %1080 = vrot.lane.b32.xlu0 %v911, 2
        %v1081 = vpop.permute.xlu0 %1080
        %1082 = vrot.lane.b32.xlu0 %v980, 2
        %v1083 = vpop.permute.xlu0 %1082
        %1088 = vrot.lane.b32.xlu0 %v912, 12
        %v1089 = vpop.permute.xlu0 %1088
        %1090 = vrot.lane.b32.xlu0 %v977, 12
        %v1091 = vpop.permute.xlu0 %1090
        %1096 = vrot.lane.b32.xlu0 %v913, 22
        %v1097 = vpop.permute.xlu0 %1096
        %1098 = vrot.lane.b32.xlu0 %v981, 22
        %v1099 = vpop.permute.xlu0 %1098
        %vm1102 = vcmask 80896
        %v1103 = vsel %vm1102, %v702, %v985
        %v1104 = vsel %vm1102, %v750, %v987
        %vm1105 = vcmask 162816
        %v1106 = vsel %vm1105, %v1103, %v993
        %v1107 = vsel %vm1105, %v1104, %v995
        %vm1108 = vcmask 244736
        %v1109 = vsel %vm1108, %v1106, %v1001
        %v1110 = vsel %vm1108, %v1107, %v1003
        %vm1111 = vcmask 326656
        %v1112 = vsel %vm1111, %v1109, %v1009
        %v1113 = vsel %vm1111, %v1110, %v1011
        %vm1114 = vcmask 408576
        %v1115 = vsel %vm1114, %v1112, %v1017
        %v1116 = vsel %vm1114, %v1113, %v1019
        %vm1117 = vcmask 490496
        %v1118 = vsel %vm1117, %v1115, %v1025
        %v1119 = vsel %vm1117, %v1116, %v1027
        %vm1120 = vcmask 572416
        %v1121 = vsel %vm1120, %v1118, %v1033
        %v1122 = vsel %vm1120, %v1119, %v1035
        %vm1123 = vcmask 654336
        %v1124 = vsel %vm1123, %v1121, %v1041
        %v1125 = vsel %vm1123, %v1122, %v1043
        %vm1126 = vcmask 736256
        %v1127 = vsel %vm1126, %v1124, %v1049
        %v1128 = vsel %vm1126, %v1125, %v1051
        %vm1129 = vcmask 818176
        %v1130 = vsel %vm1129, %v1127, %v1057
        %v1131 = vsel %vm1129, %v1128, %v1059
        %vm1132 = vcmask 900096
        %v1133 = vsel %vm1132, %v1130, %v1065
        %v1134 = vsel %vm1132, %v1131, %v1067
        %vm1135 = vcmask 982016
        %v1136 = vsel %vm1135, %v1133, %v1073
        %v1137 = vsel %vm1135, %v1134, %v1075
        %vm1138 = vcmask 15360
        %v1139 = vsel %vm1138, %v1073, %v1081
        %v1140 = vsel %vm1138, %v1075, %v1083
        %vm1141 = vcmask 97280
        %v1142 = vsel %vm1141, %v1139, %v1089
        %v1143 = vsel %vm1141, %v1140, %v1091
        %vm1144 = vcmask 179200
        %v1145 = vsel %vm1144, %v1142, %v1097
        %v1146 = vsel %vm1144, %v1143, %v1099
        %v1147 = vcombine.low %v449, %v457
        %v1148 = vcombine.high %v449, %v457
        %v1150 = vunpack.c.l.s4 1983009808
        %v1151 = vunpack.c.0.s8 %v1150
        %v1152 = vlaneseq
        %v1153 = vshrl.u32 %v1152, 7
        %v1154 = vsub.s32 %v1151, %v1153
        %v1155 = vrot.slane %v1147, %v1154
        %v1157 = vunpack.c.l.s4 1983009808
        %v1158 = vunpack.c.0.s8 %v1157
        %v1159 = vlaneseq
        %v1160 = vshrl.u32 %v1159, 7
        %v1161 = vsub.s32 %v1158, %v1160
        %v1162 = vrot.slane %v1148, %v1161
        %v1163 = vcombine.low %v453, %v461
        %v1164 = vcombine.high %v453, %v461
        %v1166 = vunpack.c.l.s4 1983009808
        %v1167 = vunpack.c.0.s8 %v1166
        %v1168 = vlaneseq
        %v1169 = vshrl.u32 %v1168, 7
        %v1170 = vsub.s32 %v1167, %v1169
        %v1171 = vrot.slane %v1163, %v1170
        %v1173 = vunpack.c.l.s4 1983009808
        %v1174 = vunpack.c.0.s8 %v1173
        %v1175 = vlaneseq
        %v1176 = vshrl.u32 %v1175, 7
        %v1177 = vsub.s32 %v1174, %v1176
        %v1178 = vrot.slane %v1164, %v1177
        %v1179 = vcombine.low %v465, %v473
        %v1180 = vcombine.high %v465, %v473
        %v1182 = vunpack.c.l.s4 1983009808
        %v1183 = vunpack.c.0.s8 %v1182
        %v1184 = vlaneseq
        %v1185 = vshrl.u32 %v1184, 7
        %v1186 = vsub.s32 %v1183, %v1185
        %v1187 = vrot.slane %v1179, %v1186
        %v1189 = vunpack.c.l.s4 1983009808
        %v1190 = vunpack.c.0.s8 %v1189
        %v1191 = vlaneseq
        %v1192 = vshrl.u32 %v1191, 7
        %v1193 = vsub.s32 %v1190, %v1192
        %v1194 = vrot.slane %v1180, %v1193
        %v1195 = vcombine.low %v469, %v477
        %v1196 = vcombine.high %v469, %v477
        %v1198 = vunpack.c.l.s4 1983009808
        %v1199 = vunpack.c.0.s8 %v1198
        %v1200 = vlaneseq
        %v1201 = vshrl.u32 %v1200, 7
        %v1202 = vsub.s32 %v1199, %v1201
        %v1203 = vrot.slane %v1195, %v1202
        %v1205 = vunpack.c.l.s4 1983009808
        %v1206 = vunpack.c.0.s8 %v1205
        %v1207 = vlaneseq
        %v1208 = vshrl.u32 %v1207, 7
        %v1209 = vsub.s32 %v1206, %v1208
        %v1210 = vrot.slane %v1196, %v1209
        %v1211 = vcombine.low %v1155, %v1171
        %v1212 = vcombine.high %v1155, %v1171
        %v1214 = vunpack.c.l.s4 1934713408
        %v1215 = vunpack.c.0.s8 %v1214
        %v1216 = vlaneseq
        %v1217 = vshrl.u32 %v1216, 7
        %v1218 = vsub.s32 %v1215, %v1217
        %v1219 = vrot.slane %v1211, %v1218
        %v1221 = vunpack.c.l.s4 1934713408
        %v1222 = vunpack.c.0.s8 %v1221
        %v1223 = vlaneseq
        %v1224 = vshrl.u32 %v1223, 7
        %v1225 = vsub.s32 %v1222, %v1224
        %v1226 = vrot.slane %v1212, %v1225
        %v1227 = vcombine.low %v1162, %v1178
        %v1228 = vcombine.high %v1162, %v1178
        %v1230 = vunpack.c.l.s4 1934713408
        %v1231 = vunpack.c.0.s8 %v1230
        %v1232 = vlaneseq
        %v1233 = vshrl.u32 %v1232, 7
        %v1234 = vsub.s32 %v1231, %v1233
        %v1235 = vrot.slane %v1227, %v1234
        %v1237 = vunpack.c.l.s4 1934713408
        %v1238 = vunpack.c.0.s8 %v1237
        %v1239 = vlaneseq
        %v1240 = vshrl.u32 %v1239, 7
        %v1241 = vsub.s32 %v1238, %v1240
        %v1242 = vrot.slane %v1228, %v1241
        %v1243 = vcombine.low %v1187, %v1203
        %v1244 = vcombine.high %v1187, %v1203
        %v1246 = vunpack.c.l.s4 1934713408
        %v1247 = vunpack.c.0.s8 %v1246
        %v1248 = vlaneseq
        %v1249 = vshrl.u32 %v1248, 7
        %v1250 = vsub.s32 %v1247, %v1249
        %v1251 = vrot.slane %v1243, %v1250
        %v1253 = vunpack.c.l.s4 1934713408
        %v1254 = vunpack.c.0.s8 %v1253
        %v1255 = vlaneseq
        %v1256 = vshrl.u32 %v1255, 7
        %v1257 = vsub.s32 %v1254, %v1256
        %v1258 = vrot.slane %v1244, %v1257
        %v1259 = vcombine.low %v1194, %v1210
        %v1260 = vcombine.high %v1194, %v1210
        %v1262 = vunpack.c.l.s4 1934713408
        %v1263 = vunpack.c.0.s8 %v1262
        %v1264 = vlaneseq
        %v1265 = vshrl.u32 %v1264, 7
        %v1266 = vsub.s32 %v1263, %v1265
        %v1267 = vrot.slane %v1259, %v1266
        %v1269 = vunpack.c.l.s4 1934713408
        %v1270 = vunpack.c.0.s8 %v1269
        %v1271 = vlaneseq
        %v1272 = vshrl.u32 %v1271, 7
        %v1273 = vsub.s32 %v1270, %v1272
        %v1274 = vrot.slane %v1260, %v1273
        %v1275 = vcombine.low %v1219, %v1251
        %v1276 = vcombine.high %v1219, %v1251
        %v1277 = vcombine.low %v1226, %v1258
        %v1278 = vcombine.high %v1226, %v1258
        %v1279 = vcombine.low %v1235, %v1267
        %v1280 = vcombine.high %v1235, %v1267
        %v1281 = vcombine.low %v1242, %v1274
        %v1282 = vcombine.high %v1242, %v1274
        %v1283 = vcombine.low %v481, %v489
        %v1284 = vcombine.high %v481, %v489
        %v1286 = vunpack.c.l.s4 1983009808
        %v1287 = vunpack.c.0.s8 %v1286
        %v1288 = vlaneseq
        %v1289 = vshrl.u32 %v1288, 7
        %v1290 = vsub.s32 %v1287, %v1289
        %v1291 = vrot.slane %v1283, %v1290
        %v1293 = vunpack.c.l.s4 1983009808
        %v1294 = vunpack.c.0.s8 %v1293
        %v1295 = vlaneseq
        %v1296 = vshrl.u32 %v1295, 7
        %v1297 = vsub.s32 %v1294, %v1296
        %v1298 = vrot.slane %v1284, %v1297
        %v1299 = vcombine.low %v485, %v493
        %v1300 = vcombine.high %v485, %v493
        %v1302 = vunpack.c.l.s4 1983009808
        %v1303 = vunpack.c.0.s8 %v1302
        %v1304 = vlaneseq
        %v1305 = vshrl.u32 %v1304, 7
        %v1306 = vsub.s32 %v1303, %v1305
        %v1307 = vrot.slane %v1299, %v1306
        %v1309 = vunpack.c.l.s4 1983009808
        %v1310 = vunpack.c.0.s8 %v1309
        %v1311 = vlaneseq
        %v1312 = vshrl.u32 %v1311, 7
        %v1313 = vsub.s32 %v1310, %v1312
        %v1314 = vrot.slane %v1300, %v1313
        %v1315 = vcombine.low %v497, %v505
        %v1316 = vcombine.high %v497, %v505
        %v1318 = vunpack.c.l.s4 1983009808
        %v1319 = vunpack.c.0.s8 %v1318
        %v1320 = vlaneseq
        %v1321 = vshrl.u32 %v1320, 7
        %v1322 = vsub.s32 %v1319, %v1321
        %v1323 = vrot.slane %v1315, %v1322
        %v1325 = vunpack.c.l.s4 1983009808
        %v1326 = vunpack.c.0.s8 %v1325
        %v1327 = vlaneseq
        %v1328 = vshrl.u32 %v1327, 7
        %v1329 = vsub.s32 %v1326, %v1328
        %v1330 = vrot.slane %v1316, %v1329
        %v1331 = vcombine.low %v501, %v509
        %v1332 = vcombine.high %v501, %v509
        %v1334 = vunpack.c.l.s4 1983009808
        %v1335 = vunpack.c.0.s8 %v1334
        %v1336 = vlaneseq
        %v1337 = vshrl.u32 %v1336, 7
        %v1338 = vsub.s32 %v1335, %v1337
        %v1339 = vrot.slane %v1331, %v1338
        %v1341 = vunpack.c.l.s4 1983009808
        %v1342 = vunpack.c.0.s8 %v1341
        %v1343 = vlaneseq
        %v1344 = vshrl.u32 %v1343, 7
        %v1345 = vsub.s32 %v1342, %v1344
        %v1346 = vrot.slane %v1332, %v1345
        %v1347 = vcombine.low %v1291, %v1307
        %v1348 = vcombine.high %v1291, %v1307
        %v1350 = vunpack.c.l.s4 1934713408
        %v1351 = vunpack.c.0.s8 %v1350
        %v1352 = vlaneseq
        %v1353 = vshrl.u32 %v1352, 7
        %v1354 = vsub.s32 %v1351, %v1353
        %v1355 = vrot.slane %v1347, %v1354
        %v1357 = vunpack.c.l.s4 1934713408
        %v1358 = vunpack.c.0.s8 %v1357
        %v1359 = vlaneseq
        %v1360 = vshrl.u32 %v1359, 7
        %v1361 = vsub.s32 %v1358, %v1360
        %v1362 = vrot.slane %v1348, %v1361
        %v1363 = vcombine.low %v1298, %v1314
        %v1364 = vcombine.high %v1298, %v1314
        %v1366 = vunpack.c.l.s4 1934713408
        %v1367 = vunpack.c.0.s8 %v1366
        %v1368 = vlaneseq
        %v1369 = vshrl.u32 %v1368, 7
        %v1370 = vsub.s32 %v1367, %v1369
        %v1371 = vrot.slane %v1363, %v1370
        %v1373 = vunpack.c.l.s4 1934713408
        %v1374 = vunpack.c.0.s8 %v1373
        %v1375 = vlaneseq
        %v1376 = vshrl.u32 %v1375, 7
        %v1377 = vsub.s32 %v1374, %v1376
        %v1378 = vrot.slane %v1364, %v1377
        %v1379 = vcombine.low %v1323, %v1339
        %v1380 = vcombine.high %v1323, %v1339
        %v1382 = vunpack.c.l.s4 1934713408
        %v1383 = vunpack.c.0.s8 %v1382
        %v1384 = vlaneseq
        %v1385 = vshrl.u32 %v1384, 7
        %v1386 = vsub.s32 %v1383, %v1385
        %v1387 = vrot.slane %v1379, %v1386
        %v1389 = vunpack.c.l.s4 1934713408
        %v1390 = vunpack.c.0.s8 %v1389
        %v1391 = vlaneseq
        %v1392 = vshrl.u32 %v1391, 7
        %v1393 = vsub.s32 %v1390, %v1392
        %v1394 = vrot.slane %v1380, %v1393
        %v1395 = vcombine.low %v1330, %v1346
        %v1396 = vcombine.high %v1330, %v1346
        %v1398 = vunpack.c.l.s4 1934713408
        %v1399 = vunpack.c.0.s8 %v1398
        %v1400 = vlaneseq
        %v1401 = vshrl.u32 %v1400, 7
        %v1402 = vsub.s32 %v1399, %v1401
        %v1403 = vrot.slane %v1395, %v1402
        %v1405 = vunpack.c.l.s4 1934713408
        %v1406 = vunpack.c.0.s8 %v1405
        %v1407 = vlaneseq
        %v1408 = vshrl.u32 %v1407, 7
        %v1409 = vsub.s32 %v1406, %v1408
        %v1410 = vrot.slane %v1396, %v1409
        %v1411 = vcombine.low %v1355, %v1387
        %v1412 = vcombine.high %v1355, %v1387
        %v1413 = vcombine.low %v1362, %v1394
        %v1414 = vcombine.high %v1362, %v1394
        %v1415 = vcombine.low %v1371, %v1403
        %v1416 = vcombine.high %v1371, %v1403
        %v1417 = vcombine.low %v1378, %v1410
        %v1418 = vcombine.high %v1378, %v1410
        %v1419 = vcombine.low %v513, %v521
        %v1420 = vcombine.high %v513, %v521
        %v1422 = vunpack.c.l.s4 1983009808
        %v1423 = vunpack.c.0.s8 %v1422
        %v1424 = vlaneseq
        %v1425 = vshrl.u32 %v1424, 7
        %v1426 = vsub.s32 %v1423, %v1425
        %v1427 = vrot.slane %v1419, %v1426
        %v1429 = vunpack.c.l.s4 1983009808
        %v1430 = vunpack.c.0.s8 %v1429
        %v1431 = vlaneseq
        %v1432 = vshrl.u32 %v1431, 7
        %v1433 = vsub.s32 %v1430, %v1432
        %v1434 = vrot.slane %v1420, %v1433
        %v1435 = vcombine.low %v517, %v525
        %v1436 = vcombine.high %v517, %v525
        %v1438 = vunpack.c.l.s4 1983009808
        %v1439 = vunpack.c.0.s8 %v1438
        %v1440 = vlaneseq
        %v1441 = vshrl.u32 %v1440, 7
        %v1442 = vsub.s32 %v1439, %v1441
        %v1443 = vrot.slane %v1435, %v1442
        %v1445 = vunpack.c.l.s4 1983009808
        %v1446 = vunpack.c.0.s8 %v1445
        %v1447 = vlaneseq
        %v1448 = vshrl.u32 %v1447, 7
        %v1449 = vsub.s32 %v1446, %v1448
        %v1450 = vrot.slane %v1436, %v1449
        %v1451 = vcombine.low %v529, %v537
        %v1452 = vcombine.high %v529, %v537
        %v1454 = vunpack.c.l.s4 1983009808
        %v1455 = vunpack.c.0.s8 %v1454
        %v1456 = vlaneseq
        %v1457 = vshrl.u32 %v1456, 7
        %v1458 = vsub.s32 %v1455, %v1457
        %v1459 = vrot.slane %v1451, %v1458
        %v1461 = vunpack.c.l.s4 1983009808
        %v1462 = vunpack.c.0.s8 %v1461
        %v1463 = vlaneseq
        %v1464 = vshrl.u32 %v1463, 7
        %v1465 = vsub.s32 %v1462, %v1464
        %v1466 = vrot.slane %v1452, %v1465
        %v1467 = vcombine.low %v533, %v541
        %v1468 = vcombine.high %v533, %v541
        %v1470 = vunpack.c.l.s4 1983009808
        %v1471 = vunpack.c.0.s8 %v1470
        %v1472 = vlaneseq
        %v1473 = vshrl.u32 %v1472, 7
        %v1474 = vsub.s32 %v1471, %v1473
        %v1475 = vrot.slane %v1467, %v1474
        %v1477 = vunpack.c.l.s4 1983009808
        %v1478 = vunpack.c.0.s8 %v1477
        %v1479 = vlaneseq
        %v1480 = vshrl.u32 %v1479, 7
        %v1481 = vsub.s32 %v1478, %v1480
        %v1482 = vrot.slane %v1468, %v1481
        %v1483 = vcombine.low %v1427, %v1443
        %v1484 = vcombine.high %v1427, %v1443
        %v1486 = vunpack.c.l.s4 1934713408
        %v1487 = vunpack.c.0.s8 %v1486
        %v1488 = vlaneseq
        %v1489 = vshrl.u32 %v1488, 7
        %v1490 = vsub.s32 %v1487, %v1489
        %v1491 = vrot.slane %v1483, %v1490
        %v1493 = vunpack.c.l.s4 1934713408
        %v1494 = vunpack.c.0.s8 %v1493
        %v1495 = vlaneseq
        %v1496 = vshrl.u32 %v1495, 7
        %v1497 = vsub.s32 %v1494, %v1496
        %v1498 = vrot.slane %v1484, %v1497
        %v1499 = vcombine.low %v1434, %v1450
        %v1500 = vcombine.high %v1434, %v1450
        %v1502 = vunpack.c.l.s4 1934713408
        %v1503 = vunpack.c.0.s8 %v1502
        %v1504 = vlaneseq
        %v1505 = vshrl.u32 %v1504, 7
        %v1506 = vsub.s32 %v1503, %v1505
        %v1507 = vrot.slane %v1499, %v1506
        %v1509 = vunpack.c.l.s4 1934713408
        %v1510 = vunpack.c.0.s8 %v1509
        %v1511 = vlaneseq
        %v1512 = vshrl.u32 %v1511, 7
        %v1513 = vsub.s32 %v1510, %v1512
        %v1514 = vrot.slane %v1500, %v1513
        %v1515 = vcombine.low %v1459, %v1475
        %v1516 = vcombine.high %v1459, %v1475
        %v1518 = vunpack.c.l.s4 1934713408
        %v1519 = vunpack.c.0.s8 %v1518
        %v1520 = vlaneseq
        %v1521 = vshrl.u32 %v1520, 7
        %v1522 = vsub.s32 %v1519, %v1521
        %v1523 = vrot.slane %v1515, %v1522
        %v1525 = vunpack.c.l.s4 1934713408
        %v1526 = vunpack.c.0.s8 %v1525
        %v1527 = vlaneseq
        %v1528 = vshrl.u32 %v1527, 7
        %v1529 = vsub.s32 %v1526, %v1528
        %v1530 = vrot.slane %v1516, %v1529
        %v1531 = vcombine.low %v1466, %v1482
        %v1532 = vcombine.high %v1466, %v1482
        %v1534 = vunpack.c.l.s4 1934713408
        %v1535 = vunpack.c.0.s8 %v1534
        %v1536 = vlaneseq
        %v1537 = vshrl.u32 %v1536, 7
        %v1538 = vsub.s32 %v1535, %v1537
        %v1539 = vrot.slane %v1531, %v1538
        %v1541 = vunpack.c.l.s4 1934713408
        %v1542 = vunpack.c.0.s8 %v1541
        %v1543 = vlaneseq
        %v1544 = vshrl.u32 %v1543, 7
        %v1545 = vsub.s32 %v1542, %v1544
        %v1546 = vrot.slane %v1532, %v1545
        %v1547 = vcombine.low %v1491, %v1523
        %v1548 = vcombine.high %v1491, %v1523
        %v1549 = vcombine.low %v1498, %v1530
        %v1550 = vcombine.high %v1498, %v1530
        %v1551 = vcombine.low %v1507, %v1539
        %v1552 = vcombine.high %v1507, %v1539
        %v1553 = vcombine.low %v1514, %v1546
        %v1554 = vcombine.high %v1514, %v1546
        %v1555 = vcombine.low %v545, %v553
        %v1556 = vcombine.high %v545, %v553
        %v1558 = vunpack.c.l.s4 1983009808
        %v1559 = vunpack.c.0.s8 %v1558
        %v1560 = vlaneseq
        %v1561 = vshrl.u32 %v1560, 7
        %v1562 = vsub.s32 %v1559, %v1561
        %v1563 = vrot.slane %v1555, %v1562
        %v1565 = vunpack.c.l.s4 1983009808
        %v1566 = vunpack.c.0.s8 %v1565
        %v1567 = vlaneseq
        %v1568 = vshrl.u32 %v1567, 7
        %v1569 = vsub.s32 %v1566, %v1568
        %v1570 = vrot.slane %v1556, %v1569
        %v1571 = vcombine.low %v549, %v557
        %v1572 = vcombine.high %v549, %v557
        %v1574 = vunpack.c.l.s4 1983009808
        %v1575 = vunpack.c.0.s8 %v1574
        %v1576 = vlaneseq
        %v1577 = vshrl.u32 %v1576, 7
        %v1578 = vsub.s32 %v1575, %v1577
        %v1579 = vrot.slane %v1571, %v1578
        %v1581 = vunpack.c.l.s4 1983009808
        %v1582 = vunpack.c.0.s8 %v1581
        %v1583 = vlaneseq
        %v1584 = vshrl.u32 %v1583, 7
        %v1585 = vsub.s32 %v1582, %v1584
        %v1586 = vrot.slane %v1572, %v1585
        %v1587 = vcombine.low %v561, %v569
        %v1588 = vcombine.high %v561, %v569
        %v1590 = vunpack.c.l.s4 1983009808
        %v1591 = vunpack.c.0.s8 %v1590
        %v1592 = vlaneseq
        %v1593 = vshrl.u32 %v1592, 7
        %v1594 = vsub.s32 %v1591, %v1593
        %v1595 = vrot.slane %v1587, %v1594
        %v1597 = vunpack.c.l.s4 1983009808
        %v1598 = vunpack.c.0.s8 %v1597
        %v1599 = vlaneseq
        %v1600 = vshrl.u32 %v1599, 7
        %v1601 = vsub.s32 %v1598, %v1600
        %v1602 = vrot.slane %v1588, %v1601
        %v1603 = vcombine.low %v565, %v573
        %v1604 = vcombine.high %v565, %v573
        %v1606 = vunpack.c.l.s4 1983009808
        %v1607 = vunpack.c.0.s8 %v1606
        %v1608 = vlaneseq
        %v1609 = vshrl.u32 %v1608, 7
        %v1610 = vsub.s32 %v1607, %v1609
        %v1611 = vrot.slane %v1603, %v1610
        %v1613 = vunpack.c.l.s4 1983009808
        %v1614 = vunpack.c.0.s8 %v1613
        %v1615 = vlaneseq
        %v1616 = vshrl.u32 %v1615, 7
        %v1617 = vsub.s32 %v1614, %v1616
        %v1618 = vrot.slane %v1604, %v1617
        %v1619 = vcombine.low %v1563, %v1579
        %v1620 = vcombine.high %v1563, %v1579
        %v1622 = vunpack.c.l.s4 1934713408
        %v1623 = vunpack.c.0.s8 %v1622
        %v1624 = vlaneseq
        %v1625 = vshrl.u32 %v1624, 7
        %v1626 = vsub.s32 %v1623, %v1625
        %v1627 = vrot.slane %v1619, %v1626
        %v1629 = vunpack.c.l.s4 1934713408
        %v1630 = vunpack.c.0.s8 %v1629
        %v1631 = vlaneseq
        %v1632 = vshrl.u32 %v1631, 7
        %v1633 = vsub.s32 %v1630, %v1632
        %v1634 = vrot.slane %v1620, %v1633
        %v1635 = vcombine.low %v1570, %v1586
        %v1636 = vcombine.high %v1570, %v1586
        %v1638 = vunpack.c.l.s4 1934713408
        %v1639 = vunpack.c.0.s8 %v1638
        %v1640 = vlaneseq
        %v1641 = vshrl.u32 %v1640, 7
        %v1642 = vsub.s32 %v1639, %v1641
        %v1643 = vrot.slane %v1635, %v1642
        %v1645 = vunpack.c.l.s4 1934713408
        %v1646 = vunpack.c.0.s8 %v1645
        %v1647 = vlaneseq
        %v1648 = vshrl.u32 %v1647, 7
        %v1649 = vsub.s32 %v1646, %v1648
        %v1650 = vrot.slane %v1636, %v1649
        %v1651 = vcombine.low %v1595, %v1611
        %v1652 = vcombine.high %v1595, %v1611
        %v1654 = vunpack.c.l.s4 1934713408
        %v1655 = vunpack.c.0.s8 %v1654
        %v1656 = vlaneseq
        %v1657 = vshrl.u32 %v1656, 7
        %v1658 = vsub.s32 %v1655, %v1657
        %v1659 = vrot.slane %v1651, %v1658
        %v1661 = vunpack.c.l.s4 1934713408
        %v1662 = vunpack.c.0.s8 %v1661
        %v1663 = vlaneseq
        %v1664 = vshrl.u32 %v1663, 7
        %v1665 = vsub.s32 %v1662, %v1664
        %v1666 = vrot.slane %v1652, %v1665
        %v1667 = vcombine.low %v1602, %v1618
        %v1668 = vcombine.high %v1602, %v1618
        %v1670 = vunpack.c.l.s4 1934713408
        %v1671 = vunpack.c.0.s8 %v1670
        %v1672 = vlaneseq
        %v1673 = vshrl.u32 %v1672, 7
        %v1674 = vsub.s32 %v1671, %v1673
        %v1675 = vrot.slane %v1667, %v1674
        %v1677 = vunpack.c.l.s4 1934713408
        %v1678 = vunpack.c.0.s8 %v1677
        %v1679 = vlaneseq
        %v1680 = vshrl.u32 %v1679, 7
        %v1681 = vsub.s32 %v1678, %v1680
        %v1682 = vrot.slane %v1668, %v1681
        %v1683 = vcombine.low %v1627, %v1659
        %v1684 = vcombine.high %v1627, %v1659
        %v1685 = vcombine.low %v1634, %v1666
        %v1686 = vcombine.high %v1634, %v1666
        %v1687 = vcombine.low %v1643, %v1675
        %v1688 = vcombine.high %v1643, %v1675
        %v1689 = vcombine.low %v1650, %v1682
        %v1690 = vcombine.high %v1650, %v1682
        %1695 = vrot.lane.b32.xlu0 %v1276, 10
        %v1696 = vpop.permute.xlu0 %1695
        %1697 = vrot.lane.b32.xlu0 %v1412, 10
        %v1698 = vpop.permute.xlu0 %1697
        %1699 = vrot.lane.b32.xlu0 %v1548, 10
        %v1700 = vpop.permute.xlu0 %1699
        %1701 = vrot.lane.b32.xlu0 %v1684, 10
        %v1702 = vpop.permute.xlu0 %1701
        %1711 = vrot.lane.b32.xlu0 %v1277, 20
        %v1712 = vpop.permute.xlu0 %1711
        %1713 = vrot.lane.b32.xlu0 %v1413, 20
        %v1714 = vpop.permute.xlu0 %1713
        %1715 = vrot.lane.b32.xlu0 %v1549, 20
        %v1716 = vpop.permute.xlu0 %1715
        %1717 = vrot.lane.b32.xlu0 %v1685, 20
        %v1718 = vpop.permute.xlu0 %1717
        %1727 = vrot.lane.b32.xlu0 %v1278, 30
        %v1728 = vpop.permute.xlu0 %1727
        %1729 = vrot.lane.b32.xlu0 %v1414, 30
        %v1730 = vpop.permute.xlu0 %1729
        %1731 = vrot.lane.b32.xlu0 %v1550, 30
        %v1732 = vpop.permute.xlu0 %1731
        %1733 = vrot.lane.b32.xlu0 %v1686, 30
        %v1734 = vpop.permute.xlu0 %1733
        %1743 = vrot.lane.b32.xlu0 %v1279, 40
        %v1744 = vpop.permute.xlu0 %1743
        %1745 = vrot.lane.b32.xlu0 %v1415, 40
        %v1746 = vpop.permute.xlu0 %1745
        %1747 = vrot.lane.b32.xlu0 %v1551, 40
        %v1748 = vpop.permute.xlu0 %1747
        %1749 = vrot.lane.b32.xlu0 %v1687, 40
        %v1750 = vpop.permute.xlu0 %1749
        %1759 = vrot.lane.b32.xlu0 %v1280, 50
        %v1760 = vpop.permute.xlu0 %1759
        %1761 = vrot.lane.b32.xlu0 %v1416, 50
        %v1762 = vpop.permute.xlu0 %1761
        %1763 = vrot.lane.b32.xlu0 %v1552, 50
        %v1764 = vpop.permute.xlu0 %1763
        %1765 = vrot.lane.b32.xlu0 %v1688, 50
        %v1766 = vpop.permute.xlu0 %1765
        %1775 = vrot.lane.b32.xlu0 %v1281, 60
        %v1776 = vpop.permute.xlu0 %1775
        %1777 = vrot.lane.b32.xlu0 %v1417, 60
        %v1778 = vpop.permute.xlu0 %1777
        %1779 = vrot.lane.b32.xlu0 %v1553, 60
        %v1780 = vpop.permute.xlu0 %1779
        %1781 = vrot.lane.b32.xlu0 %v1689, 60
        %v1782 = vpop.permute.xlu0 %1781
        %1791 = vrot.lane.b32.xlu0 %v1282, 70
        %v1792 = vpop.permute.xlu0 %1791
        %1793 = vrot.lane.b32.xlu0 %v1418, 70
        %v1794 = vpop.permute.xlu0 %1793
        %1795 = vrot.lane.b32.xlu0 %v1554, 70
        %v1796 = vpop.permute.xlu0 %1795
        %1797 = vrot.lane.b32.xlu0 %v1690, 70
        %v1798 = vpop.permute.xlu0 %1797
        %1807 = vrot.lane.b32.xlu0 %v1275, 80
        %v1808 = vpop.permute.xlu0 %1807
        %1809 = vrot.lane.b32.xlu0 %v1411, 80
        %v1810 = vpop.permute.xlu0 %1809
        %1811 = vrot.lane.b32.xlu0 %v1547, 80
        %v1812 = vpop.permute.xlu0 %1811
        %1813 = vrot.lane.b32.xlu0 %v1683, 80
        %v1814 = vpop.permute.xlu0 %1813
        %1819 = vrot.lane.b32.xlu0 %v1276, 90
        %v1820 = vpop.permute.xlu0 %1819
        %1821 = vrot.lane.b32.xlu0 %v1412, 90
        %v1822 = vpop.permute.xlu0 %1821
        %1823 = vrot.lane.b32.xlu0 %v1548, 90
        %v1824 = vpop.permute.xlu0 %1823
        %1825 = vrot.lane.b32.xlu0 %v1684, 90
        %v1826 = vpop.permute.xlu0 %1825
        %1831 = vrot.lane.b32.xlu0 %v1277, 100
        %v1832 = vpop.permute.xlu0 %1831
        %1833 = vrot.lane.b32.xlu0 %v1413, 100
        %v1834 = vpop.permute.xlu0 %1833
        %1835 = vrot.lane.b32.xlu0 %v1549, 100
        %v1836 = vpop.permute.xlu0 %1835
        %1837 = vrot.lane.b32.xlu0 %v1685, 100
        %v1838 = vpop.permute.xlu0 %1837
        %1843 = vrot.lane.b32.xlu0 %v1278, 110
        %v1844 = vpop.permute.xlu0 %1843
        %1845 = vrot.lane.b32.xlu0 %v1414, 110
        %v1846 = vpop.permute.xlu0 %1845
        %1847 = vrot.lane.b32.xlu0 %v1550, 110
        %v1848 = vpop.permute.xlu0 %1847
        %1849 = vrot.lane.b32.xlu0 %v1686, 110
        %v1850 = vpop.permute.xlu0 %1849
        %1855 = vrot.lane.b32.xlu0 %v1279, 120
        %v1856 = vpop.permute.xlu0 %1855
        %1857 = vrot.lane.b32.xlu0 %v1415, 120
        %v1858 = vpop.permute.xlu0 %1857
        %1859 = vrot.lane.b32.xlu0 %v1551, 120
        %v1860 = vpop.permute.xlu0 %1859
        %1861 = vrot.lane.b32.xlu0 %v1687, 120
        %v1862 = vpop.permute.xlu0 %1861
        %1867 = vrot.lane.b32.xlu0 %v1280, 2
        %v1868 = vpop.permute.xlu0 %1867
        %1869 = vrot.lane.b32.xlu0 %v1416, 2
        %v1870 = vpop.permute.xlu0 %1869
        %1871 = vrot.lane.b32.xlu0 %v1552, 2
        %v1872 = vpop.permute.xlu0 %1871
        %1873 = vrot.lane.b32.xlu0 %v1688, 2
        %v1874 = vpop.permute.xlu0 %1873
        %1879 = vrot.lane.b32.xlu0 %v1281, 12
        %v1880 = vpop.permute.xlu0 %1879
        %1881 = vrot.lane.b32.xlu0 %v1417, 12
        %v1882 = vpop.permute.xlu0 %1881
        %1883 = vrot.lane.b32.xlu0 %v1553, 12
        %v1884 = vpop.permute.xlu0 %1883
        %1885 = vrot.lane.b32.xlu0 %v1689, 12
        %v1886 = vpop.permute.xlu0 %1885
        %1891 = vrot.lane.b32.xlu0 %v1282, 22
        %v1892 = vpop.permute.xlu0 %1891
        %1893 = vrot.lane.b32.xlu0 %v1418, 22
        %v1894 = vpop.permute.xlu0 %1893
        %1895 = vrot.lane.b32.xlu0 %v1554, 22
        %v1896 = vpop.permute.xlu0 %1895
        %1897 = vrot.lane.b32.xlu0 %v1690, 22
        %v1898 = vpop.permute.xlu0 %1897
        %v1903 = vsel %vm1102, %v1275, %v1696
        %v1904 = vsel %vm1102, %v1411, %v1698
        %v1905 = vsel %vm1102, %v1547, %v1700
        %v1906 = vsel %vm1102, %v1683, %v1702
        %v1907 = vsel %vm1105, %v1903, %v1712
        %v1908 = vsel %vm1105, %v1904, %v1714
        %v1909 = vsel %vm1105, %v1905, %v1716
        %v1910 = vsel %vm1105, %v1906, %v1718
        %v1911 = vsel %vm1108, %v1907, %v1728
        %v1912 = vsel %vm1108, %v1908, %v1730
        %v1913 = vsel %vm1108, %v1909, %v1732
        %v1914 = vsel %vm1108, %v1910, %v1734
        %v1915 = vsel %vm1111, %v1911, %v1744
        %v1916 = vsel %vm1111, %v1912, %v1746
        %v1917 = vsel %vm1111, %v1913, %v1748
        %v1918 = vsel %vm1111, %v1914, %v1750
        %v1919 = vsel %vm1114, %v1915, %v1760
        %v1920 = vsel %vm1114, %v1916, %v1762
        %v1921 = vsel %vm1114, %v1917, %v1764
        %v1922 = vsel %vm1114, %v1918, %v1766
        %v1923 = vsel %vm1117, %v1919, %v1776
        %v1924 = vsel %vm1117, %v1920, %v1778
        %v1925 = vsel %vm1117, %v1921, %v1780
        %v1926 = vsel %vm1117, %v1922, %v1782
        %v1927 = vsel %vm1120, %v1923, %v1792
        %v1928 = vsel %vm1120, %v1924, %v1794
        %v1929 = vsel %vm1120, %v1925, %v1796
        %v1930 = vsel %vm1120, %v1926, %v1798
        %v1931 = vsel %vm1123, %v1927, %v1808
        %v1932 = vsel %vm1123, %v1928, %v1810
        %v1933 = vsel %vm1123, %v1929, %v1812
        %v1934 = vsel %vm1123, %v1930, %v1814
        %v1935 = vsel %vm1126, %v1931, %v1820
        %v1936 = vsel %vm1126, %v1932, %v1822
        %v1937 = vsel %vm1126, %v1933, %v1824
        %v1938 = vsel %vm1126, %v1934, %v1826
        %v1939 = vsel %vm1129, %v1935, %v1832
        %v1940 = vsel %vm1129, %v1936, %v1834
        %v1941 = vsel %vm1129, %v1937, %v1836
        %v1942 = vsel %vm1129, %v1938, %v1838
        %v1943 = vsel %vm1132, %v1939, %v1844
        %v1944 = vsel %vm1132, %v1940, %v1846
        %v1945 = vsel %vm1132, %v1941, %v1848
        %v1946 = vsel %vm1132, %v1942, %v1850
        %v1947 = vsel %vm1135, %v1943, %v1856
        %v1948 = vsel %vm1135, %v1944, %v1858
        %v1949 = vsel %vm1135, %v1945, %v1860
        %v1950 = vsel %vm1135, %v1946, %v1862
        %v1951 = vsel %vm1138, %v1856, %v1868
        %v1952 = vsel %vm1138, %v1858, %v1870
        %v1953 = vsel %vm1138, %v1860, %v1872
        %v1954 = vsel %vm1138, %v1862, %v1874
        %v1955 = vsel %vm1141, %v1951, %v1880
        %v1956 = vsel %vm1141, %v1952, %v1882
        %v1957 = vsel %vm1141, %v1953, %v1884
        %v1958 = vsel %vm1141, %v1954, %v1886
        %v1959 = vsel %vm1144, %v1955, %v1892
        %v1960 = vsel %vm1144, %v1956, %v1894
        %v1961 = vsel %vm1144, %v1957, %v1896
        %v1962 = vsel %vm1144, %v1958, %v1898
        %v1964 = vsel %vm1141, %v422, 0
        %v1967 = vsel %vm1141, %v423, 0
        %v1970 = vsel %vm1141, %v424, 0
        %v1973 = vsel %vm1141, %v425, 0
        %vm1975 = vcmask 1043456
        %v1977 = vsel %vm1975, %v1137, 0
        %v1980 = vsel %vm1975, %v1146, 0
        %1982 = vmatprep.subr.mxu0 0.0
        %1983 = vmatpush1.msra.mxu0 0.0
        %1984 = vmatprep.subr.mxu0 0.0
        %1985 = vmatpush1.msra.mxu0 0.0
        %1986 = vmatprep.subr.mxu0 0.0
        %1987 = vmatpush1.msra.mxu0 0.0
        %1988 = vmatprep.subr.mxu0 0.0
        %1989 = vmatpush1.msra.mxu0 0.0
        %1990 = vmatprep.subr.mxu0 0.0
        %1991 = vmatpush1.msra.mxu0 0.0
        %1992 = vmatprep.subr.mxu0 0.0
        %1993 = vmatpush1.msra.mxu0 0.0
        %1994 = vmatprep.subr.mxu0 0.0
        %1995 = vmatpush1.msra.mxu0 0.0
        %1996 = vmatprep.subr.mxu0 0.0
        %1997 = vmatpush1.msra.mxu0 0.0
        %1998 = vmatprep.subr.mxu0 0.0
        %1999 = vmatpush1.msra.mxu0 0.0
        %2000 = vmatprep.subr.mxu0 0.0
        %2001 = vmatpush1.msra.mxu0 0.0
        %2002 = vmatprep.subr.mxu0 0.0
        %2003 = vmatpush1.msra.mxu0 0.0
        %2004 = vmatprep.subr.mxu0 0.0
        %2005 = vmatpush1.msra.mxu0 0.0
        %2006 = vmatprep.subr.mxu0 0.0
        %2007 = vmatpush1.msra.mxu0 0.0
        %2008 = vmatprep.subr.mxu0 0.0
        %2009 = vmatpush1.msra.mxu0 0.0
        %2010 = vmatprep.subr.mxu0 %v1980
        %2011 = vmatpush1.msra.mxu0 %v1977
        %2012 = vmatprep.subr.mxu0 %v1145
        %2013 = vmatpush1.msra.mxu0 %v1136
        %2014 = vmatprep.subr.mxu0 0.0
        %2015 = vmatpush2.msra.mxu0 0.0
        %2016 = vmatprep.subr.mxu0 0.0
        %2017 = vmatpush2.msra.mxu0 0.0
        %2018 = vmatprep.subr.mxu0 0.0
        %2019 = vmatpush2.msra.mxu0 0.0
        %2020 = vmatprep.subr.mxu0 0.0
        %2021 = vmatpush2.msra.mxu0 0.0
        %2022 = vmatprep.subr.mxu0 0.0
        %2023 = vmatpush2.msra.mxu0 0.0
        %2024 = vmatprep.subr.mxu0 0.0
        %2025 = vmatpush2.msra.mxu0 0.0
        %2026 = vmatprep.subr.mxu0 0.0
        %2027 = vmatpush2.msra.mxu0 0.0
        %2028 = vmatprep.subr.mxu0 0.0
        %2029 = vmatpush2.msra.mxu0 0.0
        %2030 = vmatprep.subr.mxu0 0.0
        %2031 = vmatpush2.msra.mxu0 0.0
        %2032 = vmatprep.subr.mxu0 0.0
        %2033 = vmatpush2.msra.mxu0 0.0
        %2034 = vmatprep.subr.mxu0 0.0
        %2035 = vmatpush2.msra.mxu0 0.0
        %2036 = vmatprep.subr.mxu0 0.0
        %2037 = vmatpush2.msra.mxu0 0.0
        %2038 = vmatprep.subr.mxu0 0.0
        %2039 = vmatpush2.msra.mxu0 0.0
        %2040 = vmatprep.subr.mxu0 0.0
        %2041 = vmatpush2.msra.mxu0 0.0
        %2042 = vmatprep.subr.mxu0 0.0
        %2043 = vmatpush2.msra.mxu0 0.0
        %2044 = vmatprep.subr.mxu0 0.0
        %2045 = vmatpush2.msra.mxu0 0.0
        %2046 = vmatprep.mubr.f32.mxu0 0.0
        %2047 = vmatmul.mubr.f32.gmra.mxu0 %v1964
        %v2048 = vpop.f32.mrf.mxu0
        %v2049 = vadd.f32 %v1947, %v2048
        %v2050 = vpop.f32.mrf.mxu0
        %v2051 = vadd.f32 %v1959, %v2050
        %2052 = vmatprep.mubr.f32.mxu0 0.0
        %2053 = vmatmul.mubr.f32.gmra.mxu0 %v1967
        %v2054 = vpop.f32.mrf.mxu0
        %v2055 = vadd.f32 %v1948, %v2054
        %v2056 = vpop.f32.mrf.mxu0
        %v2057 = vadd.f32 %v1960, %v2056
        %2058 = vmatprep.mubr.f32.mxu0 0.0
        %2059 = vmatmul.mubr.f32.gmra.mxu0 %v1970
        %v2060 = vpop.f32.mrf.mxu0
        %v2061 = vadd.f32 %v1949, %v2060
        %v2062 = vpop.f32.mrf.mxu0
        %v2063 = vadd.f32 %v1961, %v2062
        %2064 = vmatprep.mubr.f32.mxu0 0.0
        %2065 = vmatmul.mubr.f32.gmra.mxu0 %v1973
        %v2066 = vpop.f32.mrf.mxu0
        %v2067 = vadd.f32 %v1950, %v2066
        %v2068 = vpop.f32.mrf.mxu0
        %v2069 = vadd.f32 %v1962, %v2068
        %2070 = vdwg.mxu0
        %2075 = vrot.lane.b32.xlu0 %v2049, 118
        %v2076 = vpop.permute.xlu0 %2075
        %2077 = vrot.lane.b32.xlu0 %v2055, 118
        %v2078 = vpop.permute.xlu0 %2077
        %2079 = vrot.lane.b32.xlu0 %v2061, 118
        %v2080 = vpop.permute.xlu0 %2079
        %2081 = vrot.lane.b32.xlu0 %v2067, 118
        %v2082 = vpop.permute.xlu0 %2081
        %2087 = vrot.lane.b32.xlu0 %v2049, 108
        %v2088 = vpop.permute.xlu0 %2087
        %2089 = vrot.lane.b32.xlu0 %v2055, 108
        %v2090 = vpop.permute.xlu0 %2089
        %2091 = vrot.lane.b32.xlu0 %v2061, 108
        %v2092 = vpop.permute.xlu0 %2091
        %2093 = vrot.lane.b32.xlu0 %v2067, 108
        %v2094 = vpop.permute.xlu0 %2093
        %2099 = vrot.lane.b32.xlu0 %v2049, 98
        %v2100 = vpop.permute.xlu0 %2099
        %2101 = vrot.lane.b32.xlu0 %v2055, 98
        %v2102 = vpop.permute.xlu0 %2101
        %2103 = vrot.lane.b32.xlu0 %v2061, 98
        %v2104 = vpop.permute.xlu0 %2103
        %2105 = vrot.lane.b32.xlu0 %v2067, 98
        %v2106 = vpop.permute.xlu0 %2105
        %2111 = vrot.lane.b32.xlu0 %v2049, 88
        %v2112 = vpop.permute.xlu0 %2111
        %2113 = vrot.lane.b32.xlu0 %v2055, 88
        %v2114 = vpop.permute.xlu0 %2113
        %2115 = vrot.lane.b32.xlu0 %v2061, 88
        %v2116 = vpop.permute.xlu0 %2115
        %2117 = vrot.lane.b32.xlu0 %v2067, 88
        %v2118 = vpop.permute.xlu0 %2117
        %2123 = vrot.lane.b32.xlu0 %v2049, 78
        %v2124 = vpop.permute.xlu0 %2123
        %2125 = vrot.lane.b32.xlu0 %v2055, 78
        %v2126 = vpop.permute.xlu0 %2125
        %2127 = vrot.lane.b32.xlu0 %v2061, 78
        %v2128 = vpop.permute.xlu0 %2127
        %2129 = vrot.lane.b32.xlu0 %v2067, 78
        %v2130 = vpop.permute.xlu0 %2129
        %2135 = vrot.lane.b32.xlu0 %v2049, 68
        %v2136 = vpop.permute.xlu0 %2135
        %2137 = vrot.lane.b32.xlu0 %v2055, 68
        %v2138 = vpop.permute.xlu0 %2137
        %2139 = vrot.lane.b32.xlu0 %v2061, 68
        %v2140 = vpop.permute.xlu0 %2139
        %2141 = vrot.lane.b32.xlu0 %v2067, 68
        %v2142 = vpop.permute.xlu0 %2141
        %2147 = vrot.lane.b32.xlu0 %v2049, 58
        %v2148 = vpop.permute.xlu0 %2147
        %2149 = vrot.lane.b32.xlu0 %v2055, 58
        %v2150 = vpop.permute.xlu0 %2149
        %2151 = vrot.lane.b32.xlu0 %v2061, 58
        %v2152 = vpop.permute.xlu0 %2151
        %2153 = vrot.lane.b32.xlu0 %v2067, 58
        %v2154 = vpop.permute.xlu0 %2153
        %2159 = vrot.lane.b32.xlu0 %v2049, 48
        %v2160 = vpop.permute.xlu0 %2159
        %2161 = vrot.lane.b32.xlu0 %v2055, 48
        %v2162 = vpop.permute.xlu0 %2161
        %2163 = vrot.lane.b32.xlu0 %v2061, 48
        %v2164 = vpop.permute.xlu0 %2163
        %2165 = vrot.lane.b32.xlu0 %v2067, 48
        %v2166 = vpop.permute.xlu0 %2165
        %2171 = vrot.lane.b32.xlu0 %v2049, 38
        %v2172 = vpop.permute.xlu0 %2171
        %2173 = vrot.lane.b32.xlu0 %v2055, 38
        %v2174 = vpop.permute.xlu0 %2173
        %2175 = vrot.lane.b32.xlu0 %v2061, 38
        %v2176 = vpop.permute.xlu0 %2175
        %2177 = vrot.lane.b32.xlu0 %v2067, 38
        %v2178 = vpop.permute.xlu0 %2177
        %2183 = vrot.lane.b32.xlu0 %v2049, 28
        %v2184 = vpop.permute.xlu0 %2183
        %2185 = vrot.lane.b32.xlu0 %v2055, 28
        %v2186 = vpop.permute.xlu0 %2185
        %2187 = vrot.lane.b32.xlu0 %v2061, 28
        %v2188 = vpop.permute.xlu0 %2187
        %2189 = vrot.lane.b32.xlu0 %v2067, 28
        %v2190 = vpop.permute.xlu0 %2189
        %2195 = vrot.lane.b32.xlu0 %v2049, 18
        %v2196 = vpop.permute.xlu0 %2195
        %2197 = vrot.lane.b32.xlu0 %v2055, 18
        %v2198 = vpop.permute.xlu0 %2197
        %2199 = vrot.lane.b32.xlu0 %v2061, 18
        %v2200 = vpop.permute.xlu0 %2199
        %2201 = vrot.lane.b32.xlu0 %v2067, 18
        %v2202 = vpop.permute.xlu0 %2201
        %2211 = vrot.lane.b32.xlu0 %v2049, 8
        %v2212 = vpop.permute.xlu0 %2211
        %2213 = vrot.lane.b32.xlu0 %v2051, 8
        %v2214 = vpop.permute.xlu0 %2213
        %2215 = vrot.lane.b32.xlu0 %v2055, 8
        %v2216 = vpop.permute.xlu0 %2215
        %2217 = vrot.lane.b32.xlu0 %v2057, 8
        %v2218 = vpop.permute.xlu0 %2217
        %2219 = vrot.lane.b32.xlu0 %v2061, 8
        %v2220 = vpop.permute.xlu0 %2219
        %2221 = vrot.lane.b32.xlu0 %v2063, 8
        %v2222 = vpop.permute.xlu0 %2221
        %2223 = vrot.lane.b32.xlu0 %v2067, 8
        %v2224 = vpop.permute.xlu0 %2223
        %2225 = vrot.lane.b32.xlu0 %v2069, 8
        %v2226 = vpop.permute.xlu0 %2225
        %vm2227 = vcmask 64512
        %v2228 = vsel %vm2227, %v2212, %v2214
        %v2229 = vsel %vm2227, %v2216, %v2218
        %v2230 = vsel %vm2227, %v2220, %v2222
        %v2231 = vsel %vm2227, %v2224, %v2226
        %2236 = vrot.lane.b32.xlu0 %v2051, 126
        %v2237 = vpop.permute.xlu0 %2236
        %2238 = vrot.lane.b32.xlu0 %v2057, 126
        %v2239 = vpop.permute.xlu0 %2238
        %2240 = vrot.lane.b32.xlu0 %v2063, 126
        %v2241 = vpop.permute.xlu0 %2240
        %2242 = vrot.lane.b32.xlu0 %v2069, 126
        %v2243 = vpop.permute.xlu0 %2242
        %2248 = vrot.lane.b32.xlu0 %v2051, 116
        %v2249 = vpop.permute.xlu0 %2248
        %2250 = vrot.lane.b32.xlu0 %v2057, 116
        %v2251 = vpop.permute.xlu0 %2250
        %2252 = vrot.lane.b32.xlu0 %v2063, 116
        %v2253 = vpop.permute.xlu0 %2252
        %2254 = vrot.lane.b32.xlu0 %v2069, 116
        %v2255 = vpop.permute.xlu0 %2254
        %2260 = vrot.lane.b32.xlu0 %v2051, 106
        %v2261 = vpop.permute.xlu0 %2260
        %2262 = vrot.lane.b32.xlu0 %v2057, 106
        %v2263 = vpop.permute.xlu0 %2262
        %2264 = vrot.lane.b32.xlu0 %v2063, 106
        %v2265 = vpop.permute.xlu0 %2264
        %2266 = vrot.lane.b32.xlu0 %v2069, 106
        %v2267 = vpop.permute.xlu0 %2266
        %v2272 = vcombine.low %v2049, %v2088
        %v2273 = vcombine.high %v2049, %v2088
        %v2275 = vunpack.c.l.s4 1983009808
        %v2276 = vunpack.c.0.s8 %v2275
        %v2277 = vlaneseq
        %v2278 = vshrl.u32 %v2277, 7
        %v2279 = vsub.s32 %v2276, %v2278
        %v2280 = vrot.slane %v2272, %v2279
        %v2282 = vunpack.c.l.s4 1983009808
        %v2283 = vunpack.c.0.s8 %v2282
        %v2284 = vlaneseq
        %v2285 = vshrl.u32 %v2284, 7
        %v2286 = vsub.s32 %v2283, %v2285
        %v2287 = vrot.slane %v2273, %v2286
        %v2288 = vcombine.low %v2076, %v2100
        %v2289 = vcombine.high %v2076, %v2100
        %v2291 = vunpack.c.l.s4 1983009808
        %v2292 = vunpack.c.0.s8 %v2291
        %v2293 = vlaneseq
        %v2294 = vshrl.u32 %v2293, 7
        %v2295 = vsub.s32 %v2292, %v2294
        %v2296 = vrot.slane %v2288, %v2295
        %v2298 = vunpack.c.l.s4 1983009808
        %v2299 = vunpack.c.0.s8 %v2298
        %v2300 = vlaneseq
        %v2301 = vshrl.u32 %v2300, 7
        %v2302 = vsub.s32 %v2299, %v2301
        %v2303 = vrot.slane %v2289, %v2302
        %v2304 = vcombine.low %v2112, %v2136
        %v2305 = vcombine.high %v2112, %v2136
        %v2307 = vunpack.c.l.s4 1983009808
        %v2308 = vunpack.c.0.s8 %v2307
        %v2309 = vlaneseq
        %v2310 = vshrl.u32 %v2309, 7
        %v2311 = vsub.s32 %v2308, %v2310
        %v2312 = vrot.slane %v2304, %v2311
        %v2314 = vunpack.c.l.s4 1983009808
        %v2315 = vunpack.c.0.s8 %v2314
        %v2316 = vlaneseq
        %v2317 = vshrl.u32 %v2316, 7
        %v2318 = vsub.s32 %v2315, %v2317
        %v2319 = vrot.slane %v2305, %v2318
        %v2320 = vcombine.low %v2124, %v2148
        %v2321 = vcombine.high %v2124, %v2148
        %v2323 = vunpack.c.l.s4 1983009808
        %v2324 = vunpack.c.0.s8 %v2323
        %v2325 = vlaneseq
        %v2326 = vshrl.u32 %v2325, 7
        %v2327 = vsub.s32 %v2324, %v2326
        %v2328 = vrot.slane %v2320, %v2327
        %v2330 = vunpack.c.l.s4 1983009808
        %v2331 = vunpack.c.0.s8 %v2330
        %v2332 = vlaneseq
        %v2333 = vshrl.u32 %v2332, 7
        %v2334 = vsub.s32 %v2331, %v2333
        %v2335 = vrot.slane %v2321, %v2334
        %v2336 = vcombine.low %v2280, %v2296
        %v2337 = vcombine.high %v2280, %v2296
        %v2339 = vunpack.c.l.s4 1934713408
        %v2340 = vunpack.c.0.s8 %v2339
        %v2341 = vlaneseq
        %v2342 = vshrl.u32 %v2341, 7
        %v2343 = vsub.s32 %v2340, %v2342
        %v2344 = vrot.slane %v2336, %v2343
        %v2346 = vunpack.c.l.s4 1934713408
        %v2347 = vunpack.c.0.s8 %v2346
        %v2348 = vlaneseq
        %v2349 = vshrl.u32 %v2348, 7
        %v2350 = vsub.s32 %v2347, %v2349
        %v2351 = vrot.slane %v2337, %v2350
        %v2352 = vcombine.low %v2287, %v2303
        %v2353 = vcombine.high %v2287, %v2303
        %v2355 = vunpack.c.l.s4 1934713408
        %v2356 = vunpack.c.0.s8 %v2355
        %v2357 = vlaneseq
        %v2358 = vshrl.u32 %v2357, 7
        %v2359 = vsub.s32 %v2356, %v2358
        %v2360 = vrot.slane %v2352, %v2359
        %v2362 = vunpack.c.l.s4 1934713408
        %v2363 = vunpack.c.0.s8 %v2362
        %v2364 = vlaneseq
        %v2365 = vshrl.u32 %v2364, 7
        %v2366 = vsub.s32 %v2363, %v2365
        %v2367 = vrot.slane %v2353, %v2366
        %v2368 = vcombine.low %v2312, %v2328
        %v2369 = vcombine.high %v2312, %v2328
        %v2371 = vunpack.c.l.s4 1934713408
        %v2372 = vunpack.c.0.s8 %v2371
        %v2373 = vlaneseq
        %v2374 = vshrl.u32 %v2373, 7
        %v2375 = vsub.s32 %v2372, %v2374
        %v2376 = vrot.slane %v2368, %v2375
        %v2378 = vunpack.c.l.s4 1934713408
        %v2379 = vunpack.c.0.s8 %v2378
        %v2380 = vlaneseq
        %v2381 = vshrl.u32 %v2380, 7
        %v2382 = vsub.s32 %v2379, %v2381
        %v2383 = vrot.slane %v2369, %v2382
        %v2384 = vcombine.low %v2319, %v2335
        %v2385 = vcombine.high %v2319, %v2335
        %v2387 = vunpack.c.l.s4 1934713408
        %v2388 = vunpack.c.0.s8 %v2387
        %v2389 = vlaneseq
        %v2390 = vshrl.u32 %v2389, 7
        %v2391 = vsub.s32 %v2388, %v2390
        %v2392 = vrot.slane %v2384, %v2391
        %v2394 = vunpack.c.l.s4 1934713408
        %v2395 = vunpack.c.0.s8 %v2394
        %v2396 = vlaneseq
        %v2397 = vshrl.u32 %v2396, 7
        %v2398 = vsub.s32 %v2395, %v2397
        %v2399 = vrot.slane %v2385, %v2398
        %v2400 = vcombine.low %v2344, %v2376
        %v2401 = vcombine.high %v2344, %v2376
        %v2402 = vcombine.low %v2351, %v2383
        %v2403 = vcombine.high %v2351, %v2383
        %v2404 = vcombine.low %v2360, %v2392
        %v2405 = vcombine.high %v2360, %v2392
        %v2406 = vcombine.low %v2367, %v2399
        %v2407 = vcombine.high %v2367, %v2399
        %v2408 = vcombine.low %v2160, %v2184
        %v2409 = vcombine.high %v2160, %v2184
        %v2411 = vunpack.c.l.s4 1983009808
        %v2412 = vunpack.c.0.s8 %v2411
        %v2413 = vlaneseq
        %v2414 = vshrl.u32 %v2413, 7
        %v2415 = vsub.s32 %v2412, %v2414
        %v2416 = vrot.slane %v2408, %v2415
        %v2418 = vunpack.c.l.s4 1983009808
        %v2419 = vunpack.c.0.s8 %v2418
        %v2420 = vlaneseq
        %v2421 = vshrl.u32 %v2420, 7
        %v2422 = vsub.s32 %v2419, %v2421
        %v2423 = vrot.slane %v2409, %v2422
        %v2424 = vcombine.low %v2172, %v2196
        %v2425 = vcombine.high %v2172, %v2196
        %v2427 = vunpack.c.l.s4 1983009808
        %v2428 = vunpack.c.0.s8 %v2427
        %v2429 = vlaneseq
        %v2430 = vshrl.u32 %v2429, 7
        %v2431 = vsub.s32 %v2428, %v2430
        %v2432 = vrot.slane %v2424, %v2431
        %v2434 = vunpack.c.l.s4 1983009808
        %v2435 = vunpack.c.0.s8 %v2434
        %v2436 = vlaneseq
        %v2437 = vshrl.u32 %v2436, 7
        %v2438 = vsub.s32 %v2435, %v2437
        %v2439 = vrot.slane %v2425, %v2438
        %v2440 = vcombine.low %v2228, %v2249
        %v2441 = vcombine.high %v2228, %v2249
        %v2443 = vunpack.c.l.s4 1983009808
        %v2444 = vunpack.c.0.s8 %v2443
        %v2445 = vlaneseq
        %v2446 = vshrl.u32 %v2445, 7
        %v2447 = vsub.s32 %v2444, %v2446
        %v2448 = vrot.slane %v2440, %v2447
        %v2450 = vunpack.c.l.s4 1983009808
        %v2451 = vunpack.c.0.s8 %v2450
        %v2452 = vlaneseq
        %v2453 = vshrl.u32 %v2452, 7
        %v2454 = vsub.s32 %v2451, %v2453
        %v2455 = vrot.slane %v2441, %v2454
        %v2456 = vcombine.low %v2237, %v2261
        %v2457 = vcombine.high %v2237, %v2261
        %v2459 = vunpack.c.l.s4 1983009808
        %v2460 = vunpack.c.0.s8 %v2459
        %v2461 = vlaneseq
        %v2462 = vshrl.u32 %v2461, 7
        %v2463 = vsub.s32 %v2460, %v2462
        %v2464 = vrot.slane %v2456, %v2463
        %v2466 = vunpack.c.l.s4 1983009808
        %v2467 = vunpack.c.0.s8 %v2466
        %v2468 = vlaneseq
        %v2469 = vshrl.u32 %v2468, 7
        %v2470 = vsub.s32 %v2467, %v2469
        %v2471 = vrot.slane %v2457, %v2470
        %v2472 = vcombine.low %v2416, %v2432
        %v2473 = vcombine.high %v2416, %v2432
        %v2475 = vunpack.c.l.s4 1934713408
        %v2476 = vunpack.c.0.s8 %v2475
        %v2477 = vlaneseq
        %v2478 = vshrl.u32 %v2477, 7
        %v2479 = vsub.s32 %v2476, %v2478
        %v2480 = vrot.slane %v2472, %v2479
        %v2482 = vunpack.c.l.s4 1934713408
        %v2483 = vunpack.c.0.s8 %v2482
        %v2484 = vlaneseq
        %v2485 = vshrl.u32 %v2484, 7
        %v2486 = vsub.s32 %v2483, %v2485
        %v2487 = vrot.slane %v2473, %v2486
        %v2488 = vcombine.low %v2423, %v2439
        %v2489 = vcombine.high %v2423, %v2439
        %v2491 = vunpack.c.l.s4 1934713408
        %v2492 = vunpack.c.0.s8 %v2491
        %v2493 = vlaneseq
        %v2494 = vshrl.u32 %v2493, 7
        %v2495 = vsub.s32 %v2492, %v2494
        %v2496 = vrot.slane %v2488, %v2495
        %v2498 = vunpack.c.l.s4 1934713408
        %v2499 = vunpack.c.0.s8 %v2498
        %v2500 = vlaneseq
        %v2501 = vshrl.u32 %v2500, 7
        %v2502 = vsub.s32 %v2499, %v2501
        %v2503 = vrot.slane %v2489, %v2502
        %v2504 = vcombine.low %v2448, %v2464
        %v2505 = vcombine.high %v2448, %v2464
        %v2507 = vunpack.c.l.s4 1934713408
        %v2508 = vunpack.c.0.s8 %v2507
        %v2509 = vlaneseq
        %v2510 = vshrl.u32 %v2509, 7
        %v2511 = vsub.s32 %v2508, %v2510
        %v2512 = vrot.slane %v2504, %v2511
        %v2514 = vunpack.c.l.s4 1934713408
        %v2515 = vunpack.c.0.s8 %v2514
        %v2516 = vlaneseq
        %v2517 = vshrl.u32 %v2516, 7
        %v2518 = vsub.s32 %v2515, %v2517
        %v2519 = vrot.slane %v2505, %v2518
        %v2520 = vcombine.low %v2455, %v2471
        %v2521 = vcombine.high %v2455, %v2471
        %v2523 = vunpack.c.l.s4 1934713408
        %v2524 = vunpack.c.0.s8 %v2523
        %v2525 = vlaneseq
        %v2526 = vshrl.u32 %v2525, 7
        %v2527 = vsub.s32 %v2524, %v2526
        %v2528 = vrot.slane %v2520, %v2527
        %v2530 = vunpack.c.l.s4 1934713408
        %v2531 = vunpack.c.0.s8 %v2530
        %v2532 = vlaneseq
        %v2533 = vshrl.u32 %v2532, 7
        %v2534 = vsub.s32 %v2531, %v2533
        %v2535 = vrot.slane %v2521, %v2534
        %v2536 = vcombine.low %v2480, %v2512
        %v2537 = vcombine.high %v2480, %v2512
        %v2538 = vcombine.low %v2487, %v2519
        %v2539 = vcombine.high %v2487, %v2519
        %v2540 = vcombine.low %v2496, %v2528
        %v2541 = vcombine.high %v2496, %v2528
        %v2542 = vcombine.low %v2503, %v2535
        %v2543 = vcombine.high %v2503, %v2535
        %v2544 = vcombine.low %v2055, %v2090
        %v2545 = vcombine.high %v2055, %v2090
        %v2547 = vunpack.c.l.s4 1983009808
        %v2548 = vunpack.c.0.s8 %v2547
        %v2549 = vlaneseq
        %v2550 = vshrl.u32 %v2549, 7
        %v2551 = vsub.s32 %v2548, %v2550
        %v2552 = vrot.slane %v2544, %v2551
        %v2554 = vunpack.c.l.s4 1983009808
        %v2555 = vunpack.c.0.s8 %v2554
        %v2556 = vlaneseq
        %v2557 = vshrl.u32 %v2556, 7
        %v2558 = vsub.s32 %v2555, %v2557
        %v2559 = vrot.slane %v2545, %v2558
        %v2560 = vcombine.low %v2078, %v2102
        %v2561 = vcombine.high %v2078, %v2102
        %v2563 = vunpack.c.l.s4 1983009808
        %v2564 = vunpack.c.0.s8 %v2563
        %v2565 = vlaneseq
        %v2566 = vshrl.u32 %v2565, 7
        %v2567 = vsub.s32 %v2564, %v2566
        %v2568 = vrot.slane %v2560, %v2567
        %v2570 = vunpack.c.l.s4 1983009808
        %v2571 = vunpack.c.0.s8 %v2570
        %v2572 = vlaneseq
        %v2573 = vshrl.u32 %v2572, 7
        %v2574 = vsub.s32 %v2571, %v2573
        %v2575 = vrot.slane %v2561, %v2574
        %v2576 = vcombine.low %v2114, %v2138
        %v2577 = vcombine.high %v2114, %v2138
        %v2579 = vunpack.c.l.s4 1983009808
        %v2580 = vunpack.c.0.s8 %v2579
        %v2581 = vlaneseq
        %v2582 = vshrl.u32 %v2581, 7
        %v2583 = vsub.s32 %v2580, %v2582
        %v2584 = vrot.slane %v2576, %v2583
        %v2586 = vunpack.c.l.s4 1983009808
        %v2587 = vunpack.c.0.s8 %v2586
        %v2588 = vlaneseq
        %v2589 = vshrl.u32 %v2588, 7
        %v2590 = vsub.s32 %v2587, %v2589
        %v2591 = vrot.slane %v2577, %v2590
        %v2592 = vcombine.low %v2126, %v2150
        %v2593 = vcombine.high %v2126, %v2150
        %v2595 = vunpack.c.l.s4 1983009808
        %v2596 = vunpack.c.0.s8 %v2595
        %v2597 = vlaneseq
        %v2598 = vshrl.u32 %v2597, 7
        %v2599 = vsub.s32 %v2596, %v2598
        %v2600 = vrot.slane %v2592, %v2599
        %v2602 = vunpack.c.l.s4 1983009808
        %v2603 = vunpack.c.0.s8 %v2602
        %v2604 = vlaneseq
        %v2605 = vshrl.u32 %v2604, 7
        %v2606 = vsub.s32 %v2603, %v2605
        %v2607 = vrot.slane %v2593, %v2606
        %v2608 = vcombine.low %v2552, %v2568
        %v2609 = vcombine.high %v2552, %v2568
        %v2611 = vunpack.c.l.s4 1934713408
        %v2612 = vunpack.c.0.s8 %v2611
        %v2613 = vlaneseq
        %v2614 = vshrl.u32 %v2613, 7
        %v2615 = vsub.s32 %v2612, %v2614
        %v2616 = vrot.slane %v2608, %v2615
        %v2618 = vunpack.c.l.s4 1934713408
        %v2619 = vunpack.c.0.s8 %v2618
        %v2620 = vlaneseq
        %v2621 = vshrl.u32 %v2620, 7
        %v2622 = vsub.s32 %v2619, %v2621
        %v2623 = vrot.slane %v2609, %v2622
        %v2624 = vcombine.low %v2559, %v2575
        %v2625 = vcombine.high %v2559, %v2575
        %v2627 = vunpack.c.l.s4 1934713408
        %v2628 = vunpack.c.0.s8 %v2627
        %v2629 = vlaneseq
        %v2630 = vshrl.u32 %v2629, 7
        %v2631 = vsub.s32 %v2628, %v2630
        %v2632 = vrot.slane %v2624, %v2631
        %v2634 = vunpack.c.l.s4 1934713408
        %v2635 = vunpack.c.0.s8 %v2634
        %v2636 = vlaneseq
        %v2637 = vshrl.u32 %v2636, 7
        %v2638 = vsub.s32 %v2635, %v2637
        %v2639 = vrot.slane %v2625, %v2638
        %v2640 = vcombine.low %v2584, %v2600
        %v2641 = vcombine.high %v2584, %v2600
        %v2643 = vunpack.c.l.s4 1934713408
        %v2644 = vunpack.c.0.s8 %v2643
        %v2645 = vlaneseq
        %v2646 = vshrl.u32 %v2645, 7
        %v2647 = vsub.s32 %v2644, %v2646
        %v2648 = vrot.slane %v2640, %v2647
        %v2650 = vunpack.c.l.s4 1934713408
        %v2651 = vunpack.c.0.s8 %v2650
        %v2652 = vlaneseq
        %v2653 = vshrl.u32 %v2652, 7
        %v2654 = vsub.s32 %v2651, %v2653
        %v2655 = vrot.slane %v2641, %v2654
        %v2656 = vcombine.low %v2591, %v2607
        %v2657 = vcombine.high %v2591, %v2607
        %v2659 = vunpack.c.l.s4 1934713408
        %v2660 = vunpack.c.0.s8 %v2659
        %v2661 = vlaneseq
        %v2662 = vshrl.u32 %v2661, 7
        %v2663 = vsub.s32 %v2660, %v2662
        %v2664 = vrot.slane %v2656, %v2663
        %v2666 = vunpack.c.l.s4 1934713408
        %v2667 = vunpack.c.0.s8 %v2666
        %v2668 = vlaneseq
        %v2669 = vshrl.u32 %v2668, 7
        %v2670 = vsub.s32 %v2667, %v2669
        %v2671 = vrot.slane %v2657, %v2670
        %v2672 = vcombine.low %v2616, %v2648
        %v2673 = vcombine.high %v2616, %v2648
        %v2674 = vcombine.low %v2623, %v2655
        %v2675 = vcombine.high %v2623, %v2655
        %v2676 = vcombine.low %v2632, %v2664
        %v2677 = vcombine.high %v2632, %v2664
        %v2678 = vcombine.low %v2639, %v2671
        %v2679 = vcombine.high %v2639, %v2671
        %v2680 = vcombine.low %v2162, %v2186
        %v2681 = vcombine.high %v2162, %v2186
        %v2683 = vunpack.c.l.s4 1983009808
        %v2684 = vunpack.c.0.s8 %v2683
        %v2685 = vlaneseq
        %v2686 = vshrl.u32 %v2685, 7
        %v2687 = vsub.s32 %v2684, %v2686
        %v2688 = vrot.slane %v2680, %v2687
        %v2690 = vunpack.c.l.s4 1983009808
        %v2691 = vunpack.c.0.s8 %v2690
        %v2692 = vlaneseq
        %v2693 = vshrl.u32 %v2692, 7
        %v2694 = vsub.s32 %v2691, %v2693
        %v2695 = vrot.slane %v2681, %v2694
        %v2696 = vcombine.low %v2174, %v2198
        %v2697 = vcombine.high %v2174, %v2198
        %v2699 = vunpack.c.l.s4 1983009808
        %v2700 = vunpack.c.0.s8 %v2699
        %v2701 = vlaneseq
        %v2702 = vshrl.u32 %v2701, 7
        %v2703 = vsub.s32 %v2700, %v2702
        %v2704 = vrot.slane %v2696, %v2703
        %v2706 = vunpack.c.l.s4 1983009808
        %v2707 = vunpack.c.0.s8 %v2706
        %v2708 = vlaneseq
        %v2709 = vshrl.u32 %v2708, 7
        %v2710 = vsub.s32 %v2707, %v2709
        %v2711 = vrot.slane %v2697, %v2710
        %v2712 = vcombine.low %v2229, %v2251
        %v2713 = vcombine.high %v2229, %v2251
        %v2715 = vunpack.c.l.s4 1983009808
        %v2716 = vunpack.c.0.s8 %v2715
        %v2717 = vlaneseq
        %v2718 = vshrl.u32 %v2717, 7
        %v2719 = vsub.s32 %v2716, %v2718
        %v2720 = vrot.slane %v2712, %v2719
        %v2722 = vunpack.c.l.s4 1983009808
        %v2723 = vunpack.c.0.s8 %v2722
        %v2724 = vlaneseq
        %v2725 = vshrl.u32 %v2724, 7
        %v2726 = vsub.s32 %v2723, %v2725
        %v2727 = vrot.slane %v2713, %v2726
        %v2728 = vcombine.low %v2239, %v2263
        %v2729 = vcombine.high %v2239, %v2263
        %v2731 = vunpack.c.l.s4 1983009808
        %v2732 = vunpack.c.0.s8 %v2731
        %v2733 = vlaneseq
        %v2734 = vshrl.u32 %v2733, 7
        %v2735 = vsub.s32 %v2732, %v2734
        %v2736 = vrot.slane %v2728, %v2735
        %v2738 = vunpack.c.l.s4 1983009808
        %v2739 = vunpack.c.0.s8 %v2738
        %v2740 = vlaneseq
        %v2741 = vshrl.u32 %v2740, 7
        %v2742 = vsub.s32 %v2739, %v2741
        %v2743 = vrot.slane %v2729, %v2742
        %v2744 = vcombine.low %v2688, %v2704
        %v2745 = vcombine.high %v2688, %v2704
        %v2747 = vunpack.c.l.s4 1934713408
        %v2748 = vunpack.c.0.s8 %v2747
        %v2749 = vlaneseq
        %v2750 = vshrl.u32 %v2749, 7
        %v2751 = vsub.s32 %v2748, %v2750
        %v2752 = vrot.slane %v2744, %v2751
        %v2754 = vunpack.c.l.s4 1934713408
        %v2755 = vunpack.c.0.s8 %v2754
        %v2756 = vlaneseq
        %v2757 = vshrl.u32 %v2756, 7
        %v2758 = vsub.s32 %v2755, %v2757
        %v2759 = vrot.slane %v2745, %v2758
        %v2760 = vcombine.low %v2695, %v2711
        %v2761 = vcombine.high %v2695, %v2711
        %v2763 = vunpack.c.l.s4 1934713408
        %v2764 = vunpack.c.0.s8 %v2763
        %v2765 = vlaneseq
        %v2766 = vshrl.u32 %v2765, 7
        %v2767 = vsub.s32 %v2764, %v2766
        %v2768 = vrot.slane %v2760, %v2767
        %v2770 = vunpack.c.l.s4 1934713408
        %v2771 = vunpack.c.0.s8 %v2770
        %v2772 = vlaneseq
        %v2773 = vshrl.u32 %v2772, 7
        %v2774 = vsub.s32 %v2771, %v2773
        %v2775 = vrot.slane %v2761, %v2774
        %v2776 = vcombine.low %v2720, %v2736
        %v2777 = vcombine.high %v2720, %v2736
        %v2779 = vunpack.c.l.s4 1934713408
        %v2780 = vunpack.c.0.s8 %v2779
        %v2781 = vlaneseq
        %v2782 = vshrl.u32 %v2781, 7
        %v2783 = vsub.s32 %v2780, %v2782
        %v2784 = vrot.slane %v2776, %v2783
        %v2786 = vunpack.c.l.s4 1934713408
        %v2787 = vunpack.c.0.s8 %v2786
        %v2788 = vlaneseq
        %v2789 = vshrl.u32 %v2788, 7
        %v2790 = vsub.s32 %v2787, %v2789
        %v2791 = vrot.slane %v2777, %v2790
        %v2792 = vcombine.low %v2727, %v2743
        %v2793 = vcombine.high %v2727, %v2743
        %v2795 = vunpack.c.l.s4 1934713408
        %v2796 = vunpack.c.0.s8 %v2795
        %v2797 = vlaneseq
        %v2798 = vshrl.u32 %v2797, 7
        %v2799 = vsub.s32 %v2796, %v2798
        %v2800 = vrot.slane %v2792, %v2799
        %v2802 = vunpack.c.l.s4 1934713408
        %v2803 = vunpack.c.0.s8 %v2802
        %v2804 = vlaneseq
        %v2805 = vshrl.u32 %v2804, 7
        %v2806 = vsub.s32 %v2803, %v2805
        %v2807 = vrot.slane %v2793, %v2806
        %v2808 = vcombine.low %v2752, %v2784
        %v2809 = vcombine.high %v2752, %v2784
        %v2810 = vcombine.low %v2759, %v2791
        %v2811 = vcombine.high %v2759, %v2791
        %v2812 = vcombine.low %v2768, %v2800
        %v2813 = vcombine.high %v2768, %v2800
        %v2814 = vcombine.low %v2775, %v2807
        %v2815 = vcombine.high %v2775, %v2807
        %v2816 = vcombine.low %v2061, %v2092
        %v2817 = vcombine.high %v2061, %v2092
        %v2819 = vunpack.c.l.s4 1983009808
        %v2820 = vunpack.c.0.s8 %v2819
        %v2821 = vlaneseq
        %v2822 = vshrl.u32 %v2821, 7
        %v2823 = vsub.s32 %v2820, %v2822
        %v2824 = vrot.slane %v2816, %v2823
        %v2826 = vunpack.c.l.s4 1983009808
        %v2827 = vunpack.c.0.s8 %v2826
        %v2828 = vlaneseq
        %v2829 = vshrl.u32 %v2828, 7
        %v2830 = vsub.s32 %v2827, %v2829
        %v2831 = vrot.slane %v2817, %v2830
        %v2832 = vcombine.low %v2080, %v2104
        %v2833 = vcombine.high %v2080, %v2104
        %v2835 = vunpack.c.l.s4 1983009808
        %v2836 = vunpack.c.0.s8 %v2835
        %v2837 = vlaneseq
        %v2838 = vshrl.u32 %v2837, 7
        %v2839 = vsub.s32 %v2836, %v2838
        %v2840 = vrot.slane %v2832, %v2839
        %v2842 = vunpack.c.l.s4 1983009808
        %v2843 = vunpack.c.0.s8 %v2842
        %v2844 = vlaneseq
        %v2845 = vshrl.u32 %v2844, 7
        %v2846 = vsub.s32 %v2843, %v2845
        %v2847 = vrot.slane %v2833, %v2846
        %v2848 = vcombine.low %v2116, %v2140
        %v2849 = vcombine.high %v2116, %v2140
        %v2851 = vunpack.c.l.s4 1983009808
        %v2852 = vunpack.c.0.s8 %v2851
        %v2853 = vlaneseq
        %v2854 = vshrl.u32 %v2853, 7
        %v2855 = vsub.s32 %v2852, %v2854
        %v2856 = vrot.slane %v2848, %v2855
        %v2858 = vunpack.c.l.s4 1983009808
        %v2859 = vunpack.c.0.s8 %v2858
        %v2860 = vlaneseq
        %v2861 = vshrl.u32 %v2860, 7
        %v2862 = vsub.s32 %v2859, %v2861
        %v2863 = vrot.slane %v2849, %v2862
        %v2864 = vcombine.low %v2128, %v2152
        %v2865 = vcombine.high %v2128, %v2152
        %v2867 = vunpack.c.l.s4 1983009808
        %v2868 = vunpack.c.0.s8 %v2867
        %v2869 = vlaneseq
        %v2870 = vshrl.u32 %v2869, 7
        %v2871 = vsub.s32 %v2868, %v2870
        %v2872 = vrot.slane %v2864, %v2871
        %v2874 = vunpack.c.l.s4 1983009808
        %v2875 = vunpack.c.0.s8 %v2874
        %v2876 = vlaneseq
        %v2877 = vshrl.u32 %v2876, 7
        %v2878 = vsub.s32 %v2875, %v2877
        %v2879 = vrot.slane %v2865, %v2878
        %v2880 = vcombine.low %v2824, %v2840
        %v2881 = vcombine.high %v2824, %v2840
        %v2883 = vunpack.c.l.s4 1934713408
        %v2884 = vunpack.c.0.s8 %v2883
        %v2885 = vlaneseq
        %v2886 = vshrl.u32 %v2885, 7
        %v2887 = vsub.s32 %v2884, %v2886
        %v2888 = vrot.slane %v2880, %v2887
        %v2890 = vunpack.c.l.s4 1934713408
        %v2891 = vunpack.c.0.s8 %v2890
        %v2892 = vlaneseq
        %v2893 = vshrl.u32 %v2892, 7
        %v2894 = vsub.s32 %v2891, %v2893
        %v2895 = vrot.slane %v2881, %v2894
        %v2896 = vcombine.low %v2831, %v2847
        %v2897 = vcombine.high %v2831, %v2847
        %v2899 = vunpack.c.l.s4 1934713408
        %v2900 = vunpack.c.0.s8 %v2899
        %v2901 = vlaneseq
        %v2902 = vshrl.u32 %v2901, 7
        %v2903 = vsub.s32 %v2900, %v2902
        %v2904 = vrot.slane %v2896, %v2903
        %v2906 = vunpack.c.l.s4 1934713408
        %v2907 = vunpack.c.0.s8 %v2906
        %v2908 = vlaneseq
        %v2909 = vshrl.u32 %v2908, 7
        %v2910 = vsub.s32 %v2907, %v2909
        %v2911 = vrot.slane %v2897, %v2910
        %v2912 = vcombine.low %v2856, %v2872
        %v2913 = vcombine.high %v2856, %v2872
        %v2915 = vunpack.c.l.s4 1934713408
        %v2916 = vunpack.c.0.s8 %v2915
        %v2917 = vlaneseq
        %v2918 = vshrl.u32 %v2917, 7
        %v2919 = vsub.s32 %v2916, %v2918
        %v2920 = vrot.slane %v2912, %v2919
        %v2922 = vunpack.c.l.s4 1934713408
        %v2923 = vunpack.c.0.s8 %v2922
        %v2924 = vlaneseq
        %v2925 = vshrl.u32 %v2924, 7
        %v2926 = vsub.s32 %v2923, %v2925
        %v2927 = vrot.slane %v2913, %v2926
        %v2928 = vcombine.low %v2863, %v2879
        %v2929 = vcombine.high %v2863, %v2879
        %v2931 = vunpack.c.l.s4 1934713408
        %v2932 = vunpack.c.0.s8 %v2931
        %v2933 = vlaneseq
        %v2934 = vshrl.u32 %v2933, 7
        %v2935 = vsub.s32 %v2932, %v2934
        %v2936 = vrot.slane %v2928, %v2935
        %v2938 = vunpack.c.l.s4 1934713408
        %v2939 = vunpack.c.0.s8 %v2938
        %v2940 = vlaneseq
        %v2941 = vshrl.u32 %v2940, 7
        %v2942 = vsub.s32 %v2939, %v2941
        %v2943 = vrot.slane %v2929, %v2942
        %v2944 = vcombine.low %v2888, %v2920
        %v2945 = vcombine.high %v2888, %v2920
        %v2946 = vcombine.low %v2895, %v2927
        %v2947 = vcombine.high %v2895, %v2927
        %v2948 = vcombine.low %v2904, %v2936
        %v2949 = vcombine.high %v2904, %v2936
        %v2950 = vcombine.low %v2911, %v2943
        %v2951 = vcombine.high %v2911, %v2943
        %v2952 = vcombine.low %v2164, %v2188
        %v2953 = vcombine.high %v2164, %v2188
        %v2955 = vunpack.c.l.s4 1983009808
        %v2956 = vunpack.c.0.s8 %v2955
        %v2957 = vlaneseq
        %v2958 = vshrl.u32 %v2957, 7
        %v2959 = vsub.s32 %v2956, %v2958
        %v2960 = vrot.slane %v2952, %v2959
        %v2962 = vunpack.c.l.s4 1983009808
        %v2963 = vunpack.c.0.s8 %v2962
        %v2964 = vlaneseq
        %v2965 = vshrl.u32 %v2964, 7
        %v2966 = vsub.s32 %v2963, %v2965
        %v2967 = vrot.slane %v2953, %v2966
        %v2968 = vcombine.low %v2176, %v2200
        %v2969 = vcombine.high %v2176, %v2200
        %v2971 = vunpack.c.l.s4 1983009808
        %v2972 = vunpack.c.0.s8 %v2971
        %v2973 = vlaneseq
        %v2974 = vshrl.u32 %v2973, 7
        %v2975 = vsub.s32 %v2972, %v2974
        %v2976 = vrot.slane %v2968, %v2975
        %v2978 = vunpack.c.l.s4 1983009808
        %v2979 = vunpack.c.0.s8 %v2978
        %v2980 = vlaneseq
        %v2981 = vshrl.u32 %v2980, 7
        %v2982 = vsub.s32 %v2979, %v2981
        %v2983 = vrot.slane %v2969, %v2982
        %v2984 = vcombine.low %v2230, %v2253
        %v2985 = vcombine.high %v2230, %v2253
        %v2987 = vunpack.c.l.s4 1983009808
        %v2988 = vunpack.c.0.s8 %v2987
        %v2989 = vlaneseq
        %v2990 = vshrl.u32 %v2989, 7
        %v2991 = vsub.s32 %v2988, %v2990
        %v2992 = vrot.slane %v2984, %v2991
        %v2994 = vunpack.c.l.s4 1983009808
        %v2995 = vunpack.c.0.s8 %v2994
        %v2996 = vlaneseq
        %v2997 = vshrl.u32 %v2996, 7
        %v2998 = vsub.s32 %v2995, %v2997
        %v2999 = vrot.slane %v2985, %v2998
        %v3000 = vcombine.low %v2241, %v2265
        %v3001 = vcombine.high %v2241, %v2265
        %v3003 = vunpack.c.l.s4 1983009808
        %v3004 = vunpack.c.0.s8 %v3003
        %v3005 = vlaneseq
        %v3006 = vshrl.u32 %v3005, 7
        %v3007 = vsub.s32 %v3004, %v3006
        %v3008 = vrot.slane %v3000, %v3007
        %v3010 = vunpack.c.l.s4 1983009808
        %v3011 = vunpack.c.0.s8 %v3010
        %v3012 = vlaneseq
        %v3013 = vshrl.u32 %v3012, 7
        %v3014 = vsub.s32 %v3011, %v3013
        %v3015 = vrot.slane %v3001, %v3014
        %v3016 = vcombine.low %v2960, %v2976
        %v3017 = vcombine.high %v2960, %v2976
        %v3019 = vunpack.c.l.s4 1934713408
        %v3020 = vunpack.c.0.s8 %v3019
        %v3021 = vlaneseq
        %v3022 = vshrl.u32 %v3021, 7
        %v3023 = vsub.s32 %v3020, %v3022
        %v3024 = vrot.slane %v3016, %v3023
        %v3026 = vunpack.c.l.s4 1934713408
        %v3027 = vunpack.c.0.s8 %v3026
        %v3028 = vlaneseq
        %v3029 = vshrl.u32 %v3028, 7
        %v3030 = vsub.s32 %v3027, %v3029
        %v3031 = vrot.slane %v3017, %v3030
        %v3032 = vcombine.low %v2967, %v2983
        %v3033 = vcombine.high %v2967, %v2983
        %v3035 = vunpack.c.l.s4 1934713408
        %v3036 = vunpack.c.0.s8 %v3035
        %v3037 = vlaneseq
        %v3038 = vshrl.u32 %v3037, 7
        %v3039 = vsub.s32 %v3036, %v3038
        %v3040 = vrot.slane %v3032, %v3039
        %v3042 = vunpack.c.l.s4 1934713408
        %v3043 = vunpack.c.0.s8 %v3042
        %v3044 = vlaneseq
        %v3045 = vshrl.u32 %v3044, 7
        %v3046 = vsub.s32 %v3043, %v3045
        %v3047 = vrot.slane %v3033, %v3046
        %v3048 = vcombine.low %v2992, %v3008
        %v3049 = vcombine.high %v2992, %v3008
        %v3051 = vunpack.c.l.s4 1934713408
        %v3052 = vunpack.c.0.s8 %v3051
        %v3053 = vlaneseq
        %v3054 = vshrl.u32 %v3053, 7
        %v3055 = vsub.s32 %v3052, %v3054
        %v3056 = vrot.slane %v3048, %v3055
        %v3058 = vunpack.c.l.s4 1934713408
        %v3059 = vunpack.c.0.s8 %v3058
        %v3060 = vlaneseq
        %v3061 = vshrl.u32 %v3060, 7
        %v3062 = vsub.s32 %v3059, %v3061
        %v3063 = vrot.slane %v3049, %v3062
        %v3064 = vcombine.low %v2999, %v3015
        %v3065 = vcombine.high %v2999, %v3015
        %v3067 = vunpack.c.l.s4 1934713408
        %v3068 = vunpack.c.0.s8 %v3067
        %v3069 = vlaneseq
        %v3070 = vshrl.u32 %v3069, 7
        %v3071 = vsub.s32 %v3068, %v3070
        %v3072 = vrot.slane %v3064, %v3071
        %v3074 = vunpack.c.l.s4 1934713408
        %v3075 = vunpack.c.0.s8 %v3074
        %v3076 = vlaneseq
        %v3077 = vshrl.u32 %v3076, 7
        %v3078 = vsub.s32 %v3075, %v3077
        %v3079 = vrot.slane %v3065, %v3078
        %v3080 = vcombine.low %v3024, %v3056
        %v3081 = vcombine.high %v3024, %v3056
        %v3082 = vcombine.low %v3031, %v3063
        %v3083 = vcombine.high %v3031, %v3063
        %v3084 = vcombine.low %v3040, %v3072
        %v3085 = vcombine.high %v3040, %v3072
        %v3086 = vcombine.low %v3047, %v3079
        %v3087 = vcombine.high %v3047, %v3079
        %v3088 = vcombine.low %v2067, %v2094
        %v3089 = vcombine.high %v2067, %v2094
        %v3091 = vunpack.c.l.s4 1983009808
        %v3092 = vunpack.c.0.s8 %v3091
        %v3093 = vlaneseq
        %v3094 = vshrl.u32 %v3093, 7
        %v3095 = vsub.s32 %v3092, %v3094
        %v3096 = vrot.slane %v3088, %v3095
        %v3098 = vunpack.c.l.s4 1983009808
        %v3099 = vunpack.c.0.s8 %v3098
        %v3100 = vlaneseq
        %v3101 = vshrl.u32 %v3100, 7
        %v3102 = vsub.s32 %v3099, %v3101
        %v3103 = vrot.slane %v3089, %v3102
        %v3104 = vcombine.low %v2082, %v2106
        %v3105 = vcombine.high %v2082, %v2106
        %v3107 = vunpack.c.l.s4 1983009808
        %v3108 = vunpack.c.0.s8 %v3107
        %v3109 = vlaneseq
        %v3110 = vshrl.u32 %v3109, 7
        %v3111 = vsub.s32 %v3108, %v3110
        %v3112 = vrot.slane %v3104, %v3111
        %v3114 = vunpack.c.l.s4 1983009808
        %v3115 = vunpack.c.0.s8 %v3114
        %v3116 = vlaneseq
        %v3117 = vshrl.u32 %v3116, 7
        %v3118 = vsub.s32 %v3115, %v3117
        %v3119 = vrot.slane %v3105, %v3118
        %v3120 = vcombine.low %v2118, %v2142
        %v3121 = vcombine.high %v2118, %v2142
        %v3123 = vunpack.c.l.s4 1983009808
        %v3124 = vunpack.c.0.s8 %v3123
        %v3125 = vlaneseq
        %v3126 = vshrl.u32 %v3125, 7
        %v3127 = vsub.s32 %v3124, %v3126
        %v3128 = vrot.slane %v3120, %v3127
        %v3130 = vunpack.c.l.s4 1983009808
        %v3131 = vunpack.c.0.s8 %v3130
        %v3132 = vlaneseq
        %v3133 = vshrl.u32 %v3132, 7
        %v3134 = vsub.s32 %v3131, %v3133
        %v3135 = vrot.slane %v3121, %v3134
        %v3136 = vcombine.low %v2130, %v2154
        %v3137 = vcombine.high %v2130, %v2154
        %v3139 = vunpack.c.l.s4 1983009808
        %v3140 = vunpack.c.0.s8 %v3139
        %v3141 = vlaneseq
        %v3142 = vshrl.u32 %v3141, 7
        %v3143 = vsub.s32 %v3140, %v3142
        %v3144 = vrot.slane %v3136, %v3143
        %v3146 = vunpack.c.l.s4 1983009808
        %v3147 = vunpack.c.0.s8 %v3146
        %v3148 = vlaneseq
        %v3149 = vshrl.u32 %v3148, 7
        %v3150 = vsub.s32 %v3147, %v3149
        %v3151 = vrot.slane %v3137, %v3150
        %v3152 = vcombine.low %v3096, %v3112
        %v3153 = vcombine.high %v3096, %v3112
        %v3155 = vunpack.c.l.s4 1934713408
        %v3156 = vunpack.c.0.s8 %v3155
        %v3157 = vlaneseq
        %v3158 = vshrl.u32 %v3157, 7
        %v3159 = vsub.s32 %v3156, %v3158
        %v3160 = vrot.slane %v3152, %v3159
        %v3162 = vunpack.c.l.s4 1934713408
        %v3163 = vunpack.c.0.s8 %v3162
        %v3164 = vlaneseq
        %v3165 = vshrl.u32 %v3164, 7
        %v3166 = vsub.s32 %v3163, %v3165
        %v3167 = vrot.slane %v3153, %v3166
        %v3168 = vcombine.low %v3103, %v3119
        %v3169 = vcombine.high %v3103, %v3119
        %v3171 = vunpack.c.l.s4 1934713408
        %v3172 = vunpack.c.0.s8 %v3171
        %v3173 = vlaneseq
        %v3174 = vshrl.u32 %v3173, 7
        %v3175 = vsub.s32 %v3172, %v3174
        %v3176 = vrot.slane %v3168, %v3175
        %v3178 = vunpack.c.l.s4 1934713408
        %v3179 = vunpack.c.0.s8 %v3178
        %v3180 = vlaneseq
        %v3181 = vshrl.u32 %v3180, 7
        %v3182 = vsub.s32 %v3179, %v3181
        %v3183 = vrot.slane %v3169, %v3182
        %v3184 = vcombine.low %v3128, %v3144
        %v3185 = vcombine.high %v3128, %v3144
        %v3187 = vunpack.c.l.s4 1934713408
        %v3188 = vunpack.c.0.s8 %v3187
        %v3189 = vlaneseq
        %v3190 = vshrl.u32 %v3189, 7
        %v3191 = vsub.s32 %v3188, %v3190
        %v3192 = vrot.slane %v3184, %v3191
        %v3194 = vunpack.c.l.s4 1934713408
        %v3195 = vunpack.c.0.s8 %v3194
        %v3196 = vlaneseq
        %v3197 = vshrl.u32 %v3196, 7
        %v3198 = vsub.s32 %v3195, %v3197
        %v3199 = vrot.slane %v3185, %v3198
        %v3200 = vcombine.low %v3135, %v3151
        %v3201 = vcombine.high %v3135, %v3151
        %v3203 = vunpack.c.l.s4 1934713408
        %v3204 = vunpack.c.0.s8 %v3203
        %v3205 = vlaneseq
        %v3206 = vshrl.u32 %v3205, 7
        %v3207 = vsub.s32 %v3204, %v3206
        %v3208 = vrot.slane %v3200, %v3207
        %v3210 = vunpack.c.l.s4 1934713408
        %v3211 = vunpack.c.0.s8 %v3210
        %v3212 = vlaneseq
        %v3213 = vshrl.u32 %v3212, 7
        %v3214 = vsub.s32 %v3211, %v3213
        %v3215 = vrot.slane %v3201, %v3214
        %v3216 = vcombine.low %v3160, %v3192
        %v3217 = vcombine.high %v3160, %v3192
        %v3218 = vcombine.low %v3167, %v3199
        %v3219 = vcombine.high %v3167, %v3199
        %v3220 = vcombine.low %v3176, %v3208
        %v3221 = vcombine.high %v3176, %v3208
        %v3222 = vcombine.low %v3183, %v3215
        %v3223 = vcombine.high %v3183, %v3215
        %v3224 = vcombine.low %v2166, %v2190
        %v3225 = vcombine.high %v2166, %v2190
        %v3227 = vunpack.c.l.s4 1983009808
        %v3228 = vunpack.c.0.s8 %v3227
        %v3229 = vlaneseq
        %v3230 = vshrl.u32 %v3229, 7
        %v3231 = vsub.s32 %v3228, %v3230
        %v3232 = vrot.slane %v3224, %v3231
        %v3234 = vunpack.c.l.s4 1983009808
        %v3235 = vunpack.c.0.s8 %v3234
        %v3236 = vlaneseq
        %v3237 = vshrl.u32 %v3236, 7
        %v3238 = vsub.s32 %v3235, %v3237
        %v3239 = vrot.slane %v3225, %v3238
        %v3240 = vcombine.low %v2178, %v2202
        %v3241 = vcombine.high %v2178, %v2202
        %v3243 = vunpack.c.l.s4 1983009808
        %v3244 = vunpack.c.0.s8 %v3243
        %v3245 = vlaneseq
        %v3246 = vshrl.u32 %v3245, 7
        %v3247 = vsub.s32 %v3244, %v3246
        %v3248 = vrot.slane %v3240, %v3247
        %v3250 = vunpack.c.l.s4 1983009808
        %v3251 = vunpack.c.0.s8 %v3250
        %v3252 = vlaneseq
        %v3253 = vshrl.u32 %v3252, 7
        %v3254 = vsub.s32 %v3251, %v3253
        %v3255 = vrot.slane %v3241, %v3254
        %v3256 = vcombine.low %v2231, %v2255
        %v3257 = vcombine.high %v2231, %v2255
        %v3259 = vunpack.c.l.s4 1983009808
        %v3260 = vunpack.c.0.s8 %v3259
        %v3261 = vlaneseq
        %v3262 = vshrl.u32 %v3261, 7
        %v3263 = vsub.s32 %v3260, %v3262
        %v3264 = vrot.slane %v3256, %v3263
        %v3266 = vunpack.c.l.s4 1983009808
        %v3267 = vunpack.c.0.s8 %v3266
        %v3268 = vlaneseq
        %v3269 = vshrl.u32 %v3268, 7
        %v3270 = vsub.s32 %v3267, %v3269
        %v3271 = vrot.slane %v3257, %v3270
        %v3272 = vcombine.low %v2243, %v2267
        %v3273 = vcombine.high %v2243, %v2267
        %v3275 = vunpack.c.l.s4 1983009808
        %v3276 = vunpack.c.0.s8 %v3275
        %v3277 = vlaneseq
        %v3278 = vshrl.u32 %v3277, 7
        %v3279 = vsub.s32 %v3276, %v3278
        %v3280 = vrot.slane %v3272, %v3279
        %v3282 = vunpack.c.l.s4 1983009808
        %v3283 = vunpack.c.0.s8 %v3282
        %v3284 = vlaneseq
        %v3285 = vshrl.u32 %v3284, 7
        %v3286 = vsub.s32 %v3283, %v3285
        %v3287 = vrot.slane %v3273, %v3286
        %v3288 = vcombine.low %v3232, %v3248
        %v3289 = vcombine.high %v3232, %v3248
        %v3291 = vunpack.c.l.s4 1934713408
        %v3292 = vunpack.c.0.s8 %v3291
        %v3293 = vlaneseq
        %v3294 = vshrl.u32 %v3293, 7
        %v3295 = vsub.s32 %v3292, %v3294
        %v3296 = vrot.slane %v3288, %v3295
        %v3298 = vunpack.c.l.s4 1934713408
        %v3299 = vunpack.c.0.s8 %v3298
        %v3300 = vlaneseq
        %v3301 = vshrl.u32 %v3300, 7
        %v3302 = vsub.s32 %v3299, %v3301
        %v3303 = vrot.slane %v3289, %v3302
        %v3304 = vcombine.low %v3239, %v3255
        %v3305 = vcombine.high %v3239, %v3255
        %v3307 = vunpack.c.l.s4 1934713408
        %v3308 = vunpack.c.0.s8 %v3307
        %v3309 = vlaneseq
        %v3310 = vshrl.u32 %v3309, 7
        %v3311 = vsub.s32 %v3308, %v3310
        %v3312 = vrot.slane %v3304, %v3311
        %v3314 = vunpack.c.l.s4 1934713408
        %v3315 = vunpack.c.0.s8 %v3314
        %v3316 = vlaneseq
        %v3317 = vshrl.u32 %v3316, 7
        %v3318 = vsub.s32 %v3315, %v3317
        %v3319 = vrot.slane %v3305, %v3318
        %v3320 = vcombine.low %v3264, %v3280
        %v3321 = vcombine.high %v3264, %v3280
        %v3323 = vunpack.c.l.s4 1934713408
        %v3324 = vunpack.c.0.s8 %v3323
        %v3325 = vlaneseq
        %v3326 = vshrl.u32 %v3325, 7
        %v3327 = vsub.s32 %v3324, %v3326
        %v3328 = vrot.slane %v3320, %v3327
        %v3330 = vunpack.c.l.s4 1934713408
        %v3331 = vunpack.c.0.s8 %v3330
        %v3332 = vlaneseq
        %v3333 = vshrl.u32 %v3332, 7
        %v3334 = vsub.s32 %v3331, %v3333
        %v3335 = vrot.slane %v3321, %v3334
        %v3336 = vcombine.low %v3271, %v3287
        %v3337 = vcombine.high %v3271, %v3287
        %v3339 = vunpack.c.l.s4 1934713408
        %v3340 = vunpack.c.0.s8 %v3339
        %v3341 = vlaneseq
        %v3342 = vshrl.u32 %v3341, 7
        %v3343 = vsub.s32 %v3340, %v3342
        %v3344 = vrot.slane %v3336, %v3343
        %v3346 = vunpack.c.l.s4 1934713408
        %v3347 = vunpack.c.0.s8 %v3346
        %v3348 = vlaneseq
        %v3349 = vshrl.u32 %v3348, 7
        %v3350 = vsub.s32 %v3347, %v3349
        %v3351 = vrot.slane %v3337, %v3350
        %v3352 = vcombine.low %v3296, %v3328
        %v3353 = vcombine.high %v3296, %v3328
        %v3354 = vcombine.low %v3303, %v3335
        %v3355 = vcombine.high %v3303, %v3335
        %v3356 = vcombine.low %v3312, %v3344
        %v3357 = vcombine.high %v3312, %v3344
        %v3358 = vcombine.low %v3319, %v3351
        %v3359 = vcombine.high %v3319, %v3351
        %v3360 = vxor.u32 %v2944, 2147483648
        %v3361 = vxor.u32 %v3080, 2147483648
        %v3362 = vxor.u32 %v2945, 2147483648
        %v3363 = vxor.u32 %v3081, 2147483648
        %v3364 = vxor.u32 %v2946, 2147483648
        %v3365 = vxor.u32 %v3082, 2147483648
        %v3366 = vxor.u32 %v2947, 2147483648
        %v3367 = vxor.u32 %v3083, 2147483648
        %v3368 = vxor.u32 %v2948, 2147483648
        %v3369 = vxor.u32 %v3084, 2147483648
        %v3370 = vxor.u32 %v2949, 2147483648
        %v3371 = vxor.u32 %v3085, 2147483648
        %v3372 = vxor.u32 %v2950, 2147483648
        %v3373 = vxor.u32 %v3086, 2147483648
        %v3374 = vxor.u32 %v2951, 2147483648
        %v3375 = vxor.u32 %v3087, 2147483648
        %v3376 = vxor.u32 %v3216, 2147483648
        %v3377 = vxor.u32 %v3352, 2147483648
        %v3378 = vxor.u32 %v3217, 2147483648
        %v3379 = vxor.u32 %v3353, 2147483648
        %v3380 = vxor.u32 %v3218, 2147483648
        %v3381 = vxor.u32 %v3354, 2147483648
        %v3382 = vxor.u32 %v3219, 2147483648
        %v3383 = vxor.u32 %v3355, 2147483648
        %v3384 = vxor.u32 %v3220, 2147483648
        %v3385 = vxor.u32 %v3356, 2147483648
        %v3386 = vxor.u32 %v3221, 2147483648
        %v3387 = vxor.u32 %v3357, 2147483648
        %v3388 = vxor.u32 %v3222, 2147483648
        %v3389 = vxor.u32 %v3358, 2147483648
        %v3390 = vxor.u32 %v3223, 2147483648
        %v3391 = vxor.u32 %v3359, 2147483648
        %v3392 = vmul.f32 %v3360, 1.442695
        %v3393 = vpow.pop %v3392
        %v3394 = vmul.f32 %v3361, 1.442695
        %v3395 = vpow.pop %v3394
        %v3396 = vmul.f32 %v3362, 1.442695
        %v3397 = vpow.pop %v3396
        %v3398 = vmul.f32 %v3363, 1.442695
        %v3399 = vpow.pop %v3398
        %v3400 = vmul.f32 %v3364, 1.442695
        %v3401 = vpow.pop %v3400
        %v3402 = vmul.f32 %v3365, 1.442695
        %v3403 = vpow.pop %v3402
        %v3404 = vmul.f32 %v3366, 1.442695
        %v3405 = vpow.pop %v3404
        %v3406 = vmul.f32 %v3367, 1.442695
        %v3407 = vpow.pop %v3406
        %v3408 = vmul.f32 %v3368, 1.442695
        %v3409 = vpow.pop %v3408
        %v3410 = vmul.f32 %v3369, 1.442695
        %v3411 = vpow.pop %v3410
        %v3412 = vmul.f32 %v3370, 1.442695
        %v3413 = vpow.pop %v3412
        %v3414 = vmul.f32 %v3371, 1.442695
        %v3415 = vpow.pop %v3414
        %v3416 = vmul.f32 %v3372, 1.442695
        %v3417 = vpow.pop %v3416
        %v3418 = vmul.f32 %v3373, 1.442695
        %v3419 = vpow.pop %v3418
        %v3420 = vmul.f32 %v3374, 1.442695
        %v3421 = vpow.pop %v3420
        %v3422 = vmul.f32 %v3375, 1.442695
        %v3423 = vpow.pop %v3422
        %v3424 = vmul.f32 %v3376, 1.442695
        %v3425 = vpow.pop %v3424
        %v3426 = vmul.f32 %v3377, 1.442695
        %v3427 = vpow.pop %v3426
        %v3428 = vmul.f32 %v3378, 1.442695
        %v3429 = vpow.pop %v3428
        %v3430 = vmul.f32 %v3379, 1.442695
        %v3431 = vpow.pop %v3430
        %v3432 = vmul.f32 %v3380, 1.442695
        %v3433 = vpow.pop %v3432
        %v3434 = vmul.f32 %v3381, 1.442695
        %v3435 = vpow.pop %v3434
        %v3436 = vmul.f32 %v3382, 1.442695
        %v3437 = vpow.pop %v3436
        %v3438 = vmul.f32 %v3383, 1.442695
        %v3439 = vpow.pop %v3438
        %v3440 = vmul.f32 %v3384, 1.442695
        %v3441 = vpow.pop %v3440
        %v3442 = vmul.f32 %v3385, 1.442695
        %v3443 = vpow.pop %v3442
        %v3444 = vmul.f32 %v3386, 1.442695
        %v3445 = vpow.pop %v3444
        %v3446 = vmul.f32 %v3387, 1.442695
        %v3447 = vpow.pop %v3446
        %v3448 = vmul.f32 %v3388, 1.442695
        %v3449 = vpow.pop %v3448
        %v3450 = vmul.f32 %v3389, 1.442695
        %v3451 = vpow.pop %v3450
        %v3452 = vmul.f32 %v3390, 1.442695
        %v3453 = vpow.pop %v3452
        %v3454 = vmul.f32 %v3391, 1.442695
        %v3455 = vpow.pop %v3454
        %v3456 = vadd.f32 %v3393, 1.0
        %v3457 = vadd.f32 %v3395, 1.0
        %v3458 = vadd.f32 %v3397, 1.0
        %v3459 = vadd.f32 %v3399, 1.0
        %v3460 = vadd.f32 %v3401, 1.0
        %v3461 = vadd.f32 %v3403, 1.0
        %v3462 = vadd.f32 %v3405, 1.0
        %v3463 = vadd.f32 %v3407, 1.0
        %v3464 = vadd.f32 %v3409, 1.0
        %v3465 = vadd.f32 %v3411, 1.0
        %v3466 = vadd.f32 %v3413, 1.0
        %v3467 = vadd.f32 %v3415, 1.0
        %v3468 = vadd.f32 %v3417, 1.0
        %v3469 = vadd.f32 %v3419, 1.0
        %v3470 = vadd.f32 %v3421, 1.0
        %v3471 = vadd.f32 %v3423, 1.0
        %v3472 = vadd.f32 %v3425, 1.0
        %v3473 = vadd.f32 %v3427, 1.0
        %v3474 = vadd.f32 %v3429, 1.0
        %v3475 = vadd.f32 %v3431, 1.0
        %v3476 = vadd.f32 %v3433, 1.0
        %v3477 = vadd.f32 %v3435, 1.0
        %v3478 = vadd.f32 %v3437, 1.0
        %v3479 = vadd.f32 %v3439, 1.0
        %v3480 = vadd.f32 %v3441, 1.0
        %v3481 = vadd.f32 %v3443, 1.0
        %v3482 = vadd.f32 %v3445, 1.0
        %v3483 = vadd.f32 %v3447, 1.0
        %v3484 = vadd.f32 %v3449, 1.0
        %v3485 = vadd.f32 %v3451, 1.0
        %v3486 = vadd.f32 %v3453, 1.0
        %v3487 = vadd.f32 %v3455, 1.0
        %v3488 = vrcp.pop %v3456
        %v3489 = vmul.f32 1.0, %v3488
        %v3490 = vrcp.pop %v3457
        %v3491 = vmul.f32 1.0, %v3490
        %v3492 = vrcp.pop %v3458
        %v3493 = vmul.f32 1.0, %v3492
        %v3494 = vrcp.pop %v3459
        %v3495 = vmul.f32 1.0, %v3494
        %v3496 = vrcp.pop %v3460
        %v3497 = vmul.f32 1.0, %v3496
        %v3498 = vrcp.pop %v3461
        %v3499 = vmul.f32 1.0, %v3498
        %v3500 = vrcp.pop %v3462
        %v3501 = vmul.f32 1.0, %v3500
        %v3502 = vrcp.pop %v3463
        %v3503 = vmul.f32 1.0, %v3502
        %v3504 = vrcp.pop %v3464
        %v3505 = vmul.f32 1.0, %v3504
        %v3506 = vrcp.pop %v3465
        %v3507 = vmul.f32 1.0, %v3506
        %v3508 = vrcp.pop %v3466
        %v3509 = vmul.f32 1.0, %v3508
        %v3510 = vrcp.pop %v3467
        %v3511 = vmul.f32 1.0, %v3510
        %v3512 = vrcp.pop %v3468
        %v3513 = vmul.f32 1.0, %v3512
        %v3514 = vrcp.pop %v3469
        %v3515 = vmul.f32 1.0, %v3514
        %v3516 = vrcp.pop %v3470
        %v3517 = vmul.f32 1.0, %v3516
        %v3518 = vrcp.pop %v3471
        %v3519 = vmul.f32 1.0, %v3518
        %v3520 = vrcp.pop %v3472
        %v3521 = vmul.f32 1.0, %v3520
        %v3522 = vrcp.pop %v3473
        %v3523 = vmul.f32 1.0, %v3522
        %v3524 = vrcp.pop %v3474
        %v3525 = vmul.f32 1.0, %v3524
        %v3526 = vrcp.pop %v3475
        %v3527 = vmul.f32 1.0, %v3526
        %v3528 = vrcp.pop %v3476
        %v3529 = vmul.f32 1.0, %v3528
        %v3530 = vrcp.pop %v3477
        %v3531 = vmul.f32 1.0, %v3530
        %v3532 = vrcp.pop %v3478
        %v3533 = vmul.f32 1.0, %v3532
        %v3534 = vrcp.pop %v3479
        %v3535 = vmul.f32 1.0, %v3534
        %v3536 = vrcp.pop %v3480
        %v3537 = vmul.f32 1.0, %v3536
        %v3538 = vrcp.pop %v3481
        %v3539 = vmul.f32 1.0, %v3538
        %v3540 = vrcp.pop %v3482
        %v3541 = vmul.f32 1.0, %v3540
        %v3542 = vrcp.pop %v3483
        %v3543 = vmul.f32 1.0, %v3542
        %v3544 = vrcp.pop %v3484
        %v3545 = vmul.f32 1.0, %v3544
        %v3546 = vrcp.pop %v3485
        %v3547 = vmul.f32 1.0, %v3546
        %v3548 = vrcp.pop %v3486
        %v3549 = vmul.f32 1.0, %v3548
        %v3550 = vrcp.pop %v3487
        %v3551 = vmul.f32 1.0, %v3550
        %v3552 = vmul.f32 %v2400, %v3489
        %v3553 = vmul.f32 %v2536, %v3491
        %v3554 = vmul.f32 %v2401, %v3493
        %v3555 = vmul.f32 %v2537, %v3495
        %v3556 = vmul.f32 %v2402, %v3497
        %v3557 = vmul.f32 %v2538, %v3499
        %v3558 = vmul.f32 %v2403, %v3501
        %v3559 = vmul.f32 %v2539, %v3503
        %v3560 = vmul.f32 %v2404, %v3505
        %v3561 = vmul.f32 %v2540, %v3507
        %v3562 = vmul.f32 %v2405, %v3509
        %v3563 = vmul.f32 %v2541, %v3511
        %v3564 = vmul.f32 %v2406, %v3513
        %v3565 = vmul.f32 %v2542, %v3515
        %v3566 = vmul.f32 %v2407, %v3517
        %v3567 = vmul.f32 %v2543, %v3519
        %v3568 = vmul.f32 %v2672, %v3521
        %v3569 = vmul.f32 %v2808, %v3523
        %v3570 = vmul.f32 %v2673, %v3525
        %v3571 = vmul.f32 %v2809, %v3527
        %v3572 = vmul.f32 %v2674, %v3529
        %v3573 = vmul.f32 %v2810, %v3531
        %v3574 = vmul.f32 %v2675, %v3533
        %v3575 = vmul.f32 %v2811, %v3535
        %v3576 = vmul.f32 %v2676, %v3537
        %v3577 = vmul.f32 %v2812, %v3539
        %v3578 = vmul.f32 %v2677, %v3541
        %v3579 = vmul.f32 %v2813, %v3543
        %v3580 = vmul.f32 %v2678, %v3545
        %v3581 = vmul.f32 %v2814, %v3547
        %v3582 = vmul.f32 %v2679, %v3549
        %v3583 = vmul.f32 %v2815, %v3551
        %v3584 = vld [vmem:[%s4] sm:$0xff]
        %v3585 = vld [vmem:[%s4 + $0x8] sm:$0xff]
        %v3586 = vcombine.low %v3552, %v3556
        %v3587 = vcombine.high %v3552, %v3556
        %v3589 = vunpack.c.l.s4 1983009808
        %v3590 = vunpack.c.0.s8 %v3589
        %v3591 = vlaneseq
        %v3592 = vshrl.u32 %v3591, 7
        %v3593 = vsub.s32 %v3590, %v3592
        %v3594 = vrot.slane %v3586, %v3593
        %v3596 = vunpack.c.l.s4 1983009808
        %v3597 = vunpack.c.0.s8 %v3596
        %v3598 = vlaneseq
        %v3599 = vshrl.u32 %v3598, 7
        %v3600 = vsub.s32 %v3597, %v3599
        %v3601 = vrot.slane %v3587, %v3600
        %v3602 = vcombine.low %v3554, %v3558
        %v3603 = vcombine.high %v3554, %v3558
        %v3605 = vunpack.c.l.s4 1983009808
        %v3606 = vunpack.c.0.s8 %v3605
        %v3607 = vlaneseq
        %v3608 = vshrl.u32 %v3607, 7
        %v3609 = vsub.s32 %v3606, %v3608
        %v3610 = vrot.slane %v3602, %v3609
        %v3612 = vunpack.c.l.s4 1983009808
        %v3613 = vunpack.c.0.s8 %v3612
        %v3614 = vlaneseq
        %v3615 = vshrl.u32 %v3614, 7
        %v3616 = vsub.s32 %v3613, %v3615
        %v3617 = vrot.slane %v3603, %v3616
        %v3618 = vcombine.low %v3560, %v3564
        %v3619 = vcombine.high %v3560, %v3564
        %v3621 = vunpack.c.l.s4 1983009808
        %v3622 = vunpack.c.0.s8 %v3621
        %v3623 = vlaneseq
        %v3624 = vshrl.u32 %v3623, 7
        %v3625 = vsub.s32 %v3622, %v3624
        %v3626 = vrot.slane %v3618, %v3625
        %v3628 = vunpack.c.l.s4 1983009808
        %v3629 = vunpack.c.0.s8 %v3628
        %v3630 = vlaneseq
        %v3631 = vshrl.u32 %v3630, 7
        %v3632 = vsub.s32 %v3629, %v3631
        %v3633 = vrot.slane %v3619, %v3632
        %v3634 = vcombine.low %v3562, %v3566
        %v3635 = vcombine.high %v3562, %v3566
        %v3637 = vunpack.c.l.s4 1983009808
        %v3638 = vunpack.c.0.s8 %v3637
        %v3639 = vlaneseq
        %v3640 = vshrl.u32 %v3639, 7
        %v3641 = vsub.s32 %v3638, %v3640
        %v3642 = vrot.slane %v3634, %v3641
        %v3644 = vunpack.c.l.s4 1983009808
        %v3645 = vunpack.c.0.s8 %v3644
        %v3646 = vlaneseq
        %v3647 = vshrl.u32 %v3646, 7
        %v3648 = vsub.s32 %v3645, %v3647
        %v3649 = vrot.slane %v3635, %v3648
        %v3650 = vcombine.low %v3594, %v3610
        %v3651 = vcombine.high %v3594, %v3610
        %v3653 = vunpack.c.l.s4 1934713408
        %v3654 = vunpack.c.0.s8 %v3653
        %v3655 = vlaneseq
        %v3656 = vshrl.u32 %v3655, 7
        %v3657 = vsub.s32 %v3654, %v3656
        %v3658 = vrot.slane %v3650, %v3657
        %v3660 = vunpack.c.l.s4 1934713408
        %v3661 = vunpack.c.0.s8 %v3660
        %v3662 = vlaneseq
        %v3663 = vshrl.u32 %v3662, 7
        %v3664 = vsub.s32 %v3661, %v3663
        %v3665 = vrot.slane %v3651, %v3664
        %v3666 = vcombine.low %v3601, %v3617
        %v3667 = vcombine.high %v3601, %v3617
        %v3669 = vunpack.c.l.s4 1934713408
        %v3670 = vunpack.c.0.s8 %v3669
        %v3671 = vlaneseq
        %v3672 = vshrl.u32 %v3671, 7
        %v3673 = vsub.s32 %v3670, %v3672
        %v3674 = vrot.slane %v3666, %v3673
        %v3676 = vunpack.c.l.s4 1934713408
        %v3677 = vunpack.c.0.s8 %v3676
        %v3678 = vlaneseq
        %v3679 = vshrl.u32 %v3678, 7
        %v3680 = vsub.s32 %v3677, %v3679
        %v3681 = vrot.slane %v3667, %v3680
        %v3682 = vcombine.low %v3626, %v3642
        %v3683 = vcombine.high %v3626, %v3642
        %v3685 = vunpack.c.l.s4 1934713408
        %v3686 = vunpack.c.0.s8 %v3685
        %v3687 = vlaneseq
        %v3688 = vshrl.u32 %v3687, 7
        %v3689 = vsub.s32 %v3686, %v3688
        %v3690 = vrot.slane %v3682, %v3689
        %v3692 = vunpack.c.l.s4 1934713408
        %v3693 = vunpack.c.0.s8 %v3692
        %v3694 = vlaneseq
        %v3695 = vshrl.u32 %v3694, 7
        %v3696 = vsub.s32 %v3693, %v3695
        %v3697 = vrot.slane %v3683, %v3696
        %v3698 = vcombine.low %v3633, %v3649
        %v3699 = vcombine.high %v3633, %v3649
        %v3701 = vunpack.c.l.s4 1934713408
        %v3702 = vunpack.c.0.s8 %v3701
        %v3703 = vlaneseq
        %v3704 = vshrl.u32 %v3703, 7
        %v3705 = vsub.s32 %v3702, %v3704
        %v3706 = vrot.slane %v3698, %v3705
        %v3708 = vunpack.c.l.s4 1934713408
        %v3709 = vunpack.c.0.s8 %v3708
        %v3710 = vlaneseq
        %v3711 = vshrl.u32 %v3710, 7
        %v3712 = vsub.s32 %v3709, %v3711
        %v3713 = vrot.slane %v3699, %v3712
        %v3714 = vcombine.low %v3658, %v3690
        %v3715 = vcombine.high %v3658, %v3690
        %v3716 = vcombine.low %v3665, %v3697
        %v3717 = vcombine.high %v3665, %v3697
        %v3718 = vcombine.low %v3674, %v3706
        %v3719 = vcombine.high %v3674, %v3706
        %v3720 = vcombine.low %v3681, %v3713
        %v3721 = vcombine.high %v3681, %v3713
        %v3722 = vcombine.low %v3568, %v3572
        %v3723 = vcombine.high %v3568, %v3572
        %v3725 = vunpack.c.l.s4 1983009808
        %v3726 = vunpack.c.0.s8 %v3725
        %v3727 = vlaneseq
        %v3728 = vshrl.u32 %v3727, 7
        %v3729 = vsub.s32 %v3726, %v3728
        %v3730 = vrot.slane %v3722, %v3729
        %v3732 = vunpack.c.l.s4 1983009808
        %v3733 = vunpack.c.0.s8 %v3732
        %v3734 = vlaneseq
        %v3735 = vshrl.u32 %v3734, 7
        %v3736 = vsub.s32 %v3733, %v3735
        %v3737 = vrot.slane %v3723, %v3736
        %v3738 = vcombine.low %v3570, %v3574
        %v3739 = vcombine.high %v3570, %v3574
        %v3741 = vunpack.c.l.s4 1983009808
        %v3742 = vunpack.c.0.s8 %v3741
        %v3743 = vlaneseq
        %v3744 = vshrl.u32 %v3743, 7
        %v3745 = vsub.s32 %v3742, %v3744
        %v3746 = vrot.slane %v3738, %v3745
        %v3748 = vunpack.c.l.s4 1983009808
        %v3749 = vunpack.c.0.s8 %v3748
        %v3750 = vlaneseq
        %v3751 = vshrl.u32 %v3750, 7
        %v3752 = vsub.s32 %v3749, %v3751
        %v3753 = vrot.slane %v3739, %v3752
        %v3754 = vcombine.low %v3576, %v3580
        %v3755 = vcombine.high %v3576, %v3580
        %v3757 = vunpack.c.l.s4 1983009808
        %v3758 = vunpack.c.0.s8 %v3757
        %v3759 = vlaneseq
        %v3760 = vshrl.u32 %v3759, 7
        %v3761 = vsub.s32 %v3758, %v3760
        %v3762 = vrot.slane %v3754, %v3761
        %v3764 = vunpack.c.l.s4 1983009808
        %v3765 = vunpack.c.0.s8 %v3764
        %v3766 = vlaneseq
        %v3767 = vshrl.u32 %v3766, 7
        %v3768 = vsub.s32 %v3765, %v3767
        %v3769 = vrot.slane %v3755, %v3768
        %v3770 = vcombine.low %v3578, %v3582
        %v3771 = vcombine.high %v3578, %v3582
        %v3773 = vunpack.c.l.s4 1983009808
        %v3774 = vunpack.c.0.s8 %v3773
        %v3775 = vlaneseq
        %v3776 = vshrl.u32 %v3775, 7
        %v3777 = vsub.s32 %v3774, %v3776
        %v3778 = vrot.slane %v3770, %v3777
        %v3780 = vunpack.c.l.s4 1983009808
        %v3781 = vunpack.c.0.s8 %v3780
        %v3782 = vlaneseq
        %v3783 = vshrl.u32 %v3782, 7
        %v3784 = vsub.s32 %v3781, %v3783
        %v3785 = vrot.slane %v3771, %v3784
        %v3786 = vcombine.low %v3730, %v3746
        %v3787 = vcombine.high %v3730, %v3746
        %v3789 = vunpack.c.l.s4 1934713408
        %v3790 = vunpack.c.0.s8 %v3789
        %v3791 = vlaneseq
        %v3792 = vshrl.u32 %v3791, 7
        %v3793 = vsub.s32 %v3790, %v3792
        %v3794 = vrot.slane %v3786, %v3793
        %v3796 = vunpack.c.l.s4 1934713408
        %v3797 = vunpack.c.0.s8 %v3796
        %v3798 = vlaneseq
        %v3799 = vshrl.u32 %v3798, 7
        %v3800 = vsub.s32 %v3797, %v3799
        %v3801 = vrot.slane %v3787, %v3800
        %v3802 = vcombine.low %v3737, %v3753
        %v3803 = vcombine.high %v3737, %v3753
        %v3805 = vunpack.c.l.s4 1934713408
        %v3806 = vunpack.c.0.s8 %v3805
        %v3807 = vlaneseq
        %v3808 = vshrl.u32 %v3807, 7
        %v3809 = vsub.s32 %v3806, %v3808
        %v3810 = vrot.slane %v3802, %v3809
        %v3812 = vunpack.c.l.s4 1934713408
        %v3813 = vunpack.c.0.s8 %v3812
        %v3814 = vlaneseq
        %v3815 = vshrl.u32 %v3814, 7
        %v3816 = vsub.s32 %v3813, %v3815
        %v3817 = vrot.slane %v3803, %v3816
        %v3818 = vcombine.low %v3762, %v3778
        %v3819 = vcombine.high %v3762, %v3778
        %v3821 = vunpack.c.l.s4 1934713408
        %v3822 = vunpack.c.0.s8 %v3821
        %v3823 = vlaneseq
        %v3824 = vshrl.u32 %v3823, 7
        %v3825 = vsub.s32 %v3822, %v3824
        %v3826 = vrot.slane %v3818, %v3825
        %v3828 = vunpack.c.l.s4 1934713408
        %v3829 = vunpack.c.0.s8 %v3828
        %v3830 = vlaneseq
        %v3831 = vshrl.u32 %v3830, 7
        %v3832 = vsub.s32 %v3829, %v3831
        %v3833 = vrot.slane %v3819, %v3832
        %v3834 = vcombine.low %v3769, %v3785
        %v3835 = vcombine.high %v3769, %v3785
        %v3837 = vunpack.c.l.s4 1934713408
        %v3838 = vunpack.c.0.s8 %v3837
        %v3839 = vlaneseq
        %v3840 = vshrl.u32 %v3839, 7
        %v3841 = vsub.s32 %v3838, %v3840
        %v3842 = vrot.slane %v3834, %v3841
        %v3844 = vunpack.c.l.s4 1934713408
        %v3845 = vunpack.c.0.s8 %v3844
        %v3846 = vlaneseq
        %v3847 = vshrl.u32 %v3846, 7
        %v3848 = vsub.s32 %v3845, %v3847
        %v3849 = vrot.slane %v3835, %v3848
        %v3850 = vcombine.low %v3794, %v3826
        %v3851 = vcombine.high %v3794, %v3826
        %v3852 = vcombine.low %v3801, %v3833
        %v3853 = vcombine.high %v3801, %v3833
        %v3854 = vcombine.low %v3810, %v3842
        %v3855 = vcombine.high %v3810, %v3842
        %v3856 = vcombine.low %v3817, %v3849
        %v3857 = vcombine.high %v3817, %v3849
        %v3858 = vcombine.low %v3553, %v3557
        %v3859 = vcombine.high %v3553, %v3557
        %v3861 = vunpack.c.l.s4 1983009808
        %v3862 = vunpack.c.0.s8 %v3861
        %v3863 = vlaneseq
        %v3864 = vshrl.u32 %v3863, 7
        %v3865 = vsub.s32 %v3862, %v3864
        %v3866 = vrot.slane %v3858, %v3865
        %v3868 = vunpack.c.l.s4 1983009808
        %v3869 = vunpack.c.0.s8 %v3868
        %v3870 = vlaneseq
        %v3871 = vshrl.u32 %v3870, 7
        %v3872 = vsub.s32 %v3869, %v3871
        %v3873 = vrot.slane %v3859, %v3872
        %v3874 = vcombine.low %v3555, %v3559
        %v3875 = vcombine.high %v3555, %v3559
        %v3877 = vunpack.c.l.s4 1983009808
        %v3878 = vunpack.c.0.s8 %v3877
        %v3879 = vlaneseq
        %v3880 = vshrl.u32 %v3879, 7
        %v3881 = vsub.s32 %v3878, %v3880
        %v3882 = vrot.slane %v3874, %v3881
        %v3884 = vunpack.c.l.s4 1983009808
        %v3885 = vunpack.c.0.s8 %v3884
        %v3886 = vlaneseq
        %v3887 = vshrl.u32 %v3886, 7
        %v3888 = vsub.s32 %v3885, %v3887
        %v3889 = vrot.slane %v3875, %v3888
        %v3890 = vcombine.low %v3561, %v3565
        %v3891 = vcombine.high %v3561, %v3565
        %v3893 = vunpack.c.l.s4 1983009808
        %v3894 = vunpack.c.0.s8 %v3893
        %v3895 = vlaneseq
        %v3896 = vshrl.u32 %v3895, 7
        %v3897 = vsub.s32 %v3894, %v3896
        %v3898 = vrot.slane %v3890, %v3897
        %v3900 = vunpack.c.l.s4 1983009808
        %v3901 = vunpack.c.0.s8 %v3900
        %v3902 = vlaneseq
        %v3903 = vshrl.u32 %v3902, 7
        %v3904 = vsub.s32 %v3901, %v3903
        %v3905 = vrot.slane %v3891, %v3904
        %v3906 = vcombine.low %v3563, %v3567
        %v3907 = vcombine.high %v3563, %v3567
        %v3909 = vunpack.c.l.s4 1983009808
        %v3910 = vunpack.c.0.s8 %v3909
        %v3911 = vlaneseq
        %v3912 = vshrl.u32 %v3911, 7
        %v3913 = vsub.s32 %v3910, %v3912
        %v3914 = vrot.slane %v3906, %v3913
        %v3916 = vunpack.c.l.s4 1983009808
        %v3917 = vunpack.c.0.s8 %v3916
        %v3918 = vlaneseq
        %v3919 = vshrl.u32 %v3918, 7
        %v3920 = vsub.s32 %v3917, %v3919
        %v3921 = vrot.slane %v3907, %v3920
        %v3922 = vcombine.low %v3866, %v3882
        %v3923 = vcombine.high %v3866, %v3882
        %v3925 = vunpack.c.l.s4 1934713408
        %v3926 = vunpack.c.0.s8 %v3925
        %v3927 = vlaneseq
        %v3928 = vshrl.u32 %v3927, 7
        %v3929 = vsub.s32 %v3926, %v3928
        %v3930 = vrot.slane %v3922, %v3929
        %v3932 = vunpack.c.l.s4 1934713408
        %v3933 = vunpack.c.0.s8 %v3932
        %v3934 = vlaneseq
        %v3935 = vshrl.u32 %v3934, 7
        %v3936 = vsub.s32 %v3933, %v3935
        %v3937 = vrot.slane %v3923, %v3936
        %v3938 = vcombine.low %v3873, %v3889
        %v3939 = vcombine.high %v3873, %v3889
        %v3941 = vunpack.c.l.s4 1934713408
        %v3942 = vunpack.c.0.s8 %v3941
        %v3943 = vlaneseq
        %v3944 = vshrl.u32 %v3943, 7
        %v3945 = vsub.s32 %v3942, %v3944
        %v3946 = vrot.slane %v3938, %v3945
        %v3948 = vunpack.c.l.s4 1934713408
        %v3949 = vunpack.c.0.s8 %v3948
        %v3950 = vlaneseq
        %v3951 = vshrl.u32 %v3950, 7
        %v3952 = vsub.s32 %v3949, %v3951
        %v3953 = vrot.slane %v3939, %v3952
        %v3954 = vcombine.low %v3898, %v3914
        %v3955 = vcombine.high %v3898, %v3914
        %v3957 = vunpack.c.l.s4 1934713408
        %v3958 = vunpack.c.0.s8 %v3957
        %v3959 = vlaneseq
        %v3960 = vshrl.u32 %v3959, 7
        %v3961 = vsub.s32 %v3958, %v3960
        %v3962 = vrot.slane %v3954, %v3961
        %v3964 = vunpack.c.l.s4 1934713408
        %v3965 = vunpack.c.0.s8 %v3964
        %v3966 = vlaneseq
        %v3967 = vshrl.u32 %v3966, 7
        %v3968 = vsub.s32 %v3965, %v3967
        %v3969 = vrot.slane %v3955, %v3968
        %v3970 = vcombine.low %v3905, %v3921
        %v3971 = vcombine.high %v3905, %v3921
        %v3973 = vunpack.c.l.s4 1934713408
        %v3974 = vunpack.c.0.s8 %v3973
        %v3975 = vlaneseq
        %v3976 = vshrl.u32 %v3975, 7
        %v3977 = vsub.s32 %v3974, %v3976
        %v3978 = vrot.slane %v3970, %v3977
        %v3980 = vunpack.c.l.s4 1934713408
        %v3981 = vunpack.c.0.s8 %v3980
        %v3982 = vlaneseq
        %v3983 = vshrl.u32 %v3982, 7
        %v3984 = vsub.s32 %v3981, %v3983
        %v3985 = vrot.slane %v3971, %v3984
        %v3986 = vcombine.low %v3930, %v3962
        %v3987 = vcombine.high %v3930, %v3962
        %v3988 = vcombine.low %v3937, %v3969
        %v3989 = vcombine.high %v3937, %v3969
        %v3990 = vcombine.low %v3946, %v3978
        %v3991 = vcombine.high %v3946, %v3978
        %v3992 = vcombine.low %v3953, %v3985
        %v3993 = vcombine.high %v3953, %v3985
        %v3994 = vcombine.low %v3569, %v3573
        %v3995 = vcombine.high %v3569, %v3573
        %v3997 = vunpack.c.l.s4 1983009808
        %v3998 = vunpack.c.0.s8 %v3997
        %v3999 = vlaneseq
        %v4000 = vshrl.u32 %v3999, 7
        %v4001 = vsub.s32 %v3998, %v4000
        %v4002 = vrot.slane %v3994, %v4001
        %v4004 = vunpack.c.l.s4 1983009808
        %v4005 = vunpack.c.0.s8 %v4004
        %v4006 = vlaneseq
        %v4007 = vshrl.u32 %v4006, 7
        %v4008 = vsub.s32 %v4005, %v4007
        %v4009 = vrot.slane %v3995, %v4008
        %v4010 = vcombine.low %v3571, %v3575
        %v4011 = vcombine.high %v3571, %v3575
        %v4013 = vunpack.c.l.s4 1983009808
        %v4014 = vunpack.c.0.s8 %v4013
        %v4015 = vlaneseq
        %v4016 = vshrl.u32 %v4015, 7
        %v4017 = vsub.s32 %v4014, %v4016
        %v4018 = vrot.slane %v4010, %v4017
        %v4020 = vunpack.c.l.s4 1983009808
        %v4021 = vunpack.c.0.s8 %v4020
        %v4022 = vlaneseq
        %v4023 = vshrl.u32 %v4022, 7
        %v4024 = vsub.s32 %v4021, %v4023
        %v4025 = vrot.slane %v4011, %v4024
        %v4026 = vcombine.low %v3577, %v3581
        %v4027 = vcombine.high %v3577, %v3581
        %v4029 = vunpack.c.l.s4 1983009808
        %v4030 = vunpack.c.0.s8 %v4029
        %v4031 = vlaneseq
        %v4032 = vshrl.u32 %v4031, 7
        %v4033 = vsub.s32 %v4030, %v4032
        %v4034 = vrot.slane %v4026, %v4033
        %v4036 = vunpack.c.l.s4 1983009808
        %v4037 = vunpack.c.0.s8 %v4036
        %v4038 = vlaneseq
        %v4039 = vshrl.u32 %v4038, 7
        %v4040 = vsub.s32 %v4037, %v4039
        %v4041 = vrot.slane %v4027, %v4040
        %v4042 = vcombine.low %v3579, %v3583
        %v4043 = vcombine.high %v3579, %v3583
        %v4045 = vunpack.c.l.s4 1983009808
        %v4046 = vunpack.c.0.s8 %v4045
        %v4047 = vlaneseq
        %v4048 = vshrl.u32 %v4047, 7
        %v4049 = vsub.s32 %v4046, %v4048
        %v4050 = vrot.slane %v4042, %v4049
        %v4052 = vunpack.c.l.s4 1983009808
        %v4053 = vunpack.c.0.s8 %v4052
        %v4054 = vlaneseq
        %v4055 = vshrl.u32 %v4054, 7
        %v4056 = vsub.s32 %v4053, %v4055
        %v4057 = vrot.slane %v4043, %v4056
        %v4058 = vcombine.low %v4002, %v4018
        %v4059 = vcombine.high %v4002, %v4018
        %v4061 = vunpack.c.l.s4 1934713408
        %v4062 = vunpack.c.0.s8 %v4061
        %v4063 = vlaneseq
        %v4064 = vshrl.u32 %v4063, 7
        %v4065 = vsub.s32 %v4062, %v4064
        %v4066 = vrot.slane %v4058, %v4065
        %v4068 = vunpack.c.l.s4 1934713408
        %v4069 = vunpack.c.0.s8 %v4068
        %v4070 = vlaneseq
        %v4071 = vshrl.u32 %v4070, 7
        %v4072 = vsub.s32 %v4069, %v4071
        %v4073 = vrot.slane %v4059, %v4072
        %v4074 = vcombine.low %v4009, %v4025
        %v4075 = vcombine.high %v4009, %v4025
        %v4077 = vunpack.c.l.s4 1934713408
        %v4078 = vunpack.c.0.s8 %v4077
        %v4079 = vlaneseq
        %v4080 = vshrl.u32 %v4079, 7
        %v4081 = vsub.s32 %v4078, %v4080
        %v4082 = vrot.slane %v4074, %v4081
        %v4084 = vunpack.c.l.s4 1934713408
        %v4085 = vunpack.c.0.s8 %v4084
        %v4086 = vlaneseq
        %v4087 = vshrl.u32 %v4086, 7
        %v4088 = vsub.s32 %v4085, %v4087
        %v4089 = vrot.slane %v4075, %v4088
        %v4090 = vcombine.low %v4034, %v4050
        %v4091 = vcombine.high %v4034, %v4050
        %v4093 = vunpack.c.l.s4 1934713408
        %v4094 = vunpack.c.0.s8 %v4093
        %v4095 = vlaneseq
        %v4096 = vshrl.u32 %v4095, 7
        %v4097 = vsub.s32 %v4094, %v4096
        %v4098 = vrot.slane %v4090, %v4097
        %v4100 = vunpack.c.l.s4 1934713408
        %v4101 = vunpack.c.0.s8 %v4100
        %v4102 = vlaneseq
        %v4103 = vshrl.u32 %v4102, 7
        %v4104 = vsub.s32 %v4101, %v4103
        %v4105 = vrot.slane %v4091, %v4104
        %v4106 = vcombine.low %v4041, %v4057
        %v4107 = vcombine.high %v4041, %v4057
        %v4109 = vunpack.c.l.s4 1934713408
        %v4110 = vunpack.c.0.s8 %v4109
        %v4111 = vlaneseq
        %v4112 = vshrl.u32 %v4111, 7
        %v4113 = vsub.s32 %v4110, %v4112
        %v4114 = vrot.slane %v4106, %v4113
        %v4116 = vunpack.c.l.s4 1934713408
        %v4117 = vunpack.c.0.s8 %v4116
        %v4118 = vlaneseq
        %v4119 = vshrl.u32 %v4118, 7
        %v4120 = vsub.s32 %v4117, %v4119
        %v4121 = vrot.slane %v4107, %v4120
        %v4122 = vcombine.low %v4066, %v4098
        %v4123 = vcombine.high %v4066, %v4098
        %v4124 = vcombine.low %v4073, %v4105
        %v4125 = vcombine.high %v4073, %v4105
        %v4126 = vcombine.low %v4082, %v4114
        %v4127 = vcombine.high %v4082, %v4114
        %v4128 = vcombine.low %v4089, %v4121
        %v4129 = vcombine.high %v4089, %v4121
        %4132 = vrot.lane.b32.xlu0 %v3715, 10
        %v4133 = vpop.permute.xlu0 %4132
        %4134 = vrot.lane.b32.xlu0 %v3851, 10
        %v4135 = vpop.permute.xlu0 %4134
        %4140 = vrot.lane.b32.xlu0 %v3716, 20
        %v4141 = vpop.permute.xlu0 %4140
        %4142 = vrot.lane.b32.xlu0 %v3852, 20
        %v4143 = vpop.permute.xlu0 %4142
        %4148 = vrot.lane.b32.xlu0 %v3717, 30
        %v4149 = vpop.permute.xlu0 %4148
        %4150 = vrot.lane.b32.xlu0 %v3853, 30
        %v4151 = vpop.permute.xlu0 %4150
        %4156 = vrot.lane.b32.xlu0 %v3718, 40
        %v4157 = vpop.permute.xlu0 %4156
        %4158 = vrot.lane.b32.xlu0 %v3854, 40
        %v4159 = vpop.permute.xlu0 %4158
        %4164 = vrot.lane.b32.xlu0 %v3719, 50
        %v4165 = vpop.permute.xlu0 %4164
        %4166 = vrot.lane.b32.xlu0 %v3855, 50
        %v4167 = vpop.permute.xlu0 %4166
        %4172 = vrot.lane.b32.xlu0 %v3720, 60
        %v4173 = vpop.permute.xlu0 %4172
        %4174 = vrot.lane.b32.xlu0 %v3856, 60
        %v4175 = vpop.permute.xlu0 %4174
        %4180 = vrot.lane.b32.xlu0 %v3721, 70
        %v4181 = vpop.permute.xlu0 %4180
        %4182 = vrot.lane.b32.xlu0 %v3857, 70
        %v4183 = vpop.permute.xlu0 %4182
        %4188 = vrot.lane.b32.xlu0 %v3986, 80
        %v4189 = vpop.permute.xlu0 %4188
        %4190 = vrot.lane.b32.xlu0 %v4122, 80
        %v4191 = vpop.permute.xlu0 %4190
        %4196 = vrot.lane.b32.xlu0 %v3987, 90
        %v4197 = vpop.permute.xlu0 %4196
        %4198 = vrot.lane.b32.xlu0 %v4123, 90
        %v4199 = vpop.permute.xlu0 %4198
        %4204 = vrot.lane.b32.xlu0 %v3988, 100
        %v4205 = vpop.permute.xlu0 %4204
        %4206 = vrot.lane.b32.xlu0 %v4124, 100
        %v4207 = vpop.permute.xlu0 %4206
        %4212 = vrot.lane.b32.xlu0 %v3989, 110
        %v4213 = vpop.permute.xlu0 %4212
        %4214 = vrot.lane.b32.xlu0 %v4125, 110
        %v4215 = vpop.permute.xlu0 %4214
        %4220 = vrot.lane.b32.xlu0 %v3990, 120
        %v4221 = vpop.permute.xlu0 %4220
        %4222 = vrot.lane.b32.xlu0 %v4126, 120
        %v4223 = vpop.permute.xlu0 %4222
        %4228 = vrot.lane.b32.xlu0 %v3991, 2
        %v4229 = vpop.permute.xlu0 %4228
        %4230 = vrot.lane.b32.xlu0 %v4127, 2
        %v4231 = vpop.permute.xlu0 %4230
        %4236 = vrot.lane.b32.xlu0 %v3992, 12
        %v4237 = vpop.permute.xlu0 %4236
        %4238 = vrot.lane.b32.xlu0 %v4128, 12
        %v4239 = vpop.permute.xlu0 %4238
        %4244 = vrot.lane.b32.xlu0 %v3993, 22
        %v4245 = vpop.permute.xlu0 %4244
        %4246 = vrot.lane.b32.xlu0 %v4129, 22
        %v4247 = vpop.permute.xlu0 %4246
        %v4250 = vsel %vm1102, %v3714, %v4133
        %v4251 = vsel %vm1102, %v3850, %v4135
        %v4252 = vsel %vm1105, %v4250, %v4141
        %v4253 = vsel %vm1105, %v4251, %v4143
        %v4254 = vsel %vm1108, %v4252, %v4149
        %v4255 = vsel %vm1108, %v4253, %v4151
        %v4256 = vsel %vm1111, %v4254, %v4157
        %v4257 = vsel %vm1111, %v4255, %v4159
        %v4258 = vsel %vm1114, %v4256, %v4165
        %v4259 = vsel %vm1114, %v4257, %v4167
        %v4260 = vsel %vm1117, %v4258, %v4173
        %v4261 = vsel %vm1117, %v4259, %v4175
        %v4262 = vsel %vm1120, %v4260, %v4181
        %v4263 = vsel %vm1120, %v4261, %v4183
        %v4264 = vsel %vm1123, %v4262, %v4189
        %v4265 = vsel %vm1123, %v4263, %v4191
        %v4266 = vsel %vm1126, %v4264, %v4197
        %v4267 = vsel %vm1126, %v4265, %v4199
        %v4268 = vsel %vm1129, %v4266, %v4205
        %v4269 = vsel %vm1129, %v4267, %v4207
        %v4270 = vsel %vm1132, %v4268, %v4213
        %v4271 = vsel %vm1132, %v4269, %v4215
        %v4272 = vsel %vm1135, %v4270, %v4221
        %v4273 = vsel %vm1135, %v4271, %v4223
        %v4274 = vsel %vm1138, %v4221, %v4229
        %v4275 = vsel %vm1138, %v4223, %v4231
        %v4276 = vsel %vm1141, %v4274, %v4237
        %v4277 = vsel %vm1141, %v4275, %v4239
        %v4278 = vsel %vm1144, %v4276, %v4245
        %v4279 = vsel %vm1144, %v4277, %v4247
        %v4280 = vcombine.low 0.0, 0.0
        %v4281 = vcombine.high 0.0, 0.0
        %v4283 = vunpack.c.l.s4 1983009808
        %v4284 = vunpack.c.0.s8 %v4283
        %v4285 = vlaneseq
        %v4286 = vshrl.u32 %v4285, 7
        %v4287 = vsub.s32 %v4284, %v4286
        %v4288 = vrot.slane %v4280, %v4287
        %v4290 = vunpack.c.l.s4 1983009808
        %v4291 = vunpack.c.0.s8 %v4290
        %v4292 = vlaneseq
        %v4293 = vshrl.u32 %v4292, 7
        %v4294 = vsub.s32 %v4291, %v4293
        %v4295 = vrot.slane %v4281, %v4294
        %v4296 = vcombine.low %v4288, %v4288
        %v4297 = vcombine.high %v4288, %v4288
        %v4299 = vunpack.c.l.s4 1934713408
        %v4300 = vunpack.c.0.s8 %v4299
        %v4301 = vlaneseq
        %v4302 = vshrl.u32 %v4301, 7
        %v4303 = vsub.s32 %v4300, %v4302
        %v4304 = vrot.slane %v4296, %v4303
        %v4306 = vunpack.c.l.s4 1934713408
        %v4307 = vunpack.c.0.s8 %v4306
        %v4308 = vlaneseq
        %v4309 = vshrl.u32 %v4308, 7
        %v4310 = vsub.s32 %v4307, %v4309
        %v4311 = vrot.slane %v4297, %v4310
        %v4312 = vcombine.low %v4295, %v4295
        %v4313 = vcombine.high %v4295, %v4295
        %v4315 = vunpack.c.l.s4 1934713408
        %v4316 = vunpack.c.0.s8 %v4315
        %v4317 = vlaneseq
        %v4318 = vshrl.u32 %v4317, 7
        %v4319 = vsub.s32 %v4316, %v4318
        %v4320 = vrot.slane %v4312, %v4319
        %v4322 = vunpack.c.l.s4 1934713408
        %v4323 = vunpack.c.0.s8 %v4322
        %v4324 = vlaneseq
        %v4325 = vshrl.u32 %v4324, 7
        %v4326 = vsub.s32 %v4323, %v4325
        %v4327 = vrot.slane %v4313, %v4326
        %v4328 = vcombine.low %v4304, %v4304
        %v4329 = vcombine.high %v4304, %v4304
        %v4330 = vcombine.low %v4311, %v4311
        %v4331 = vcombine.high %v4311, %v4311
        %v4332 = vcombine.low %v4320, %v4320
        %v4333 = vcombine.high %v4320, %v4320
        %v4334 = vcombine.low %v4327, %v4327
        %v4335 = vcombine.high %v4327, %v4327
        %4337 = vrot.lane.b32.xlu0 %v4329, 10
        %v4338 = vpop.permute.xlu0 %4337
        %4341 = vrot.lane.b32.xlu0 %v4330, 20
        %v4342 = vpop.permute.xlu0 %4341
        %4345 = vrot.lane.b32.xlu0 %v4331, 30
        %v4346 = vpop.permute.xlu0 %4345
        %4349 = vrot.lane.b32.xlu0 %v4332, 40
        %v4350 = vpop.permute.xlu0 %4349
        %4353 = vrot.lane.b32.xlu0 %v4333, 50
        %v4354 = vpop.permute.xlu0 %4353
        %4357 = vrot.lane.b32.xlu0 %v4334, 60
        %v4358 = vpop.permute.xlu0 %4357
        %4361 = vrot.lane.b32.xlu0 %v4335, 70
        %v4362 = vpop.permute.xlu0 %4361
        %4365 = vrot.lane.b32.xlu0 %v4328, 80
        %v4366 = vpop.permute.xlu0 %4365
        %4368 = vrot.lane.b32.xlu0 %v4329, 90
        %v4369 = vpop.permute.xlu0 %4368
        %4371 = vrot.lane.b32.xlu0 %v4330, 100
        %v4372 = vpop.permute.xlu0 %4371
        %4374 = vrot.lane.b32.xlu0 %v4331, 110
        %v4375 = vpop.permute.xlu0 %4374
        %4377 = vrot.lane.b32.xlu0 %v4332, 120
        %v4378 = vpop.permute.xlu0 %4377
        %4380 = vrot.lane.b32.xlu0 %v4333, 2
        %v4381 = vpop.permute.xlu0 %4380
        %4383 = vrot.lane.b32.xlu0 %v4334, 12
        %v4384 = vpop.permute.xlu0 %4383
        %4386 = vrot.lane.b32.xlu0 %v4335, 22
        %v4387 = vpop.permute.xlu0 %4386
        %v4389 = vsel %vm1102, %v4328, %v4338
        %v4390 = vsel %vm1105, %v4389, %v4342
        %v4391 = vsel %vm1108, %v4390, %v4346
        %v4392 = vsel %vm1111, %v4391, %v4350
        %v4393 = vsel %vm1114, %v4392, %v4354
        %v4394 = vsel %vm1117, %v4393, %v4358
        %v4395 = vsel %vm1120, %v4394, %v4362
        %v4396 = vsel %vm1123, %v4395, %v4366
        %v4397 = vsel %vm1126, %v4396, %v4369
        %v4398 = vsel %vm1129, %v4397, %v4372
        %v4399 = vsel %vm1132, %v4398, %v4375
        %v4400 = vsel %vm1135, %v4399, %v4378
        %v4401 = vsel %vm1138, %v4378, %v4381
        %v4402 = vsel %vm1141, %v4401, %v4384
        %v4403 = vsel %vm1144, %v4402, %v4387
        %vm4404 = vcmask 130048
        %v4406 = vsel %vm4404, %v3584, 0
        %v4409 = vsel %vm4404, %v3585, 0
        %4411 = vmatprep.subr.mxu0 0.0
        %4412 = vmatpush1.msra.mxu0 0.0
        %4413 = vmatprep.subr.mxu0 0.0
        %4414 = vmatpush1.msra.mxu0 0.0
        %4415 = vmatprep.subr.mxu0 0.0
        %4416 = vmatpush1.msra.mxu0 0.0
        %4417 = vmatprep.subr.mxu0 0.0
        %4418 = vmatpush1.msra.mxu0 0.0
        %4419 = vmatprep.subr.mxu0 0.0
        %4420 = vmatpush1.msra.mxu0 0.0
        %4421 = vmatprep.subr.mxu0 0.0
        %4422 = vmatpush1.msra.mxu0 0.0
        %4423 = vmatprep.subr.mxu0 0.0
        %4424 = vmatpush1.msra.mxu0 0.0
        %4425 = vmatprep.subr.mxu0 0.0
        %4426 = vmatpush1.msra.mxu0 0.0
        %4427 = vmatprep.subr.mxu0 0.0
        %4428 = vmatpush1.msra.mxu0 0.0
        %4429 = vmatprep.subr.mxu0 0.0
        %4430 = vmatpush1.msra.mxu0 0.0
        %4431 = vmatprep.subr.mxu0 0.0
        %4432 = vmatpush1.msra.mxu0 0.0
        %4433 = vmatprep.subr.mxu0 0.0
        %4434 = vmatpush1.msra.mxu0 0.0
        %4435 = vmatprep.subr.mxu0 0.0
        %4436 = vmatpush1.msra.mxu0 0.0
        %4437 = vmatprep.subr.mxu0 0.0
        %4438 = vmatpush1.msra.mxu0 0.0
        %4439 = vmatprep.subr.mxu0 %v4279
        %4440 = vmatpush1.msra.mxu0 %v4273
        %4441 = vmatprep.subr.mxu0 %v4278
        %4442 = vmatpush1.msra.mxu0 %v4272
        %4443 = vmatprep.subr.mxu0 0.0
        %4444 = vmatpush2.msra.mxu0 0.0
        %4445 = vmatprep.subr.mxu0 0.0
        %4446 = vmatpush2.msra.mxu0 0.0
        %4447 = vmatprep.subr.mxu0 0.0
        %4448 = vmatpush2.msra.mxu0 0.0
        %4449 = vmatprep.subr.mxu0 0.0
        %4450 = vmatpush2.msra.mxu0 0.0
        %4451 = vmatprep.subr.mxu0 0.0
        %4452 = vmatpush2.msra.mxu0 0.0
        %4453 = vmatprep.subr.mxu0 0.0
        %4454 = vmatpush2.msra.mxu0 0.0
        %4455 = vmatprep.subr.mxu0 0.0
        %4456 = vmatpush2.msra.mxu0 0.0
        %4457 = vmatprep.subr.mxu0 0.0
        %4458 = vmatpush2.msra.mxu0 0.0
        %4459 = vmatprep.subr.mxu0 0.0
        %4460 = vmatpush2.msra.mxu0 0.0
        %4461 = vmatprep.subr.mxu0 0.0
        %4462 = vmatpush2.msra.mxu0 0.0
        %4463 = vmatprep.subr.mxu0 0.0
        %4464 = vmatpush2.msra.mxu0 0.0
        %4465 = vmatprep.subr.mxu0 0.0
        %4466 = vmatpush2.msra.mxu0 0.0
        %4467 = vmatprep.subr.mxu0 0.0
        %4468 = vmatpush2.msra.mxu0 0.0
        %4469 = vmatprep.subr.mxu0 0.0
        %4470 = vmatpush2.msra.mxu0 0.0
        %4471 = vmatprep.subr.mxu0 0.0
        %4472 = vmatpush2.msra.mxu0 0.0
        %4473 = vmatprep.subr.mxu0 0.0
        %4474 = vmatpush2.msra.mxu0 0.0
        %4475 = vmatprep.mubr.f32.mxu0 0.0
        %4476 = vmatmul.mubr.f32.gmra.mxu0 %v4406
        %v4477 = vpop.f32.mrf.mxu0
        %v4478 = vadd.f32 %v4400, %v4477
        %v4479 = vpop.f32.mrf.mxu0
        %v4480 = vadd.f32 %v4403, %v4479
        %4481 = vmatprep.mubr.f32.mxu0 0.0
        %4482 = vmatmul.mubr.f32.gmra.mxu0 %v4409
        %v4483 = vpop.f32.mrf.mxu0
        %v4484 = vadd.f32 %v4400, %v4483
        %v4485 = vpop.f32.mrf.mxu0
        %v4486 = vadd.f32 %v4403, %v4485
        %4487 = vdwg.mxu0
        %4490 = vrot.lane.b32.xlu0 %v4478, 118
        %v4491 = vpop.permute.xlu0 %4490
        %4492 = vrot.lane.b32.xlu0 %v4484, 118
        %v4493 = vpop.permute.xlu0 %4492
        %4496 = vrot.lane.b32.xlu0 %v4478, 108
        %v4497 = vpop.permute.xlu0 %4496
        %4498 = vrot.lane.b32.xlu0 %v4484, 108
        %v4499 = vpop.permute.xlu0 %4498
        %4502 = vrot.lane.b32.xlu0 %v4478, 98
        %v4503 = vpop.permute.xlu0 %4502
        %4504 = vrot.lane.b32.xlu0 %v4484, 98
        %v4505 = vpop.permute.xlu0 %4504
        %4508 = vrot.lane.b32.xlu0 %v4478, 88
        %v4509 = vpop.permute.xlu0 %4508
        %4510 = vrot.lane.b32.xlu0 %v4484, 88
        %v4511 = vpop.permute.xlu0 %4510
        %4514 = vrot.lane.b32.xlu0 %v4478, 78
        %v4515 = vpop.permute.xlu0 %4514
        %4516 = vrot.lane.b32.xlu0 %v4484, 78
        %v4517 = vpop.permute.xlu0 %4516
        %4520 = vrot.lane.b32.xlu0 %v4478, 68
        %v4521 = vpop.permute.xlu0 %4520
        %4522 = vrot.lane.b32.xlu0 %v4484, 68
        %v4523 = vpop.permute.xlu0 %4522
        %4526 = vrot.lane.b32.xlu0 %v4478, 58
        %v4527 = vpop.permute.xlu0 %4526
        %4528 = vrot.lane.b32.xlu0 %v4484, 58
        %v4529 = vpop.permute.xlu0 %4528
        %4532 = vrot.lane.b32.xlu0 %v4478, 48
        %v4533 = vpop.permute.xlu0 %4532
        %4534 = vrot.lane.b32.xlu0 %v4484, 48
        %v4535 = vpop.permute.xlu0 %4534
        %4538 = vrot.lane.b32.xlu0 %v4478, 38
        %v4539 = vpop.permute.xlu0 %4538
        %4540 = vrot.lane.b32.xlu0 %v4484, 38
        %v4541 = vpop.permute.xlu0 %4540
        %4544 = vrot.lane.b32.xlu0 %v4478, 28
        %v4545 = vpop.permute.xlu0 %4544
        %4546 = vrot.lane.b32.xlu0 %v4484, 28
        %v4547 = vpop.permute.xlu0 %4546
        %4550 = vrot.lane.b32.xlu0 %v4478, 18
        %v4551 = vpop.permute.xlu0 %4550
        %4552 = vrot.lane.b32.xlu0 %v4484, 18
        %v4553 = vpop.permute.xlu0 %4552
        %4558 = vrot.lane.b32.xlu0 %v4478, 8
        %v4559 = vpop.permute.xlu0 %4558
        %4560 = vrot.lane.b32.xlu0 %v4480, 8
        %v4561 = vpop.permute.xlu0 %4560
        %4562 = vrot.lane.b32.xlu0 %v4484, 8
        %v4563 = vpop.permute.xlu0 %4562
        %4564 = vrot.lane.b32.xlu0 %v4486, 8
        %v4565 = vpop.permute.xlu0 %4564
        %v4566 = vsel %vm2227, %v4559, %v4561
        %v4567 = vsel %vm2227, %v4563, %v4565
        %4570 = vrot.lane.b32.xlu0 %v4480, 126
        %v4571 = vpop.permute.xlu0 %4570
        %4572 = vrot.lane.b32.xlu0 %v4486, 126
        %v4573 = vpop.permute.xlu0 %4572
        %4576 = vrot.lane.b32.xlu0 %v4480, 116
        %v4577 = vpop.permute.xlu0 %4576
        %4578 = vrot.lane.b32.xlu0 %v4486, 116
        %v4579 = vpop.permute.xlu0 %4578
        %4582 = vrot.lane.b32.xlu0 %v4480, 106
        %v4583 = vpop.permute.xlu0 %4582
        %4584 = vrot.lane.b32.xlu0 %v4486, 106
        %v4585 = vpop.permute.xlu0 %4584
        %v4588 = vcombine.low %v4478, %v4497
        %v4589 = vcombine.high %v4478, %v4497
        %v4591 = vunpack.c.l.s4 1983009808
        %v4592 = vunpack.c.0.s8 %v4591
        %v4593 = vlaneseq
        %v4594 = vshrl.u32 %v4593, 7
        %v4595 = vsub.s32 %v4592, %v4594
        %v4596 = vrot.slane %v4588, %v4595
        %v4598 = vunpack.c.l.s4 1983009808
        %v4599 = vunpack.c.0.s8 %v4598
        %v4600 = vlaneseq
        %v4601 = vshrl.u32 %v4600, 7
        %v4602 = vsub.s32 %v4599, %v4601
        %v4603 = vrot.slane %v4589, %v4602
        %v4604 = vcombine.low %v4491, %v4503
        %v4605 = vcombine.high %v4491, %v4503
        %v4607 = vunpack.c.l.s4 1983009808
        %v4608 = vunpack.c.0.s8 %v4607
        %v4609 = vlaneseq
        %v4610 = vshrl.u32 %v4609, 7
        %v4611 = vsub.s32 %v4608, %v4610
        %v4612 = vrot.slane %v4604, %v4611
        %v4614 = vunpack.c.l.s4 1983009808
        %v4615 = vunpack.c.0.s8 %v4614
        %v4616 = vlaneseq
        %v4617 = vshrl.u32 %v4616, 7
        %v4618 = vsub.s32 %v4615, %v4617
        %v4619 = vrot.slane %v4605, %v4618
        %v4620 = vcombine.low %v4509, %v4521
        %v4621 = vcombine.high %v4509, %v4521
        %v4623 = vunpack.c.l.s4 1983009808
        %v4624 = vunpack.c.0.s8 %v4623
        %v4625 = vlaneseq
        %v4626 = vshrl.u32 %v4625, 7
        %v4627 = vsub.s32 %v4624, %v4626
        %v4628 = vrot.slane %v4620, %v4627
        %v4630 = vunpack.c.l.s4 1983009808
        %v4631 = vunpack.c.0.s8 %v4630
        %v4632 = vlaneseq
        %v4633 = vshrl.u32 %v4632, 7
        %v4634 = vsub.s32 %v4631, %v4633
        %v4635 = vrot.slane %v4621, %v4634
        %v4636 = vcombine.low %v4515, %v4527
        %v4637 = vcombine.high %v4515, %v4527
        %v4639 = vunpack.c.l.s4 1983009808
        %v4640 = vunpack.c.0.s8 %v4639
        %v4641 = vlaneseq
        %v4642 = vshrl.u32 %v4641, 7
        %v4643 = vsub.s32 %v4640, %v4642
        %v4644 = vrot.slane %v4636, %v4643
        %v4646 = vunpack.c.l.s4 1983009808
        %v4647 = vunpack.c.0.s8 %v4646
        %v4648 = vlaneseq
        %v4649 = vshrl.u32 %v4648, 7
        %v4650 = vsub.s32 %v4647, %v4649
        %v4651 = vrot.slane %v4637, %v4650
        %v4652 = vcombine.low %v4596, %v4612
        %v4653 = vcombine.high %v4596, %v4612
        %v4655 = vunpack.c.l.s4 1934713408
        %v4656 = vunpack.c.0.s8 %v4655
        %v4657 = vlaneseq
        %v4658 = vshrl.u32 %v4657, 7
        %v4659 = vsub.s32 %v4656, %v4658
        %v4660 = vrot.slane %v4652, %v4659
        %v4662 = vunpack.c.l.s4 1934713408
        %v4663 = vunpack.c.0.s8 %v4662
        %v4664 = vlaneseq
        %v4665 = vshrl.u32 %v4664, 7
        %v4666 = vsub.s32 %v4663, %v4665
        %v4667 = vrot.slane %v4653, %v4666
        %v4668 = vcombine.low %v4603, %v4619
        %v4669 = vcombine.high %v4603, %v4619
        %v4671 = vunpack.c.l.s4 1934713408
        %v4672 = vunpack.c.0.s8 %v4671
        %v4673 = vlaneseq
        %v4674 = vshrl.u32 %v4673, 7
        %v4675 = vsub.s32 %v4672, %v4674
        %v4676 = vrot.slane %v4668, %v4675
        %v4678 = vunpack.c.l.s4 1934713408
        %v4679 = vunpack.c.0.s8 %v4678
        %v4680 = vlaneseq
        %v4681 = vshrl.u32 %v4680, 7
        %v4682 = vsub.s32 %v4679, %v4681
        %v4683 = vrot.slane %v4669, %v4682
        %v4684 = vcombine.low %v4628, %v4644
        %v4685 = vcombine.high %v4628, %v4644
        %v4687 = vunpack.c.l.s4 1934713408
        %v4688 = vunpack.c.0.s8 %v4687
        %v4689 = vlaneseq
        %v4690 = vshrl.u32 %v4689, 7
        %v4691 = vsub.s32 %v4688, %v4690
        %v4692 = vrot.slane %v4684, %v4691
        %v4694 = vunpack.c.l.s4 1934713408
        %v4695 = vunpack.c.0.s8 %v4694
        %v4696 = vlaneseq
        %v4697 = vshrl.u32 %v4696, 7
        %v4698 = vsub.s32 %v4695, %v4697
        %v4699 = vrot.slane %v4685, %v4698
        %v4700 = vcombine.low %v4635, %v4651
        %v4701 = vcombine.high %v4635, %v4651
        %v4703 = vunpack.c.l.s4 1934713408
        %v4704 = vunpack.c.0.s8 %v4703
        %v4705 = vlaneseq
        %v4706 = vshrl.u32 %v4705, 7
        %v4707 = vsub.s32 %v4704, %v4706
        %v4708 = vrot.slane %v4700, %v4707
        %v4710 = vunpack.c.l.s4 1934713408
        %v4711 = vunpack.c.0.s8 %v4710
        %v4712 = vlaneseq
        %v4713 = vshrl.u32 %v4712, 7
        %v4714 = vsub.s32 %v4711, %v4713
        %v4715 = vrot.slane %v4701, %v4714
        %v4716 = vcombine.low %v4660, %v4692
        %v4717 = vcombine.high %v4660, %v4692
        %v4718 = vcombine.low %v4667, %v4699
        %v4719 = vcombine.high %v4667, %v4699
        %v4720 = vcombine.low %v4676, %v4708
        %v4721 = vcombine.high %v4676, %v4708
        %v4722 = vcombine.low %v4683, %v4715
        %v4723 = vcombine.high %v4683, %v4715
        %v4724 = vcombine.low %v4533, %v4545
        %v4725 = vcombine.high %v4533, %v4545
        %v4727 = vunpack.c.l.s4 1983009808
        %v4728 = vunpack.c.0.s8 %v4727
        %v4729 = vlaneseq
        %v4730 = vshrl.u32 %v4729, 7
        %v4731 = vsub.s32 %v4728, %v4730
        %v4732 = vrot.slane %v4724, %v4731
        %v4734 = vunpack.c.l.s4 1983009808
        %v4735 = vunpack.c.0.s8 %v4734
        %v4736 = vlaneseq
        %v4737 = vshrl.u32 %v4736, 7
        %v4738 = vsub.s32 %v4735, %v4737
        %v4739 = vrot.slane %v4725, %v4738
        %v4740 = vcombine.low %v4539, %v4551
        %v4741 = vcombine.high %v4539, %v4551
        %v4743 = vunpack.c.l.s4 1983009808
        %v4744 = vunpack.c.0.s8 %v4743
        %v4745 = vlaneseq
        %v4746 = vshrl.u32 %v4745, 7
        %v4747 = vsub.s32 %v4744, %v4746
        %v4748 = vrot.slane %v4740, %v4747
        %v4750 = vunpack.c.l.s4 1983009808
        %v4751 = vunpack.c.0.s8 %v4750
        %v4752 = vlaneseq
        %v4753 = vshrl.u32 %v4752, 7
        %v4754 = vsub.s32 %v4751, %v4753
        %v4755 = vrot.slane %v4741, %v4754
        %v4756 = vcombine.low %v4566, %v4577
        %v4757 = vcombine.high %v4566, %v4577
        %v4759 = vunpack.c.l.s4 1983009808
        %v4760 = vunpack.c.0.s8 %v4759
        %v4761 = vlaneseq
        %v4762 = vshrl.u32 %v4761, 7
        %v4763 = vsub.s32 %v4760, %v4762
        %v4764 = vrot.slane %v4756, %v4763
        %v4766 = vunpack.c.l.s4 1983009808
        %v4767 = vunpack.c.0.s8 %v4766
        %v4768 = vlaneseq
        %v4769 = vshrl.u32 %v4768, 7
        %v4770 = vsub.s32 %v4767, %v4769
        %v4771 = vrot.slane %v4757, %v4770
        %v4772 = vcombine.low %v4571, %v4583
        %v4773 = vcombine.high %v4571, %v4583
        %v4775 = vunpack.c.l.s4 1983009808
        %v4776 = vunpack.c.0.s8 %v4775
        %v4777 = vlaneseq
        %v4778 = vshrl.u32 %v4777, 7
        %v4779 = vsub.s32 %v4776, %v4778
        %v4780 = vrot.slane %v4772, %v4779
        %v4782 = vunpack.c.l.s4 1983009808
        %v4783 = vunpack.c.0.s8 %v4782
        %v4784 = vlaneseq
        %v4785 = vshrl.u32 %v4784, 7
        %v4786 = vsub.s32 %v4783, %v4785
        %v4787 = vrot.slane %v4773, %v4786
        %v4788 = vcombine.low %v4732, %v4748
        %v4789 = vcombine.high %v4732, %v4748
        %v4791 = vunpack.c.l.s4 1934713408
        %v4792 = vunpack.c.0.s8 %v4791
        %v4793 = vlaneseq
        %v4794 = vshrl.u32 %v4793, 7
        %v4795 = vsub.s32 %v4792, %v4794
        %v4796 = vrot.slane %v4788, %v4795
        %v4798 = vunpack.c.l.s4 1934713408
        %v4799 = vunpack.c.0.s8 %v4798
        %v4800 = vlaneseq
        %v4801 = vshrl.u32 %v4800, 7
        %v4802 = vsub.s32 %v4799, %v4801
        %v4803 = vrot.slane %v4789, %v4802
        %v4804 = vcombine.low %v4739, %v4755
        %v4805 = vcombine.high %v4739, %v4755
        %v4807 = vunpack.c.l.s4 1934713408
        %v4808 = vunpack.c.0.s8 %v4807
        %v4809 = vlaneseq
        %v4810 = vshrl.u32 %v4809, 7
        %v4811 = vsub.s32 %v4808, %v4810
        %v4812 = vrot.slane %v4804, %v4811
        %v4814 = vunpack.c.l.s4 1934713408
        %v4815 = vunpack.c.0.s8 %v4814
        %v4816 = vlaneseq
        %v4817 = vshrl.u32 %v4816, 7
        %v4818 = vsub.s32 %v4815, %v4817
        %v4819 = vrot.slane %v4805, %v4818
        %v4820 = vcombine.low %v4764, %v4780
        %v4821 = vcombine.high %v4764, %v4780
        %v4823 = vunpack.c.l.s4 1934713408
        %v4824 = vunpack.c.0.s8 %v4823
        %v4825 = vlaneseq
        %v4826 = vshrl.u32 %v4825, 7
        %v4827 = vsub.s32 %v4824, %v4826
        %v4828 = vrot.slane %v4820, %v4827
        %v4830 = vunpack.c.l.s4 1934713408
        %v4831 = vunpack.c.0.s8 %v4830
        %v4832 = vlaneseq
        %v4833 = vshrl.u32 %v4832, 7
        %v4834 = vsub.s32 %v4831, %v4833
        %v4835 = vrot.slane %v4821, %v4834
        %v4836 = vcombine.low %v4771, %v4787
        %v4837 = vcombine.high %v4771, %v4787
        %v4839 = vunpack.c.l.s4 1934713408
        %v4840 = vunpack.c.0.s8 %v4839
        %v4841 = vlaneseq
        %v4842 = vshrl.u32 %v4841, 7
        %v4843 = vsub.s32 %v4840, %v4842
        %v4844 = vrot.slane %v4836, %v4843
        %v4846 = vunpack.c.l.s4 1934713408
        %v4847 = vunpack.c.0.s8 %v4846
        %v4848 = vlaneseq
        %v4849 = vshrl.u32 %v4848, 7
        %v4850 = vsub.s32 %v4847, %v4849
        %v4851 = vrot.slane %v4837, %v4850
        %v4852 = vcombine.low %v4796, %v4828
        %v4853 = vcombine.high %v4796, %v4828
        %v4854 = vcombine.low %v4803, %v4835
        %v4855 = vcombine.high %v4803, %v4835
        %v4856 = vcombine.low %v4812, %v4844
        %v4857 = vcombine.high %v4812, %v4844
        %v4858 = vcombine.low %v4819, %v4851
        %v4859 = vcombine.high %v4819, %v4851
        %v4860 = vcombine.low %v4484, %v4499
        %v4861 = vcombine.high %v4484, %v4499
        %v4863 = vunpack.c.l.s4 1983009808
        %v4864 = vunpack.c.0.s8 %v4863
        %v4865 = vlaneseq
        %v4866 = vshrl.u32 %v4865, 7
        %v4867 = vsub.s32 %v4864, %v4866
        %v4868 = vrot.slane %v4860, %v4867
        %v4870 = vunpack.c.l.s4 1983009808
        %v4871 = vunpack.c.0.s8 %v4870
        %v4872 = vlaneseq
        %v4873 = vshrl.u32 %v4872, 7
        %v4874 = vsub.s32 %v4871, %v4873
        %v4875 = vrot.slane %v4861, %v4874
        %v4876 = vcombine.low %v4493, %v4505
        %v4877 = vcombine.high %v4493, %v4505
        %v4879 = vunpack.c.l.s4 1983009808
        %v4880 = vunpack.c.0.s8 %v4879
        %v4881 = vlaneseq
        %v4882 = vshrl.u32 %v4881, 7
        %v4883 = vsub.s32 %v4880, %v4882
        %v4884 = vrot.slane %v4876, %v4883
        %v4886 = vunpack.c.l.s4 1983009808
        %v4887 = vunpack.c.0.s8 %v4886
        %v4888 = vlaneseq
        %v4889 = vshrl.u32 %v4888, 7
        %v4890 = vsub.s32 %v4887, %v4889
        %v4891 = vrot.slane %v4877, %v4890
        %v4892 = vcombine.low %v4511, %v4523
        %v4893 = vcombine.high %v4511, %v4523
        %v4895 = vunpack.c.l.s4 1983009808
        %v4896 = vunpack.c.0.s8 %v4895
        %v4897 = vlaneseq
        %v4898 = vshrl.u32 %v4897, 7
        %v4899 = vsub.s32 %v4896, %v4898
        %v4900 = vrot.slane %v4892, %v4899
        %v4902 = vunpack.c.l.s4 1983009808
        %v4903 = vunpack.c.0.s8 %v4902
        %v4904 = vlaneseq
        %v4905 = vshrl.u32 %v4904, 7
        %v4906 = vsub.s32 %v4903, %v4905
        %v4907 = vrot.slane %v4893, %v4906
        %v4908 = vcombine.low %v4517, %v4529
        %v4909 = vcombine.high %v4517, %v4529
        %v4911 = vunpack.c.l.s4 1983009808
        %v4912 = vunpack.c.0.s8 %v4911
        %v4913 = vlaneseq
        %v4914 = vshrl.u32 %v4913, 7
        %v4915 = vsub.s32 %v4912, %v4914
        %v4916 = vrot.slane %v4908, %v4915
        %v4918 = vunpack.c.l.s4 1983009808
        %v4919 = vunpack.c.0.s8 %v4918
        %v4920 = vlaneseq
        %v4921 = vshrl.u32 %v4920, 7
        %v4922 = vsub.s32 %v4919, %v4921
        %v4923 = vrot.slane %v4909, %v4922
        %v4924 = vcombine.low %v4868, %v4884
        %v4925 = vcombine.high %v4868, %v4884
        %v4927 = vunpack.c.l.s4 1934713408
        %v4928 = vunpack.c.0.s8 %v4927
        %v4929 = vlaneseq
        %v4930 = vshrl.u32 %v4929, 7
        %v4931 = vsub.s32 %v4928, %v4930
        %v4932 = vrot.slane %v4924, %v4931
        %v4934 = vunpack.c.l.s4 1934713408
        %v4935 = vunpack.c.0.s8 %v4934
        %v4936 = vlaneseq
        %v4937 = vshrl.u32 %v4936, 7
        %v4938 = vsub.s32 %v4935, %v4937
        %v4939 = vrot.slane %v4925, %v4938
        %v4940 = vcombine.low %v4875, %v4891
        %v4941 = vcombine.high %v4875, %v4891
        %v4943 = vunpack.c.l.s4 1934713408
        %v4944 = vunpack.c.0.s8 %v4943
        %v4945 = vlaneseq
        %v4946 = vshrl.u32 %v4945, 7
        %v4947 = vsub.s32 %v4944, %v4946
        %v4948 = vrot.slane %v4940, %v4947
        %v4950 = vunpack.c.l.s4 1934713408
        %v4951 = vunpack.c.0.s8 %v4950
        %v4952 = vlaneseq
        %v4953 = vshrl.u32 %v4952, 7
        %v4954 = vsub.s32 %v4951, %v4953
        %v4955 = vrot.slane %v4941, %v4954
        %v4956 = vcombine.low %v4900, %v4916
        %v4957 = vcombine.high %v4900, %v4916
        %v4959 = vunpack.c.l.s4 1934713408
        %v4960 = vunpack.c.0.s8 %v4959
        %v4961 = vlaneseq
        %v4962 = vshrl.u32 %v4961, 7
        %v4963 = vsub.s32 %v4960, %v4962
        %v4964 = vrot.slane %v4956, %v4963
        %v4966 = vunpack.c.l.s4 1934713408
        %v4967 = vunpack.c.0.s8 %v4966
        %v4968 = vlaneseq
        %v4969 = vshrl.u32 %v4968, 7
        %v4970 = vsub.s32 %v4967, %v4969
        %v4971 = vrot.slane %v4957, %v4970
        %v4972 = vcombine.low %v4907, %v4923
        %v4973 = vcombine.high %v4907, %v4923
        %v4975 = vunpack.c.l.s4 1934713408
        %v4976 = vunpack.c.0.s8 %v4975
        %v4977 = vlaneseq
        %v4978 = vshrl.u32 %v4977, 7
        %v4979 = vsub.s32 %v4976, %v4978
        %v4980 = vrot.slane %v4972, %v4979
        %v4982 = vunpack.c.l.s4 1934713408
        %v4983 = vunpack.c.0.s8 %v4982
        %v4984 = vlaneseq
        %v4985 = vshrl.u32 %v4984, 7
        %v4986 = vsub.s32 %v4983, %v4985
        %v4987 = vrot.slane %v4973, %v4986
        %v4988 = vcombine.low %v4932, %v4964
        %v4989 = vcombine.high %v4932, %v4964
        %v4990 = vcombine.low %v4939, %v4971
        %v4991 = vcombine.high %v4939, %v4971
        %v4992 = vcombine.low %v4948, %v4980
        %v4993 = vcombine.high %v4948, %v4980
        %v4994 = vcombine.low %v4955, %v4987
        %v4995 = vcombine.high %v4955, %v4987
        %v4996 = vcombine.low %v4535, %v4547
        %v4997 = vcombine.high %v4535, %v4547
        %v4999 = vunpack.c.l.s4 1983009808
        %v5000 = vunpack.c.0.s8 %v4999
        %v5001 = vlaneseq
        %v5002 = vshrl.u32 %v5001, 7
        %v5003 = vsub.s32 %v5000, %v5002
        %v5004 = vrot.slane %v4996, %v5003
        %v5006 = vunpack.c.l.s4 1983009808
        %v5007 = vunpack.c.0.s8 %v5006
        %v5008 = vlaneseq
        %v5009 = vshrl.u32 %v5008, 7
        %v5010 = vsub.s32 %v5007, %v5009
        %v5011 = vrot.slane %v4997, %v5010
        %v5012 = vcombine.low %v4541, %v4553
        %v5013 = vcombine.high %v4541, %v4553
        %v5015 = vunpack.c.l.s4 1983009808
        %v5016 = vunpack.c.0.s8 %v5015
        %v5017 = vlaneseq
        %v5018 = vshrl.u32 %v5017, 7
        %v5019 = vsub.s32 %v5016, %v5018
        %v5020 = vrot.slane %v5012, %v5019
        %v5022 = vunpack.c.l.s4 1983009808
        %v5023 = vunpack.c.0.s8 %v5022
        %v5024 = vlaneseq
        %v5025 = vshrl.u32 %v5024, 7
        %v5026 = vsub.s32 %v5023, %v5025
        %v5027 = vrot.slane %v5013, %v5026
        %v5028 = vcombine.low %v4567, %v4579
        %v5029 = vcombine.high %v4567, %v4579
        %v5031 = vunpack.c.l.s4 1983009808
        %v5032 = vunpack.c.0.s8 %v5031
        %v5033 = vlaneseq
        %v5034 = vshrl.u32 %v5033, 7
        %v5035 = vsub.s32 %v5032, %v5034
        %v5036 = vrot.slane %v5028, %v5035
        %v5038 = vunpack.c.l.s4 1983009808
        %v5039 = vunpack.c.0.s8 %v5038
        %v5040 = vlaneseq
        %v5041 = vshrl.u32 %v5040, 7
        %v5042 = vsub.s32 %v5039, %v5041
        %v5043 = vrot.slane %v5029, %v5042
        %v5044 = vcombine.low %v4573, %v4585
        %v5045 = vcombine.high %v4573, %v4585
        %v5047 = vunpack.c.l.s4 1983009808
        %v5048 = vunpack.c.0.s8 %v5047
        %v5049 = vlaneseq
        %v5050 = vshrl.u32 %v5049, 7
        %v5051 = vsub.s32 %v5048, %v5050
        %v5052 = vrot.slane %v5044, %v5051
        %v5054 = vunpack.c.l.s4 1983009808
        %v5055 = vunpack.c.0.s8 %v5054
        %v5056 = vlaneseq
        %v5057 = vshrl.u32 %v5056, 7
        %v5058 = vsub.s32 %v5055, %v5057
        %v5059 = vrot.slane %v5045, %v5058
        %v5060 = vcombine.low %v5004, %v5020
        %v5061 = vcombine.high %v5004, %v5020
        %v5063 = vunpack.c.l.s4 1934713408
        %v5064 = vunpack.c.0.s8 %v5063
        %v5065 = vlaneseq
        %v5066 = vshrl.u32 %v5065, 7
        %v5067 = vsub.s32 %v5064, %v5066
        %v5068 = vrot.slane %v5060, %v5067
        %v5070 = vunpack.c.l.s4 1934713408
        %v5071 = vunpack.c.0.s8 %v5070
        %v5072 = vlaneseq
        %v5073 = vshrl.u32 %v5072, 7
        %v5074 = vsub.s32 %v5071, %v5073
        %v5075 = vrot.slane %v5061, %v5074
        %v5076 = vcombine.low %v5011, %v5027
        %v5077 = vcombine.high %v5011, %v5027
        %v5079 = vunpack.c.l.s4 1934713408
        %v5080 = vunpack.c.0.s8 %v5079
        %v5081 = vlaneseq
        %v5082 = vshrl.u32 %v5081, 7
        %v5083 = vsub.s32 %v5080, %v5082
        %v5084 = vrot.slane %v5076, %v5083
        %v5086 = vunpack.c.l.s4 1934713408
        %v5087 = vunpack.c.0.s8 %v5086
        %v5088 = vlaneseq
        %v5089 = vshrl.u32 %v5088, 7
        %v5090 = vsub.s32 %v5087, %v5089
        %v5091 = vrot.slane %v5077, %v5090
        %v5092 = vcombine.low %v5036, %v5052
        %v5093 = vcombine.high %v5036, %v5052
        %v5095 = vunpack.c.l.s4 1934713408
        %v5096 = vunpack.c.0.s8 %v5095
        %v5097 = vlaneseq
        %v5098 = vshrl.u32 %v5097, 7
        %v5099 = vsub.s32 %v5096, %v5098
        %v5100 = vrot.slane %v5092, %v5099
        %v5102 = vunpack.c.l.s4 1934713408
        %v5103 = vunpack.c.0.s8 %v5102
        %v5104 = vlaneseq
        %v5105 = vshrl.u32 %v5104, 7
        %v5106 = vsub.s32 %v5103, %v5105
        %v5107 = vrot.slane %v5093, %v5106
        %v5108 = vcombine.low %v5043, %v5059
        %v5109 = vcombine.high %v5043, %v5059
        %v5111 = vunpack.c.l.s4 1934713408
        %v5112 = vunpack.c.0.s8 %v5111
        %v5113 = vlaneseq
        %v5114 = vshrl.u32 %v5113, 7
        %v5115 = vsub.s32 %v5112, %v5114
        %v5116 = vrot.slane %v5108, %v5115
        %v5118 = vunpack.c.l.s4 1934713408
        %v5119 = vunpack.c.0.s8 %v5118
        %v5120 = vlaneseq
        %v5121 = vshrl.u32 %v5120, 7
        %v5122 = vsub.s32 %v5119, %v5121
        %v5123 = vrot.slane %v5109, %v5122
        %v5124 = vcombine.low %v5068, %v5100
        %v5125 = vcombine.high %v5068, %v5100
        %v5126 = vcombine.low %v5075, %v5107
        %v5127 = vcombine.high %v5075, %v5107
        %v5128 = vcombine.low %v5084, %v5116
        %v5129 = vcombine.high %v5084, %v5116
        %v5130 = vcombine.low %v5091, %v5123
        %v5131 = vcombine.high %v5091, %v5123
        %v5132 = vld [vmem:[%s3] sm:$0xff]
        %v5133 = vld [vmem:[%s3 + $0x8] sm:$0xff]
        %v5134 = vld [vmem:[%s3 + $0x10] sm:$0xff]
        %v5135 = vld [vmem:[%s3 + $0x18] sm:$0xff]
        %5136 = vxpose.xlu0.b32.start [1/16] %v4716, 128
        %5137 = vxpose.xlu0.b32.cont [2/16] %v4852, 128
        %5138 = vxpose.xlu0.b32.cont [3/16] 0.0, 128
        %5139 = vxpose.xlu0.b32.cont [4/16] 0.0, 128
        %5140 = vxpose.xlu0.b32.cont [5/16] 0.0, 128
        %5141 = vxpose.xlu0.b32.cont [6/16] 0.0, 128
        %5142 = vxpose.xlu0.b32.cont [7/16] 0.0, 128
        %5143 = vxpose.xlu0.b32.cont [8/16] 0.0, 128
        %5144 = vxpose.xlu0.b32.cont [9/16] 0.0, 128
        %5145 = vxpose.xlu0.b32.cont [10/16] 0.0, 128
        %5146 = vxpose.xlu0.b32.cont [11/16] 0.0, 128
        %5147 = vxpose.xlu0.b32.cont [12/16] 0.0, 128
        %5148 = vxpose.xlu0.b32.cont [13/16] 0.0, 128
        %5149 = vxpose.xlu0.b32.cont [14/16] 0.0, 128
        %5150 = vxpose.xlu0.b32.cont [15/16] 0.0, 128
        %5151 = vxpose.xlu0.b32.end [16/16] 0.0, 128
        %v5152 = vpop.trf.xlu0
        %v5153 = vpop.trf.xlu0
        %v5154 = vpop.trf.xlu0
        %v5155 = vpop.trf.xlu0
        %v5156 = vpop.trf.xlu0
        %v5157 = vpop.trf.xlu0
        %v5158 = vpop.trf.xlu0
        %v5159 = vpop.trf.xlu0
        %v5160 = vpop.trf.xlu0
        %v5161 = vpop.trf.xlu0
        %v5162 = vpop.trf.xlu0
        %v5163 = vpop.trf.xlu0
        %v5164 = vpop.trf.xlu0
        %v5165 = vpop.trf.xlu0
        %v5166 = vpop.trf.xlu0
        %v5167 = vpop.trf.xlu0
        %5168 = vxpose.xlu0.b32.start [1/16] %v4717, 128
        %5169 = vxpose.xlu0.b32.cont [2/16] %v4853, 128
        %5170 = vxpose.xlu0.b32.cont [3/16] 0.0, 128
        %5171 = vxpose.xlu0.b32.cont [4/16] 0.0, 128
        %5172 = vxpose.xlu0.b32.cont [5/16] 0.0, 128
        %5173 = vxpose.xlu0.b32.cont [6/16] 0.0, 128
        %5174 = vxpose.xlu0.b32.cont [7/16] 0.0, 128
        %5175 = vxpose.xlu0.b32.cont [8/16] 0.0, 128
        %5176 = vxpose.xlu0.b32.cont [9/16] 0.0, 128
        %5177 = vxpose.xlu0.b32.cont [10/16] 0.0, 128
        %5178 = vxpose.xlu0.b32.cont [11/16] 0.0, 128
        %5179 = vxpose.xlu0.b32.cont [12/16] 0.0, 128
        %5180 = vxpose.xlu0.b32.cont [13/16] 0.0, 128
        %5181 = vxpose.xlu0.b32.cont [14/16] 0.0, 128
        %5182 = vxpose.xlu0.b32.cont [15/16] 0.0, 128
        %5183 = vxpose.xlu0.b32.end [16/16] 0.0, 128
        %v5184 = vpop.trf.xlu0
        %v5185 = vpop.trf.xlu0
        %v5186 = vpop.trf.xlu0
        %v5187 = vpop.trf.xlu0
        %v5188 = vpop.trf.xlu0
        %v5189 = vpop.trf.xlu0
        %v5190 = vpop.trf.xlu0
        %v5191 = vpop.trf.xlu0
        %v5192 = vpop.trf.xlu0
        %v5193 = vpop.trf.xlu0
        %v5194 = vpop.trf.xlu0
        %v5195 = vpop.trf.xlu0
        %v5196 = vpop.trf.xlu0
        %v5197 = vpop.trf.xlu0
        %v5198 = vpop.trf.xlu0
        %v5199 = vpop.trf.xlu0
        %5200 = vxpose.xlu0.b32.start [1/16] %v4718, 128
        %5201 = vxpose.xlu0.b32.cont [2/16] %v4854, 128
        %5202 = vxpose.xlu0.b32.cont [3/16] 0.0, 128
        %5203 = vxpose.xlu0.b32.cont [4/16] 0.0, 128
        %5204 = vxpose.xlu0.b32.cont [5/16] 0.0, 128
        %5205 = vxpose.xlu0.b32.cont [6/16] 0.0, 128
        %5206 = vxpose.xlu0.b32.cont [7/16] 0.0, 128
        %5207 = vxpose.xlu0.b32.cont [8/16] 0.0, 128
        %5208 = vxpose.xlu0.b32.cont [9/16] 0.0, 128
        %5209 = vxpose.xlu0.b32.cont [10/16] 0.0, 128
        %5210 = vxpose.xlu0.b32.cont [11/16] 0.0, 128
        %5211 = vxpose.xlu0.b32.cont [12/16] 0.0, 128
        %5212 = vxpose.xlu0.b32.cont [13/16] 0.0, 128
        %5213 = vxpose.xlu0.b32.cont [14/16] 0.0, 128
        %5214 = vxpose.xlu0.b32.cont [15/16] 0.0, 128
        %5215 = vxpose.xlu0.b32.end [16/16] 0.0, 128
        %v5216 = vpop.trf.xlu0
        %v5217 = vpop.trf.xlu0
        %v5218 = vpop.trf.xlu0
        %v5219 = vpop.trf.xlu0
        %v5220 = vpop.trf.xlu0
        %v5221 = vpop.trf.xlu0
        %v5222 = vpop.trf.xlu0
        %v5223 = vpop.trf.xlu0
        %v5224 = vpop.trf.xlu0
        %v5225 = vpop.trf.xlu0
        %v5226 = vpop.trf.xlu0
        %v5227 = vpop.trf.xlu0
        %v5228 = vpop.trf.xlu0
        %v5229 = vpop.trf.xlu0
        %v5230 = vpop.trf.xlu0
        %v5231 = vpop.trf.xlu0
        %5232 = vxpose.xlu0.b32.start [1/16] %v4719, 128
        %5233 = vxpose.xlu0.b32.cont [2/16] %v4855, 128
        %5234 = vxpose.xlu0.b32.cont [3/16] 0.0, 128
        %5235 = vxpose.xlu0.b32.cont [4/16] 0.0, 128
        %5236 = vxpose.xlu0.b32.cont [5/16] 0.0, 128
        %5237 = vxpose.xlu0.b32.cont [6/16] 0.0, 128
        %5238 = vxpose.xlu0.b32.cont [7/16] 0.0, 128
        %5239 = vxpose.xlu0.b32.cont [8/16] 0.0, 128
        %5240 = vxpose.xlu0.b32.cont [9/16] 0.0, 128
        %5241 = vxpose.xlu0.b32.cont [10/16] 0.0, 128
        %5242 = vxpose.xlu0.b32.cont [11/16] 0.0, 128
        %5243 = vxpose.xlu0.b32.cont [12/16] 0.0, 128
        %5244 = vxpose.xlu0.b32.cont [13/16] 0.0, 128
        %5245 = vxpose.xlu0.b32.cont [14/16] 0.0, 128
        %5246 = vxpose.xlu0.b32.cont [15/16] 0.0, 128
        %5247 = vxpose.xlu0.b32.end [16/16] 0.0, 128
        %v5248 = vpop.trf.xlu0
        %v5249 = vpop.trf.xlu0
        %v5250 = vpop.trf.xlu0
        %v5251 = vpop.trf.xlu0
        %v5252 = vpop.trf.xlu0
        %v5253 = vpop.trf.xlu0
        %v5254 = vpop.trf.xlu0
        %v5255 = vpop.trf.xlu0
        %v5256 = vpop.trf.xlu0
        %v5257 = vpop.trf.xlu0
        %v5258 = vpop.trf.xlu0
        %v5259 = vpop.trf.xlu0
        %v5260 = vpop.trf.xlu0
        %v5261 = vpop.trf.xlu0
        %v5262 = vpop.trf.xlu0
        %v5263 = vpop.trf.xlu0
        %5264 = vxpose.xlu0.b32.start [1/16] %v4720, 128
        %5265 = vxpose.xlu0.b32.cont [2/16] %v4856, 128
        %5266 = vxpose.xlu0.b32.cont [3/16] 0.0, 128
        %5267 = vxpose.xlu0.b32.cont [4/16] 0.0, 128
        %5268 = vxpose.xlu0.b32.cont [5/16] 0.0, 128
        %5269 = vxpose.xlu0.b32.cont [6/16] 0.0, 128
        %5270 = vxpose.xlu0.b32.cont [7/16] 0.0, 128
        %5271 = vxpose.xlu0.b32.cont [8/16] 0.0, 128
        %5272 = vxpose.xlu0.b32.cont [9/16] 0.0, 128
        %5273 = vxpose.xlu0.b32.cont [10/16] 0.0, 128
        %5274 = vxpose.xlu0.b32.cont [11/16] 0.0, 128
        %5275 = vxpose.xlu0.b32.cont [12/16] 0.0, 128
        %5276 = vxpose.xlu0.b32.cont [13/16] 0.0, 128
        %5277 = vxpose.xlu0.b32.cont [14/16] 0.0, 128
        %5278 = vxpose.xlu0.b32.cont [15/16] 0.0, 128
        %5279 = vxpose.xlu0.b32.end [16/16] 0.0, 128
        %v5280 = vpop.trf.xlu0
        %v5281 = vpop.trf.xlu0
        %v5282 = vpop.trf.xlu0
        %v5283 = vpop.trf.xlu0
        %v5284 = vpop.trf.xlu0
        %v5285 = vpop.trf.xlu0
        %v5286 = vpop.trf.xlu0
        %v5287 = vpop.trf.xlu0
        %v5288 = vpop.trf.xlu0
        %v5289 = vpop.trf.xlu0
        %v5290 = vpop.trf.xlu0
        %v5291 = vpop.trf.xlu0
        %v5292 = vpop.trf.xlu0
        %v5293 = vpop.trf.xlu0
        %v5294 = vpop.trf.xlu0
        %v5295 = vpop.trf.xlu0
        %5296 = vxpose.xlu0.b32.start [1/16] %v4721, 128
        %5297 = vxpose.xlu0.b32.cont [2/16] %v4857, 128
        %5298 = vxpose.xlu0.b32.cont [3/16] 0.0, 128
        %5299 = vxpose.xlu0.b32.cont [4/16] 0.0, 128
        %5300 = vxpose.xlu0.b32.cont [5/16] 0.0, 128
        %5301 = vxpose.xlu0.b32.cont [6/16] 0.0, 128
        %5302 = vxpose.xlu0.b32.cont [7/16] 0.0, 128
        %5303 = vxpose.xlu0.b32.cont [8/16] 0.0, 128
        %5304 = vxpose.xlu0.b32.cont [9/16] 0.0, 128
        %5305 = vxpose.xlu0.b32.cont [10/16] 0.0, 128
        %5306 = vxpose.xlu0.b32.cont [11/16] 0.0, 128
        %5307 = vxpose.xlu0.b32.cont [12/16] 0.0, 128
        %5308 = vxpose.xlu0.b32.cont [13/16] 0.0, 128
        %5309 = vxpose.xlu0.b32.cont [14/16] 0.0, 128
        %5310 = vxpose.xlu0.b32.cont [15/16] 0.0, 128
        %5311 = vxpose.xlu0.b32.end [16/16] 0.0, 128
        %v5312 = vpop.trf.xlu0
        %v5313 = vpop.trf.xlu0
        %v5314 = vpop.trf.xlu0
        %v5315 = vpop.trf.xlu0
        %v5316 = vpop.trf.xlu0
        %v5317 = vpop.trf.xlu0
        %v5318 = vpop.trf.xlu0
        %v5319 = vpop.trf.xlu0
        %v5320 = vpop.trf.xlu0
        %v5321 = vpop.trf.xlu0
        %v5322 = vpop.trf.xlu0
        %v5323 = vpop.trf.xlu0
        %v5324 = vpop.trf.xlu0
        %v5325 = vpop.trf.xlu0
        %v5326 = vpop.trf.xlu0
        %v5327 = vpop.trf.xlu0
        %5328 = vxpose.xlu0.b32.start [1/16] %v4722, 128
        %5329 = vxpose.xlu0.b32.cont [2/16] %v4858, 128
        %5330 = vxpose.xlu0.b32.cont [3/16] 0.0, 128
        %5331 = vxpose.xlu0.b32.cont [4/16] 0.0, 128
        %5332 = vxpose.xlu0.b32.cont [5/16] 0.0, 128
        %5333 = vxpose.xlu0.b32.cont [6/16] 0.0, 128
        %5334 = vxpose.xlu0.b32.cont [7/16] 0.0, 128
        %5335 = vxpose.xlu0.b32.cont [8/16] 0.0, 128
        %5336 = vxpose.xlu0.b32.cont [9/16] 0.0, 128
        %5337 = vxpose.xlu0.b32.cont [10/16] 0.0, 128
        %5338 = vxpose.xlu0.b32.cont [11/16] 0.0, 128
        %5339 = vxpose.xlu0.b32.cont [12/16] 0.0, 128
        %5340 = vxpose.xlu0.b32.cont [13/16] 0.0, 128
        %5341 = vxpose.xlu0.b32.cont [14/16] 0.0, 128
        %5342 = vxpose.xlu0.b32.cont [15/16] 0.0, 128
        %5343 = vxpose.xlu0.b32.end [16/16] 0.0, 128
        %v5344 = vpop.trf.xlu0
        %v5345 = vpop.trf.xlu0
        %v5346 = vpop.trf.xlu0
        %v5347 = vpop.trf.xlu0
        %v5348 = vpop.trf.xlu0
        %v5349 = vpop.trf.xlu0
        %v5350 = vpop.trf.xlu0
        %v5351 = vpop.trf.xlu0
        %v5352 = vpop.trf.xlu0
        %v5353 = vpop.trf.xlu0
        %v5354 = vpop.trf.xlu0
        %v5355 = vpop.trf.xlu0
        %v5356 = vpop.trf.xlu0
        %v5357 = vpop.trf.xlu0
        %v5358 = vpop.trf.xlu0
        %v5359 = vpop.trf.xlu0
        %5360 = vxpose.xlu0.b32.start [1/16] %v4723, 128
        %5361 = vxpose.xlu0.b32.cont [2/16] %v4859, 128
        %5362 = vxpose.xlu0.b32.cont [3/16] 0.0, 128
        %5363 = vxpose.xlu0.b32.cont [4/16] 0.0, 128
        %5364 = vxpose.xlu0.b32.cont [5/16] 0.0, 128
        %5365 = vxpose.xlu0.b32.cont [6/16] 0.0, 128
        %5366 = vxpose.xlu0.b32.cont [7/16] 0.0, 128
        %5367 = vxpose.xlu0.b32.cont [8/16] 0.0, 128
        %5368 = vxpose.xlu0.b32.cont [9/16] 0.0, 128
        %5369 = vxpose.xlu0.b32.cont [10/16] 0.0, 128
        %5370 = vxpose.xlu0.b32.cont [11/16] 0.0, 128
        %5371 = vxpose.xlu0.b32.cont [12/16] 0.0, 128
        %5372 = vxpose.xlu0.b32.cont [13/16] 0.0, 128
        %5373 = vxpose.xlu0.b32.cont [14/16] 0.0, 128
        %5374 = vxpose.xlu0.b32.cont [15/16] 0.0, 128
        %5375 = vxpose.xlu0.b32.end [16/16] 0.0, 128
        %v5376 = vpop.trf.xlu0
        %v5377 = vpop.trf.xlu0
        %v5378 = vpop.trf.xlu0
        %v5379 = vpop.trf.xlu0
        %v5380 = vpop.trf.xlu0
        %v5381 = vpop.trf.xlu0
        %v5382 = vpop.trf.xlu0
        %v5383 = vpop.trf.xlu0
        %v5384 = vpop.trf.xlu0
        %v5385 = vpop.trf.xlu0
        %v5386 = vpop.trf.xlu0
        %v5387 = vpop.trf.xlu0
        %v5388 = vpop.trf.xlu0
        %v5389 = vpop.trf.xlu0
        %v5390 = vpop.trf.xlu0
        %v5391 = vpop.trf.xlu0
        %v5408 = vcombine.high %v5152, %v5152
        %v5410 = vunpack.c.l.s4 1983009808
        %v5411 = vunpack.c.0.s8 %v5410
        %v5412 = vlaneseq
        %v5413 = vshrl.u32 %v5412, 7
        %v5414 = vsub.s32 %v5411, %v5413
        %v5415 = vrot.slane %v5152, %v5414
        %v5417 = vunpack.c.l.s4 1983009808
        %v5418 = vunpack.c.0.s8 %v5417
        %v5419 = vlaneseq
        %v5420 = vshrl.u32 %v5419, 7
        %v5421 = vsub.s32 %v5418, %v5420
        %v5422 = vrot.slane %v5408, %v5421
        %v5423 = vcombine.high %v5415, %v5415
        %v5424 = vcombine.high %v5422, %v5422
        %v5426 = vunpack.c.l.s4 1983009808
        %v5427 = vunpack.c.0.s8 %v5426
        %v5428 = vlaneseq
        %v5429 = vshrl.u32 %v5428, 7
        %v5430 = vsub.s32 %v5427, %v5429
        %v5431 = vrot.slane %v5153, %v5430
        %v5432 = vcombine.high %v5184, %v5184
        %v5434 = vunpack.c.l.s4 1983009808
        %v5435 = vunpack.c.0.s8 %v5434
        %v5436 = vlaneseq
        %v5437 = vshrl.u32 %v5436, 7
        %v5438 = vsub.s32 %v5435, %v5437
        %v5439 = vrot.slane %v5184, %v5438
        %v5441 = vunpack.c.l.s4 1983009808
        %v5442 = vunpack.c.0.s8 %v5441
        %v5443 = vlaneseq
        %v5444 = vshrl.u32 %v5443, 7
        %v5445 = vsub.s32 %v5442, %v5444
        %v5446 = vrot.slane %v5432, %v5445
        %v5447 = vcombine.high %v5439, %v5439
        %v5448 = vcombine.high %v5446, %v5446
        %v5450 = vunpack.c.l.s4 1983009808
        %v5451 = vunpack.c.0.s8 %v5450
        %v5452 = vlaneseq
        %v5453 = vshrl.u32 %v5452, 7
        %v5454 = vsub.s32 %v5451, %v5453
        %v5455 = vrot.slane %v5185, %v5454
        %v5456 = vcombine.high %v5216, %v5216
        %v5458 = vunpack.c.l.s4 1983009808
        %v5459 = vunpack.c.0.s8 %v5458
        %v5460 = vlaneseq
        %v5461 = vshrl.u32 %v5460, 7
        %v5462 = vsub.s32 %v5459, %v5461
        %v5463 = vrot.slane %v5216, %v5462
        %v5465 = vunpack.c.l.s4 1983009808
        %v5466 = vunpack.c.0.s8 %v5465
        %v5467 = vlaneseq
        %v5468 = vshrl.u32 %v5467, 7
        %v5469 = vsub.s32 %v5466, %v5468
        %v5470 = vrot.slane %v5456, %v5469
        %v5471 = vcombine.high %v5463, %v5463
        %v5472 = vcombine.high %v5470, %v5470
        %v5474 = vunpack.c.l.s4 1983009808
        %v5475 = vunpack.c.0.s8 %v5474
        %v5476 = vlaneseq
        %v5477 = vshrl.u32 %v5476, 7
        %v5478 = vsub.s32 %v5475, %v5477
        %v5479 = vrot.slane %v5217, %v5478
        %v5480 = vcombine.high %v5248, %v5248
        %v5482 = vunpack.c.l.s4 1983009808
        %v5483 = vunpack.c.0.s8 %v5482
        %v5484 = vlaneseq
        %v5485 = vshrl.u32 %v5484, 7
        %v5486 = vsub.s32 %v5483, %v5485
        %v5487 = vrot.slane %v5248, %v5486
        %v5489 = vunpack.c.l.s4 1983009808
        %v5490 = vunpack.c.0.s8 %v5489
        %v5491 = vlaneseq
        %v5492 = vshrl.u32 %v5491, 7
        %v5493 = vsub.s32 %v5490, %v5492
        %v5494 = vrot.slane %v5480, %v5493
        %v5495 = vcombine.high %v5487, %v5487
        %v5496 = vcombine.high %v5494, %v5494
        %v5498 = vunpack.c.l.s4 1983009808
        %v5499 = vunpack.c.0.s8 %v5498
        %v5500 = vlaneseq
        %v5501 = vshrl.u32 %v5500, 7
        %v5502 = vsub.s32 %v5499, %v5501
        %v5503 = vrot.slane %v5249, %v5502
        %v5504 = vcombine.high %v5280, %v5280
        %v5506 = vunpack.c.l.s4 1983009808
        %v5507 = vunpack.c.0.s8 %v5506
        %v5508 = vlaneseq
        %v5509 = vshrl.u32 %v5508, 7
        %v5510 = vsub.s32 %v5507, %v5509
        %v5511 = vrot.slane %v5280, %v5510
        %v5513 = vunpack.c.l.s4 1983009808
        %v5514 = vunpack.c.0.s8 %v5513
        %v5515 = vlaneseq
        %v5516 = vshrl.u32 %v5515, 7
        %v5517 = vsub.s32 %v5514, %v5516
        %v5518 = vrot.slane %v5504, %v5517
        %v5519 = vcombine.high %v5511, %v5511
        %v5520 = vcombine.high %v5518, %v5518
        %v5522 = vunpack.c.l.s4 1983009808
        %v5523 = vunpack.c.0.s8 %v5522
        %v5524 = vlaneseq
        %v5525 = vshrl.u32 %v5524, 7
        %v5526 = vsub.s32 %v5523, %v5525
        %v5527 = vrot.slane %v5281, %v5526
        %v5528 = vcombine.high %v5312, %v5312
        %v5530 = vunpack.c.l.s4 1983009808
        %v5531 = vunpack.c.0.s8 %v5530
        %v5532 = vlaneseq
        %v5533 = vshrl.u32 %v5532, 7
        %v5534 = vsub.s32 %v5531, %v5533
        %v5535 = vrot.slane %v5312, %v5534
        %v5537 = vunpack.c.l.s4 1983009808
        %v5538 = vunpack.c.0.s8 %v5537
        %v5539 = vlaneseq
        %v5540 = vshrl.u32 %v5539, 7
        %v5541 = vsub.s32 %v5538, %v5540
        %v5542 = vrot.slane %v5528, %v5541
        %v5543 = vcombine.high %v5535, %v5535
        %v5544 = vcombine.high %v5542, %v5542
        %v5546 = vunpack.c.l.s4 1983009808
        %v5547 = vunpack.c.0.s8 %v5546
        %v5548 = vlaneseq
        %v5549 = vshrl.u32 %v5548, 7
        %v5550 = vsub.s32 %v5547, %v5549
        %v5551 = vrot.slane %v5313, %v5550
        %v5552 = vcombine.high %v5344, %v5344
        %v5554 = vunpack.c.l.s4 1983009808
        %v5555 = vunpack.c.0.s8 %v5554
        %v5556 = vlaneseq
        %v5557 = vshrl.u32 %v5556, 7
        %v5558 = vsub.s32 %v5555, %v5557
        %v5559 = vrot.slane %v5344, %v5558
        %v5561 = vunpack.c.l.s4 1983009808
        %v5562 = vunpack.c.0.s8 %v5561
        %v5563 = vlaneseq
        %v5564 = vshrl.u32 %v5563, 7
        %v5565 = vsub.s32 %v5562, %v5564
        %v5566 = vrot.slane %v5552, %v5565
        %v5567 = vcombine.high %v5559, %v5559
        %v5568 = vcombine.high %v5566, %v5566
        %v5570 = vunpack.c.l.s4 1983009808
        %v5571 = vunpack.c.0.s8 %v5570
        %v5572 = vlaneseq
        %v5573 = vshrl.u32 %v5572, 7
        %v5574 = vsub.s32 %v5571, %v5573
        %v5575 = vrot.slane %v5345, %v5574
        %v5576 = vcombine.high %v5376, %v5376
        %v5578 = vunpack.c.l.s4 1983009808
        %v5579 = vunpack.c.0.s8 %v5578
        %v5580 = vlaneseq
        %v5581 = vshrl.u32 %v5580, 7
        %v5582 = vsub.s32 %v5579, %v5581
        %v5583 = vrot.slane %v5376, %v5582
        %v5585 = vunpack.c.l.s4 1983009808
        %v5586 = vunpack.c.0.s8 %v5585
        %v5587 = vlaneseq
        %v5588 = vshrl.u32 %v5587, 7
        %v5589 = vsub.s32 %v5586, %v5588
        %v5590 = vrot.slane %v5576, %v5589
        %v5591 = vcombine.high %v5583, %v5583
        %v5592 = vcombine.high %v5590, %v5590
        %v5594 = vunpack.c.l.s4 1983009808
        %v5595 = vunpack.c.0.s8 %v5594
        %v5596 = vlaneseq
        %v5597 = vshrl.u32 %v5596, 7
        %v5598 = vsub.s32 %v5595, %v5597
        %v5599 = vrot.slane %v5377, %v5598
        %v5600 = vcombine.low %v5415, %v5423
        %v5601 = vcombine.low %v5422, %v5424
        %v5603 = vunpack.c.l.s4 1983009808
        %v5604 = vunpack.c.0.s8 %v5603
        %v5605 = vlaneseq
        %v5606 = vshrl.u32 %v5605, 7
        %v5607 = vsub.s32 %v5604, %v5606
        %v5608 = vrot.slane %v5600, %v5607
        %v5610 = vunpack.c.l.s4 1983009808
        %v5611 = vunpack.c.0.s8 %v5610
        %v5612 = vlaneseq
        %v5613 = vshrl.u32 %v5612, 7
        %v5614 = vsub.s32 %v5611, %v5613
        %v5615 = vrot.slane %v5601, %v5614
        %v5616 = vcombine.low %v5608, %v5615
        %v5617 = vcombine.low %v5431, %v5439
        %v5618 = vcombine.low %v5447, %v5446
        %v5620 = vunpack.c.l.s4 1983009808
        %v5621 = vunpack.c.0.s8 %v5620
        %v5622 = vlaneseq
        %v5623 = vshrl.u32 %v5622, 7
        %v5624 = vsub.s32 %v5621, %v5623
        %v5625 = vrot.slane %v5617, %v5624
        %v5627 = vunpack.c.l.s4 1983009808
        %v5628 = vunpack.c.0.s8 %v5627
        %v5629 = vlaneseq
        %v5630 = vshrl.u32 %v5629, 7
        %v5631 = vsub.s32 %v5628, %v5630
        %v5632 = vrot.slane %v5618, %v5631
        %v5633 = vcombine.low %v5625, %v5632
        %v5634 = vcombine.low %v5448, %v5455
        %v5635 = vcombine.low %v5463, %v5471
        %v5637 = vunpack.c.l.s4 1983009808
        %v5638 = vunpack.c.0.s8 %v5637
        %v5639 = vlaneseq
        %v5640 = vshrl.u32 %v5639, 7
        %v5641 = vsub.s32 %v5638, %v5640
        %v5642 = vrot.slane %v5634, %v5641
        %v5644 = vunpack.c.l.s4 1983009808
        %v5645 = vunpack.c.0.s8 %v5644
        %v5646 = vlaneseq
        %v5647 = vshrl.u32 %v5646, 7
        %v5648 = vsub.s32 %v5645, %v5647
        %v5649 = vrot.slane %v5635, %v5648
        %v5650 = vcombine.low %v5642, %v5649
        %v5651 = vcombine.low %v5470, %v5472
        %v5652 = vcombine.low %v5479, %v5487
        %v5654 = vunpack.c.l.s4 1983009808
        %v5655 = vunpack.c.0.s8 %v5654
        %v5656 = vlaneseq
        %v5657 = vshrl.u32 %v5656, 7
        %v5658 = vsub.s32 %v5655, %v5657
        %v5659 = vrot.slane %v5651, %v5658
        %v5661 = vunpack.c.l.s4 1983009808
        %v5662 = vunpack.c.0.s8 %v5661
        %v5663 = vlaneseq
        %v5664 = vshrl.u32 %v5663, 7
        %v5665 = vsub.s32 %v5662, %v5664
        %v5666 = vrot.slane %v5652, %v5665
        %v5667 = vcombine.low %v5659, %v5666
        %v5668 = vcombine.low %v5495, %v5494
        %v5669 = vcombine.low %v5496, %v5503
        %v5671 = vunpack.c.l.s4 1983009808
        %v5672 = vunpack.c.0.s8 %v5671
        %v5673 = vlaneseq
        %v5674 = vshrl.u32 %v5673, 7
        %v5675 = vsub.s32 %v5672, %v5674
        %v5676 = vrot.slane %v5668, %v5675
        %v5678 = vunpack.c.l.s4 1983009808
        %v5679 = vunpack.c.0.s8 %v5678
        %v5680 = vlaneseq
        %v5681 = vshrl.u32 %v5680, 7
        %v5682 = vsub.s32 %v5679, %v5681
        %v5683 = vrot.slane %v5669, %v5682
        %v5684 = vcombine.low %v5676, %v5683
        %v5685 = vcombine.low %v5511, %v5519
        %v5686 = vcombine.low %v5518, %v5520
        %v5688 = vunpack.c.l.s4 1983009808
        %v5689 = vunpack.c.0.s8 %v5688
        %v5690 = vlaneseq
        %v5691 = vshrl.u32 %v5690, 7
        %v5692 = vsub.s32 %v5689, %v5691
        %v5693 = vrot.slane %v5685, %v5692
        %v5695 = vunpack.c.l.s4 1983009808
        %v5696 = vunpack.c.0.s8 %v5695
        %v5697 = vlaneseq
        %v5698 = vshrl.u32 %v5697, 7
        %v5699 = vsub.s32 %v5696, %v5698
        %v5700 = vrot.slane %v5686, %v5699
        %v5701 = vcombine.low %v5693, %v5700
        %v5702 = vcombine.low %v5527, %v5535
        %v5703 = vcombine.low %v5543, %v5542
        %v5705 = vunpack.c.l.s4 1983009808
        %v5706 = vunpack.c.0.s8 %v5705
        %v5707 = vlaneseq
        %v5708 = vshrl.u32 %v5707, 7
        %v5709 = vsub.s32 %v5706, %v5708
        %v5710 = vrot.slane %v5702, %v5709
        %v5712 = vunpack.c.l.s4 1983009808
        %v5713 = vunpack.c.0.s8 %v5712
        %v5714 = vlaneseq
        %v5715 = vshrl.u32 %v5714, 7
        %v5716 = vsub.s32 %v5713, %v5715
        %v5717 = vrot.slane %v5703, %v5716
        %v5718 = vcombine.low %v5710, %v5717
        %v5719 = vcombine.low %v5544, %v5551
        %v5720 = vcombine.low %v5559, %v5567
        %v5722 = vunpack.c.l.s4 1983009808
        %v5723 = vunpack.c.0.s8 %v5722
        %v5724 = vlaneseq
        %v5725 = vshrl.u32 %v5724, 7
        %v5726 = vsub.s32 %v5723, %v5725
        %v5727 = vrot.slane %v5719, %v5726
        %v5729 = vunpack.c.l.s4 1983009808
        %v5730 = vunpack.c.0.s8 %v5729
        %v5731 = vlaneseq
        %v5732 = vshrl.u32 %v5731, 7
        %v5733 = vsub.s32 %v5730, %v5732
        %v5734 = vrot.slane %v5720, %v5733
        %v5735 = vcombine.low %v5727, %v5734
        %v5736 = vcombine.low %v5566, %v5568
        %v5737 = vcombine.low %v5575, %v5583
        %v5739 = vunpack.c.l.s4 1983009808
        %v5740 = vunpack.c.0.s8 %v5739
        %v5741 = vlaneseq
        %v5742 = vshrl.u32 %v5741, 7
        %v5743 = vsub.s32 %v5740, %v5742
        %v5744 = vrot.slane %v5736, %v5743
        %v5746 = vunpack.c.l.s4 1983009808
        %v5747 = vunpack.c.0.s8 %v5746
        %v5748 = vlaneseq
        %v5749 = vshrl.u32 %v5748, 7
        %v5750 = vsub.s32 %v5747, %v5749
        %v5751 = vrot.slane %v5737, %v5750
        %v5752 = vcombine.low %v5744, %v5751
        %v5753 = vcombine.low %v5591, %v5590
        %v5754 = vcombine.low %v5592, %v5599
        %v5756 = vunpack.c.l.s4 1983009808
        %v5757 = vunpack.c.0.s8 %v5756
        %v5758 = vlaneseq
        %v5759 = vshrl.u32 %v5758, 7
        %v5760 = vsub.s32 %v5757, %v5759
        %v5761 = vrot.slane %v5753, %v5760
        %v5763 = vunpack.c.l.s4 1983009808
        %v5764 = vunpack.c.0.s8 %v5763
        %v5765 = vlaneseq
        %v5766 = vshrl.u32 %v5765, 7
        %v5767 = vsub.s32 %v5764, %v5766
        %v5768 = vrot.slane %v5754, %v5767
        %v5769 = vcombine.low %v5761, %v5768
        %v5770 = vsel %vm4404, %v5616, 0
        %v5772 = vsel %vm4404, %v5633, 0
        %v5774 = vsel %vm4404, %v5650, 0
        %v5776 = vsel %vm4404, %v5667, 0
        %v5778 = vsel %vm4404, %v5684, 0
        %v5780 = vsel %vm4404, %v5701, 0
        %v5782 = vsel %vm4404, %v5718, 0
        %v5784 = vsel %vm4404, %v5735, 0
        %v5786 = vsel %vm4404, %v5752, 0
        %v5788 = vsel %vm4404, %v5769, 0
        %v5791 = vsel %vm4404, %v5132, 0
        %v5794 = vsel %vm4404, %v5133, 0
        %5796 = vmatprep.subr.mxu0 0.0
        %5797 = vmatpush1.xpose.msra.mxu0 0.0
        %5798 = vmatprep.subr.mxu0 0.0
        %5799 = vmatpush1.xpose.msra.mxu0 0.0
        %5800 = vmatprep.subr.mxu0 0.0
        %5801 = vmatpush1.xpose.msra.mxu0 0.0
        %5802 = vmatprep.subr.mxu0 0.0
        %5803 = vmatpush1.xpose.msra.mxu0 0.0
        %5804 = vmatprep.subr.mxu0 0.0
        %5805 = vmatpush1.xpose.msra.mxu0 0.0
        %5806 = vmatprep.subr.mxu0 0.0
        %5807 = vmatpush1.xpose.msra.mxu0 0.0
        %5808 = vmatprep.subr.mxu0 0.0
        %5809 = vmatpush1.xpose.msra.mxu0 0.0
        %5810 = vmatprep.subr.mxu0 0.0
        %5811 = vmatpush1.xpose.msra.mxu0 0.0
        %5812 = vmatprep.subr.mxu0 0.0
        %5813 = vmatpush1.xpose.msra.mxu0 0.0
        %5814 = vmatprep.subr.mxu0 0.0
        %5815 = vmatpush1.xpose.msra.mxu0 0.0
        %5816 = vmatprep.subr.mxu0 0.0
        %5817 = vmatpush1.xpose.msra.mxu0 0.0
        %5818 = vmatprep.subr.mxu0 0.0
        %5819 = vmatpush1.xpose.msra.mxu0 0.0
        %5820 = vmatprep.subr.mxu0 0.0
        %5821 = vmatpush1.xpose.msra.mxu0 0.0
        %5822 = vmatprep.subr.mxu0 0.0
        %5823 = vmatpush1.xpose.msra.mxu0 0.0
        %5824 = vmatprep.subr.mxu0 0.0
        %5825 = vmatpush1.xpose.msra.mxu0 %v5794
        %5826 = vmatprep.subr.mxu0 0.0
        %5827 = vmatpush1.xpose.msra.mxu0 %v5791
        %5828 = vmatprep.subr.mxu0 0.0
        %5829 = vmatpush2.xpose.msra.mxu0 0.0
        %5830 = vmatprep.subr.mxu0 0.0
        %5831 = vmatpush2.xpose.msra.mxu0 0.0
        %5832 = vmatprep.subr.mxu0 0.0
        %5833 = vmatpush2.xpose.msra.mxu0 0.0
        %5834 = vmatprep.subr.mxu0 0.0
        %5835 = vmatpush2.xpose.msra.mxu0 0.0
        %5836 = vmatprep.subr.mxu0 0.0
        %5837 = vmatpush2.xpose.msra.mxu0 0.0
        %5838 = vmatprep.subr.mxu0 0.0
        %5839 = vmatpush2.xpose.msra.mxu0 0.0
        %5840 = vmatprep.subr.mxu0 0.0
        %5841 = vmatpush2.xpose.msra.mxu0 0.0
        %5842 = vmatprep.subr.mxu0 0.0
        %5843 = vmatpush2.xpose.msra.mxu0 0.0
        %5844 = vmatprep.subr.mxu0 0.0
        %5845 = vmatpush2.xpose.msra.mxu0 0.0
        %5846 = vmatprep.subr.mxu0 0.0
        %5847 = vmatpush2.xpose.msra.mxu0 0.0
        %5848 = vmatprep.subr.mxu0 0.0
        %5849 = vmatpush2.xpose.msra.mxu0 0.0
        %5850 = vmatprep.subr.mxu0 0.0
        %5851 = vmatpush2.xpose.msra.mxu0 0.0
        %5852 = vmatprep.subr.mxu0 0.0
        %5853 = vmatpush2.xpose.msra.mxu0 0.0
        %5854 = vmatprep.subr.mxu0 0.0
        %5855 = vmatpush2.xpose.msra.mxu0 0.0
        %5856 = vmatprep.subr.mxu0 0.0
        %5857 = vmatpush2.xpose.msra.mxu0 0.0
        %5858 = vmatprep.subr.mxu0 0.0
        %5859 = vmatpush2.xpose.msra.mxu0 0.0
        %5860 = vmatprep.mubr.f32.mxu0 0.0
        %5861 = vmatmul.mubr.f32.gmra.mxu0 %v5770
        %v5862 = vpop.f32.mrf.mxu0
        %v5863 = vadd.f32 0.0, %v5862
        %v5864 = vpop.f32.mrf.mxu0
        %5865 = vmatprep.mubr.f32.mxu0 0.0
        %5866 = vmatmul.mubr.f32.gmra.mxu0 %v5772
        %v5867 = vpop.f32.mrf.mxu0
        %v5868 = vadd.f32 0.0, %v5867
        %v5869 = vpop.f32.mrf.mxu0
        %5870 = vmatprep.mubr.f32.mxu0 0.0
        %5871 = vmatmul.mubr.f32.gmra.mxu0 %v5774
        %v5872 = vpop.f32.mrf.mxu0
        %v5873 = vadd.f32 0.0, %v5872
        %v5874 = vpop.f32.mrf.mxu0
        %5875 = vmatprep.mubr.f32.mxu0 0.0
        %5876 = vmatmul.mubr.f32.gmra.mxu0 %v5776
        %v5877 = vpop.f32.mrf.mxu0
        %v5878 = vadd.f32 0.0, %v5877
        %v5879 = vpop.f32.mrf.mxu0
        %5880 = vmatprep.mubr.f32.mxu0 0.0
        %5881 = vmatmul.mubr.f32.gmra.mxu0 %v5778
        %v5882 = vpop.f32.mrf.mxu0
        %v5883 = vadd.f32 0.0, %v5882
        %v5884 = vpop.f32.mrf.mxu0
        %5885 = vmatprep.mubr.f32.mxu0 0.0
        %5886 = vmatmul.mubr.f32.gmra.mxu0 %v5780
        %v5887 = vpop.f32.mrf.mxu0
        %v5888 = vadd.f32 0.0, %v5887
        %v5889 = vpop.f32.mrf.mxu0
        %5890 = vmatprep.mubr.f32.mxu0 0.0
        %5891 = vmatmul.mubr.f32.gmra.mxu0 %v5782
        %v5892 = vpop.f32.mrf.mxu0
        %v5893 = vadd.f32 0.0, %v5892
        %v5894 = vpop.f32.mrf.mxu0
        %5895 = vmatprep.mubr.f32.mxu0 0.0
        %5896 = vmatmul.mubr.f32.gmra.mxu0 %v5784
        %v5897 = vpop.f32.mrf.mxu0
        %v5898 = vadd.f32 0.0, %v5897
        %v5899 = vpop.f32.mrf.mxu0
        %5900 = vmatprep.mubr.f32.mxu0 0.0
        %5901 = vmatmul.mubr.f32.gmra.mxu0 %v5786
        %v5902 = vpop.f32.mrf.mxu0
        %v5903 = vadd.f32 0.0, %v5902
        %v5904 = vpop.f32.mrf.mxu0
        %5905 = vmatprep.mubr.f32.mxu0 0.0
        %5906 = vmatmul.mubr.f32.gmra.mxu0 %v5788
        %v5907 = vpop.f32.mrf.mxu0
        %v5908 = vadd.f32 0.0, %v5907
        %v5909 = vpop.f32.mrf.mxu0
        %5910 = vdwg.mxu0
        %v5921 = vcombine.high %v5863, %v5863
        %v5923 = vunpack.c.l.s4 1983009808
        %v5924 = vunpack.c.0.s8 %v5923
        %v5925 = vlaneseq
        %v5926 = vshrl.u32 %v5925, 7
        %v5927 = vsub.s32 %v5924, %v5926
        %v5928 = vrot.slane %v5863, %v5927
        %v5930 = vunpack.c.l.s4 1983009808
        %v5931 = vunpack.c.0.s8 %v5930
        %v5932 = vlaneseq
        %v5933 = vshrl.u32 %v5932, 7
        %v5934 = vsub.s32 %v5931, %v5933
        %v5935 = vrot.slane %v5921, %v5934
        %v5936 = vcombine.high %v5928, %v5928
        %v5937 = vcombine.high %v5935, %v5935
        %v5938 = vcombine.high %v5868, %v5868
        %v5940 = vunpack.c.l.s4 1983009808
        %v5941 = vunpack.c.0.s8 %v5940
        %v5942 = vlaneseq
        %v5943 = vshrl.u32 %v5942, 7
        %v5944 = vsub.s32 %v5941, %v5943
        %v5945 = vrot.slane %v5868, %v5944
        %v5947 = vunpack.c.l.s4 1983009808
        %v5948 = vunpack.c.0.s8 %v5947
        %v5949 = vlaneseq
        %v5950 = vshrl.u32 %v5949, 7
        %v5951 = vsub.s32 %v5948, %v5950
        %v5952 = vrot.slane %v5938, %v5951
        %v5953 = vcombine.high %v5945, %v5945
        %v5954 = vcombine.high %v5952, %v5952
        %v5955 = vcombine.high %v5873, %v5873
        %v5957 = vunpack.c.l.s4 1983009808
        %v5958 = vunpack.c.0.s8 %v5957
        %v5959 = vlaneseq
        %v5960 = vshrl.u32 %v5959, 7
        %v5961 = vsub.s32 %v5958, %v5960
        %v5962 = vrot.slane %v5873, %v5961
        %v5964 = vunpack.c.l.s4 1983009808
        %v5965 = vunpack.c.0.s8 %v5964
        %v5966 = vlaneseq
        %v5967 = vshrl.u32 %v5966, 7
        %v5968 = vsub.s32 %v5965, %v5967
        %v5969 = vrot.slane %v5955, %v5968
        %v5970 = vcombine.high %v5962, %v5962
        %v5971 = vcombine.high %v5969, %v5969
        %v5972 = vcombine.high %v5878, %v5878
        %v5974 = vunpack.c.l.s4 1983009808
        %v5975 = vunpack.c.0.s8 %v5974
        %v5976 = vlaneseq
        %v5977 = vshrl.u32 %v5976, 7
        %v5978 = vsub.s32 %v5975, %v5977
        %v5979 = vrot.slane %v5878, %v5978
        %v5981 = vunpack.c.l.s4 1983009808
        %v5982 = vunpack.c.0.s8 %v5981
        %v5983 = vlaneseq
        %v5984 = vshrl.u32 %v5983, 7
        %v5985 = vsub.s32 %v5982, %v5984
        %v5986 = vrot.slane %v5972, %v5985
        %v5987 = vcombine.high %v5979, %v5979
        %v5988 = vcombine.high %v5986, %v5986
        %v5989 = vcombine.high %v5883, %v5883
        %v5991 = vunpack.c.l.s4 1983009808
        %v5992 = vunpack.c.0.s8 %v5991
        %v5993 = vlaneseq
        %v5994 = vshrl.u32 %v5993, 7
        %v5995 = vsub.s32 %v5992, %v5994
        %v5996 = vrot.slane %v5883, %v5995
        %v5998 = vunpack.c.l.s4 1983009808
        %v5999 = vunpack.c.0.s8 %v5998
        %v6000 = vlaneseq
        %v6001 = vshrl.u32 %v6000, 7
        %v6002 = vsub.s32 %v5999, %v6001
        %v6003 = vrot.slane %v5989, %v6002
        %v6004 = vcombine.high %v5996, %v5996
        %v6005 = vcombine.high %v6003, %v6003
        %v6006 = vcombine.high %v5888, %v5888
        %v6008 = vunpack.c.l.s4 1983009808
        %v6009 = vunpack.c.0.s8 %v6008
        %v6010 = vlaneseq
        %v6011 = vshrl.u32 %v6010, 7
        %v6012 = vsub.s32 %v6009, %v6011
        %v6013 = vrot.slane %v5888, %v6012
        %v6015 = vunpack.c.l.s4 1983009808
        %v6016 = vunpack.c.0.s8 %v6015
        %v6017 = vlaneseq
        %v6018 = vshrl.u32 %v6017, 7
        %v6019 = vsub.s32 %v6016, %v6018
        %v6020 = vrot.slane %v6006, %v6019
        %v6021 = vcombine.high %v6013, %v6013
        %v6022 = vcombine.high %v6020, %v6020
        %v6023 = vcombine.high %v5893, %v5893
        %v6025 = vunpack.c.l.s4 1983009808
        %v6026 = vunpack.c.0.s8 %v6025
        %v6027 = vlaneseq
        %v6028 = vshrl.u32 %v6027, 7
        %v6029 = vsub.s32 %v6026, %v6028
        %v6030 = vrot.slane %v5893, %v6029
        %v6032 = vunpack.c.l.s4 1983009808
        %v6033 = vunpack.c.0.s8 %v6032
        %v6034 = vlaneseq
        %v6035 = vshrl.u32 %v6034, 7
        %v6036 = vsub.s32 %v6033, %v6035
        %v6037 = vrot.slane %v6023, %v6036
        %v6038 = vcombine.high %v6030, %v6030
        %v6039 = vcombine.high %v6037, %v6037
        %v6040 = vcombine.high %v5898, %v5898
        %v6042 = vunpack.c.l.s4 1983009808
        %v6043 = vunpack.c.0.s8 %v6042
        %v6044 = vlaneseq
        %v6045 = vshrl.u32 %v6044, 7
        %v6046 = vsub.s32 %v6043, %v6045
        %v6047 = vrot.slane %v5898, %v6046
        %v6049 = vunpack.c.l.s4 1983009808
        %v6050 = vunpack.c.0.s8 %v6049
        %v6051 = vlaneseq
        %v6052 = vshrl.u32 %v6051, 7
        %v6053 = vsub.s32 %v6050, %v6052
        %v6054 = vrot.slane %v6040, %v6053
        %v6055 = vcombine.high %v6047, %v6047
        %v6056 = vcombine.high %v6054, %v6054
        %v6057 = vcombine.high %v5903, %v5903
        %v6059 = vunpack.c.l.s4 1983009808
        %v6060 = vunpack.c.0.s8 %v6059
        %v6061 = vlaneseq
        %v6062 = vshrl.u32 %v6061, 7
        %v6063 = vsub.s32 %v6060, %v6062
        %v6064 = vrot.slane %v5903, %v6063
        %v6066 = vunpack.c.l.s4 1983009808
        %v6067 = vunpack.c.0.s8 %v6066
        %v6068 = vlaneseq
        %v6069 = vshrl.u32 %v6068, 7
        %v6070 = vsub.s32 %v6067, %v6069
        %v6071 = vrot.slane %v6057, %v6070
        %v6072 = vcombine.high %v6064, %v6064
        %v6073 = vcombine.high %v6071, %v6071
        %v6074 = vcombine.high %v5908, %v5908
        %v6076 = vunpack.c.l.s4 1983009808
        %v6077 = vunpack.c.0.s8 %v6076
        %v6078 = vlaneseq
        %v6079 = vshrl.u32 %v6078, 7
        %v6080 = vsub.s32 %v6077, %v6079
        %v6081 = vrot.slane %v5908, %v6080
        %v6083 = vunpack.c.l.s4 1983009808
        %v6084 = vunpack.c.0.s8 %v6083
        %v6085 = vlaneseq
        %v6086 = vshrl.u32 %v6085, 7
        %v6087 = vsub.s32 %v6084, %v6086
        %v6088 = vrot.slane %v6074, %v6087
        %v6089 = vcombine.high %v6081, %v6081
        %v6090 = vcombine.high %v6088, %v6088
        %v6091 = vcombine.low %v5928, %v5936
        %v6092 = vcombine.low %v5935, %v5937
        %v6094 = vunpack.c.l.s4 1983009808
        %v6095 = vunpack.c.0.s8 %v6094
        %v6096 = vlaneseq
        %v6097 = vshrl.u32 %v6096, 7
        %v6098 = vsub.s32 %v6095, %v6097
        %v6099 = vrot.slane %v6091, %v6098
        %v6101 = vunpack.c.l.s4 1983009808
        %v6102 = vunpack.c.0.s8 %v6101
        %v6103 = vlaneseq
        %v6104 = vshrl.u32 %v6103, 7
        %v6105 = vsub.s32 %v6102, %v6104
        %v6106 = vrot.slane %v6092, %v6105
        %v6107 = vcombine.low %v6099, %v6106
        %v6109 = vunpack.c.l.s4 1983009808
        %v6110 = vunpack.c.0.s8 %v6109
        %v6111 = vlaneseq
        %v6112 = vshrl.u32 %v6111, 7
        %v6113 = vsub.s32 %v6110, %v6112
        %v6114 = vrot.slane %v5945, %v6113
        %v6115 = vcombine.low %v5953, %v5952
        %v6116 = vcombine.low %v5954, %v5962
        %v6118 = vunpack.c.l.s4 1983009808
        %v6119 = vunpack.c.0.s8 %v6118
        %v6120 = vlaneseq
        %v6121 = vshrl.u32 %v6120, 7
        %v6122 = vsub.s32 %v6119, %v6121
        %v6123 = vrot.slane %v6115, %v6122
        %v6125 = vunpack.c.l.s4 1983009808
        %v6126 = vunpack.c.0.s8 %v6125
        %v6127 = vlaneseq
        %v6128 = vshrl.u32 %v6127, 7
        %v6129 = vsub.s32 %v6126, %v6128
        %v6130 = vrot.slane %v6116, %v6129
        %v6131 = vcombine.low %v6123, %v6130
        %v6133 = vunpack.c.l.s4 1983009808
        %v6134 = vunpack.c.0.s8 %v6133
        %v6135 = vlaneseq
        %v6136 = vshrl.u32 %v6135, 7
        %v6137 = vsub.s32 %v6134, %v6136
        %v6138 = vrot.slane %v5970, %v6137
        %v6139 = vcombine.low %v5969, %v5971
        %v6140 = vcombine.low %v5979, %v5987
        %v6142 = vunpack.c.l.s4 1983009808
        %v6143 = vunpack.c.0.s8 %v6142
        %v6144 = vlaneseq
        %v6145 = vshrl.u32 %v6144, 7
        %v6146 = vsub.s32 %v6143, %v6145
        %v6147 = vrot.slane %v6139, %v6146
        %v6149 = vunpack.c.l.s4 1983009808
        %v6150 = vunpack.c.0.s8 %v6149
        %v6151 = vlaneseq
        %v6152 = vshrl.u32 %v6151, 7
        %v6153 = vsub.s32 %v6150, %v6152
        %v6154 = vrot.slane %v6140, %v6153
        %v6155 = vcombine.low %v6147, %v6154
        %v6157 = vunpack.c.l.s4 1983009808
        %v6158 = vunpack.c.0.s8 %v6157
        %v6159 = vlaneseq
        %v6160 = vshrl.u32 %v6159, 7
        %v6161 = vsub.s32 %v6158, %v6160
        %v6162 = vrot.slane %v5986, %v6161
        %v6163 = vcombine.low %v5988, %v5996
        %v6164 = vcombine.low %v6004, %v6003
        %v6166 = vunpack.c.l.s4 1983009808
        %v6167 = vunpack.c.0.s8 %v6166
        %v6168 = vlaneseq
        %v6169 = vshrl.u32 %v6168, 7
        %v6170 = vsub.s32 %v6167, %v6169
        %v6171 = vrot.slane %v6163, %v6170
        %v6173 = vunpack.c.l.s4 1983009808
        %v6174 = vunpack.c.0.s8 %v6173
        %v6175 = vlaneseq
        %v6176 = vshrl.u32 %v6175, 7
        %v6177 = vsub.s32 %v6174, %v6176
        %v6178 = vrot.slane %v6164, %v6177
        %v6179 = vcombine.low %v6171, %v6178
        %v6181 = vunpack.c.l.s4 1983009808
        %v6182 = vunpack.c.0.s8 %v6181
        %v6183 = vlaneseq
        %v6184 = vshrl.u32 %v6183, 7
        %v6185 = vsub.s32 %v6182, %v6184
        %v6186 = vrot.slane %v6005, %v6185
        %v6187 = vcombine.low %v6013, %v6021
        %v6188 = vcombine.low %v6020, %v6022
        %v6190 = vunpack.c.l.s4 1983009808
        %v6191 = vunpack.c.0.s8 %v6190
        %v6192 = vlaneseq
        %v6193 = vshrl.u32 %v6192, 7
        %v6194 = vsub.s32 %v6191, %v6193
        %v6195 = vrot.slane %v6187, %v6194
        %v6197 = vunpack.c.l.s4 1983009808
        %v6198 = vunpack.c.0.s8 %v6197
        %v6199 = vlaneseq
        %v6200 = vshrl.u32 %v6199, 7
        %v6201 = vsub.s32 %v6198, %v6200
        %v6202 = vrot.slane %v6188, %v6201
        %v6203 = vcombine.low %v6195, %v6202
        %v6205 = vunpack.c.l.s4 1983009808
        %v6206 = vunpack.c.0.s8 %v6205
        %v6207 = vlaneseq
        %v6208 = vshrl.u32 %v6207, 7
        %v6209 = vsub.s32 %v6206, %v6208
        %v6210 = vrot.slane %v6030, %v6209
        %v6211 = vcombine.low %v6038, %v6037
        %v6212 = vcombine.low %v6039, %v6047
        %v6214 = vunpack.c.l.s4 1983009808
        %v6215 = vunpack.c.0.s8 %v6214
        %v6216 = vlaneseq
        %v6217 = vshrl.u32 %v6216, 7
        %v6218 = vsub.s32 %v6215, %v6217
        %v6219 = vrot.slane %v6211, %v6218
        %v6221 = vunpack.c.l.s4 1983009808
        %v6222 = vunpack.c.0.s8 %v6221
        %v6223 = vlaneseq
        %v6224 = vshrl.u32 %v6223, 7
        %v6225 = vsub.s32 %v6222, %v6224
        %v6226 = vrot.slane %v6212, %v6225
        %v6227 = vcombine.low %v6219, %v6226
        %v6229 = vunpack.c.l.s4 1983009808
        %v6230 = vunpack.c.0.s8 %v6229
        %v6231 = vlaneseq
        %v6232 = vshrl.u32 %v6231, 7
        %v6233 = vsub.s32 %v6230, %v6232
        %v6234 = vrot.slane %v6055, %v6233
        %v6235 = vcombine.low %v6054, %v6056
        %v6236 = vcombine.low %v6064, %v6072
        %v6238 = vunpack.c.l.s4 1983009808
        %v6239 = vunpack.c.0.s8 %v6238
        %v6240 = vlaneseq
        %v6241 = vshrl.u32 %v6240, 7
        %v6242 = vsub.s32 %v6239, %v6241
        %v6243 = vrot.slane %v6235, %v6242
        %v6245 = vunpack.c.l.s4 1983009808
        %v6246 = vunpack.c.0.s8 %v6245
        %v6247 = vlaneseq
        %v6248 = vshrl.u32 %v6247, 7
        %v6249 = vsub.s32 %v6246, %v6248
        %v6250 = vrot.slane %v6236, %v6249
        %v6251 = vcombine.low %v6243, %v6250
        %v6253 = vunpack.c.l.s4 1983009808
        %v6254 = vunpack.c.0.s8 %v6253
        %v6255 = vlaneseq
        %v6256 = vshrl.u32 %v6255, 7
        %v6257 = vsub.s32 %v6254, %v6256
        %v6258 = vrot.slane %v6071, %v6257
        %v6259 = vcombine.low %v6073, %v6081
        %v6260 = vcombine.low %v6089, %v6088
        %v6262 = vunpack.c.l.s4 1983009808
        %v6263 = vunpack.c.0.s8 %v6262
        %v6264 = vlaneseq
        %v6265 = vshrl.u32 %v6264, 7
        %v6266 = vsub.s32 %v6263, %v6265
        %v6267 = vrot.slane %v6259, %v6266
        %v6269 = vunpack.c.l.s4 1983009808
        %v6270 = vunpack.c.0.s8 %v6269
        %v6271 = vlaneseq
        %v6272 = vshrl.u32 %v6271, 7
        %v6273 = vsub.s32 %v6270, %v6272
        %v6274 = vrot.slane %v6260, %v6273
        %v6275 = vcombine.low %v6267, %v6274
        %v6277 = vunpack.c.l.s4 1983009808
        %v6278 = vunpack.c.0.s8 %v6277
        %v6279 = vlaneseq
        %v6280 = vshrl.u32 %v6279, 7
        %v6281 = vsub.s32 %v6278, %v6280
        %v6282 = vrot.slane %v6090, %v6281
        %6299 = vxpose.xlu0.b32.start [1/16] %v6107, 128
        %6300 = vxpose.xlu0.b32.cont [2/16] %v6114, 128
        %6301 = vxpose.xlu0.b32.cont [3/16] 0.0, 128
        %6302 = vxpose.xlu0.b32.cont [4/16] 0.0, 128
        %6303 = vxpose.xlu0.b32.cont [5/16] 0.0, 128
        %6304 = vxpose.xlu0.b32.cont [6/16] 0.0, 128
        %6305 = vxpose.xlu0.b32.cont [7/16] 0.0, 128
        %6306 = vxpose.xlu0.b32.cont [8/16] 0.0, 128
        %6307 = vxpose.xlu0.b32.cont [9/16] 0.0, 128
        %6308 = vxpose.xlu0.b32.cont [10/16] 0.0, 128
        %6309 = vxpose.xlu0.b32.cont [11/16] 0.0, 128
        %6310 = vxpose.xlu0.b32.cont [12/16] 0.0, 128
        %6311 = vxpose.xlu0.b32.cont [13/16] 0.0, 128
        %6312 = vxpose.xlu0.b32.cont [14/16] 0.0, 128
        %6313 = vxpose.xlu0.b32.cont [15/16] 0.0, 128
        %6314 = vxpose.xlu0.b32.end [16/16] 0.0, 128
        %v6315 = vpop.trf.xlu0
        %v6316 = vpop.trf.xlu0
        %v6317 = vpop.trf.xlu0
        %v6318 = vpop.trf.xlu0
        %v6319 = vpop.trf.xlu0
        %v6320 = vpop.trf.xlu0
        %v6321 = vpop.trf.xlu0
        %v6322 = vpop.trf.xlu0
        %v6323 = vpop.trf.xlu0
        %v6324 = vpop.trf.xlu0
        %v6325 = vpop.trf.xlu0
        %v6326 = vpop.trf.xlu0
        %v6327 = vpop.trf.xlu0
        %v6328 = vpop.trf.xlu0
        %v6329 = vpop.trf.xlu0
        %v6330 = vpop.trf.xlu0
        %6331 = vxpose.xlu0.b32.start [1/16] %v6131, 128
        %6332 = vxpose.xlu0.b32.cont [2/16] %v6138, 128
        %6333 = vxpose.xlu0.b32.cont [3/16] 0.0, 128
        %6334 = vxpose.xlu0.b32.cont [4/16] 0.0, 128
        %6335 = vxpose.xlu0.b32.cont [5/16] 0.0, 128
        %6336 = vxpose.xlu0.b32.cont [6/16] 0.0, 128
        %6337 = vxpose.xlu0.b32.cont [7/16] 0.0, 128
        %6338 = vxpose.xlu0.b32.cont [8/16] 0.0, 128
        %6339 = vxpose.xlu0.b32.cont [9/16] 0.0, 128
        %6340 = vxpose.xlu0.b32.cont [10/16] 0.0, 128
        %6341 = vxpose.xlu0.b32.cont [11/16] 0.0, 128
        %6342 = vxpose.xlu0.b32.cont [12/16] 0.0, 128
        %6343 = vxpose.xlu0.b32.cont [13/16] 0.0, 128
        %6344 = vxpose.xlu0.b32.cont [14/16] 0.0, 128
        %6345 = vxpose.xlu0.b32.cont [15/16] 0.0, 128
        %6346 = vxpose.xlu0.b32.end [16/16] 0.0, 128
        %v6347 = vpop.trf.xlu0
        %v6348 = vpop.trf.xlu0
        %v6349 = vpop.trf.xlu0
        %v6350 = vpop.trf.xlu0
        %v6351 = vpop.trf.xlu0
        %v6352 = vpop.trf.xlu0
        %v6353 = vpop.trf.xlu0
        %v6354 = vpop.trf.xlu0
        %v6355 = vpop.trf.xlu0
        %v6356 = vpop.trf.xlu0
        %v6357 = vpop.trf.xlu0
        %v6358 = vpop.trf.xlu0
        %v6359 = vpop.trf.xlu0
        %v6360 = vpop.trf.xlu0
        %v6361 = vpop.trf.xlu0
        %v6362 = vpop.trf.xlu0
        %6363 = vxpose.xlu0.b32.start [1/16] %v6155, 128
        %6364 = vxpose.xlu0.b32.cont [2/16] %v6162, 128
        %6365 = vxpose.xlu0.b32.cont [3/16] 0.0, 128
        %6366 = vxpose.xlu0.b32.cont [4/16] 0.0, 128
        %6367 = vxpose.xlu0.b32.cont [5/16] 0.0, 128
        %6368 = vxpose.xlu0.b32.cont [6/16] 0.0, 128
        %6369 = vxpose.xlu0.b32.cont [7/16] 0.0, 128
        %6370 = vxpose.xlu0.b32.cont [8/16] 0.0, 128
        %6371 = vxpose.xlu0.b32.cont [9/16] 0.0, 128
        %6372 = vxpose.xlu0.b32.cont [10/16] 0.0, 128
        %6373 = vxpose.xlu0.b32.cont [11/16] 0.0, 128
        %6374 = vxpose.xlu0.b32.cont [12/16] 0.0, 128
        %6375 = vxpose.xlu0.b32.cont [13/16] 0.0, 128
        %6376 = vxpose.xlu0.b32.cont [14/16] 0.0, 128
        %6377 = vxpose.xlu0.b32.cont [15/16] 0.0, 128
        %6378 = vxpose.xlu0.b32.end [16/16] 0.0, 128
        %v6379 = vpop.trf.xlu0
        %v6380 = vpop.trf.xlu0
        %v6381 = vpop.trf.xlu0
        %v6382 = vpop.trf.xlu0
        %v6383 = vpop.trf.xlu0
        %v6384 = vpop.trf.xlu0
        %v6385 = vpop.trf.xlu0
        %v6386 = vpop.trf.xlu0
        %v6387 = vpop.trf.xlu0
        %v6388 = vpop.trf.xlu0
        %v6389 = vpop.trf.xlu0
        %v6390 = vpop.trf.xlu0
        %v6391 = vpop.trf.xlu0
        %v6392 = vpop.trf.xlu0
        %v6393 = vpop.trf.xlu0
        %v6394 = vpop.trf.xlu0
        %6395 = vxpose.xlu0.b32.start [1/16] %v6179, 128
        %6396 = vxpose.xlu0.b32.cont [2/16] %v6186, 128
        %6397 = vxpose.xlu0.b32.cont [3/16] 0.0, 128
        %6398 = vxpose.xlu0.b32.cont [4/16] 0.0, 128
        %6399 = vxpose.xlu0.b32.cont [5/16] 0.0, 128
        %6400 = vxpose.xlu0.b32.cont [6/16] 0.0, 128
        %6401 = vxpose.xlu0.b32.cont [7/16] 0.0, 128
        %6402 = vxpose.xlu0.b32.cont [8/16] 0.0, 128
        %6403 = vxpose.xlu0.b32.cont [9/16] 0.0, 128
        %6404 = vxpose.xlu0.b32.cont [10/16] 0.0, 128
        %6405 = vxpose.xlu0.b32.cont [11/16] 0.0, 128
        %6406 = vxpose.xlu0.b32.cont [12/16] 0.0, 128
        %6407 = vxpose.xlu0.b32.cont [13/16] 0.0, 128
        %6408 = vxpose.xlu0.b32.cont [14/16] 0.0, 128
        %6409 = vxpose.xlu0.b32.cont [15/16] 0.0, 128
        %6410 = vxpose.xlu0.b32.end [16/16] 0.0, 128
        %v6411 = vpop.trf.xlu0
        %v6412 = vpop.trf.xlu0
        %v6413 = vpop.trf.xlu0
        %v6414 = vpop.trf.xlu0
        %v6415 = vpop.trf.xlu0
        %v6416 = vpop.trf.xlu0
        %v6417 = vpop.trf.xlu0
        %v6418 = vpop.trf.xlu0
        %v6419 = vpop.trf.xlu0
        %v6420 = vpop.trf.xlu0
        %v6421 = vpop.trf.xlu0
        %v6422 = vpop.trf.xlu0
        %v6423 = vpop.trf.xlu0
        %v6424 = vpop.trf.xlu0
        %v6425 = vpop.trf.xlu0
        %v6426 = vpop.trf.xlu0
        %6427 = vxpose.xlu0.b32.start [1/16] %v6203, 128
        %6428 = vxpose.xlu0.b32.cont [2/16] %v6210, 128
        %6429 = vxpose.xlu0.b32.cont [3/16] 0.0, 128
        %6430 = vxpose.xlu0.b32.cont [4/16] 0.0, 128
        %6431 = vxpose.xlu0.b32.cont [5/16] 0.0, 128
        %6432 = vxpose.xlu0.b32.cont [6/16] 0.0, 128
        %6433 = vxpose.xlu0.b32.cont [7/16] 0.0, 128
        %6434 = vxpose.xlu0.b32.cont [8/16] 0.0, 128
        %6435 = vxpose.xlu0.b32.cont [9/16] 0.0, 128
        %6436 = vxpose.xlu0.b32.cont [10/16] 0.0, 128
        %6437 = vxpose.xlu0.b32.cont [11/16] 0.0, 128
        %6438 = vxpose.xlu0.b32.cont [12/16] 0.0, 128
        %6439 = vxpose.xlu0.b32.cont [13/16] 0.0, 128
        %6440 = vxpose.xlu0.b32.cont [14/16] 0.0, 128
        %6441 = vxpose.xlu0.b32.cont [15/16] 0.0, 128
        %6442 = vxpose.xlu0.b32.end [16/16] 0.0, 128
        %v6443 = vpop.trf.xlu0
        %v6444 = vpop.trf.xlu0
        %v6445 = vpop.trf.xlu0
        %v6446 = vpop.trf.xlu0
        %v6447 = vpop.trf.xlu0
        %v6448 = vpop.trf.xlu0
        %v6449 = vpop.trf.xlu0
        %v6450 = vpop.trf.xlu0
        %v6451 = vpop.trf.xlu0
        %v6452 = vpop.trf.xlu0
        %v6453 = vpop.trf.xlu0
        %v6454 = vpop.trf.xlu0
        %v6455 = vpop.trf.xlu0
        %v6456 = vpop.trf.xlu0
        %v6457 = vpop.trf.xlu0
        %v6458 = vpop.trf.xlu0
        %6459 = vxpose.xlu0.b32.start [1/16] %v6227, 128
        %6460 = vxpose.xlu0.b32.cont [2/16] %v6234, 128
        %6461 = vxpose.xlu0.b32.cont [3/16] 0.0, 128
        %6462 = vxpose.xlu0.b32.cont [4/16] 0.0, 128
        %6463 = vxpose.xlu0.b32.cont [5/16] 0.0, 128
        %6464 = vxpose.xlu0.b32.cont [6/16] 0.0, 128
        %6465 = vxpose.xlu0.b32.cont [7/16] 0.0, 128
        %6466 = vxpose.xlu0.b32.cont [8/16] 0.0, 128
        %6467 = vxpose.xlu0.b32.cont [9/16] 0.0, 128
        %6468 = vxpose.xlu0.b32.cont [10/16] 0.0, 128
        %6469 = vxpose.xlu0.b32.cont [11/16] 0.0, 128
        %6470 = vxpose.xlu0.b32.cont [12/16] 0.0, 128
        %6471 = vxpose.xlu0.b32.cont [13/16] 0.0, 128
        %6472 = vxpose.xlu0.b32.cont [14/16] 0.0, 128
        %6473 = vxpose.xlu0.b32.cont [15/16] 0.0, 128
        %6474 = vxpose.xlu0.b32.end [16/16] 0.0, 128
        %v6475 = vpop.trf.xlu0
        %v6476 = vpop.trf.xlu0
        %v6477 = vpop.trf.xlu0
        %v6478 = vpop.trf.xlu0
        %v6479 = vpop.trf.xlu0
        %v6480 = vpop.trf.xlu0
        %v6481 = vpop.trf.xlu0
        %v6482 = vpop.trf.xlu0
        %v6483 = vpop.trf.xlu0
        %v6484 = vpop.trf.xlu0
        %v6485 = vpop.trf.xlu0
        %v6486 = vpop.trf.xlu0
        %v6487 = vpop.trf.xlu0
        %v6488 = vpop.trf.xlu0
        %v6489 = vpop.trf.xlu0
        %v6490 = vpop.trf.xlu0
        %6491 = vxpose.xlu0.b32.start [1/16] %v6251, 128
        %6492 = vxpose.xlu0.b32.cont [2/16] %v6258, 128
        %6493 = vxpose.xlu0.b32.cont [3/16] 0.0, 128
        %6494 = vxpose.xlu0.b32.cont [4/16] 0.0, 128
        %6495 = vxpose.xlu0.b32.cont [5/16] 0.0, 128
        %6496 = vxpose.xlu0.b32.cont [6/16] 0.0, 128
        %6497 = vxpose.xlu0.b32.cont [7/16] 0.0, 128
        %6498 = vxpose.xlu0.b32.cont [8/16] 0.0, 128
        %6499 = vxpose.xlu0.b32.cont [9/16] 0.0, 128
        %6500 = vxpose.xlu0.b32.cont [10/16] 0.0, 128
        %6501 = vxpose.xlu0.b32.cont [11/16] 0.0, 128
        %6502 = vxpose.xlu0.b32.cont [12/16] 0.0, 128
        %6503 = vxpose.xlu0.b32.cont [13/16] 0.0, 128
        %6504 = vxpose.xlu0.b32.cont [14/16] 0.0, 128
        %6505 = vxpose.xlu0.b32.cont [15/16] 0.0, 128
        %6506 = vxpose.xlu0.b32.end [16/16] 0.0, 128
        %v6507 = vpop.trf.xlu0
        %v6508 = vpop.trf.xlu0
        %v6509 = vpop.trf.xlu0
        %v6510 = vpop.trf.xlu0
        %v6511 = vpop.trf.xlu0
        %v6512 = vpop.trf.xlu0
        %v6513 = vpop.trf.xlu0
        %v6514 = vpop.trf.xlu0
        %v6515 = vpop.trf.xlu0
        %v6516 = vpop.trf.xlu0
        %v6517 = vpop.trf.xlu0
        %v6518 = vpop.trf.xlu0
        %v6519 = vpop.trf.xlu0
        %v6520 = vpop.trf.xlu0
        %v6521 = vpop.trf.xlu0
        %v6522 = vpop.trf.xlu0
        %6523 = vxpose.xlu0.b32.start [1/16] %v6275, 128
        %6524 = vxpose.xlu0.b32.cont [2/16] %v6282, 128
        %6525 = vxpose.xlu0.b32.cont [3/16] 0.0, 128
        %6526 = vxpose.xlu0.b32.cont [4/16] 0.0, 128
        %6527 = vxpose.xlu0.b32.cont [5/16] 0.0, 128
        %6528 = vxpose.xlu0.b32.cont [6/16] 0.0, 128
        %6529 = vxpose.xlu0.b32.cont [7/16] 0.0, 128
        %6530 = vxpose.xlu0.b32.cont [8/16] 0.0, 128
        %6531 = vxpose.xlu0.b32.cont [9/16] 0.0, 128
        %6532 = vxpose.xlu0.b32.cont [10/16] 0.0, 128
        %6533 = vxpose.xlu0.b32.cont [11/16] 0.0, 128
        %6534 = vxpose.xlu0.b32.cont [12/16] 0.0, 128
        %6535 = vxpose.xlu0.b32.cont [13/16] 0.0, 128
        %6536 = vxpose.xlu0.b32.cont [14/16] 0.0, 128
        %6537 = vxpose.xlu0.b32.cont [15/16] 0.0, 128
        %6538 = vxpose.xlu0.b32.end [16/16] 0.0, 128
        %v6539 = vpop.trf.xlu0
        %v6540 = vpop.trf.xlu0
        %v6541 = vpop.trf.xlu0
        %v6542 = vpop.trf.xlu0
        %v6543 = vpop.trf.xlu0
        %v6544 = vpop.trf.xlu0
        %v6545 = vpop.trf.xlu0
        %v6546 = vpop.trf.xlu0
        %v6547 = vpop.trf.xlu0
        %v6548 = vpop.trf.xlu0
        %v6549 = vpop.trf.xlu0
        %v6550 = vpop.trf.xlu0
        %v6551 = vpop.trf.xlu0
        %v6552 = vpop.trf.xlu0
        %v6553 = vpop.trf.xlu0
        %v6554 = vpop.trf.xlu0
        %v6555 = vadd.f32 %v6315, 0.0
        %v6556 = vadd.f32 %v6316, 0.0
        %v6557 = vadd.f32 %v6347, 0.0
        %v6558 = vadd.f32 %v6348, 0.0
        %v6559 = vadd.f32 %v6379, 0.0
        %v6560 = vadd.f32 %v6380, 0.0
        %v6561 = vadd.f32 %v6411, 0.0
        %v6562 = vadd.f32 %v6412, 0.0
        %v6563 = vadd.f32 %v6443, 0.0
        %v6564 = vadd.f32 %v6444, 0.0
        %v6565 = vadd.f32 %v6475, 0.0
        %v6566 = vadd.f32 %v6476, 0.0
        %v6567 = vadd.f32 %v6507, 0.0
        %v6568 = vadd.f32 %v6508, 0.0
        %v6569 = vadd.f32 %v6539, 0.0
        %v6570 = vadd.f32 %v6540, 0.0
        %6571 = vxpose.xlu0.b32.start [1/16] %v4988, 128
        %6572 = vxpose.xlu0.b32.cont [2/16] %v5124, 128
        %6573 = vxpose.xlu0.b32.cont [3/16] 0.0, 128
        %6574 = vxpose.xlu0.b32.cont [4/16] 0.0, 128
        %6575 = vxpose.xlu0.b32.cont [5/16] 0.0, 128
        %6576 = vxpose.xlu0.b32.cont [6/16] 0.0, 128
        %6577 = vxpose.xlu0.b32.cont [7/16] 0.0, 128
        %6578 = vxpose.xlu0.b32.cont [8/16] 0.0, 128
        %6579 = vxpose.xlu0.b32.cont [9/16] 0.0, 128
        %6580 = vxpose.xlu0.b32.cont [10/16] 0.0, 128
        %6581 = vxpose.xlu0.b32.cont [11/16] 0.0, 128
        %6582 = vxpose.xlu0.b32.cont [12/16] 0.0, 128
        %6583 = vxpose.xlu0.b32.cont [13/16] 0.0, 128
        %6584 = vxpose.xlu0.b32.cont [14/16] 0.0, 128
        %6585 = vxpose.xlu0.b32.cont [15/16] 0.0, 128
        %6586 = vxpose.xlu0.b32.end [16/16] 0.0, 128
        %v6587 = vpop.trf.xlu0
        %v6588 = vpop.trf.xlu0
        %v6589 = vpop.trf.xlu0
        %v6590 = vpop.trf.xlu0
        %v6591 = vpop.trf.xlu0
        %v6592 = vpop.trf.xlu0
        %v6593 = vpop.trf.xlu0
        %v6594 = vpop.trf.xlu0
        %v6595 = vpop.trf.xlu0
        %v6596 = vpop.trf.xlu0
        %v6597 = vpop.trf.xlu0
        %v6598 = vpop.trf.xlu0
        %v6599 = vpop.trf.xlu0
        %v6600 = vpop.trf.xlu0
        %v6601 = vpop.trf.xlu0
        %v6602 = vpop.trf.xlu0
        %6603 = vxpose.xlu0.b32.start [1/16] %v4989, 128
        %6604 = vxpose.xlu0.b32.cont [2/16] %v5125, 128
        %6605 = vxpose.xlu0.b32.cont [3/16] 0.0, 128
        %6606 = vxpose.xlu0.b32.cont [4/16] 0.0, 128
        %6607 = vxpose.xlu0.b32.cont [5/16] 0.0, 128
        %6608 = vxpose.xlu0.b32.cont [6/16] 0.0, 128
        %6609 = vxpose.xlu0.b32.cont [7/16] 0.0, 128
        %6610 = vxpose.xlu0.b32.cont [8/16] 0.0, 128
        %6611 = vxpose.xlu0.b32.cont [9/16] 0.0, 128
        %6612 = vxpose.xlu0.b32.cont [10/16] 0.0, 128
        %6613 = vxpose.xlu0.b32.cont [11/16] 0.0, 128
        %6614 = vxpose.xlu0.b32.cont [12/16] 0.0, 128
        %6615 = vxpose.xlu0.b32.cont [13/16] 0.0, 128
        %6616 = vxpose.xlu0.b32.cont [14/16] 0.0, 128
        %6617 = vxpose.xlu0.b32.cont [15/16] 0.0, 128
        %6618 = vxpose.xlu0.b32.end [16/16] 0.0, 128
        %v6619 = vpop.trf.xlu0
        %v6620 = vpop.trf.xlu0
        %v6621 = vpop.trf.xlu0
        %v6622 = vpop.trf.xlu0
        %v6623 = vpop.trf.xlu0
        %v6624 = vpop.trf.xlu0
        %v6625 = vpop.trf.xlu0
        %v6626 = vpop.trf.xlu0
        %v6627 = vpop.trf.xlu0
        %v6628 = vpop.trf.xlu0
        %v6629 = vpop.trf.xlu0
        %v6630 = vpop.trf.xlu0
        %v6631 = vpop.trf.xlu0
        %v6632 = vpop.trf.xlu0
        %v6633 = vpop.trf.xlu0
        %v6634 = vpop.trf.xlu0
        %6635 = vxpose.xlu0.b32.start [1/16] %v4990, 128
        %6636 = vxpose.xlu0.b32.cont [2/16] %v5126, 128
        %6637 = vxpose.xlu0.b32.cont [3/16] 0.0, 128
        %6638 = vxpose.xlu0.b32.cont [4/16] 0.0, 128
        %6639 = vxpose.xlu0.b32.cont [5/16] 0.0, 128
        %6640 = vxpose.xlu0.b32.cont [6/16] 0.0, 128
        %6641 = vxpose.xlu0.b32.cont [7/16] 0.0, 128
        %6642 = vxpose.xlu0.b32.cont [8/16] 0.0, 128
        %6643 = vxpose.xlu0.b32.cont [9/16] 0.0, 128
        %6644 = vxpose.xlu0.b32.cont [10/16] 0.0, 128
        %6645 = vxpose.xlu0.b32.cont [11/16] 0.0, 128
        %6646 = vxpose.xlu0.b32.cont [12/16] 0.0, 128
        %6647 = vxpose.xlu0.b32.cont [13/16] 0.0, 128
        %6648 = vxpose.xlu0.b32.cont [14/16] 0.0, 128
        %6649 = vxpose.xlu0.b32.cont [15/16] 0.0, 128
        %6650 = vxpose.xlu0.b32.end [16/16] 0.0, 128
        %v6651 = vpop.trf.xlu0
        %v6652 = vpop.trf.xlu0
        %v6653 = vpop.trf.xlu0
        %v6654 = vpop.trf.xlu0
        %v6655 = vpop.trf.xlu0
        %v6656 = vpop.trf.xlu0
        %v6657 = vpop.trf.xlu0
        %v6658 = vpop.trf.xlu0
        %v6659 = vpop.trf.xlu0
        %v6660 = vpop.trf.xlu0
        %v6661 = vpop.trf.xlu0
        %v6662 = vpop.trf.xlu0
        %v6663 = vpop.trf.xlu0
        %v6664 = vpop.trf.xlu0
        %v6665 = vpop.trf.xlu0
        %v6666 = vpop.trf.xlu0
        %6667 = vxpose.xlu0.b32.start [1/16] %v4991, 128
        %6668 = vxpose.xlu0.b32.cont [2/16] %v5127, 128
        %6669 = vxpose.xlu0.b32.cont [3/16] 0.0, 128
        %6670 = vxpose.xlu0.b32.cont [4/16] 0.0, 128
        %6671 = vxpose.xlu0.b32.cont [5/16] 0.0, 128
        %6672 = vxpose.xlu0.b32.cont [6/16] 0.0, 128
        %6673 = vxpose.xlu0.b32.cont [7/16] 0.0, 128
        %6674 = vxpose.xlu0.b32.cont [8/16] 0.0, 128
        %6675 = vxpose.xlu0.b32.cont [9/16] 0.0, 128
        %6676 = vxpose.xlu0.b32.cont [10/16] 0.0, 128
        %6677 = vxpose.xlu0.b32.cont [11/16] 0.0, 128
        %6678 = vxpose.xlu0.b32.cont [12/16] 0.0, 128
        %6679 = vxpose.xlu0.b32.cont [13/16] 0.0, 128
        %6680 = vxpose.xlu0.b32.cont [14/16] 0.0, 128
        %6681 = vxpose.xlu0.b32.cont [15/16] 0.0, 128
        %6682 = vxpose.xlu0.b32.end [16/16] 0.0, 128
        %v6683 = vpop.trf.xlu0
        %v6684 = vpop.trf.xlu0
        %v6685 = vpop.trf.xlu0
        %v6686 = vpop.trf.xlu0
        %v6687 = vpop.trf.xlu0
        %v6688 = vpop.trf.xlu0
        %v6689 = vpop.trf.xlu0
        %v6690 = vpop.trf.xlu0
        %v6691 = vpop.trf.xlu0
        %v6692 = vpop.trf.xlu0
        %v6693 = vpop.trf.xlu0
        %v6694 = vpop.trf.xlu0
        %v6695 = vpop.trf.xlu0
        %v6696 = vpop.trf.xlu0
        %v6697 = vpop.trf.xlu0
        %v6698 = vpop.trf.xlu0
        %6699 = vxpose.xlu0.b32.start [1/16] %v4992, 128
        %6700 = vxpose.xlu0.b32.cont [2/16] %v5128, 128
        %6701 = vxpose.xlu0.b32.cont [3/16] 0.0, 128
        %6702 = vxpose.xlu0.b32.cont [4/16] 0.0, 128
        %6703 = vxpose.xlu0.b32.cont [5/16] 0.0, 128
        %6704 = vxpose.xlu0.b32.cont [6/16] 0.0, 128
        %6705 = vxpose.xlu0.b32.cont [7/16] 0.0, 128
        %6706 = vxpose.xlu0.b32.cont [8/16] 0.0, 128
        %6707 = vxpose.xlu0.b32.cont [9/16] 0.0, 128
        %6708 = vxpose.xlu0.b32.cont [10/16] 0.0, 128
        %6709 = vxpose.xlu0.b32.cont [11/16] 0.0, 128
        %6710 = vxpose.xlu0.b32.cont [12/16] 0.0, 128
        %6711 = vxpose.xlu0.b32.cont [13/16] 0.0, 128
        %6712 = vxpose.xlu0.b32.cont [14/16] 0.0, 128
        %6713 = vxpose.xlu0.b32.cont [15/16] 0.0, 128
        %6714 = vxpose.xlu0.b32.end [16/16] 0.0, 128
        %v6715 = vpop.trf.xlu0
        %v6716 = vpop.trf.xlu0
        %v6717 = vpop.trf.xlu0
        %v6718 = vpop.trf.xlu0
        %v6719 = vpop.trf.xlu0
        %v6720 = vpop.trf.xlu0
        %v6721 = vpop.trf.xlu0
        %v6722 = vpop.trf.xlu0
        %v6723 = vpop.trf.xlu0
        %v6724 = vpop.trf.xlu0
        %v6725 = vpop.trf.xlu0
        %v6726 = vpop.trf.xlu0
        %v6727 = vpop.trf.xlu0
        %v6728 = vpop.trf.xlu0
        %v6729 = vpop.trf.xlu0
        %v6730 = vpop.trf.xlu0
        %6731 = vxpose.xlu0.b32.start [1/16] %v4993, 128
        %6732 = vxpose.xlu0.b32.cont [2/16] %v5129, 128
        %6733 = vxpose.xlu0.b32.cont [3/16] 0.0, 128
        %6734 = vxpose.xlu0.b32.cont [4/16] 0.0, 128
        %6735 = vxpose.xlu0.b32.cont [5/16] 0.0, 128
        %6736 = vxpose.xlu0.b32.cont [6/16] 0.0, 128
        %6737 = vxpose.xlu0.b32.cont [7/16] 0.0, 128
        %6738 = vxpose.xlu0.b32.cont [8/16] 0.0, 128
        %6739 = vxpose.xlu0.b32.cont [9/16] 0.0, 128
        %6740 = vxpose.xlu0.b32.cont [10/16] 0.0, 128
        %6741 = vxpose.xlu0.b32.cont [11/16] 0.0, 128
        %6742 = vxpose.xlu0.b32.cont [12/16] 0.0, 128
        %6743 = vxpose.xlu0.b32.cont [13/16] 0.0, 128
        %6744 = vxpose.xlu0.b32.cont [14/16] 0.0, 128
        %6745 = vxpose.xlu0.b32.cont [15/16] 0.0, 128
        %6746 = vxpose.xlu0.b32.end [16/16] 0.0, 128
        %v6747 = vpop.trf.xlu0
        %v6748 = vpop.trf.xlu0
        %v6749 = vpop.trf.xlu0
        %v6750 = vpop.trf.xlu0
        %v6751 = vpop.trf.xlu0
        %v6752 = vpop.trf.xlu0
        %v6753 = vpop.trf.xlu0
        %v6754 = vpop.trf.xlu0
        %v6755 = vpop.trf.xlu0
        %v6756 = vpop.trf.xlu0
        %v6757 = vpop.trf.xlu0
        %v6758 = vpop.trf.xlu0
        %v6759 = vpop.trf.xlu0
        %v6760 = vpop.trf.xlu0
        %v6761 = vpop.trf.xlu0
        %v6762 = vpop.trf.xlu0
        %6763 = vxpose.xlu0.b32.start [1/16] %v4994, 128
        %6764 = vxpose.xlu0.b32.cont [2/16] %v5130, 128
        %6765 = vxpose.xlu0.b32.cont [3/16] 0.0, 128
        %6766 = vxpose.xlu0.b32.cont [4/16] 0.0, 128
        %6767 = vxpose.xlu0.b32.cont [5/16] 0.0, 128
        %6768 = vxpose.xlu0.b32.cont [6/16] 0.0, 128
        %6769 = vxpose.xlu0.b32.cont [7/16] 0.0, 128
        %6770 = vxpose.xlu0.b32.cont [8/16] 0.0, 128
        %6771 = vxpose.xlu0.b32.cont [9/16] 0.0, 128
        %6772 = vxpose.xlu0.b32.cont [10/16] 0.0, 128
        %6773 = vxpose.xlu0.b32.cont [11/16] 0.0, 128
        %6774 = vxpose.xlu0.b32.cont [12/16] 0.0, 128
        %6775 = vxpose.xlu0.b32.cont [13/16] 0.0, 128
        %6776 = vxpose.xlu0.b32.cont [14/16] 0.0, 128
        %6777 = vxpose.xlu0.b32.cont [15/16] 0.0, 128
        %6778 = vxpose.xlu0.b32.end [16/16] 0.0, 128
        %v6779 = vpop.trf.xlu0
        %v6780 = vpop.trf.xlu0
        %v6781 = vpop.trf.xlu0
        %v6782 = vpop.trf.xlu0
        %v6783 = vpop.trf.xlu0
        %v6784 = vpop.trf.xlu0
        %v6785 = vpop.trf.xlu0
        %v6786 = vpop.trf.xlu0
        %v6787 = vpop.trf.xlu0
        %v6788 = vpop.trf.xlu0
        %v6789 = vpop.trf.xlu0
        %v6790 = vpop.trf.xlu0
        %v6791 = vpop.trf.xlu0
        %v6792 = vpop.trf.xlu0
        %v6793 = vpop.trf.xlu0
        %v6794 = vpop.trf.xlu0
        %6795 = vxpose.xlu0.b32.start [1/16] %v4995, 128
        %6796 = vxpose.xlu0.b32.cont [2/16] %v5131, 128
        %6797 = vxpose.xlu0.b32.cont [3/16] 0.0, 128
        %6798 = vxpose.xlu0.b32.cont [4/16] 0.0, 128
        %6799 = vxpose.xlu0.b32.cont [5/16] 0.0, 128
        %6800 = vxpose.xlu0.b32.cont [6/16] 0.0, 128
        %6801 = vxpose.xlu0.b32.cont [7/16] 0.0, 128
        %6802 = vxpose.xlu0.b32.cont [8/16] 0.0, 128
        %6803 = vxpose.xlu0.b32.cont [9/16] 0.0, 128
        %6804 = vxpose.xlu0.b32.cont [10/16] 0.0, 128
        %6805 = vxpose.xlu0.b32.cont [11/16] 0.0, 128
        %6806 = vxpose.xlu0.b32.cont [12/16] 0.0, 128
        %6807 = vxpose.xlu0.b32.cont [13/16] 0.0, 128
        %6808 = vxpose.xlu0.b32.cont [14/16] 0.0, 128
        %6809 = vxpose.xlu0.b32.cont [15/16] 0.0, 128
        %6810 = vxpose.xlu0.b32.end [16/16] 0.0, 128
        %v6811 = vpop.trf.xlu0
        %v6812 = vpop.trf.xlu0
        %v6813 = vpop.trf.xlu0
        %v6814 = vpop.trf.xlu0
        %v6815 = vpop.trf.xlu0
        %v6816 = vpop.trf.xlu0
        %v6817 = vpop.trf.xlu0
        %v6818 = vpop.trf.xlu0
        %v6819 = vpop.trf.xlu0
        %v6820 = vpop.trf.xlu0
        %v6821 = vpop.trf.xlu0
        %v6822 = vpop.trf.xlu0
        %v6823 = vpop.trf.xlu0
        %v6824 = vpop.trf.xlu0
        %v6825 = vpop.trf.xlu0
        %v6826 = vpop.trf.xlu0
        %v6843 = vcombine.high %v6587, %v6587
        %v6845 = vunpack.c.l.s4 1983009808
        %v6846 = vunpack.c.0.s8 %v6845
        %v6847 = vlaneseq
        %v6848 = vshrl.u32 %v6847, 7
        %v6849 = vsub.s32 %v6846, %v6848
        %v6850 = vrot.slane %v6587, %v6849
        %v6852 = vunpack.c.l.s4 1983009808
        %v6853 = vunpack.c.0.s8 %v6852
        %v6854 = vlaneseq
        %v6855 = vshrl.u32 %v6854, 7
        %v6856 = vsub.s32 %v6853, %v6855
        %v6857 = vrot.slane %v6843, %v6856
        %v6858 = vcombine.high %v6850, %v6850
        %v6859 = vcombine.high %v6857, %v6857
        %v6861 = vunpack.c.l.s4 1983009808
        %v6862 = vunpack.c.0.s8 %v6861
        %v6863 = vlaneseq
        %v6864 = vshrl.u32 %v6863, 7
        %v6865 = vsub.s32 %v6862, %v6864
        %v6866 = vrot.slane %v6588, %v6865
        %v6867 = vcombine.high %v6619, %v6619
        %v6869 = vunpack.c.l.s4 1983009808
        %v6870 = vunpack.c.0.s8 %v6869
        %v6871 = vlaneseq
        %v6872 = vshrl.u32 %v6871, 7
        %v6873 = vsub.s32 %v6870, %v6872
        %v6874 = vrot.slane %v6619, %v6873
        %v6876 = vunpack.c.l.s4 1983009808
        %v6877 = vunpack.c.0.s8 %v6876
        %v6878 = vlaneseq
        %v6879 = vshrl.u32 %v6878, 7
        %v6880 = vsub.s32 %v6877, %v6879
        %v6881 = vrot.slane %v6867, %v6880
        %v6882 = vcombine.high %v6874, %v6874
        %v6883 = vcombine.high %v6881, %v6881
        %v6885 = vunpack.c.l.s4 1983009808
        %v6886 = vunpack.c.0.s8 %v6885
        %v6887 = vlaneseq
        %v6888 = vshrl.u32 %v6887, 7
        %v6889 = vsub.s32 %v6886, %v6888
        %v6890 = vrot.slane %v6620, %v6889
        %v6891 = vcombine.high %v6651, %v6651
        %v6893 = vunpack.c.l.s4 1983009808
        %v6894 = vunpack.c.0.s8 %v6893
        %v6895 = vlaneseq
        %v6896 = vshrl.u32 %v6895, 7
        %v6897 = vsub.s32 %v6894, %v6896
        %v6898 = vrot.slane %v6651, %v6897
        %v6900 = vunpack.c.l.s4 1983009808
        %v6901 = vunpack.c.0.s8 %v6900
        %v6902 = vlaneseq
        %v6903 = vshrl.u32 %v6902, 7
        %v6904 = vsub.s32 %v6901, %v6903
        %v6905 = vrot.slane %v6891, %v6904
        %v6906 = vcombine.high %v6898, %v6898
        %v6907 = vcombine.high %v6905, %v6905
        %v6909 = vunpack.c.l.s4 1983009808
        %v6910 = vunpack.c.0.s8 %v6909
        %v6911 = vlaneseq
        %v6912 = vshrl.u32 %v6911, 7
        %v6913 = vsub.s32 %v6910, %v6912
        %v6914 = vrot.slane %v6652, %v6913
        %v6915 = vcombine.high %v6683, %v6683
        %v6917 = vunpack.c.l.s4 1983009808
        %v6918 = vunpack.c.0.s8 %v6917
        %v6919 = vlaneseq
        %v6920 = vshrl.u32 %v6919, 7
        %v6921 = vsub.s32 %v6918, %v6920
        %v6922 = vrot.slane %v6683, %v6921
        %v6924 = vunpack.c.l.s4 1983009808
        %v6925 = vunpack.c.0.s8 %v6924
        %v6926 = vlaneseq
        %v6927 = vshrl.u32 %v6926, 7
        %v6928 = vsub.s32 %v6925, %v6927
        %v6929 = vrot.slane %v6915, %v6928
        %v6930 = vcombine.high %v6922, %v6922
        %v6931 = vcombine.high %v6929, %v6929
        %v6933 = vunpack.c.l.s4 1983009808
        %v6934 = vunpack.c.0.s8 %v6933
        %v6935 = vlaneseq
        %v6936 = vshrl.u32 %v6935, 7
        %v6937 = vsub.s32 %v6934, %v6936
        %v6938 = vrot.slane %v6684, %v6937
        %v6939 = vcombine.high %v6715, %v6715
        %v6941 = vunpack.c.l.s4 1983009808
        %v6942 = vunpack.c.0.s8 %v6941
        %v6943 = vlaneseq
        %v6944 = vshrl.u32 %v6943, 7
        %v6945 = vsub.s32 %v6942, %v6944
        %v6946 = vrot.slane %v6715, %v6945
        %v6948 = vunpack.c.l.s4 1983009808
        %v6949 = vunpack.c.0.s8 %v6948
        %v6950 = vlaneseq
        %v6951 = vshrl.u32 %v6950, 7
        %v6952 = vsub.s32 %v6949, %v6951
        %v6953 = vrot.slane %v6939, %v6952
        %v6954 = vcombine.high %v6946, %v6946
        %v6955 = vcombine.high %v6953, %v6953
        %v6957 = vunpack.c.l.s4 1983009808
        %v6958 = vunpack.c.0.s8 %v6957
        %v6959 = vlaneseq
        %v6960 = vshrl.u32 %v6959, 7
        %v6961 = vsub.s32 %v6958, %v6960
        %v6962 = vrot.slane %v6716, %v6961
        %v6963 = vcombine.high %v6747, %v6747
        %v6965 = vunpack.c.l.s4 1983009808
        %v6966 = vunpack.c.0.s8 %v6965
        %v6967 = vlaneseq
        %v6968 = vshrl.u32 %v6967, 7
        %v6969 = vsub.s32 %v6966, %v6968
        %v6970 = vrot.slane %v6747, %v6969
        %v6972 = vunpack.c.l.s4 1983009808
        %v6973 = vunpack.c.0.s8 %v6972
        %v6974 = vlaneseq
        %v6975 = vshrl.u32 %v6974, 7
        %v6976 = vsub.s32 %v6973, %v6975
        %v6977 = vrot.slane %v6963, %v6976
        %v6978 = vcombine.high %v6970, %v6970
        %v6979 = vcombine.high %v6977, %v6977
        %v6981 = vunpack.c.l.s4 1983009808
        %v6982 = vunpack.c.0.s8 %v6981
        %v6983 = vlaneseq
        %v6984 = vshrl.u32 %v6983, 7
        %v6985 = vsub.s32 %v6982, %v6984
        %v6986 = vrot.slane %v6748, %v6985
        %v6987 = vcombine.high %v6779, %v6779
        %v6989 = vunpack.c.l.s4 1983009808
        %v6990 = vunpack.c.0.s8 %v6989
        %v6991 = vlaneseq
        %v6992 = vshrl.u32 %v6991, 7
        %v6993 = vsub.s32 %v6990, %v6992
        %v6994 = vrot.slane %v6779, %v6993
        %v6996 = vunpack.c.l.s4 1983009808
        %v6997 = vunpack.c.0.s8 %v6996
        %v6998 = vlaneseq
        %v6999 = vshrl.u32 %v6998, 7
        %v7000 = vsub.s32 %v6997, %v6999
        %v7001 = vrot.slane %v6987, %v7000
        %v7002 = vcombine.high %v6994, %v6994
        %v7003 = vcombine.high %v7001, %v7001
        %v7005 = vunpack.c.l.s4 1983009808
        %v7006 = vunpack.c.0.s8 %v7005
        %v7007 = vlaneseq
        %v7008 = vshrl.u32 %v7007, 7
        %v7009 = vsub.s32 %v7006, %v7008
        %v7010 = vrot.slane %v6780, %v7009
        %v7011 = vcombine.high %v6811, %v6811
        %v7013 = vunpack.c.l.s4 1983009808
        %v7014 = vunpack.c.0.s8 %v7013
        %v7015 = vlaneseq
        %v7016 = vshrl.u32 %v7015, 7
        %v7017 = vsub.s32 %v7014, %v7016
        %v7018 = vrot.slane %v6811, %v7017
        %v7020 = vunpack.c.l.s4 1983009808
        %v7021 = vunpack.c.0.s8 %v7020
        %v7022 = vlaneseq
        %v7023 = vshrl.u32 %v7022, 7
        %v7024 = vsub.s32 %v7021, %v7023
        %v7025 = vrot.slane %v7011, %v7024
        %v7026 = vcombine.high %v7018, %v7018
        %v7027 = vcombine.high %v7025, %v7025
        %v7029 = vunpack.c.l.s4 1983009808
        %v7030 = vunpack.c.0.s8 %v7029
        %v7031 = vlaneseq
        %v7032 = vshrl.u32 %v7031, 7
        %v7033 = vsub.s32 %v7030, %v7032
        %v7034 = vrot.slane %v6812, %v7033
        %v7035 = vcombine.low %v6850, %v6858
        %v7036 = vcombine.low %v6857, %v6859
        %v7038 = vunpack.c.l.s4 1983009808
        %v7039 = vunpack.c.0.s8 %v7038
        %v7040 = vlaneseq
        %v7041 = vshrl.u32 %v7040, 7
        %v7042 = vsub.s32 %v7039, %v7041
        %v7043 = vrot.slane %v7035, %v7042
        %v7045 = vunpack.c.l.s4 1983009808
        %v7046 = vunpack.c.0.s8 %v7045
        %v7047 = vlaneseq
        %v7048 = vshrl.u32 %v7047, 7
        %v7049 = vsub.s32 %v7046, %v7048
        %v7050 = vrot.slane %v7036, %v7049
        %v7051 = vcombine.low %v7043, %v7050
        %v7052 = vcombine.low %v6866, %v6874
        %v7053 = vcombine.low %v6882, %v6881
        %v7055 = vunpack.c.l.s4 1983009808
        %v7056 = vunpack.c.0.s8 %v7055
        %v7057 = vlaneseq
        %v7058 = vshrl.u32 %v7057, 7
        %v7059 = vsub.s32 %v7056, %v7058
        %v7060 = vrot.slane %v7052, %v7059
        %v7062 = vunpack.c.l.s4 1983009808
        %v7063 = vunpack.c.0.s8 %v7062
        %v7064 = vlaneseq
        %v7065 = vshrl.u32 %v7064, 7
        %v7066 = vsub.s32 %v7063, %v7065
        %v7067 = vrot.slane %v7053, %v7066
        %v7068 = vcombine.low %v7060, %v7067
        %v7069 = vcombine.low %v6883, %v6890
        %v7070 = vcombine.low %v6898, %v6906
        %v7072 = vunpack.c.l.s4 1983009808
        %v7073 = vunpack.c.0.s8 %v7072
        %v7074 = vlaneseq
        %v7075 = vshrl.u32 %v7074, 7
        %v7076 = vsub.s32 %v7073, %v7075
        %v7077 = vrot.slane %v7069, %v7076
        %v7079 = vunpack.c.l.s4 1983009808
        %v7080 = vunpack.c.0.s8 %v7079
        %v7081 = vlaneseq
        %v7082 = vshrl.u32 %v7081, 7
        %v7083 = vsub.s32 %v7080, %v7082
        %v7084 = vrot.slane %v7070, %v7083
        %v7085 = vcombine.low %v7077, %v7084
        %v7086 = vcombine.low %v6905, %v6907
        %v7087 = vcombine.low %v6914, %v6922
        %v7089 = vunpack.c.l.s4 1983009808
        %v7090 = vunpack.c.0.s8 %v7089
        %v7091 = vlaneseq
        %v7092 = vshrl.u32 %v7091, 7
        %v7093 = vsub.s32 %v7090, %v7092
        %v7094 = vrot.slane %v7086, %v7093
        %v7096 = vunpack.c.l.s4 1983009808
        %v7097 = vunpack.c.0.s8 %v7096
        %v7098 = vlaneseq
        %v7099 = vshrl.u32 %v7098, 7
        %v7100 = vsub.s32 %v7097, %v7099
        %v7101 = vrot.slane %v7087, %v7100
        %v7102 = vcombine.low %v7094, %v7101
        %v7103 = vcombine.low %v6930, %v6929
        %v7104 = vcombine.low %v6931, %v6938
        %v7106 = vunpack.c.l.s4 1983009808
        %v7107 = vunpack.c.0.s8 %v7106
        %v7108 = vlaneseq
        %v7109 = vshrl.u32 %v7108, 7
        %v7110 = vsub.s32 %v7107, %v7109
        %v7111 = vrot.slane %v7103, %v7110
        %v7113 = vunpack.c.l.s4 1983009808
        %v7114 = vunpack.c.0.s8 %v7113
        %v7115 = vlaneseq
        %v7116 = vshrl.u32 %v7115, 7
        %v7117 = vsub.s32 %v7114, %v7116
        %v7118 = vrot.slane %v7104, %v7117
        %v7119 = vcombine.low %v7111, %v7118
        %v7120 = vcombine.low %v6946, %v6954
        %v7121 = vcombine.low %v6953, %v6955
        %v7123 = vunpack.c.l.s4 1983009808
        %v7124 = vunpack.c.0.s8 %v7123
        %v7125 = vlaneseq
        %v7126 = vshrl.u32 %v7125, 7
        %v7127 = vsub.s32 %v7124, %v7126
        %v7128 = vrot.slane %v7120, %v7127
        %v7130 = vunpack.c.l.s4 1983009808
        %v7131 = vunpack.c.0.s8 %v7130
        %v7132 = vlaneseq
        %v7133 = vshrl.u32 %v7132, 7
        %v7134 = vsub.s32 %v7131, %v7133
        %v7135 = vrot.slane %v7121, %v7134
        %v7136 = vcombine.low %v7128, %v7135
        %v7137 = vcombine.low %v6962, %v6970
        %v7138 = vcombine.low %v6978, %v6977
        %v7140 = vunpack.c.l.s4 1983009808
        %v7141 = vunpack.c.0.s8 %v7140
        %v7142 = vlaneseq
        %v7143 = vshrl.u32 %v7142, 7
        %v7144 = vsub.s32 %v7141, %v7143
        %v7145 = vrot.slane %v7137, %v7144
        %v7147 = vunpack.c.l.s4 1983009808
        %v7148 = vunpack.c.0.s8 %v7147
        %v7149 = vlaneseq
        %v7150 = vshrl.u32 %v7149, 7
        %v7151 = vsub.s32 %v7148, %v7150
        %v7152 = vrot.slane %v7138, %v7151
        %v7153 = vcombine.low %v7145, %v7152
        %v7154 = vcombine.low %v6979, %v6986
        %v7155 = vcombine.low %v6994, %v7002
        %v7157 = vunpack.c.l.s4 1983009808
        %v7158 = vunpack.c.0.s8 %v7157
        %v7159 = vlaneseq
        %v7160 = vshrl.u32 %v7159, 7
        %v7161 = vsub.s32 %v7158, %v7160
        %v7162 = vrot.slane %v7154, %v7161
        %v7164 = vunpack.c.l.s4 1983009808
        %v7165 = vunpack.c.0.s8 %v7164
        %v7166 = vlaneseq
        %v7167 = vshrl.u32 %v7166, 7
        %v7168 = vsub.s32 %v7165, %v7167
        %v7169 = vrot.slane %v7155, %v7168
        %v7170 = vcombine.low %v7162, %v7169
        %v7171 = vcombine.low %v7001, %v7003
        %v7172 = vcombine.low %v7010, %v7018
        %v7174 = vunpack.c.l.s4 1983009808
        %v7175 = vunpack.c.0.s8 %v7174
        %v7176 = vlaneseq
        %v7177 = vshrl.u32 %v7176, 7
        %v7178 = vsub.s32 %v7175, %v7177
        %v7179 = vrot.slane %v7171, %v7178
        %v7181 = vunpack.c.l.s4 1983009808
        %v7182 = vunpack.c.0.s8 %v7181
        %v7183 = vlaneseq
        %v7184 = vshrl.u32 %v7183, 7
        %v7185 = vsub.s32 %v7182, %v7184
        %v7186 = vrot.slane %v7172, %v7185
        %v7187 = vcombine.low %v7179, %v7186
        %v7188 = vcombine.low %v7026, %v7025
        %v7189 = vcombine.low %v7027, %v7034
        %v7191 = vunpack.c.l.s4 1983009808
        %v7192 = vunpack.c.0.s8 %v7191
        %v7193 = vlaneseq
        %v7194 = vshrl.u32 %v7193, 7
        %v7195 = vsub.s32 %v7192, %v7194
        %v7196 = vrot.slane %v7188, %v7195
        %v7198 = vunpack.c.l.s4 1983009808
        %v7199 = vunpack.c.0.s8 %v7198
        %v7200 = vlaneseq
        %v7201 = vshrl.u32 %v7200, 7
        %v7202 = vsub.s32 %v7199, %v7201
        %v7203 = vrot.slane %v7189, %v7202
        %v7204 = vcombine.low %v7196, %v7203
        %v7205 = vsel %vm4404, %v7051, 0
        %v7207 = vsel %vm4404, %v7068, 0
        %v7209 = vsel %vm4404, %v7085, 0
        %v7211 = vsel %vm4404, %v7102, 0
        %v7213 = vsel %vm4404, %v7119, 0
        %v7215 = vsel %vm4404, %v7136, 0
        %v7217 = vsel %vm4404, %v7153, 0
        %v7219 = vsel %vm4404, %v7170, 0
        %v7221 = vsel %vm4404, %v7187, 0
        %v7223 = vsel %vm4404, %v7204, 0
        %v7226 = vsel %vm4404, %v5134, 0
        %v7229 = vsel %vm4404, %v5135, 0
        %7231 = vmatprep.subr.mxu0 0.0
        %7232 = vmatpush1.xpose.msra.mxu0 0.0
        %7233 = vmatprep.subr.mxu0 0.0
        %7234 = vmatpush1.xpose.msra.mxu0 0.0
        %7235 = vmatprep.subr.mxu0 0.0
        %7236 = vmatpush1.xpose.msra.mxu0 0.0
        %7237 = vmatprep.subr.mxu0 0.0
        %7238 = vmatpush1.xpose.msra.mxu0 0.0
        %7239 = vmatprep.subr.mxu0 0.0
        %7240 = vmatpush1.xpose.msra.mxu0 0.0
        %7241 = vmatprep.subr.mxu0 0.0
        %7242 = vmatpush1.xpose.msra.mxu0 0.0
        %7243 = vmatprep.subr.mxu0 0.0
        %7244 = vmatpush1.xpose.msra.mxu0 0.0
        %7245 = vmatprep.subr.mxu0 0.0
        %7246 = vmatpush1.xpose.msra.mxu0 0.0
        %7247 = vmatprep.subr.mxu0 0.0
        %7248 = vmatpush1.xpose.msra.mxu0 0.0
        %7249 = vmatprep.subr.mxu0 0.0
        %7250 = vmatpush1.xpose.msra.mxu0 0.0
        %7251 = vmatprep.subr.mxu0 0.0
        %7252 = vmatpush1.xpose.msra.mxu0 0.0
        %7253 = vmatprep.subr.mxu0 0.0
        %7254 = vmatpush1.xpose.msra.mxu0 0.0
        %7255 = vmatprep.subr.mxu0 0.0
        %7256 = vmatpush1.xpose.msra.mxu0 0.0
        %7257 = vmatprep.subr.mxu0 0.0
        %7258 = vmatpush1.xpose.msra.mxu0 0.0
        %7259 = vmatprep.subr.mxu0 0.0
        %7260 = vmatpush1.xpose.msra.mxu0 %v7229
        %7261 = vmatprep.subr.mxu0 0.0
        %7262 = vmatpush1.xpose.msra.mxu0 %v7226
        %7263 = vmatprep.subr.mxu0 0.0
        %7264 = vmatpush2.xpose.msra.mxu0 0.0
        %7265 = vmatprep.subr.mxu0 0.0
        %7266 = vmatpush2.xpose.msra.mxu0 0.0
        %7267 = vmatprep.subr.mxu0 0.0
        %7268 = vmatpush2.xpose.msra.mxu0 0.0
        %7269 = vmatprep.subr.mxu0 0.0
        %7270 = vmatpush2.xpose.msra.mxu0 0.0
        %7271 = vmatprep.subr.mxu0 0.0
        %7272 = vmatpush2.xpose.msra.mxu0 0.0
        %7273 = vmatprep.subr.mxu0 0.0
        %7274 = vmatpush2.xpose.msra.mxu0 0.0
        %7275 = vmatprep.subr.mxu0 0.0
        %7276 = vmatpush2.xpose.msra.mxu0 0.0
        %7277 = vmatprep.subr.mxu0 0.0
        %7278 = vmatpush2.xpose.msra.mxu0 0.0
        %7279 = vmatprep.subr.mxu0 0.0
        %7280 = vmatpush2.xpose.msra.mxu0 0.0
        %7281 = vmatprep.subr.mxu0 0.0
        %7282 = vmatpush2.xpose.msra.mxu0 0.0
        %7283 = vmatprep.subr.mxu0 0.0
        %7284 = vmatpush2.xpose.msra.mxu0 0.0
        %7285 = vmatprep.subr.mxu0 0.0
        %7286 = vmatpush2.xpose.msra.mxu0 0.0
        %7287 = vmatprep.subr.mxu0 0.0
        %7288 = vmatpush2.xpose.msra.mxu0 0.0
        %7289 = vmatprep.subr.mxu0 0.0
        %7290 = vmatpush2.xpose.msra.mxu0 0.0
        %7291 = vmatprep.subr.mxu0 0.0
        %7292 = vmatpush2.xpose.msra.mxu0 0.0
        %7293 = vmatprep.subr.mxu0 0.0
        %7294 = vmatpush2.xpose.msra.mxu0 0.0
        %7295 = vmatprep.mubr.f32.mxu0 0.0
        %7296 = vmatmul.mubr.f32.gmra.mxu0 %v7205
        %v7297 = vpop.f32.mrf.mxu0
        %v7298 = vadd.f32 0.0, %v7297
        %v7299 = vpop.f32.mrf.mxu0
        %7300 = vmatprep.mubr.f32.mxu0 0.0
        %7301 = vmatmul.mubr.f32.gmra.mxu0 %v7207
        %v7302 = vpop.f32.mrf.mxu0
        %v7303 = vadd.f32 0.0, %v7302
        %v7304 = vpop.f32.mrf.mxu0
        %7305 = vmatprep.mubr.f32.mxu0 0.0
        %7306 = vmatmul.mubr.f32.gmra.mxu0 %v7209
        %v7307 = vpop.f32.mrf.mxu0
        %v7308 = vadd.f32 0.0, %v7307
        %v7309 = vpop.f32.mrf.mxu0
        %7310 = vmatprep.mubr.f32.mxu0 0.0
        %7311 = vmatmul.mubr.f32.gmra.mxu0 %v7211
        %v7312 = vpop.f32.mrf.mxu0
        %v7313 = vadd.f32 0.0, %v7312
        %v7314 = vpop.f32.mrf.mxu0
        %7315 = vmatprep.mubr.f32.mxu0 0.0
        %7316 = vmatmul.mubr.f32.gmra.mxu0 %v7213
        %v7317 = vpop.f32.mrf.mxu0
        %v7318 = vadd.f32 0.0, %v7317
        %v7319 = vpop.f32.mrf.mxu0
        %7320 = vmatprep.mubr.f32.mxu0 0.0
        %7321 = vmatmul.mubr.f32.gmra.mxu0 %v7215
        %v7322 = vpop.f32.mrf.mxu0
        %v7323 = vadd.f32 0.0, %v7322
        %v7324 = vpop.f32.mrf.mxu0
        %7325 = vmatprep.mubr.f32.mxu0 0.0
        %7326 = vmatmul.mubr.f32.gmra.mxu0 %v7217
        %v7327 = vpop.f32.mrf.mxu0
        %v7328 = vadd.f32 0.0, %v7327
        %v7329 = vpop.f32.mrf.mxu0
        %7330 = vmatprep.mubr.f32.mxu0 0.0
        %7331 = vmatmul.mubr.f32.gmra.mxu0 %v7219
        %v7332 = vpop.f32.mrf.mxu0
        %v7333 = vadd.f32 0.0, %v7332
        %v7334 = vpop.f32.mrf.mxu0
        %7335 = vmatprep.mubr.f32.mxu0 0.0
        %7336 = vmatmul.mubr.f32.gmra.mxu0 %v7221
        %v7337 = vpop.f32.mrf.mxu0
        %v7338 = vadd.f32 0.0, %v7337
        %v7339 = vpop.f32.mrf.mxu0
        %7340 = vmatprep.mubr.f32.mxu0 0.0
        %7341 = vmatmul.mubr.f32.gmra.mxu0 %v7223
        %v7342 = vpop.f32.mrf.mxu0
        %v7343 = vadd.f32 0.0, %v7342
        %v7344 = vpop.f32.mrf.mxu0
        %7345 = vdwg.mxu0
        %v7356 = vcombine.high %v7298, %v7298
        %v7358 = vunpack.c.l.s4 1983009808
        %v7359 = vunpack.c.0.s8 %v7358
        %v7360 = vlaneseq
        %v7361 = vshrl.u32 %v7360, 7
        %v7362 = vsub.s32 %v7359, %v7361
        %v7363 = vrot.slane %v7298, %v7362
        %v7365 = vunpack.c.l.s4 1983009808
        %v7366 = vunpack.c.0.s8 %v7365
        %v7367 = vlaneseq
        %v7368 = vshrl.u32 %v7367, 7
        %v7369 = vsub.s32 %v7366, %v7368
        %v7370 = vrot.slane %v7356, %v7369
        %v7371 = vcombine.high %v7363, %v7363
        %v7372 = vcombine.high %v7370, %v7370
        %v7373 = vcombine.high %v7303, %v7303
        %v7375 = vunpack.c.l.s4 1983009808
        %v7376 = vunpack.c.0.s8 %v7375
        %v7377 = vlaneseq
        %v7378 = vshrl.u32 %v7377, 7
        %v7379 = vsub.s32 %v7376, %v7378
        %v7380 = vrot.slane %v7303, %v7379
        %v7382 = vunpack.c.l.s4 1983009808
        %v7383 = vunpack.c.0.s8 %v7382
        %v7384 = vlaneseq
        %v7385 = vshrl.u32 %v7384, 7
        %v7386 = vsub.s32 %v7383, %v7385
        %v7387 = vrot.slane %v7373, %v7386
        %v7388 = vcombine.high %v7380, %v7380
        %v7389 = vcombine.high %v7387, %v7387
        %v7390 = vcombine.high %v7308, %v7308
        %v7392 = vunpack.c.l.s4 1983009808
        %v7393 = vunpack.c.0.s8 %v7392
        %v7394 = vlaneseq
        %v7395 = vshrl.u32 %v7394, 7
        %v7396 = vsub.s32 %v7393, %v7395
        %v7397 = vrot.slane %v7308, %v7396
        %v7399 = vunpack.c.l.s4 1983009808
        %v7400 = vunpack.c.0.s8 %v7399
        %v7401 = vlaneseq
        %v7402 = vshrl.u32 %v7401, 7
        %v7403 = vsub.s32 %v7400, %v7402
        %v7404 = vrot.slane %v7390, %v7403
        %v7405 = vcombine.high %v7397, %v7397
        %v7406 = vcombine.high %v7404, %v7404
        %v7407 = vcombine.high %v7313, %v7313
        %v7409 = vunpack.c.l.s4 1983009808
        %v7410 = vunpack.c.0.s8 %v7409
        %v7411 = vlaneseq
        %v7412 = vshrl.u32 %v7411, 7
        %v7413 = vsub.s32 %v7410, %v7412
        %v7414 = vrot.slane %v7313, %v7413
        %v7416 = vunpack.c.l.s4 1983009808
        %v7417 = vunpack.c.0.s8 %v7416
        %v7418 = vlaneseq
        %v7419 = vshrl.u32 %v7418, 7
        %v7420 = vsub.s32 %v7417, %v7419
        %v7421 = vrot.slane %v7407, %v7420
        %v7422 = vcombine.high %v7414, %v7414
        %v7423 = vcombine.high %v7421, %v7421
        %v7424 = vcombine.high %v7318, %v7318
        %v7426 = vunpack.c.l.s4 1983009808
        %v7427 = vunpack.c.0.s8 %v7426
        %v7428 = vlaneseq
        %v7429 = vshrl.u32 %v7428, 7
        %v7430 = vsub.s32 %v7427, %v7429
        %v7431 = vrot.slane %v7318, %v7430
        %v7433 = vunpack.c.l.s4 1983009808
        %v7434 = vunpack.c.0.s8 %v7433
        %v7435 = vlaneseq
        %v7436 = vshrl.u32 %v7435, 7
        %v7437 = vsub.s32 %v7434, %v7436
        %v7438 = vrot.slane %v7424, %v7437
        %v7439 = vcombine.high %v7431, %v7431
        %v7440 = vcombine.high %v7438, %v7438
        %v7441 = vcombine.high %v7323, %v7323
        %v7443 = vunpack.c.l.s4 1983009808
        %v7444 = vunpack.c.0.s8 %v7443
        %v7445 = vlaneseq
        %v7446 = vshrl.u32 %v7445, 7
        %v7447 = vsub.s32 %v7444, %v7446
        %v7448 = vrot.slane %v7323, %v7447
        %v7450 = vunpack.c.l.s4 1983009808
        %v7451 = vunpack.c.0.s8 %v7450
        %v7452 = vlaneseq
        %v7453 = vshrl.u32 %v7452, 7
        %v7454 = vsub.s32 %v7451, %v7453
        %v7455 = vrot.slane %v7441, %v7454
        %v7456 = vcombine.high %v7448, %v7448
        %v7457 = vcombine.high %v7455, %v7455
        %v7458 = vcombine.high %v7328, %v7328
        %v7460 = vunpack.c.l.s4 1983009808
        %v7461 = vunpack.c.0.s8 %v7460
        %v7462 = vlaneseq
        %v7463 = vshrl.u32 %v7462, 7
        %v7464 = vsub.s32 %v7461, %v7463
        %v7465 = vrot.slane %v7328, %v7464
        %v7467 = vunpack.c.l.s4 1983009808
        %v7468 = vunpack.c.0.s8 %v7467
        %v7469 = vlaneseq
        %v7470 = vshrl.u32 %v7469, 7
        %v7471 = vsub.s32 %v7468, %v7470
        %v7472 = vrot.slane %v7458, %v7471
        %v7473 = vcombine.high %v7465, %v7465
        %v7474 = vcombine.high %v7472, %v7472
        %v7475 = vcombine.high %v7333, %v7333
        %v7477 = vunpack.c.l.s4 1983009808
        %v7478 = vunpack.c.0.s8 %v7477
        %v7479 = vlaneseq
        %v7480 = vshrl.u32 %v7479, 7
        %v7481 = vsub.s32 %v7478, %v7480
        %v7482 = vrot.slane %v7333, %v7481
        %v7484 = vunpack.c.l.s4 1983009808
        %v7485 = vunpack.c.0.s8 %v7484
        %v7486 = vlaneseq
        %v7487 = vshrl.u32 %v7486, 7
        %v7488 = vsub.s32 %v7485, %v7487
        %v7489 = vrot.slane %v7475, %v7488
        %v7490 = vcombine.high %v7482, %v7482
        %v7491 = vcombine.high %v7489, %v7489
        %v7492 = vcombine.high %v7338, %v7338
        %v7494 = vunpack.c.l.s4 1983009808
        %v7495 = vunpack.c.0.s8 %v7494
        %v7496 = vlaneseq
        %v7497 = vshrl.u32 %v7496, 7
        %v7498 = vsub.s32 %v7495, %v7497
        %v7499 = vrot.slane %v7338, %v7498
        %v7501 = vunpack.c.l.s4 1983009808
        %v7502 = vunpack.c.0.s8 %v7501
        %v7503 = vlaneseq
        %v7504 = vshrl.u32 %v7503, 7
        %v7505 = vsub.s32 %v7502, %v7504
        %v7506 = vrot.slane %v7492, %v7505
        %v7507 = vcombine.high %v7499, %v7499
        %v7508 = vcombine.high %v7506, %v7506
        %v7509 = vcombine.high %v7343, %v7343
        %v7511 = vunpack.c.l.s4 1983009808
        %v7512 = vunpack.c.0.s8 %v7511
        %v7513 = vlaneseq
        %v7514 = vshrl.u32 %v7513, 7
        %v7515 = vsub.s32 %v7512, %v7514
        %v7516 = vrot.slane %v7343, %v7515
        %v7518 = vunpack.c.l.s4 1983009808
        %v7519 = vunpack.c.0.s8 %v7518
        %v7520 = vlaneseq
        %v7521 = vshrl.u32 %v7520, 7
        %v7522 = vsub.s32 %v7519, %v7521
        %v7523 = vrot.slane %v7509, %v7522
        %v7524 = vcombine.high %v7516, %v7516
        %v7525 = vcombine.high %v7523, %v7523
        %v7526 = vcombine.low %v7363, %v7371
        %v7527 = vcombine.low %v7370, %v7372
        %v7529 = vunpack.c.l.s4 1983009808
        %v7530 = vunpack.c.0.s8 %v7529
        %v7531 = vlaneseq
        %v7532 = vshrl.u32 %v7531, 7
        %v7533 = vsub.s32 %v7530, %v7532
        %v7534 = vrot.slane %v7526, %v7533
        %v7536 = vunpack.c.l.s4 1983009808
        %v7537 = vunpack.c.0.s8 %v7536
        %v7538 = vlaneseq
        %v7539 = vshrl.u32 %v7538, 7
        %v7540 = vsub.s32 %v7537, %v7539
        %v7541 = vrot.slane %v7527, %v7540
        %v7542 = vcombine.low %v7534, %v7541
        %v7544 = vunpack.c.l.s4 1983009808
        %v7545 = vunpack.c.0.s8 %v7544
        %v7546 = vlaneseq
        %v7547 = vshrl.u32 %v7546, 7
        %v7548 = vsub.s32 %v7545, %v7547
        %v7549 = vrot.slane %v7380, %v7548
        %v7550 = vcombine.low %v7388, %v7387
        %v7551 = vcombine.low %v7389, %v7397
        %v7553 = vunpack.c.l.s4 1983009808
        %v7554 = vunpack.c.0.s8 %v7553
        %v7555 = vlaneseq
        %v7556 = vshrl.u32 %v7555, 7
        %v7557 = vsub.s32 %v7554, %v7556
        %v7558 = vrot.slane %v7550, %v7557
        %v7560 = vunpack.c.l.s4 1983009808
        %v7561 = vunpack.c.0.s8 %v7560
        %v7562 = vlaneseq
        %v7563 = vshrl.u32 %v7562, 7
        %v7564 = vsub.s32 %v7561, %v7563
        %v7565 = vrot.slane %v7551, %v7564
        %v7566 = vcombine.low %v7558, %v7565
        %v7568 = vunpack.c.l.s4 1983009808
        %v7569 = vunpack.c.0.s8 %v7568
        %v7570 = vlaneseq
        %v7571 = vshrl.u32 %v7570, 7
        %v7572 = vsub.s32 %v7569, %v7571
        %v7573 = vrot.slane %v7405, %v7572
        %v7574 = vcombine.low %v7404, %v7406
        %v7575 = vcombine.low %v7414, %v7422
        %v7577 = vunpack.c.l.s4 1983009808
        %v7578 = vunpack.c.0.s8 %v7577
        %v7579 = vlaneseq
        %v7580 = vshrl.u32 %v7579, 7
        %v7581 = vsub.s32 %v7578, %v7580
        %v7582 = vrot.slane %v7574, %v7581
        %v7584 = vunpack.c.l.s4 1983009808
        %v7585 = vunpack.c.0.s8 %v7584
        %v7586 = vlaneseq
        %v7587 = vshrl.u32 %v7586, 7
        %v7588 = vsub.s32 %v7585, %v7587
        %v7589 = vrot.slane %v7575, %v7588
        %v7590 = vcombine.low %v7582, %v7589
        %v7592 = vunpack.c.l.s4 1983009808
        %v7593 = vunpack.c.0.s8 %v7592
        %v7594 = vlaneseq
        %v7595 = vshrl.u32 %v7594, 7
        %v7596 = vsub.s32 %v7593, %v7595
        %v7597 = vrot.slane %v7421, %v7596
        %v7598 = vcombine.low %v7423, %v7431
        %v7599 = vcombine.low %v7439, %v7438
        %v7601 = vunpack.c.l.s4 1983009808
        %v7602 = vunpack.c.0.s8 %v7601
        %v7603 = vlaneseq
        %v7604 = vshrl.u32 %v7603, 7
        %v7605 = vsub.s32 %v7602, %v7604
        %v7606 = vrot.slane %v7598, %v7605
        %v7608 = vunpack.c.l.s4 1983009808
        %v7609 = vunpack.c.0.s8 %v7608
        %v7610 = vlaneseq
        %v7611 = vshrl.u32 %v7610, 7
        %v7612 = vsub.s32 %v7609, %v7611
        %v7613 = vrot.slane %v7599, %v7612
        %v7614 = vcombine.low %v7606, %v7613
        %v7616 = vunpack.c.l.s4 1983009808
        %v7617 = vunpack.c.0.s8 %v7616
        %v7618 = vlaneseq
        %v7619 = vshrl.u32 %v7618, 7
        %v7620 = vsub.s32 %v7617, %v7619
        %v7621 = vrot.slane %v7440, %v7620
        %v7622 = vcombine.low %v7448, %v7456
        %v7623 = vcombine.low %v7455, %v7457
        %v7625 = vunpack.c.l.s4 1983009808
        %v7626 = vunpack.c.0.s8 %v7625
        %v7627 = vlaneseq
        %v7628 = vshrl.u32 %v7627, 7
        %v7629 = vsub.s32 %v7626, %v7628
        %v7630 = vrot.slane %v7622, %v7629
        %v7632 = vunpack.c.l.s4 1983009808
        %v7633 = vunpack.c.0.s8 %v7632
        %v7634 = vlaneseq
        %v7635 = vshrl.u32 %v7634, 7
        %v7636 = vsub.s32 %v7633, %v7635
        %v7637 = vrot.slane %v7623, %v7636
        %v7638 = vcombine.low %v7630, %v7637
        %v7640 = vunpack.c.l.s4 1983009808
        %v7641 = vunpack.c.0.s8 %v7640
        %v7642 = vlaneseq
        %v7643 = vshrl.u32 %v7642, 7
        %v7644 = vsub.s32 %v7641, %v7643
        %v7645 = vrot.slane %v7465, %v7644
        %v7646 = vcombine.low %v7473, %v7472
        %v7647 = vcombine.low %v7474, %v7482
        %v7649 = vunpack.c.l.s4 1983009808
        %v7650 = vunpack.c.0.s8 %v7649
        %v7651 = vlaneseq
        %v7652 = vshrl.u32 %v7651, 7
        %v7653 = vsub.s32 %v7650, %v7652
        %v7654 = vrot.slane %v7646, %v7653
        %v7656 = vunpack.c.l.s4 1983009808
        %v7657 = vunpack.c.0.s8 %v7656
        %v7658 = vlaneseq
        %v7659 = vshrl.u32 %v7658, 7
        %v7660 = vsub.s32 %v7657, %v7659
        %v7661 = vrot.slane %v7647, %v7660
        %v7662 = vcombine.low %v7654, %v7661
        %v7664 = vunpack.c.l.s4 1983009808
        %v7665 = vunpack.c.0.s8 %v7664
        %v7666 = vlaneseq
        %v7667 = vshrl.u32 %v7666, 7
        %v7668 = vsub.s32 %v7665, %v7667
        %v7669 = vrot.slane %v7490, %v7668
        %v7670 = vcombine.low %v7489, %v7491
        %v7671 = vcombine.low %v7499, %v7507
        %v7673 = vunpack.c.l.s4 1983009808
        %v7674 = vunpack.c.0.s8 %v7673
        %v7675 = vlaneseq
        %v7676 = vshrl.u32 %v7675, 7
        %v7677 = vsub.s32 %v7674, %v7676
        %v7678 = vrot.slane %v7670, %v7677
        %v7680 = vunpack.c.l.s4 1983009808
        %v7681 = vunpack.c.0.s8 %v7680
        %v7682 = vlaneseq
        %v7683 = vshrl.u32 %v7682, 7
        %v7684 = vsub.s32 %v7681, %v7683
        %v7685 = vrot.slane %v7671, %v7684
        %v7686 = vcombine.low %v7678, %v7685
        %v7688 = vunpack.c.l.s4 1983009808
        %v7689 = vunpack.c.0.s8 %v7688
        %v7690 = vlaneseq
        %v7691 = vshrl.u32 %v7690, 7
        %v7692 = vsub.s32 %v7689, %v7691
        %v7693 = vrot.slane %v7506, %v7692
        %v7694 = vcombine.low %v7508, %v7516
        %v7695 = vcombine.low %v7524, %v7523
        %v7697 = vunpack.c.l.s4 1983009808
        %v7698 = vunpack.c.0.s8 %v7697
        %v7699 = vlaneseq
        %v7700 = vshrl.u32 %v7699, 7
        %v7701 = vsub.s32 %v7698, %v7700
        %v7702 = vrot.slane %v7694, %v7701
        %v7704 = vunpack.c.l.s4 1983009808
        %v7705 = vunpack.c.0.s8 %v7704
        %v7706 = vlaneseq
        %v7707 = vshrl.u32 %v7706, 7
        %v7708 = vsub.s32 %v7705, %v7707
        %v7709 = vrot.slane %v7695, %v7708
        %v7710 = vcombine.low %v7702, %v7709
        %v7712 = vunpack.c.l.s4 1983009808
        %v7713 = vunpack.c.0.s8 %v7712
        %v7714 = vlaneseq
        %v7715 = vshrl.u32 %v7714, 7
        %v7716 = vsub.s32 %v7713, %v7715
        %v7717 = vrot.slane %v7525, %v7716
        %7734 = vxpose.xlu0.b32.start [1/16] %v7542, 128
        %7735 = vxpose.xlu0.b32.cont [2/16] %v7549, 128
        %7736 = vxpose.xlu0.b32.cont [3/16] 0.0, 128
        %7737 = vxpose.xlu0.b32.cont [4/16] 0.0, 128
        %7738 = vxpose.xlu0.b32.cont [5/16] 0.0, 128
        %7739 = vxpose.xlu0.b32.cont [6/16] 0.0, 128
        %7740 = vxpose.xlu0.b32.cont [7/16] 0.0, 128
        %7741 = vxpose.xlu0.b32.cont [8/16] 0.0, 128
        %7742 = vxpose.xlu0.b32.cont [9/16] 0.0, 128
        %7743 = vxpose.xlu0.b32.cont [10/16] 0.0, 128
        %7744 = vxpose.xlu0.b32.cont [11/16] 0.0, 128
        %7745 = vxpose.xlu0.b32.cont [12/16] 0.0, 128
        %7746 = vxpose.xlu0.b32.cont [13/16] 0.0, 128
        %7747 = vxpose.xlu0.b32.cont [14/16] 0.0, 128
        %7748 = vxpose.xlu0.b32.cont [15/16] 0.0, 128
        %7749 = vxpose.xlu0.b32.end [16/16] 0.0, 128
        %v7750 = vpop.trf.xlu0
        %v7751 = vpop.trf.xlu0
        %v7752 = vpop.trf.xlu0
        %v7753 = vpop.trf.xlu0
        %v7754 = vpop.trf.xlu0
        %v7755 = vpop.trf.xlu0
        %v7756 = vpop.trf.xlu0
        %v7757 = vpop.trf.xlu0
        %v7758 = vpop.trf.xlu0
        %v7759 = vpop.trf.xlu0
        %v7760 = vpop.trf.xlu0
        %v7761 = vpop.trf.xlu0
        %v7762 = vpop.trf.xlu0
        %v7763 = vpop.trf.xlu0
        %v7764 = vpop.trf.xlu0
        %v7765 = vpop.trf.xlu0
        %7766 = vxpose.xlu0.b32.start [1/16] %v7566, 128
        %7767 = vxpose.xlu0.b32.cont [2/16] %v7573, 128
        %7768 = vxpose.xlu0.b32.cont [3/16] 0.0, 128
        %7769 = vxpose.xlu0.b32.cont [4/16] 0.0, 128
        %7770 = vxpose.xlu0.b32.cont [5/16] 0.0, 128
        %7771 = vxpose.xlu0.b32.cont [6/16] 0.0, 128
        %7772 = vxpose.xlu0.b32.cont [7/16] 0.0, 128
        %7773 = vxpose.xlu0.b32.cont [8/16] 0.0, 128
        %7774 = vxpose.xlu0.b32.cont [9/16] 0.0, 128
        %7775 = vxpose.xlu0.b32.cont [10/16] 0.0, 128
        %7776 = vxpose.xlu0.b32.cont [11/16] 0.0, 128
        %7777 = vxpose.xlu0.b32.cont [12/16] 0.0, 128
        %7778 = vxpose.xlu0.b32.cont [13/16] 0.0, 128
        %7779 = vxpose.xlu0.b32.cont [14/16] 0.0, 128
        %7780 = vxpose.xlu0.b32.cont [15/16] 0.0, 128
        %7781 = vxpose.xlu0.b32.end [16/16] 0.0, 128
        %v7782 = vpop.trf.xlu0
        %v7783 = vpop.trf.xlu0
        %v7784 = vpop.trf.xlu0
        %v7785 = vpop.trf.xlu0
        %v7786 = vpop.trf.xlu0
        %v7787 = vpop.trf.xlu0
        %v7788 = vpop.trf.xlu0
        %v7789 = vpop.trf.xlu0
        %v7790 = vpop.trf.xlu0
        %v7791 = vpop.trf.xlu0
        %v7792 = vpop.trf.xlu0
        %v7793 = vpop.trf.xlu0
        %v7794 = vpop.trf.xlu0
        %v7795 = vpop.trf.xlu0
        %v7796 = vpop.trf.xlu0
        %v7797 = vpop.trf.xlu0
        %7798 = vxpose.xlu0.b32.start [1/16] %v7590, 128
        %7799 = vxpose.xlu0.b32.cont [2/16] %v7597, 128
        %7800 = vxpose.xlu0.b32.cont [3/16] 0.0, 128
        %7801 = vxpose.xlu0.b32.cont [4/16] 0.0, 128
        %7802 = vxpose.xlu0.b32.cont [5/16] 0.0, 128
        %7803 = vxpose.xlu0.b32.cont [6/16] 0.0, 128
        %7804 = vxpose.xlu0.b32.cont [7/16] 0.0, 128
        %7805 = vxpose.xlu0.b32.cont [8/16] 0.0, 128
        %7806 = vxpose.xlu0.b32.cont [9/16] 0.0, 128
        %7807 = vxpose.xlu0.b32.cont [10/16] 0.0, 128
        %7808 = vxpose.xlu0.b32.cont [11/16] 0.0, 128
        %7809 = vxpose.xlu0.b32.cont [12/16] 0.0, 128
        %7810 = vxpose.xlu0.b32.cont [13/16] 0.0, 128
        %7811 = vxpose.xlu0.b32.cont [14/16] 0.0, 128
        %7812 = vxpose.xlu0.b32.cont [15/16] 0.0, 128
        %7813 = vxpose.xlu0.b32.end [16/16] 0.0, 128
        %v7814 = vpop.trf.xlu0
        %v7815 = vpop.trf.xlu0
        %v7816 = vpop.trf.xlu0
        %v7817 = vpop.trf.xlu0
        %v7818 = vpop.trf.xlu0
        %v7819 = vpop.trf.xlu0
        %v7820 = vpop.trf.xlu0
        %v7821 = vpop.trf.xlu0
        %v7822 = vpop.trf.xlu0
        %v7823 = vpop.trf.xlu0
        %v7824 = vpop.trf.xlu0
        %v7825 = vpop.trf.xlu0
        %v7826 = vpop.trf.xlu0
        %v7827 = vpop.trf.xlu0
        %v7828 = vpop.trf.xlu0
        %v7829 = vpop.trf.xlu0
        %7830 = vxpose.xlu0.b32.start [1/16] %v7614, 128
        %7831 = vxpose.xlu0.b32.cont [2/16] %v7621, 128
        %7832 = vxpose.xlu0.b32.cont [3/16] 0.0, 128
        %7833 = vxpose.xlu0.b32.cont [4/16] 0.0, 128
        %7834 = vxpose.xlu0.b32.cont [5/16] 0.0, 128
        %7835 = vxpose.xlu0.b32.cont [6/16] 0.0, 128
        %7836 = vxpose.xlu0.b32.cont [7/16] 0.0, 128
        %7837 = vxpose.xlu0.b32.cont [8/16] 0.0, 128
        %7838 = vxpose.xlu0.b32.cont [9/16] 0.0, 128
        %7839 = vxpose.xlu0.b32.cont [10/16] 0.0, 128
        %7840 = vxpose.xlu0.b32.cont [11/16] 0.0, 128
        %7841 = vxpose.xlu0.b32.cont [12/16] 0.0, 128
        %7842 = vxpose.xlu0.b32.cont [13/16] 0.0, 128
        %7843 = vxpose.xlu0.b32.cont [14/16] 0.0, 128
        %7844 = vxpose.xlu0.b32.cont [15/16] 0.0, 128
        %7845 = vxpose.xlu0.b32.end [16/16] 0.0, 128
        %v7846 = vpop.trf.xlu0
        %v7847 = vpop.trf.xlu0
        %v7848 = vpop.trf.xlu0
        %v7849 = vpop.trf.xlu0
        %v7850 = vpop.trf.xlu0
        %v7851 = vpop.trf.xlu0
        %v7852 = vpop.trf.xlu0
        %v7853 = vpop.trf.xlu0
        %v7854 = vpop.trf.xlu0
        %v7855 = vpop.trf.xlu0
        %v7856 = vpop.trf.xlu0
        %v7857 = vpop.trf.xlu0
        %v7858 = vpop.trf.xlu0
        %v7859 = vpop.trf.xlu0
        %v7860 = vpop.trf.xlu0
        %v7861 = vpop.trf.xlu0
        %7862 = vxpose.xlu0.b32.start [1/16] %v7638, 128
        %7863 = vxpose.xlu0.b32.cont [2/16] %v7645, 128
        %7864 = vxpose.xlu0.b32.cont [3/16] 0.0, 128
        %7865 = vxpose.xlu0.b32.cont [4/16] 0.0, 128
        %7866 = vxpose.xlu0.b32.cont [5/16] 0.0, 128
        %7867 = vxpose.xlu0.b32.cont [6/16] 0.0, 128
        %7868 = vxpose.xlu0.b32.cont [7/16] 0.0, 128
        %7869 = vxpose.xlu0.b32.cont [8/16] 0.0, 128
        %7870 = vxpose.xlu0.b32.cont [9/16] 0.0, 128
        %7871 = vxpose.xlu0.b32.cont [10/16] 0.0, 128
        %7872 = vxpose.xlu0.b32.cont [11/16] 0.0, 128
        %7873 = vxpose.xlu0.b32.cont [12/16] 0.0, 128
        %7874 = vxpose.xlu0.b32.cont [13/16] 0.0, 128
        %7875 = vxpose.xlu0.b32.cont [14/16] 0.0, 128
        %7876 = vxpose.xlu0.b32.cont [15/16] 0.0, 128
        %7877 = vxpose.xlu0.b32.end [16/16] 0.0, 128
        %v7878 = vpop.trf.xlu0
        %v7879 = vpop.trf.xlu0
        %v7880 = vpop.trf.xlu0
        %v7881 = vpop.trf.xlu0
        %v7882 = vpop.trf.xlu0
        %v7883 = vpop.trf.xlu0
        %v7884 = vpop.trf.xlu0
        %v7885 = vpop.trf.xlu0
        %v7886 = vpop.trf.xlu0
        %v7887 = vpop.trf.xlu0
        %v7888 = vpop.trf.xlu0
        %v7889 = vpop.trf.xlu0
        %v7890 = vpop.trf.xlu0
        %v7891 = vpop.trf.xlu0
        %v7892 = vpop.trf.xlu0
        %v7893 = vpop.trf.xlu0
        %7894 = vxpose.xlu0.b32.start [1/16] %v7662, 128
        %7895 = vxpose.xlu0.b32.cont [2/16] %v7669, 128
        %7896 = vxpose.xlu0.b32.cont [3/16] 0.0, 128
        %7897 = vxpose.xlu0.b32.cont [4/16] 0.0, 128
        %7898 = vxpose.xlu0.b32.cont [5/16] 0.0, 128
        %7899 = vxpose.xlu0.b32.cont [6/16] 0.0, 128
        %7900 = vxpose.xlu0.b32.cont [7/16] 0.0, 128
        %7901 = vxpose.xlu0.b32.cont [8/16] 0.0, 128
        %7902 = vxpose.xlu0.b32.cont [9/16] 0.0, 128
        %7903 = vxpose.xlu0.b32.cont [10/16] 0.0, 128
        %7904 = vxpose.xlu0.b32.cont [11/16] 0.0, 128
        %7905 = vxpose.xlu0.b32.cont [12/16] 0.0, 128
        %7906 = vxpose.xlu0.b32.cont [13/16] 0.0, 128
        %7907 = vxpose.xlu0.b32.cont [14/16] 0.0, 128
        %7908 = vxpose.xlu0.b32.cont [15/16] 0.0, 128
        %7909 = vxpose.xlu0.b32.end [16/16] 0.0, 128
        %v7910 = vpop.trf.xlu0
        %v7911 = vpop.trf.xlu0
        %v7912 = vpop.trf.xlu0
        %v7913 = vpop.trf.xlu0
        %v7914 = vpop.trf.xlu0
        %v7915 = vpop.trf.xlu0
        %v7916 = vpop.trf.xlu0
        %v7917 = vpop.trf.xlu0
        %v7918 = vpop.trf.xlu0
        %v7919 = vpop.trf.xlu0
        %v7920 = vpop.trf.xlu0
        %v7921 = vpop.trf.xlu0
        %v7922 = vpop.trf.xlu0
        %v7923 = vpop.trf.xlu0
        %v7924 = vpop.trf.xlu0
        %v7925 = vpop.trf.xlu0
        %7926 = vxpose.xlu0.b32.start [1/16] %v7686, 128
        %7927 = vxpose.xlu0.b32.cont [2/16] %v7693, 128
        %7928 = vxpose.xlu0.b32.cont [3/16] 0.0, 128
        %7929 = vxpose.xlu0.b32.cont [4/16] 0.0, 128
        %7930 = vxpose.xlu0.b32.cont [5/16] 0.0, 128
        %7931 = vxpose.xlu0.b32.cont [6/16] 0.0, 128
        %7932 = vxpose.xlu0.b32.cont [7/16] 0.0, 128
        %7933 = vxpose.xlu0.b32.cont [8/16] 0.0, 128
        %7934 = vxpose.xlu0.b32.cont [9/16] 0.0, 128
        %7935 = vxpose.xlu0.b32.cont [10/16] 0.0, 128
        %7936 = vxpose.xlu0.b32.cont [11/16] 0.0, 128
        %7937 = vxpose.xlu0.b32.cont [12/16] 0.0, 128
        %7938 = vxpose.xlu0.b32.cont [13/16] 0.0, 128
        %7939 = vxpose.xlu0.b32.cont [14/16] 0.0, 128
        %7940 = vxpose.xlu0.b32.cont [15/16] 0.0, 128
        %7941 = vxpose.xlu0.b32.end [16/16] 0.0, 128
        %v7942 = vpop.trf.xlu0
        %v7943 = vpop.trf.xlu0
        %v7944 = vpop.trf.xlu0
        %v7945 = vpop.trf.xlu0
        %v7946 = vpop.trf.xlu0
        %v7947 = vpop.trf.xlu0
        %v7948 = vpop.trf.xlu0
        %v7949 = vpop.trf.xlu0
        %v7950 = vpop.trf.xlu0
        %v7951 = vpop.trf.xlu0
        %v7952 = vpop.trf.xlu0
        %v7953 = vpop.trf.xlu0
        %v7954 = vpop.trf.xlu0
        %v7955 = vpop.trf.xlu0
        %v7956 = vpop.trf.xlu0
        %v7957 = vpop.trf.xlu0
        %7958 = vxpose.xlu0.b32.start [1/16] %v7710, 128
        %7959 = vxpose.xlu0.b32.cont [2/16] %v7717, 128
        %7960 = vxpose.xlu0.b32.cont [3/16] 0.0, 128
        %7961 = vxpose.xlu0.b32.cont [4/16] 0.0, 128
        %7962 = vxpose.xlu0.b32.cont [5/16] 0.0, 128
        %7963 = vxpose.xlu0.b32.cont [6/16] 0.0, 128
        %7964 = vxpose.xlu0.b32.cont [7/16] 0.0, 128
        %7965 = vxpose.xlu0.b32.cont [8/16] 0.0, 128
        %7966 = vxpose.xlu0.b32.cont [9/16] 0.0, 128
        %7967 = vxpose.xlu0.b32.cont [10/16] 0.0, 128
        %7968 = vxpose.xlu0.b32.cont [11/16] 0.0, 128
        %7969 = vxpose.xlu0.b32.cont [12/16] 0.0, 128
        %7970 = vxpose.xlu0.b32.cont [13/16] 0.0, 128
        %7971 = vxpose.xlu0.b32.cont [14/16] 0.0, 128
        %7972 = vxpose.xlu0.b32.cont [15/16] 0.0, 128
        %7973 = vxpose.xlu0.b32.end [16/16] 0.0, 128
        %v7974 = vpop.trf.xlu0
        %v7975 = vpop.trf.xlu0
        %v7976 = vpop.trf.xlu0
        %v7977 = vpop.trf.xlu0
        %v7978 = vpop.trf.xlu0
        %v7979 = vpop.trf.xlu0
        %v7980 = vpop.trf.xlu0
        %v7981 = vpop.trf.xlu0
        %v7982 = vpop.trf.xlu0
        %v7983 = vpop.trf.xlu0
        %v7984 = vpop.trf.xlu0
        %v7985 = vpop.trf.xlu0
        %v7986 = vpop.trf.xlu0
        %v7987 = vpop.trf.xlu0
        %v7988 = vpop.trf.xlu0
        %v7989 = vpop.trf.xlu0
        %v7990 = vadd.f32 %v6555, %v7750
        %v7991 = vadd.f32 %v6556, %v7751
        %v7992 = vadd.f32 %v6557, %v7782
        %v7993 = vadd.f32 %v6558, %v7783
        %v7994 = vadd.f32 %v6559, %v7814
        %v7995 = vadd.f32 %v6560, %v7815
        %v7996 = vadd.f32 %v6561, %v7846
        %v7997 = vadd.f32 %v6562, %v7847
        %v7998 = vadd.f32 %v6563, %v7878
        %v7999 = vadd.f32 %v6564, %v7879
        %v8000 = vadd.f32 %v6565, %v7910
        %v8001 = vadd.f32 %v6566, %v7911
        %v8002 = vadd.f32 %v6567, %v7942
        %v8003 = vadd.f32 %v6568, %v7943
        %v8004 = vadd.f32 %v6569, %v7974
        %v8005 = vadd.f32 %v6570, %v7975
        %v8006 = vld [vmem:[%s5] sm:$0x1]
        %v8007 = vlaneseq
        %v8008 = vshrl.u32 %v8007, 7
        %v8009 = vsub.s32 0, %v8008
        %v8010 = vrot.slane %v8006, %v8009
        %8012 = vbcast.lane.b32.xlu0 %v8010, 256
        %v8013 = vpop.permute.xlu0 %8012
        %v8014 = vlaneseq
        %v8015 = vshrl.u32 %v8014, 7
        %v8016 = vsub.s32 0, %v8015
        %v8017 = vrot.slane %v8013, %v8016
        %v8018 = vlaneseq
        %v8019 = vshrl.u32 %v8018, 7
        %v8020 = vsub.s32 1, %v8019
        %v8021 = vrot.slane %v8013, %v8020
        %v8022 = vlaneseq
        %v8023 = vshrl.u32 %v8022, 7
        %v8024 = vsub.s32 2, %v8023
        %v8025 = vrot.slane %v8013, %v8024
        %v8026 = vlaneseq
        %v8027 = vshrl.u32 %v8026, 7
        %v8028 = vsub.s32 3, %v8027
        %v8029 = vrot.slane %v8013, %v8028
        %v8030 = vlaneseq
        %v8031 = vshrl.u32 %v8030, 7
        %v8032 = vsub.s32 4, %v8031
        %v8033 = vrot.slane %v8013, %v8032
        %v8034 = vlaneseq
        %v8035 = vshrl.u32 %v8034, 7
        %v8036 = vsub.s32 5, %v8035
        %v8037 = vrot.slane %v8013, %v8036
        %v8038 = vlaneseq
        %v8039 = vshrl.u32 %v8038, 7
        %v8040 = vsub.s32 6, %v8039
        %v8041 = vrot.slane %v8013, %v8040
        %v8042 = vlaneseq
        %v8043 = vshrl.u32 %v8042, 7
        %v8044 = vsub.s32 7, %v8043
        %v8045 = vrot.slane %v8013, %v8044
        %v8046 = vadd.f32 %v7990, %v8017
        %v8047 = vadd.f32 %v7991, %v8017
        %v8048 = vadd.f32 %v7992, %v8021
        %v8049 = vadd.f32 %v7993, %v8021
        %v8050 = vadd.f32 %v7994, %v8025
        %v8051 = vadd.f32 %v7995, %v8025
        %v8052 = vadd.f32 %v7996, %v8029
        %v8053 = vadd.f32 %v7997, %v8029
        %v8054 = vadd.f32 %v7998, %v8033
        %v8055 = vadd.f32 %v7999, %v8033
        %v8056 = vadd.f32 %v8000, %v8037
        %v8057 = vadd.f32 %v8001, %v8037
        %v8058 = vadd.f32 %v8002, %v8041
        %v8059 = vadd.f32 %v8003, %v8041
        %v8060 = vadd.f32 %v8004, %v8045
        %v8061 = vadd.f32 %v8005, %v8045
        %v8062 = vmax.f32 %v8046, 0.0
        %v8063 = vmax.f32 %v8047, 0.0
        %v8064 = vmax.f32 %v8048, 0.0
        %v8065 = vmax.f32 %v8049, 0.0
        %v8066 = vmax.f32 %v8050, 0.0
        %v8067 = vmax.f32 %v8051, 0.0
        %v8068 = vmax.f32 %v8052, 0.0
        %v8069 = vmax.f32 %v8053, 0.0
        %v8070 = vmax.f32 %v8054, 0.0
        %v8071 = vmax.f32 %v8055, 0.0
        %v8072 = vmax.f32 %v8056, 0.0
        %v8073 = vmax.f32 %v8057, 0.0
        %v8074 = vmax.f32 %v8058, 0.0
        %v8075 = vmax.f32 %v8059, 0.0
        %v8076 = vmax.f32 %v8060, 0.0
        %v8077 = vmax.f32 %v8061, 0.0
        %8094 = vrot.lane.b32.xlu0 %v8062, 127
        %v8095 = vpop.permute.xlu0 %8094
        %8096 = vrot.lane.b32.xlu0 %v8063, 127
        %v8097 = vpop.permute.xlu0 %8096
        %8098 = vrot.lane.b32.xlu0 %v8064, 127
        %v8099 = vpop.permute.xlu0 %8098
        %8100 = vrot.lane.b32.xlu0 %v8065, 127
        %v8101 = vpop.permute.xlu0 %8100
        %8102 = vrot.lane.b32.xlu0 %v8066, 127
        %v8103 = vpop.permute.xlu0 %8102
        %8104 = vrot.lane.b32.xlu0 %v8067, 127
        %v8105 = vpop.permute.xlu0 %8104
        %8106 = vrot.lane.b32.xlu0 %v8068, 127
        %v8107 = vpop.permute.xlu0 %8106
        %8108 = vrot.lane.b32.xlu0 %v8069, 127
        %v8109 = vpop.permute.xlu0 %8108
        %8110 = vrot.lane.b32.xlu0 %v8070, 127
        %v8111 = vpop.permute.xlu0 %8110
        %8112 = vrot.lane.b32.xlu0 %v8071, 127
        %v8113 = vpop.permute.xlu0 %8112
        %8114 = vrot.lane.b32.xlu0 %v8072, 127
        %v8115 = vpop.permute.xlu0 %8114
        %8116 = vrot.lane.b32.xlu0 %v8073, 127
        %v8117 = vpop.permute.xlu0 %8116
        %8118 = vrot.lane.b32.xlu0 %v8074, 127
        %v8119 = vpop.permute.xlu0 %8118
        %8120 = vrot.lane.b32.xlu0 %v8075, 127
        %v8121 = vpop.permute.xlu0 %8120
        %8122 = vrot.lane.b32.xlu0 %v8076, 127
        %v8123 = vpop.permute.xlu0 %8122
        %8124 = vrot.lane.b32.xlu0 %v8077, 127
        %v8125 = vpop.permute.xlu0 %8124
        %8142 = vrot.lane.b32.xlu0 %v8062, 126
        %v8143 = vpop.permute.xlu0 %8142
        %8144 = vrot.lane.b32.xlu0 %v8063, 126
        %v8145 = vpop.permute.xlu0 %8144
        %8146 = vrot.lane.b32.xlu0 %v8064, 126
        %v8147 = vpop.permute.xlu0 %8146
        %8148 = vrot.lane.b32.xlu0 %v8065, 126
        %v8149 = vpop.permute.xlu0 %8148
        %8150 = vrot.lane.b32.xlu0 %v8066, 126
        %v8151 = vpop.permute.xlu0 %8150
        %8152 = vrot.lane.b32.xlu0 %v8067, 126
        %v8153 = vpop.permute.xlu0 %8152
        %8154 = vrot.lane.b32.xlu0 %v8068, 126
        %v8155 = vpop.permute.xlu0 %8154
        %8156 = vrot.lane.b32.xlu0 %v8069, 126
        %v8157 = vpop.permute.xlu0 %8156
        %8158 = vrot.lane.b32.xlu0 %v8070, 126
        %v8159 = vpop.permute.xlu0 %8158
        %8160 = vrot.lane.b32.xlu0 %v8071, 126
        %v8161 = vpop.permute.xlu0 %8160
        %8162 = vrot.lane.b32.xlu0 %v8072, 126
        %v8163 = vpop.permute.xlu0 %8162
        %8164 = vrot.lane.b32.xlu0 %v8073, 126
        %v8165 = vpop.permute.xlu0 %8164
        %8166 = vrot.lane.b32.xlu0 %v8074, 126
        %v8167 = vpop.permute.xlu0 %8166
        %8168 = vrot.lane.b32.xlu0 %v8075, 126
        %v8169 = vpop.permute.xlu0 %8168
        %8170 = vrot.lane.b32.xlu0 %v8076, 126
        %v8171 = vpop.permute.xlu0 %8170
        %8172 = vrot.lane.b32.xlu0 %v8077, 126
        %v8173 = vpop.permute.xlu0 %8172
        %v8190 = vld [vmem:[%s6] sm:$0xff]
        %v8191 = vld [vmem:[%s6 + $0x8] sm:$0xff]
        %v8192 = vld [vmem:[%s6 + $0x10] sm:$0xff]
        %v8193 = vld [vmem:[%s6 + $0x18] sm:$0xff]
        %v8194 = vld [vmem:[%s7] sm:$0x1]
        %v8195 = vlaneseq
        %v8196 = vshrl.u32 %v8195, 7
        %v8197 = vsub.s32 0, %v8196
        %v8198 = vrot.slane %v8194, %v8197
        %8200 = vbcast.lane.b32.xlu0 %v8198, 256
        %v8201 = vpop.permute.xlu0 %8200
        %s8203 = sor.u32 256, 8
        %8204 = vbcast.lane.b32.xlu0 %v8198, %s8203
        %v8205 = vpop.permute.xlu0 %8204
        %s8207 = sor.u32 256, 16
        %8208 = vbcast.lane.b32.xlu0 %v8198, %s8207
        %v8209 = vpop.permute.xlu0 %8208
        %s8211 = sor.u32 256, 24
        %8212 = vbcast.lane.b32.xlu0 %v8198, %s8211
        %v8213 = vpop.permute.xlu0 %8212
        %v8214 = vlaneseq
        %v8215 = vshrl.u32 %v8214, 7
        %v8216 = vsub.s32 0, %v8215
        %v8217 = vrot.slane %v8201, %v8216
        %v8218 = vlaneseq
        %v8219 = vshrl.u32 %v8218, 7
        %v8220 = vsub.s32 1, %v8219
        %v8221 = vrot.slane %v8201, %v8220
        %v8222 = vlaneseq
        %v8223 = vshrl.u32 %v8222, 7
        %v8224 = vsub.s32 2, %v8223
        %v8225 = vrot.slane %v8201, %v8224
        %v8226 = vlaneseq
        %v8227 = vshrl.u32 %v8226, 7
        %v8228 = vsub.s32 3, %v8227
        %v8229 = vrot.slane %v8201, %v8228
        %v8230 = vlaneseq
        %v8231 = vshrl.u32 %v8230, 7
        %v8232 = vsub.s32 4, %v8231
        %v8233 = vrot.slane %v8201, %v8232
        %v8234 = vlaneseq
        %v8235 = vshrl.u32 %v8234, 7
        %v8236 = vsub.s32 5, %v8235
        %v8237 = vrot.slane %v8201, %v8236
        %v8238 = vlaneseq
        %v8239 = vshrl.u32 %v8238, 7
        %v8240 = vsub.s32 6, %v8239
        %v8241 = vrot.slane %v8201, %v8240
        %v8242 = vlaneseq
        %v8243 = vshrl.u32 %v8242, 7
        %v8244 = vsub.s32 7, %v8243
        %v8245 = vrot.slane %v8201, %v8244
        %v8246 = vlaneseq
        %v8247 = vshrl.u32 %v8246, 7
        %v8248 = vsub.s32 0, %v8247
        %v8249 = vrot.slane %v8205, %v8248
        %v8250 = vlaneseq
        %v8251 = vshrl.u32 %v8250, 7
        %v8252 = vsub.s32 1, %v8251
        %v8253 = vrot.slane %v8205, %v8252
        %v8254 = vlaneseq
        %v8255 = vshrl.u32 %v8254, 7
        %v8256 = vsub.s32 2, %v8255
        %v8257 = vrot.slane %v8205, %v8256
        %v8258 = vlaneseq
        %v8259 = vshrl.u32 %v8258, 7
        %v8260 = vsub.s32 3, %v8259
        %v8261 = vrot.slane %v8205, %v8260
        %v8262 = vlaneseq
        %v8263 = vshrl.u32 %v8262, 7
        %v8264 = vsub.s32 4, %v8263
        %v8265 = vrot.slane %v8205, %v8264
        %v8266 = vlaneseq
        %v8267 = vshrl.u32 %v8266, 7
        %v8268 = vsub.s32 5, %v8267
        %v8269 = vrot.slane %v8205, %v8268
        %v8270 = vlaneseq
        %v8271 = vshrl.u32 %v8270, 7
        %v8272 = vsub.s32 6, %v8271
        %v8273 = vrot.slane %v8205, %v8272
        %v8274 = vlaneseq
        %v8275 = vshrl.u32 %v8274, 7
        %v8276 = vsub.s32 7, %v8275
        %v8277 = vrot.slane %v8205, %v8276
        %v8278 = vlaneseq
        %v8279 = vshrl.u32 %v8278, 7
        %v8280 = vsub.s32 0, %v8279
        %v8281 = vrot.slane %v8209, %v8280
        %v8282 = vlaneseq
        %v8283 = vshrl.u32 %v8282, 7
        %v8284 = vsub.s32 1, %v8283
        %v8285 = vrot.slane %v8209, %v8284
        %v8286 = vlaneseq
        %v8287 = vshrl.u32 %v8286, 7
        %v8288 = vsub.s32 2, %v8287
        %v8289 = vrot.slane %v8209, %v8288
        %v8290 = vlaneseq
        %v8291 = vshrl.u32 %v8290, 7
        %v8292 = vsub.s32 3, %v8291
        %v8293 = vrot.slane %v8209, %v8292
        %v8294 = vlaneseq
        %v8295 = vshrl.u32 %v8294, 7
        %v8296 = vsub.s32 4, %v8295
        %v8297 = vrot.slane %v8209, %v8296
        %v8298 = vlaneseq
        %v8299 = vshrl.u32 %v8298, 7
        %v8300 = vsub.s32 5, %v8299
        %v8301 = vrot.slane %v8209, %v8300
        %v8302 = vlaneseq
        %v8303 = vshrl.u32 %v8302, 7
        %v8304 = vsub.s32 6, %v8303
        %v8305 = vrot.slane %v8209, %v8304
        %v8306 = vlaneseq
        %v8307 = vshrl.u32 %v8306, 7
        %v8308 = vsub.s32 7, %v8307
        %v8309 = vrot.slane %v8209, %v8308
        %v8310 = vlaneseq
        %v8311 = vshrl.u32 %v8310, 7
        %v8312 = vsub.s32 0, %v8311
        %v8313 = vrot.slane %v8213, %v8312
        %v8314 = vlaneseq
        %v8315 = vshrl.u32 %v8314, 7
        %v8316 = vsub.s32 1, %v8315
        %v8317 = vrot.slane %v8213, %v8316
        %v8318 = vlaneseq
        %v8319 = vshrl.u32 %v8318, 7
        %v8320 = vsub.s32 2, %v8319
        %v8321 = vrot.slane %v8213, %v8320
        %v8322 = vlaneseq
        %v8323 = vshrl.u32 %v8322, 7
        %v8324 = vsub.s32 3, %v8323
        %v8325 = vrot.slane %v8213, %v8324
        %v8326 = vlaneseq
        %v8327 = vshrl.u32 %v8326, 7
        %v8328 = vsub.s32 4, %v8327
        %v8329 = vrot.slane %v8213, %v8328
        %v8330 = vlaneseq
        %v8331 = vshrl.u32 %v8330, 7
        %v8332 = vsub.s32 5, %v8331
        %v8333 = vrot.slane %v8213, %v8332
        %v8334 = vlaneseq
        %v8335 = vshrl.u32 %v8334, 7
        %v8336 = vsub.s32 6, %v8335
        %v8337 = vrot.slane %v8213, %v8336
        %v8338 = vlaneseq
        %v8339 = vshrl.u32 %v8338, 7
        %v8340 = vsub.s32 7, %v8339
        %v8341 = vrot.slane %v8213, %v8340
        %v8342 = vcombine.low %v8062, %v8066
        %v8343 = vcombine.high %v8062, %v8066
        %v8345 = vunpack.c.l.s4 1983009808
        %v8346 = vunpack.c.0.s8 %v8345
        %v8347 = vlaneseq
        %v8348 = vshrl.u32 %v8347, 7
        %v8349 = vsub.s32 %v8346, %v8348
        %v8350 = vrot.slane %v8342, %v8349
        %v8352 = vunpack.c.l.s4 1983009808
        %v8353 = vunpack.c.0.s8 %v8352
        %v8354 = vlaneseq
        %v8355 = vshrl.u32 %v8354, 7
        %v8356 = vsub.s32 %v8353, %v8355
        %v8357 = vrot.slane %v8343, %v8356
        %v8358 = vcombine.low %v8064, %v8068
        %v8359 = vcombine.high %v8064, %v8068
        %v8361 = vunpack.c.l.s4 1983009808
        %v8362 = vunpack.c.0.s8 %v8361
        %v8363 = vlaneseq
        %v8364 = vshrl.u32 %v8363, 7
        %v8365 = vsub.s32 %v8362, %v8364
        %v8366 = vrot.slane %v8358, %v8365
        %v8368 = vunpack.c.l.s4 1983009808
        %v8369 = vunpack.c.0.s8 %v8368
        %v8370 = vlaneseq
        %v8371 = vshrl.u32 %v8370, 7
        %v8372 = vsub.s32 %v8369, %v8371
        %v8373 = vrot.slane %v8359, %v8372
        %v8374 = vcombine.low %v8070, %v8074
        %v8375 = vcombine.high %v8070, %v8074
        %v8377 = vunpack.c.l.s4 1983009808
        %v8378 = vunpack.c.0.s8 %v8377
        %v8379 = vlaneseq
        %v8380 = vshrl.u32 %v8379, 7
        %v8381 = vsub.s32 %v8378, %v8380
        %v8382 = vrot.slane %v8374, %v8381
        %v8384 = vunpack.c.l.s4 1983009808
        %v8385 = vunpack.c.0.s8 %v8384
        %v8386 = vlaneseq
        %v8387 = vshrl.u32 %v8386, 7
        %v8388 = vsub.s32 %v8385, %v8387
        %v8389 = vrot.slane %v8375, %v8388
        %v8390 = vcombine.low %v8072, %v8076
        %v8391 = vcombine.high %v8072, %v8076
        %v8393 = vunpack.c.l.s4 1983009808
        %v8394 = vunpack.c.0.s8 %v8393
        %v8395 = vlaneseq
        %v8396 = vshrl.u32 %v8395, 7
        %v8397 = vsub.s32 %v8394, %v8396
        %v8398 = vrot.slane %v8390, %v8397
        %v8400 = vunpack.c.l.s4 1983009808
        %v8401 = vunpack.c.0.s8 %v8400
        %v8402 = vlaneseq
        %v8403 = vshrl.u32 %v8402, 7
        %v8404 = vsub.s32 %v8401, %v8403
        %v8405 = vrot.slane %v8391, %v8404
        %v8406 = vcombine.low %v8350, %v8366
        %v8407 = vcombine.high %v8350, %v8366
        %v8409 = vunpack.c.l.s4 1934713408
        %v8410 = vunpack.c.0.s8 %v8409
        %v8411 = vlaneseq
        %v8412 = vshrl.u32 %v8411, 7
        %v8413 = vsub.s32 %v8410, %v8412
        %v8414 = vrot.slane %v8406, %v8413
        %v8416 = vunpack.c.l.s4 1934713408
        %v8417 = vunpack.c.0.s8 %v8416
        %v8418 = vlaneseq
        %v8419 = vshrl.u32 %v8418, 7
        %v8420 = vsub.s32 %v8417, %v8419
        %v8421 = vrot.slane %v8407, %v8420
        %v8422 = vcombine.low %v8357, %v8373
        %v8423 = vcombine.high %v8357, %v8373
        %v8425 = vunpack.c.l.s4 1934713408
        %v8426 = vunpack.c.0.s8 %v8425
        %v8427 = vlaneseq
        %v8428 = vshrl.u32 %v8427, 7
        %v8429 = vsub.s32 %v8426, %v8428
        %v8430 = vrot.slane %v8422, %v8429
        %v8432 = vunpack.c.l.s4 1934713408
        %v8433 = vunpack.c.0.s8 %v8432
        %v8434 = vlaneseq
        %v8435 = vshrl.u32 %v8434, 7
        %v8436 = vsub.s32 %v8433, %v8435
        %v8437 = vrot.slane %v8423, %v8436
        %v8438 = vcombine.low %v8382, %v8398
        %v8439 = vcombine.high %v8382, %v8398
        %v8441 = vunpack.c.l.s4 1934713408
        %v8442 = vunpack.c.0.s8 %v8441
        %v8443 = vlaneseq
        %v8444 = vshrl.u32 %v8443, 7
        %v8445 = vsub.s32 %v8442, %v8444
        %v8446 = vrot.slane %v8438, %v8445
        %v8448 = vunpack.c.l.s4 1934713408
        %v8449 = vunpack.c.0.s8 %v8448
        %v8450 = vlaneseq
        %v8451 = vshrl.u32 %v8450, 7
        %v8452 = vsub.s32 %v8449, %v8451
        %v8453 = vrot.slane %v8439, %v8452
        %v8454 = vcombine.low %v8389, %v8405
        %v8455 = vcombine.high %v8389, %v8405
        %v8457 = vunpack.c.l.s4 1934713408
        %v8458 = vunpack.c.0.s8 %v8457
        %v8459 = vlaneseq
        %v8460 = vshrl.u32 %v8459, 7
        %v8461 = vsub.s32 %v8458, %v8460
        %v8462 = vrot.slane %v8454, %v8461
        %v8464 = vunpack.c.l.s4 1934713408
        %v8465 = vunpack.c.0.s8 %v8464
        %v8466 = vlaneseq
        %v8467 = vshrl.u32 %v8466, 7
        %v8468 = vsub.s32 %v8465, %v8467
        %v8469 = vrot.slane %v8455, %v8468
        %v8470 = vcombine.low %v8414, %v8446
        %v8471 = vcombine.high %v8414, %v8446
        %v8472 = vcombine.low %v8421, %v8453
        %v8473 = vcombine.high %v8421, %v8453
        %v8474 = vcombine.low %v8430, %v8462
        %v8475 = vcombine.high %v8430, %v8462
        %v8476 = vcombine.low %v8437, %v8469
        %v8477 = vcombine.high %v8437, %v8469
        %v8478 = vcombine.low %v8095, %v8103
        %v8479 = vcombine.high %v8095, %v8103
        %v8481 = vunpack.c.l.s4 1983009808
        %v8482 = vunpack.c.0.s8 %v8481
        %v8483 = vlaneseq
        %v8484 = vshrl.u32 %v8483, 7
        %v8485 = vsub.s32 %v8482, %v8484
        %v8486 = vrot.slane %v8478, %v8485
        %v8488 = vunpack.c.l.s4 1983009808
        %v8489 = vunpack.c.0.s8 %v8488
        %v8490 = vlaneseq
        %v8491 = vshrl.u32 %v8490, 7
        %v8492 = vsub.s32 %v8489, %v8491
        %v8493 = vrot.slane %v8479, %v8492
        %v8494 = vcombine.low %v8099, %v8107
        %v8495 = vcombine.high %v8099, %v8107
        %v8497 = vunpack.c.l.s4 1983009808
        %v8498 = vunpack.c.0.s8 %v8497
        %v8499 = vlaneseq
        %v8500 = vshrl.u32 %v8499, 7
        %v8501 = vsub.s32 %v8498, %v8500
        %v8502 = vrot.slane %v8494, %v8501
        %v8504 = vunpack.c.l.s4 1983009808
        %v8505 = vunpack.c.0.s8 %v8504
        %v8506 = vlaneseq
        %v8507 = vshrl.u32 %v8506, 7
        %v8508 = vsub.s32 %v8505, %v8507
        %v8509 = vrot.slane %v8495, %v8508
        %v8510 = vcombine.low %v8111, %v8119
        %v8511 = vcombine.high %v8111, %v8119
        %v8513 = vunpack.c.l.s4 1983009808
        %v8514 = vunpack.c.0.s8 %v8513
        %v8515 = vlaneseq
        %v8516 = vshrl.u32 %v8515, 7
        %v8517 = vsub.s32 %v8514, %v8516
        %v8518 = vrot.slane %v8510, %v8517
        %v8520 = vunpack.c.l.s4 1983009808
        %v8521 = vunpack.c.0.s8 %v8520
        %v8522 = vlaneseq
        %v8523 = vshrl.u32 %v8522, 7
        %v8524 = vsub.s32 %v8521, %v8523
        %v8525 = vrot.slane %v8511, %v8524
        %v8526 = vcombine.low %v8115, %v8123
        %v8527 = vcombine.high %v8115, %v8123
        %v8529 = vunpack.c.l.s4 1983009808
        %v8530 = vunpack.c.0.s8 %v8529
        %v8531 = vlaneseq
        %v8532 = vshrl.u32 %v8531, 7
        %v8533 = vsub.s32 %v8530, %v8532
        %v8534 = vrot.slane %v8526, %v8533
        %v8536 = vunpack.c.l.s4 1983009808
        %v8537 = vunpack.c.0.s8 %v8536
        %v8538 = vlaneseq
        %v8539 = vshrl.u32 %v8538, 7
        %v8540 = vsub.s32 %v8537, %v8539
        %v8541 = vrot.slane %v8527, %v8540
        %v8542 = vcombine.low %v8486, %v8502
        %v8543 = vcombine.high %v8486, %v8502
        %v8545 = vunpack.c.l.s4 1934713408
        %v8546 = vunpack.c.0.s8 %v8545
        %v8547 = vlaneseq
        %v8548 = vshrl.u32 %v8547, 7
        %v8549 = vsub.s32 %v8546, %v8548
        %v8550 = vrot.slane %v8542, %v8549
        %v8552 = vunpack.c.l.s4 1934713408
        %v8553 = vunpack.c.0.s8 %v8552
        %v8554 = vlaneseq
        %v8555 = vshrl.u32 %v8554, 7
        %v8556 = vsub.s32 %v8553, %v8555
        %v8557 = vrot.slane %v8543, %v8556
        %v8558 = vcombine.low %v8493, %v8509
        %v8559 = vcombine.high %v8493, %v8509
        %v8561 = vunpack.c.l.s4 1934713408
        %v8562 = vunpack.c.0.s8 %v8561
        %v8563 = vlaneseq
        %v8564 = vshrl.u32 %v8563, 7
        %v8565 = vsub.s32 %v8562, %v8564
        %v8566 = vrot.slane %v8558, %v8565
        %v8568 = vunpack.c.l.s4 1934713408
        %v8569 = vunpack.c.0.s8 %v8568
        %v8570 = vlaneseq
        %v8571 = vshrl.u32 %v8570, 7
        %v8572 = vsub.s32 %v8569, %v8571
        %v8573 = vrot.slane %v8559, %v8572
        %v8574 = vcombine.low %v8518, %v8534
        %v8575 = vcombine.high %v8518, %v8534
        %v8577 = vunpack.c.l.s4 1934713408
        %v8578 = vunpack.c.0.s8 %v8577
        %v8579 = vlaneseq
        %v8580 = vshrl.u32 %v8579, 7
        %v8581 = vsub.s32 %v8578, %v8580
        %v8582 = vrot.slane %v8574, %v8581
        %v8584 = vunpack.c.l.s4 1934713408
        %v8585 = vunpack.c.0.s8 %v8584
        %v8586 = vlaneseq
        %v8587 = vshrl.u32 %v8586, 7
        %v8588 = vsub.s32 %v8585, %v8587
        %v8589 = vrot.slane %v8575, %v8588
        %v8590 = vcombine.low %v8525, %v8541
        %v8591 = vcombine.high %v8525, %v8541
        %v8593 = vunpack.c.l.s4 1934713408
        %v8594 = vunpack.c.0.s8 %v8593
        %v8595 = vlaneseq
        %v8596 = vshrl.u32 %v8595, 7
        %v8597 = vsub.s32 %v8594, %v8596
        %v8598 = vrot.slane %v8590, %v8597
        %v8600 = vunpack.c.l.s4 1934713408
        %v8601 = vunpack.c.0.s8 %v8600
        %v8602 = vlaneseq
        %v8603 = vshrl.u32 %v8602, 7
        %v8604 = vsub.s32 %v8601, %v8603
        %v8605 = vrot.slane %v8591, %v8604
        %v8606 = vcombine.low %v8550, %v8582
        %v8607 = vcombine.high %v8550, %v8582
        %v8608 = vcombine.low %v8557, %v8589
        %v8609 = vcombine.high %v8557, %v8589
        %v8610 = vcombine.low %v8566, %v8598
        %v8611 = vcombine.high %v8566, %v8598
        %v8612 = vcombine.low %v8573, %v8605
        %v8613 = vcombine.high %v8573, %v8605
        %v8614 = vcombine.low %v8143, %v8151
        %v8615 = vcombine.high %v8143, %v8151
        %v8617 = vunpack.c.l.s4 1983009808
        %v8618 = vunpack.c.0.s8 %v8617
        %v8619 = vlaneseq
        %v8620 = vshrl.u32 %v8619, 7
        %v8621 = vsub.s32 %v8618, %v8620
        %v8622 = vrot.slane %v8614, %v8621
        %v8624 = vunpack.c.l.s4 1983009808
        %v8625 = vunpack.c.0.s8 %v8624
        %v8626 = vlaneseq
        %v8627 = vshrl.u32 %v8626, 7
        %v8628 = vsub.s32 %v8625, %v8627
        %v8629 = vrot.slane %v8615, %v8628
        %v8630 = vcombine.low %v8147, %v8155
        %v8631 = vcombine.high %v8147, %v8155
        %v8633 = vunpack.c.l.s4 1983009808
        %v8634 = vunpack.c.0.s8 %v8633
        %v8635 = vlaneseq
        %v8636 = vshrl.u32 %v8635, 7
        %v8637 = vsub.s32 %v8634, %v8636
        %v8638 = vrot.slane %v8630, %v8637
        %v8640 = vunpack.c.l.s4 1983009808
        %v8641 = vunpack.c.0.s8 %v8640
        %v8642 = vlaneseq
        %v8643 = vshrl.u32 %v8642, 7
        %v8644 = vsub.s32 %v8641, %v8643
        %v8645 = vrot.slane %v8631, %v8644
        %v8646 = vcombine.low %v8159, %v8167
        %v8647 = vcombine.high %v8159, %v8167
        %v8649 = vunpack.c.l.s4 1983009808
        %v8650 = vunpack.c.0.s8 %v8649
        %v8651 = vlaneseq
        %v8652 = vshrl.u32 %v8651, 7
        %v8653 = vsub.s32 %v8650, %v8652
        %v8654 = vrot.slane %v8646, %v8653
        %v8656 = vunpack.c.l.s4 1983009808
        %v8657 = vunpack.c.0.s8 %v8656
        %v8658 = vlaneseq
        %v8659 = vshrl.u32 %v8658, 7
        %v8660 = vsub.s32 %v8657, %v8659
        %v8661 = vrot.slane %v8647, %v8660
        %v8662 = vcombine.low %v8163, %v8171
        %v8663 = vcombine.high %v8163, %v8171
        %v8665 = vunpack.c.l.s4 1983009808
        %v8666 = vunpack.c.0.s8 %v8665
        %v8667 = vlaneseq
        %v8668 = vshrl.u32 %v8667, 7
        %v8669 = vsub.s32 %v8666, %v8668
        %v8670 = vrot.slane %v8662, %v8669
        %v8672 = vunpack.c.l.s4 1983009808
        %v8673 = vunpack.c.0.s8 %v8672
        %v8674 = vlaneseq
        %v8675 = vshrl.u32 %v8674, 7
        %v8676 = vsub.s32 %v8673, %v8675
        %v8677 = vrot.slane %v8663, %v8676
        %v8678 = vcombine.low %v8622, %v8638
        %v8679 = vcombine.high %v8622, %v8638
        %v8681 = vunpack.c.l.s4 1934713408
        %v8682 = vunpack.c.0.s8 %v8681
        %v8683 = vlaneseq
        %v8684 = vshrl.u32 %v8683, 7
        %v8685 = vsub.s32 %v8682, %v8684
        %v8686 = vrot.slane %v8678, %v8685
        %v8688 = vunpack.c.l.s4 1934713408
        %v8689 = vunpack.c.0.s8 %v8688
        %v8690 = vlaneseq
        %v8691 = vshrl.u32 %v8690, 7
        %v8692 = vsub.s32 %v8689, %v8691
        %v8693 = vrot.slane %v8679, %v8692
        %v8694 = vcombine.low %v8629, %v8645
        %v8695 = vcombine.high %v8629, %v8645
        %v8697 = vunpack.c.l.s4 1934713408
        %v8698 = vunpack.c.0.s8 %v8697
        %v8699 = vlaneseq
        %v8700 = vshrl.u32 %v8699, 7
        %v8701 = vsub.s32 %v8698, %v8700
        %v8702 = vrot.slane %v8694, %v8701
        %v8704 = vunpack.c.l.s4 1934713408
        %v8705 = vunpack.c.0.s8 %v8704
        %v8706 = vlaneseq
        %v8707 = vshrl.u32 %v8706, 7
        %v8708 = vsub.s32 %v8705, %v8707
        %v8709 = vrot.slane %v8695, %v8708
        %v8710 = vcombine.low %v8654, %v8670
        %v8711 = vcombine.high %v8654, %v8670
        %v8713 = vunpack.c.l.s4 1934713408
        %v8714 = vunpack.c.0.s8 %v8713
        %v8715 = vlaneseq
        %v8716 = vshrl.u32 %v8715, 7
        %v8717 = vsub.s32 %v8714, %v8716
        %v8718 = vrot.slane %v8710, %v8717
        %v8720 = vunpack.c.l.s4 1934713408
        %v8721 = vunpack.c.0.s8 %v8720
        %v8722 = vlaneseq
        %v8723 = vshrl.u32 %v8722, 7
        %v8724 = vsub.s32 %v8721, %v8723
        %v8725 = vrot.slane %v8711, %v8724
        %v8726 = vcombine.low %v8661, %v8677
        %v8727 = vcombine.high %v8661, %v8677
        %v8729 = vunpack.c.l.s4 1934713408
        %v8730 = vunpack.c.0.s8 %v8729
        %v8731 = vlaneseq
        %v8732 = vshrl.u32 %v8731, 7
        %v8733 = vsub.s32 %v8730, %v8732
        %v8734 = vrot.slane %v8726, %v8733
        %v8736 = vunpack.c.l.s4 1934713408
        %v8737 = vunpack.c.0.s8 %v8736
        %v8738 = vlaneseq
        %v8739 = vshrl.u32 %v8738, 7
        %v8740 = vsub.s32 %v8737, %v8739
        %v8741 = vrot.slane %v8727, %v8740
        %v8742 = vcombine.low %v8686, %v8718
        %v8743 = vcombine.high %v8686, %v8718
        %v8744 = vcombine.low %v8693, %v8725
        %v8745 = vcombine.high %v8693, %v8725
        %v8746 = vcombine.low %v8702, %v8734
        %v8747 = vcombine.high %v8702, %v8734
        %v8748 = vcombine.low %v8709, %v8741
        %v8749 = vcombine.high %v8709, %v8741
        %v8750 = vcombine.low %v8063, %v8067
        %v8751 = vcombine.high %v8063, %v8067
        %v8753 = vunpack.c.l.s4 1983009808
        %v8754 = vunpack.c.0.s8 %v8753
        %v8755 = vlaneseq
        %v8756 = vshrl.u32 %v8755, 7
        %v8757 = vsub.s32 %v8754, %v8756
        %v8758 = vrot.slane %v8750, %v8757
        %v8760 = vunpack.c.l.s4 1983009808
        %v8761 = vunpack.c.0.s8 %v8760
        %v8762 = vlaneseq
        %v8763 = vshrl.u32 %v8762, 7
        %v8764 = vsub.s32 %v8761, %v8763
        %v8765 = vrot.slane %v8751, %v8764
        %v8766 = vcombine.low %v8065, %v8069
        %v8767 = vcombine.high %v8065, %v8069
        %v8769 = vunpack.c.l.s4 1983009808
        %v8770 = vunpack.c.0.s8 %v8769
        %v8771 = vlaneseq
        %v8772 = vshrl.u32 %v8771, 7
        %v8773 = vsub.s32 %v8770, %v8772
        %v8774 = vrot.slane %v8766, %v8773
        %v8776 = vunpack.c.l.s4 1983009808
        %v8777 = vunpack.c.0.s8 %v8776
        %v8778 = vlaneseq
        %v8779 = vshrl.u32 %v8778, 7
        %v8780 = vsub.s32 %v8777, %v8779
        %v8781 = vrot.slane %v8767, %v8780
        %v8782 = vcombine.low %v8071, %v8075
        %v8783 = vcombine.high %v8071, %v8075
        %v8785 = vunpack.c.l.s4 1983009808
        %v8786 = vunpack.c.0.s8 %v8785
        %v8787 = vlaneseq
        %v8788 = vshrl.u32 %v8787, 7
        %v8789 = vsub.s32 %v8786, %v8788
        %v8790 = vrot.slane %v8782, %v8789
        %v8792 = vunpack.c.l.s4 1983009808
        %v8793 = vunpack.c.0.s8 %v8792
        %v8794 = vlaneseq
        %v8795 = vshrl.u32 %v8794, 7
        %v8796 = vsub.s32 %v8793, %v8795
        %v8797 = vrot.slane %v8783, %v8796
        %v8798 = vcombine.low %v8073, %v8077
        %v8799 = vcombine.high %v8073, %v8077
        %v8801 = vunpack.c.l.s4 1983009808
        %v8802 = vunpack.c.0.s8 %v8801
        %v8803 = vlaneseq
        %v8804 = vshrl.u32 %v8803, 7
        %v8805 = vsub.s32 %v8802, %v8804
        %v8806 = vrot.slane %v8798, %v8805
        %v8808 = vunpack.c.l.s4 1983009808
        %v8809 = vunpack.c.0.s8 %v8808
        %v8810 = vlaneseq
        %v8811 = vshrl.u32 %v8810, 7
        %v8812 = vsub.s32 %v8809, %v8811
        %v8813 = vrot.slane %v8799, %v8812
        %v8814 = vcombine.low %v8758, %v8774
        %v8815 = vcombine.high %v8758, %v8774
        %v8817 = vunpack.c.l.s4 1934713408
        %v8818 = vunpack.c.0.s8 %v8817
        %v8819 = vlaneseq
        %v8820 = vshrl.u32 %v8819, 7
        %v8821 = vsub.s32 %v8818, %v8820
        %v8822 = vrot.slane %v8814, %v8821
        %v8824 = vunpack.c.l.s4 1934713408
        %v8825 = vunpack.c.0.s8 %v8824
        %v8826 = vlaneseq
        %v8827 = vshrl.u32 %v8826, 7
        %v8828 = vsub.s32 %v8825, %v8827
        %v8829 = vrot.slane %v8815, %v8828
        %v8830 = vcombine.low %v8765, %v8781
        %v8831 = vcombine.high %v8765, %v8781
        %v8833 = vunpack.c.l.s4 1934713408
        %v8834 = vunpack.c.0.s8 %v8833
        %v8835 = vlaneseq
        %v8836 = vshrl.u32 %v8835, 7
        %v8837 = vsub.s32 %v8834, %v8836
        %v8838 = vrot.slane %v8830, %v8837
        %v8840 = vunpack.c.l.s4 1934713408
        %v8841 = vunpack.c.0.s8 %v8840
        %v8842 = vlaneseq
        %v8843 = vshrl.u32 %v8842, 7
        %v8844 = vsub.s32 %v8841, %v8843
        %v8845 = vrot.slane %v8831, %v8844
        %v8846 = vcombine.low %v8790, %v8806
        %v8847 = vcombine.high %v8790, %v8806
        %v8849 = vunpack.c.l.s4 1934713408
        %v8850 = vunpack.c.0.s8 %v8849
        %v8851 = vlaneseq
        %v8852 = vshrl.u32 %v8851, 7
        %v8853 = vsub.s32 %v8850, %v8852
        %v8854 = vrot.slane %v8846, %v8853
        %v8856 = vunpack.c.l.s4 1934713408
        %v8857 = vunpack.c.0.s8 %v8856
        %v8858 = vlaneseq
        %v8859 = vshrl.u32 %v8858, 7
        %v8860 = vsub.s32 %v8857, %v8859
        %v8861 = vrot.slane %v8847, %v8860
        %v8862 = vcombine.low %v8797, %v8813
        %v8863 = vcombine.high %v8797, %v8813
        %v8865 = vunpack.c.l.s4 1934713408
        %v8866 = vunpack.c.0.s8 %v8865
        %v8867 = vlaneseq
        %v8868 = vshrl.u32 %v8867, 7
        %v8869 = vsub.s32 %v8866, %v8868
        %v8870 = vrot.slane %v8862, %v8869
        %v8872 = vunpack.c.l.s4 1934713408
        %v8873 = vunpack.c.0.s8 %v8872
        %v8874 = vlaneseq
        %v8875 = vshrl.u32 %v8874, 7
        %v8876 = vsub.s32 %v8873, %v8875
        %v8877 = vrot.slane %v8863, %v8876
        %v8878 = vcombine.low %v8822, %v8854
        %v8879 = vcombine.high %v8822, %v8854
        %v8880 = vcombine.low %v8829, %v8861
        %v8881 = vcombine.high %v8829, %v8861
        %v8882 = vcombine.low %v8838, %v8870
        %v8883 = vcombine.high %v8838, %v8870
        %v8884 = vcombine.low %v8845, %v8877
        %v8885 = vcombine.high %v8845, %v8877
        %v8886 = vcombine.low %v8097, %v8105
        %v8887 = vcombine.high %v8097, %v8105
        %v8889 = vunpack.c.l.s4 1983009808
        %v8890 = vunpack.c.0.s8 %v8889
        %v8891 = vlaneseq
        %v8892 = vshrl.u32 %v8891, 7
        %v8893 = vsub.s32 %v8890, %v8892
        %v8894 = vrot.slane %v8886, %v8893
        %v8896 = vunpack.c.l.s4 1983009808
        %v8897 = vunpack.c.0.s8 %v8896
        %v8898 = vlaneseq
        %v8899 = vshrl.u32 %v8898, 7
        %v8900 = vsub.s32 %v8897, %v8899
        %v8901 = vrot.slane %v8887, %v8900
        %v8902 = vcombine.low %v8101, %v8109
        %v8903 = vcombine.high %v8101, %v8109
        %v8905 = vunpack.c.l.s4 1983009808
        %v8906 = vunpack.c.0.s8 %v8905
        %v8907 = vlaneseq
        %v8908 = vshrl.u32 %v8907, 7
        %v8909 = vsub.s32 %v8906, %v8908
        %v8910 = vrot.slane %v8902, %v8909
        %v8912 = vunpack.c.l.s4 1983009808
        %v8913 = vunpack.c.0.s8 %v8912
        %v8914 = vlaneseq
        %v8915 = vshrl.u32 %v8914, 7
        %v8916 = vsub.s32 %v8913, %v8915
        %v8917 = vrot.slane %v8903, %v8916
        %v8918 = vcombine.low %v8113, %v8121
        %v8919 = vcombine.high %v8113, %v8121
        %v8921 = vunpack.c.l.s4 1983009808
        %v8922 = vunpack.c.0.s8 %v8921
        %v8923 = vlaneseq
        %v8924 = vshrl.u32 %v8923, 7
        %v8925 = vsub.s32 %v8922, %v8924
        %v8926 = vrot.slane %v8918, %v8925
        %v8928 = vunpack.c.l.s4 1983009808
        %v8929 = vunpack.c.0.s8 %v8928
        %v8930 = vlaneseq
        %v8931 = vshrl.u32 %v8930, 7
        %v8932 = vsub.s32 %v8929, %v8931
        %v8933 = vrot.slane %v8919, %v8932
        %v8934 = vcombine.low %v8117, %v8125
        %v8935 = vcombine.high %v8117, %v8125
        %v8937 = vunpack.c.l.s4 1983009808
        %v8938 = vunpack.c.0.s8 %v8937
        %v8939 = vlaneseq
        %v8940 = vshrl.u32 %v8939, 7
        %v8941 = vsub.s32 %v8938, %v8940
        %v8942 = vrot.slane %v8934, %v8941
        %v8944 = vunpack.c.l.s4 1983009808
        %v8945 = vunpack.c.0.s8 %v8944
        %v8946 = vlaneseq
        %v8947 = vshrl.u32 %v8946, 7
        %v8948 = vsub.s32 %v8945, %v8947
        %v8949 = vrot.slane %v8935, %v8948
        %v8950 = vcombine.low %v8894, %v8910
        %v8951 = vcombine.high %v8894, %v8910
        %v8953 = vunpack.c.l.s4 1934713408
        %v8954 = vunpack.c.0.s8 %v8953
        %v8955 = vlaneseq
        %v8956 = vshrl.u32 %v8955, 7
        %v8957 = vsub.s32 %v8954, %v8956
        %v8958 = vrot.slane %v8950, %v8957
        %v8960 = vunpack.c.l.s4 1934713408
        %v8961 = vunpack.c.0.s8 %v8960
        %v8962 = vlaneseq
        %v8963 = vshrl.u32 %v8962, 7
        %v8964 = vsub.s32 %v8961, %v8963
        %v8965 = vrot.slane %v8951, %v8964
        %v8966 = vcombine.low %v8901, %v8917
        %v8967 = vcombine.high %v8901, %v8917
        %v8969 = vunpack.c.l.s4 1934713408
        %v8970 = vunpack.c.0.s8 %v8969
        %v8971 = vlaneseq
        %v8972 = vshrl.u32 %v8971, 7
        %v8973 = vsub.s32 %v8970, %v8972
        %v8974 = vrot.slane %v8966, %v8973
        %v8976 = vunpack.c.l.s4 1934713408
        %v8977 = vunpack.c.0.s8 %v8976
        %v8978 = vlaneseq
        %v8979 = vshrl.u32 %v8978, 7
        %v8980 = vsub.s32 %v8977, %v8979
        %v8981 = vrot.slane %v8967, %v8980
        %v8982 = vcombine.low %v8926, %v8942
        %v8983 = vcombine.high %v8926, %v8942
        %v8985 = vunpack.c.l.s4 1934713408
        %v8986 = vunpack.c.0.s8 %v8985
        %v8987 = vlaneseq
        %v8988 = vshrl.u32 %v8987, 7
        %v8989 = vsub.s32 %v8986, %v8988
        %v8990 = vrot.slane %v8982, %v8989
        %v8992 = vunpack.c.l.s4 1934713408
        %v8993 = vunpack.c.0.s8 %v8992
        %v8994 = vlaneseq
        %v8995 = vshrl.u32 %v8994, 7
        %v8996 = vsub.s32 %v8993, %v8995
        %v8997 = vrot.slane %v8983, %v8996
        %v8998 = vcombine.low %v8933, %v8949
        %v8999 = vcombine.high %v8933, %v8949
        %v9001 = vunpack.c.l.s4 1934713408
        %v9002 = vunpack.c.0.s8 %v9001
        %v9003 = vlaneseq
        %v9004 = vshrl.u32 %v9003, 7
        %v9005 = vsub.s32 %v9002, %v9004
        %v9006 = vrot.slane %v8998, %v9005
        %v9008 = vunpack.c.l.s4 1934713408
        %v9009 = vunpack.c.0.s8 %v9008
        %v9010 = vlaneseq
        %v9011 = vshrl.u32 %v9010, 7
        %v9012 = vsub.s32 %v9009, %v9011
        %v9013 = vrot.slane %v8999, %v9012
        %v9014 = vcombine.low %v8958, %v8990
        %v9015 = vcombine.high %v8958, %v8990
        %v9016 = vcombine.low %v8965, %v8997
        %v9017 = vcombine.high %v8965, %v8997
        %v9018 = vcombine.low %v8974, %v9006
        %v9019 = vcombine.high %v8974, %v9006
        %v9020 = vcombine.low %v8981, %v9013
        %v9021 = vcombine.high %v8981, %v9013
        %v9022 = vcombine.low %v8145, %v8153
        %v9023 = vcombine.high %v8145, %v8153
        %v9025 = vunpack.c.l.s4 1983009808
        %v9026 = vunpack.c.0.s8 %v9025
        %v9027 = vlaneseq
        %v9028 = vshrl.u32 %v9027, 7
        %v9029 = vsub.s32 %v9026, %v9028
        %v9030 = vrot.slane %v9022, %v9029
        %v9032 = vunpack.c.l.s4 1983009808
        %v9033 = vunpack.c.0.s8 %v9032
        %v9034 = vlaneseq
        %v9035 = vshrl.u32 %v9034, 7
        %v9036 = vsub.s32 %v9033, %v9035
        %v9037 = vrot.slane %v9023, %v9036
        %v9038 = vcombine.low %v8149, %v8157
        %v9039 = vcombine.high %v8149, %v8157
        %v9041 = vunpack.c.l.s4 1983009808
        %v9042 = vunpack.c.0.s8 %v9041
        %v9043 = vlaneseq
        %v9044 = vshrl.u32 %v9043, 7
        %v9045 = vsub.s32 %v9042, %v9044
        %v9046 = vrot.slane %v9038, %v9045
        %v9048 = vunpack.c.l.s4 1983009808
        %v9049 = vunpack.c.0.s8 %v9048
        %v9050 = vlaneseq
        %v9051 = vshrl.u32 %v9050, 7
        %v9052 = vsub.s32 %v9049, %v9051
        %v9053 = vrot.slane %v9039, %v9052
        %v9054 = vcombine.low %v8161, %v8169
        %v9055 = vcombine.high %v8161, %v8169
        %v9057 = vunpack.c.l.s4 1983009808
        %v9058 = vunpack.c.0.s8 %v9057
        %v9059 = vlaneseq
        %v9060 = vshrl.u32 %v9059, 7
        %v9061 = vsub.s32 %v9058, %v9060
        %v9062 = vrot.slane %v9054, %v9061
        %v9064 = vunpack.c.l.s4 1983009808
        %v9065 = vunpack.c.0.s8 %v9064
        %v9066 = vlaneseq
        %v9067 = vshrl.u32 %v9066, 7
        %v9068 = vsub.s32 %v9065, %v9067
        %v9069 = vrot.slane %v9055, %v9068
        %v9070 = vcombine.low %v8165, %v8173
        %v9071 = vcombine.high %v8165, %v8173
        %v9073 = vunpack.c.l.s4 1983009808
        %v9074 = vunpack.c.0.s8 %v9073
        %v9075 = vlaneseq
        %v9076 = vshrl.u32 %v9075, 7
        %v9077 = vsub.s32 %v9074, %v9076
        %v9078 = vrot.slane %v9070, %v9077
        %v9080 = vunpack.c.l.s4 1983009808
        %v9081 = vunpack.c.0.s8 %v9080
        %v9082 = vlaneseq
        %v9083 = vshrl.u32 %v9082, 7
        %v9084 = vsub.s32 %v9081, %v9083
        %v9085 = vrot.slane %v9071, %v9084
        %v9086 = vcombine.low %v9030, %v9046
        %v9087 = vcombine.high %v9030, %v9046
        %v9089 = vunpack.c.l.s4 1934713408
        %v9090 = vunpack.c.0.s8 %v9089
        %v9091 = vlaneseq
        %v9092 = vshrl.u32 %v9091, 7
        %v9093 = vsub.s32 %v9090, %v9092
        %v9094 = vrot.slane %v9086, %v9093
        %v9096 = vunpack.c.l.s4 1934713408
        %v9097 = vunpack.c.0.s8 %v9096
        %v9098 = vlaneseq
        %v9099 = vshrl.u32 %v9098, 7
        %v9100 = vsub.s32 %v9097, %v9099
        %v9101 = vrot.slane %v9087, %v9100
        %v9102 = vcombine.low %v9037, %v9053
        %v9103 = vcombine.high %v9037, %v9053
        %v9105 = vunpack.c.l.s4 1934713408
        %v9106 = vunpack.c.0.s8 %v9105
        %v9107 = vlaneseq
        %v9108 = vshrl.u32 %v9107, 7
        %v9109 = vsub.s32 %v9106, %v9108
        %v9110 = vrot.slane %v9102, %v9109
        %v9112 = vunpack.c.l.s4 1934713408
        %v9113 = vunpack.c.0.s8 %v9112
        %v9114 = vlaneseq
        %v9115 = vshrl.u32 %v9114, 7
        %v9116 = vsub.s32 %v9113, %v9115
        %v9117 = vrot.slane %v9103, %v9116
        %v9118 = vcombine.low %v9062, %v9078
        %v9119 = vcombine.high %v9062, %v9078
        %v9121 = vunpack.c.l.s4 1934713408
        %v9122 = vunpack.c.0.s8 %v9121
        %v9123 = vlaneseq
        %v9124 = vshrl.u32 %v9123, 7
        %v9125 = vsub.s32 %v9122, %v9124
        %v9126 = vrot.slane %v9118, %v9125
        %v9128 = vunpack.c.l.s4 1934713408
        %v9129 = vunpack.c.0.s8 %v9128
        %v9130 = vlaneseq
        %v9131 = vshrl.u32 %v9130, 7
        %v9132 = vsub.s32 %v9129, %v9131
        %v9133 = vrot.slane %v9119, %v9132
        %v9134 = vcombine.low %v9069, %v9085
        %v9135 = vcombine.high %v9069, %v9085
        %v9137 = vunpack.c.l.s4 1934713408
        %v9138 = vunpack.c.0.s8 %v9137
        %v9139 = vlaneseq
        %v9140 = vshrl.u32 %v9139, 7
        %v9141 = vsub.s32 %v9138, %v9140
        %v9142 = vrot.slane %v9134, %v9141
        %v9144 = vunpack.c.l.s4 1934713408
        %v9145 = vunpack.c.0.s8 %v9144
        %v9146 = vlaneseq
        %v9147 = vshrl.u32 %v9146, 7
        %v9148 = vsub.s32 %v9145, %v9147
        %v9149 = vrot.slane %v9135, %v9148
        %v9150 = vcombine.low %v9094, %v9126
        %v9151 = vcombine.high %v9094, %v9126
        %v9152 = vcombine.low %v9101, %v9133
        %v9153 = vcombine.high %v9101, %v9133
        %v9154 = vcombine.low %v9110, %v9142
        %v9155 = vcombine.high %v9110, %v9142
        %v9156 = vcombine.low %v9117, %v9149
        %v9157 = vcombine.high %v9117, %v9149
        %9161 = vrot.lane.b32.xlu0 %v8471, 8
        %v9162 = vpop.permute.xlu0 %9161
        %9163 = vrot.lane.b32.xlu0 %v8607, 8
        %v9164 = vpop.permute.xlu0 %9163
        %9165 = vrot.lane.b32.xlu0 %v8743, 8
        %v9166 = vpop.permute.xlu0 %9165
        %9173 = vrot.lane.b32.xlu0 %v8472, 16
        %v9174 = vpop.permute.xlu0 %9173
        %9175 = vrot.lane.b32.xlu0 %v8608, 16
        %v9176 = vpop.permute.xlu0 %9175
        %9177 = vrot.lane.b32.xlu0 %v8744, 16
        %v9178 = vpop.permute.xlu0 %9177
        %9185 = vrot.lane.b32.xlu0 %v8473, 24
        %v9186 = vpop.permute.xlu0 %9185
        %9187 = vrot.lane.b32.xlu0 %v8609, 24
        %v9188 = vpop.permute.xlu0 %9187
        %9189 = vrot.lane.b32.xlu0 %v8745, 24
        %v9190 = vpop.permute.xlu0 %9189
        %9197 = vrot.lane.b32.xlu0 %v8474, 32
        %v9198 = vpop.permute.xlu0 %9197
        %9199 = vrot.lane.b32.xlu0 %v8610, 32
        %v9200 = vpop.permute.xlu0 %9199
        %9201 = vrot.lane.b32.xlu0 %v8746, 32
        %v9202 = vpop.permute.xlu0 %9201
        %9209 = vrot.lane.b32.xlu0 %v8475, 40
        %v9210 = vpop.permute.xlu0 %9209
        %9211 = vrot.lane.b32.xlu0 %v8611, 40
        %v9212 = vpop.permute.xlu0 %9211
        %9213 = vrot.lane.b32.xlu0 %v8747, 40
        %v9214 = vpop.permute.xlu0 %9213
        %9221 = vrot.lane.b32.xlu0 %v8476, 48
        %v9222 = vpop.permute.xlu0 %9221
        %9223 = vrot.lane.b32.xlu0 %v8612, 48
        %v9224 = vpop.permute.xlu0 %9223
        %9225 = vrot.lane.b32.xlu0 %v8748, 48
        %v9226 = vpop.permute.xlu0 %9225
        %9233 = vrot.lane.b32.xlu0 %v8477, 56
        %v9234 = vpop.permute.xlu0 %9233
        %9235 = vrot.lane.b32.xlu0 %v8613, 56
        %v9236 = vpop.permute.xlu0 %9235
        %9237 = vrot.lane.b32.xlu0 %v8749, 56
        %v9238 = vpop.permute.xlu0 %9237
        %9245 = vrot.lane.b32.xlu0 %v8878, 64
        %v9246 = vpop.permute.xlu0 %9245
        %9247 = vrot.lane.b32.xlu0 %v9014, 64
        %v9248 = vpop.permute.xlu0 %9247
        %9249 = vrot.lane.b32.xlu0 %v9150, 64
        %v9250 = vpop.permute.xlu0 %9249
        %9257 = vrot.lane.b32.xlu0 %v8879, 72
        %v9258 = vpop.permute.xlu0 %9257
        %9259 = vrot.lane.b32.xlu0 %v9015, 72
        %v9260 = vpop.permute.xlu0 %9259
        %9261 = vrot.lane.b32.xlu0 %v9151, 72
        %v9262 = vpop.permute.xlu0 %9261
        %9269 = vrot.lane.b32.xlu0 %v8880, 80
        %v9270 = vpop.permute.xlu0 %9269
        %9271 = vrot.lane.b32.xlu0 %v9016, 80
        %v9272 = vpop.permute.xlu0 %9271
        %9273 = vrot.lane.b32.xlu0 %v9152, 80
        %v9274 = vpop.permute.xlu0 %9273
        %9281 = vrot.lane.b32.xlu0 %v8881, 88
        %v9282 = vpop.permute.xlu0 %9281
        %9283 = vrot.lane.b32.xlu0 %v9017, 88
        %v9284 = vpop.permute.xlu0 %9283
        %9285 = vrot.lane.b32.xlu0 %v9153, 88
        %v9286 = vpop.permute.xlu0 %9285
        %9293 = vrot.lane.b32.xlu0 %v8882, 96
        %v9294 = vpop.permute.xlu0 %9293
        %9295 = vrot.lane.b32.xlu0 %v9018, 96
        %v9296 = vpop.permute.xlu0 %9295
        %9297 = vrot.lane.b32.xlu0 %v9154, 96
        %v9298 = vpop.permute.xlu0 %9297
        %9305 = vrot.lane.b32.xlu0 %v8883, 104
        %v9306 = vpop.permute.xlu0 %9305
        %9307 = vrot.lane.b32.xlu0 %v9019, 104
        %v9308 = vpop.permute.xlu0 %9307
        %9309 = vrot.lane.b32.xlu0 %v9155, 104
        %v9310 = vpop.permute.xlu0 %9309
        %9317 = vrot.lane.b32.xlu0 %v8884, 112
        %v9318 = vpop.permute.xlu0 %9317
        %9319 = vrot.lane.b32.xlu0 %v9020, 112
        %v9320 = vpop.permute.xlu0 %9319
        %9321 = vrot.lane.b32.xlu0 %v9156, 112
        %v9322 = vpop.permute.xlu0 %9321
        %9329 = vrot.lane.b32.xlu0 %v8885, 120
        %v9330 = vpop.permute.xlu0 %9329
        %9331 = vrot.lane.b32.xlu0 %v9021, 120
        %v9332 = vpop.permute.xlu0 %9331
        %9333 = vrot.lane.b32.xlu0 %v9157, 120
        %v9334 = vpop.permute.xlu0 %9333
        %v9338 = vsel %vm2227, %v8470, %v9162
        %v9339 = vsel %vm2227, %v8606, %v9164
        %v9340 = vsel %vm2227, %v8742, %v9166
        %v9341 = vsel %vm4404, %v9338, %v9174
        %v9342 = vsel %vm4404, %v9339, %v9176
        %v9343 = vsel %vm4404, %v9340, %v9178
        %vm9344 = vcmask 195584
        %v9345 = vsel %vm9344, %v9341, %v9186
        %v9346 = vsel %vm9344, %v9342, %v9188
        %v9347 = vsel %vm9344, %v9343, %v9190
        %vm9348 = vcmask 261120
        %v9349 = vsel %vm9348, %v9345, %v9198
        %v9350 = vsel %vm9348, %v9346, %v9200
        %v9351 = vsel %vm9348, %v9347, %v9202
        %v9352 = vsel %vm1111, %v9349, %v9210
        %v9353 = vsel %vm1111, %v9350, %v9212
        %v9354 = vsel %vm1111, %v9351, %v9214
        %vm9355 = vcmask 392192
        %v9356 = vsel %vm9355, %v9352, %v9222
        %v9357 = vsel %vm9355, %v9353, %v9224
        %v9358 = vsel %vm9355, %v9354, %v9226
        %vm9359 = vcmask 457728
        %v9360 = vsel %vm9359, %v9356, %v9234
        %v9361 = vsel %vm9359, %v9357, %v9236
        %v9362 = vsel %vm9359, %v9358, %v9238
        %vm9363 = vcmask 523264
        %v9364 = vsel %vm9363, %v9360, %v9246
        %v9365 = vsel %vm9363, %v9361, %v9248
        %v9366 = vsel %vm9363, %v9362, %v9250
        %vm9367 = vcmask 588800
        %v9368 = vsel %vm9367, %v9364, %v9258
        %v9369 = vsel %vm9367, %v9365, %v9260
        %v9370 = vsel %vm9367, %v9366, %v9262
        %v9371 = vsel %vm1123, %v9368, %v9270
        %v9372 = vsel %vm1123, %v9369, %v9272
        %v9373 = vsel %vm1123, %v9370, %v9274
        %vm9374 = vcmask 719872
        %v9375 = vsel %vm9374, %v9371, %v9282
        %v9376 = vsel %vm9374, %v9372, %v9284
        %v9377 = vsel %vm9374, %v9373, %v9286
        %vm9378 = vcmask 785408
        %v9379 = vsel %vm9378, %v9375, %v9294
        %v9380 = vsel %vm9378, %v9376, %v9296
        %v9381 = vsel %vm9378, %v9377, %v9298
        %vm9382 = vcmask 850944
        %v9383 = vsel %vm9382, %v9379, %v9306
        %v9384 = vsel %vm9382, %v9380, %v9308
        %v9385 = vsel %vm9382, %v9381, %v9310
        %vm9386 = vcmask 916480
        %v9387 = vsel %vm9386, %v9383, %v9318
        %v9388 = vsel %vm9386, %v9384, %v9320
        %v9389 = vsel %vm9386, %v9385, %v9322
        %v9390 = vsel %vm1135, %v9387, %v9330
        %v9391 = vsel %vm1135, %v9388, %v9332
        %v9392 = vsel %vm1135, %v9389, %v9334
        %v9393 = vcombine.low %v8217, %v8225
        %v9394 = vcombine.high %v8217, %v8225
        %v9396 = vunpack.c.l.s4 1983009808
        %v9397 = vunpack.c.0.s8 %v9396
        %v9398 = vlaneseq
        %v9399 = vshrl.u32 %v9398, 7
        %v9400 = vsub.s32 %v9397, %v9399
        %v9401 = vrot.slane %v9393, %v9400
        %v9403 = vunpack.c.l.s4 1983009808
        %v9404 = vunpack.c.0.s8 %v9403
        %v9405 = vlaneseq
        %v9406 = vshrl.u32 %v9405, 7
        %v9407 = vsub.s32 %v9404, %v9406
        %v9408 = vrot.slane %v9394, %v9407
        %v9409 = vcombine.low %v8221, %v8229
        %v9410 = vcombine.high %v8221, %v8229
        %v9412 = vunpack.c.l.s4 1983009808
        %v9413 = vunpack.c.0.s8 %v9412
        %v9414 = vlaneseq
        %v9415 = vshrl.u32 %v9414, 7
        %v9416 = vsub.s32 %v9413, %v9415
        %v9417 = vrot.slane %v9409, %v9416
        %v9419 = vunpack.c.l.s4 1983009808
        %v9420 = vunpack.c.0.s8 %v9419
        %v9421 = vlaneseq
        %v9422 = vshrl.u32 %v9421, 7
        %v9423 = vsub.s32 %v9420, %v9422
        %v9424 = vrot.slane %v9410, %v9423
        %v9425 = vcombine.low %v8233, %v8241
        %v9426 = vcombine.high %v8233, %v8241
        %v9428 = vunpack.c.l.s4 1983009808
        %v9429 = vunpack.c.0.s8 %v9428
        %v9430 = vlaneseq
        %v9431 = vshrl.u32 %v9430, 7
        %v9432 = vsub.s32 %v9429, %v9431
        %v9433 = vrot.slane %v9425, %v9432
        %v9435 = vunpack.c.l.s4 1983009808
        %v9436 = vunpack.c.0.s8 %v9435
        %v9437 = vlaneseq
        %v9438 = vshrl.u32 %v9437, 7
        %v9439 = vsub.s32 %v9436, %v9438
        %v9440 = vrot.slane %v9426, %v9439
        %v9441 = vcombine.low %v8237, %v8245
        %v9442 = vcombine.high %v8237, %v8245
        %v9444 = vunpack.c.l.s4 1983009808
        %v9445 = vunpack.c.0.s8 %v9444
        %v9446 = vlaneseq
        %v9447 = vshrl.u32 %v9446, 7
        %v9448 = vsub.s32 %v9445, %v9447
        %v9449 = vrot.slane %v9441, %v9448
        %v9451 = vunpack.c.l.s4 1983009808
        %v9452 = vunpack.c.0.s8 %v9451
        %v9453 = vlaneseq
        %v9454 = vshrl.u32 %v9453, 7
        %v9455 = vsub.s32 %v9452, %v9454
        %v9456 = vrot.slane %v9442, %v9455
        %v9457 = vcombine.low %v9401, %v9417
        %v9458 = vcombine.high %v9401, %v9417
        %v9460 = vunpack.c.l.s4 1934713408
        %v9461 = vunpack.c.0.s8 %v9460
        %v9462 = vlaneseq
        %v9463 = vshrl.u32 %v9462, 7
        %v9464 = vsub.s32 %v9461, %v9463
        %v9465 = vrot.slane %v9457, %v9464
        %v9467 = vunpack.c.l.s4 1934713408
        %v9468 = vunpack.c.0.s8 %v9467
        %v9469 = vlaneseq
        %v9470 = vshrl.u32 %v9469, 7
        %v9471 = vsub.s32 %v9468, %v9470
        %v9472 = vrot.slane %v9458, %v9471
        %v9473 = vcombine.low %v9408, %v9424
        %v9474 = vcombine.high %v9408, %v9424
        %v9476 = vunpack.c.l.s4 1934713408
        %v9477 = vunpack.c.0.s8 %v9476
        %v9478 = vlaneseq
        %v9479 = vshrl.u32 %v9478, 7
        %v9480 = vsub.s32 %v9477, %v9479
        %v9481 = vrot.slane %v9473, %v9480
        %v9483 = vunpack.c.l.s4 1934713408
        %v9484 = vunpack.c.0.s8 %v9483
        %v9485 = vlaneseq
        %v9486 = vshrl.u32 %v9485, 7
        %v9487 = vsub.s32 %v9484, %v9486
        %v9488 = vrot.slane %v9474, %v9487
        %v9489 = vcombine.low %v9433, %v9449
        %v9490 = vcombine.high %v9433, %v9449
        %v9492 = vunpack.c.l.s4 1934713408
        %v9493 = vunpack.c.0.s8 %v9492
        %v9494 = vlaneseq
        %v9495 = vshrl.u32 %v9494, 7
        %v9496 = vsub.s32 %v9493, %v9495
        %v9497 = vrot.slane %v9489, %v9496
        %v9499 = vunpack.c.l.s4 1934713408
        %v9500 = vunpack.c.0.s8 %v9499
        %v9501 = vlaneseq
        %v9502 = vshrl.u32 %v9501, 7
        %v9503 = vsub.s32 %v9500, %v9502
        %v9504 = vrot.slane %v9490, %v9503
        %v9505 = vcombine.low %v9440, %v9456
        %v9506 = vcombine.high %v9440, %v9456
        %v9508 = vunpack.c.l.s4 1934713408
        %v9509 = vunpack.c.0.s8 %v9508
        %v9510 = vlaneseq
        %v9511 = vshrl.u32 %v9510, 7
        %v9512 = vsub.s32 %v9509, %v9511
        %v9513 = vrot.slane %v9505, %v9512
        %v9515 = vunpack.c.l.s4 1934713408
        %v9516 = vunpack.c.0.s8 %v9515
        %v9517 = vlaneseq
        %v9518 = vshrl.u32 %v9517, 7
        %v9519 = vsub.s32 %v9516, %v9518
        %v9520 = vrot.slane %v9506, %v9519
        %v9521 = vcombine.low %v9465, %v9497
        %v9522 = vcombine.high %v9465, %v9497
        %v9523 = vcombine.low %v9472, %v9504
        %v9524 = vcombine.high %v9472, %v9504
        %v9525 = vcombine.low %v9481, %v9513
        %v9526 = vcombine.high %v9481, %v9513
        %v9527 = vcombine.low %v9488, %v9520
        %v9528 = vcombine.high %v9488, %v9520
        %v9529 = vcombine.low %v8249, %v8257
        %v9530 = vcombine.high %v8249, %v8257
        %v9532 = vunpack.c.l.s4 1983009808
        %v9533 = vunpack.c.0.s8 %v9532
        %v9534 = vlaneseq
        %v9535 = vshrl.u32 %v9534, 7
        %v9536 = vsub.s32 %v9533, %v9535
        %v9537 = vrot.slane %v9529, %v9536
        %v9539 = vunpack.c.l.s4 1983009808
        %v9540 = vunpack.c.0.s8 %v9539
        %v9541 = vlaneseq
        %v9542 = vshrl.u32 %v9541, 7
        %v9543 = vsub.s32 %v9540, %v9542
        %v9544 = vrot.slane %v9530, %v9543
        %v9545 = vcombine.low %v8253, %v8261
        %v9546 = vcombine.high %v8253, %v8261
        %v9548 = vunpack.c.l.s4 1983009808
        %v9549 = vunpack.c.0.s8 %v9548
        %v9550 = vlaneseq
        %v9551 = vshrl.u32 %v9550, 7
        %v9552 = vsub.s32 %v9549, %v9551
        %v9553 = vrot.slane %v9545, %v9552
        %v9555 = vunpack.c.l.s4 1983009808
        %v9556 = vunpack.c.0.s8 %v9555
        %v9557 = vlaneseq
        %v9558 = vshrl.u32 %v9557, 7
        %v9559 = vsub.s32 %v9556, %v9558
        %v9560 = vrot.slane %v9546, %v9559
        %v9561 = vcombine.low %v8265, %v8273
        %v9562 = vcombine.high %v8265, %v8273
        %v9564 = vunpack.c.l.s4 1983009808
        %v9565 = vunpack.c.0.s8 %v9564
        %v9566 = vlaneseq
        %v9567 = vshrl.u32 %v9566, 7
        %v9568 = vsub.s32 %v9565, %v9567
        %v9569 = vrot.slane %v9561, %v9568
        %v9571 = vunpack.c.l.s4 1983009808
        %v9572 = vunpack.c.0.s8 %v9571
        %v9573 = vlaneseq
        %v9574 = vshrl.u32 %v9573, 7
        %v9575 = vsub.s32 %v9572, %v9574
        %v9576 = vrot.slane %v9562, %v9575
        %v9577 = vcombine.low %v8269, %v8277
        %v9578 = vcombine.high %v8269, %v8277
        %v9580 = vunpack.c.l.s4 1983009808
        %v9581 = vunpack.c.0.s8 %v9580
        %v9582 = vlaneseq
        %v9583 = vshrl.u32 %v9582, 7
        %v9584 = vsub.s32 %v9581, %v9583
        %v9585 = vrot.slane %v9577, %v9584
        %v9587 = vunpack.c.l.s4 1983009808
        %v9588 = vunpack.c.0.s8 %v9587
        %v9589 = vlaneseq
        %v9590 = vshrl.u32 %v9589, 7
        %v9591 = vsub.s32 %v9588, %v9590
        %v9592 = vrot.slane %v9578, %v9591
        %v9593 = vcombine.low %v9537, %v9553
        %v9594 = vcombine.high %v9537, %v9553
        %v9596 = vunpack.c.l.s4 1934713408
        %v9597 = vunpack.c.0.s8 %v9596
        %v9598 = vlaneseq
        %v9599 = vshrl.u32 %v9598, 7
        %v9600 = vsub.s32 %v9597, %v9599
        %v9601 = vrot.slane %v9593, %v9600
        %v9603 = vunpack.c.l.s4 1934713408
        %v9604 = vunpack.c.0.s8 %v9603
        %v9605 = vlaneseq
        %v9606 = vshrl.u32 %v9605, 7
        %v9607 = vsub.s32 %v9604, %v9606
        %v9608 = vrot.slane %v9594, %v9607
        %v9609 = vcombine.low %v9544, %v9560
        %v9610 = vcombine.high %v9544, %v9560
        %v9612 = vunpack.c.l.s4 1934713408
        %v9613 = vunpack.c.0.s8 %v9612
        %v9614 = vlaneseq
        %v9615 = vshrl.u32 %v9614, 7
        %v9616 = vsub.s32 %v9613, %v9615
        %v9617 = vrot.slane %v9609, %v9616
        %v9619 = vunpack.c.l.s4 1934713408
        %v9620 = vunpack.c.0.s8 %v9619
        %v9621 = vlaneseq
        %v9622 = vshrl.u32 %v9621, 7
        %v9623 = vsub.s32 %v9620, %v9622
        %v9624 = vrot.slane %v9610, %v9623
        %v9625 = vcombine.low %v9569, %v9585
        %v9626 = vcombine.high %v9569, %v9585
        %v9628 = vunpack.c.l.s4 1934713408
        %v9629 = vunpack.c.0.s8 %v9628
        %v9630 = vlaneseq
        %v9631 = vshrl.u32 %v9630, 7
        %v9632 = vsub.s32 %v9629, %v9631
        %v9633 = vrot.slane %v9625, %v9632
        %v9635 = vunpack.c.l.s4 1934713408
        %v9636 = vunpack.c.0.s8 %v9635
        %v9637 = vlaneseq
        %v9638 = vshrl.u32 %v9637, 7
        %v9639 = vsub.s32 %v9636, %v9638
        %v9640 = vrot.slane %v9626, %v9639
        %v9641 = vcombine.low %v9576, %v9592
        %v9642 = vcombine.high %v9576, %v9592
        %v9644 = vunpack.c.l.s4 1934713408
        %v9645 = vunpack.c.0.s8 %v9644
        %v9646 = vlaneseq
        %v9647 = vshrl.u32 %v9646, 7
        %v9648 = vsub.s32 %v9645, %v9647
        %v9649 = vrot.slane %v9641, %v9648
        %v9651 = vunpack.c.l.s4 1934713408
        %v9652 = vunpack.c.0.s8 %v9651
        %v9653 = vlaneseq
        %v9654 = vshrl.u32 %v9653, 7
        %v9655 = vsub.s32 %v9652, %v9654
        %v9656 = vrot.slane %v9642, %v9655
        %v9657 = vcombine.low %v9601, %v9633
        %v9658 = vcombine.high %v9601, %v9633
        %v9659 = vcombine.low %v9608, %v9640
        %v9660 = vcombine.high %v9608, %v9640
        %v9661 = vcombine.low %v9617, %v9649
        %v9662 = vcombine.high %v9617, %v9649
        %v9663 = vcombine.low %v9624, %v9656
        %v9664 = vcombine.high %v9624, %v9656
        %v9665 = vcombine.low %v8281, %v8289
        %v9666 = vcombine.high %v8281, %v8289
        %v9668 = vunpack.c.l.s4 1983009808
        %v9669 = vunpack.c.0.s8 %v9668
        %v9670 = vlaneseq
        %v9671 = vshrl.u32 %v9670, 7
        %v9672 = vsub.s32 %v9669, %v9671
        %v9673 = vrot.slane %v9665, %v9672
        %v9675 = vunpack.c.l.s4 1983009808
        %v9676 = vunpack.c.0.s8 %v9675
        %v9677 = vlaneseq
        %v9678 = vshrl.u32 %v9677, 7
        %v9679 = vsub.s32 %v9676, %v9678
        %v9680 = vrot.slane %v9666, %v9679
        %v9681 = vcombine.low %v8285, %v8293
        %v9682 = vcombine.high %v8285, %v8293
        %v9684 = vunpack.c.l.s4 1983009808
        %v9685 = vunpack.c.0.s8 %v9684
        %v9686 = vlaneseq
        %v9687 = vshrl.u32 %v9686, 7
        %v9688 = vsub.s32 %v9685, %v9687
        %v9689 = vrot.slane %v9681, %v9688
        %v9691 = vunpack.c.l.s4 1983009808
        %v9692 = vunpack.c.0.s8 %v9691
        %v9693 = vlaneseq
        %v9694 = vshrl.u32 %v9693, 7
        %v9695 = vsub.s32 %v9692, %v9694
        %v9696 = vrot.slane %v9682, %v9695
        %v9697 = vcombine.low %v8297, %v8305
        %v9698 = vcombine.high %v8297, %v8305
        %v9700 = vunpack.c.l.s4 1983009808
        %v9701 = vunpack.c.0.s8 %v9700
        %v9702 = vlaneseq
        %v9703 = vshrl.u32 %v9702, 7
        %v9704 = vsub.s32 %v9701, %v9703
        %v9705 = vrot.slane %v9697, %v9704
        %v9707 = vunpack.c.l.s4 1983009808
        %v9708 = vunpack.c.0.s8 %v9707
        %v9709 = vlaneseq
        %v9710 = vshrl.u32 %v9709, 7
        %v9711 = vsub.s32 %v9708, %v9710
        %v9712 = vrot.slane %v9698, %v9711
        %v9713 = vcombine.low %v8301, %v8309
        %v9714 = vcombine.high %v8301, %v8309
        %v9716 = vunpack.c.l.s4 1983009808
        %v9717 = vunpack.c.0.s8 %v9716
        %v9718 = vlaneseq
        %v9719 = vshrl.u32 %v9718, 7
        %v9720 = vsub.s32 %v9717, %v9719
        %v9721 = vrot.slane %v9713, %v9720
        %v9723 = vunpack.c.l.s4 1983009808
        %v9724 = vunpack.c.0.s8 %v9723
        %v9725 = vlaneseq
        %v9726 = vshrl.u32 %v9725, 7
        %v9727 = vsub.s32 %v9724, %v9726
        %v9728 = vrot.slane %v9714, %v9727
        %v9729 = vcombine.low %v9673, %v9689
        %v9730 = vcombine.high %v9673, %v9689
        %v9732 = vunpack.c.l.s4 1934713408
        %v9733 = vunpack.c.0.s8 %v9732
        %v9734 = vlaneseq
        %v9735 = vshrl.u32 %v9734, 7
        %v9736 = vsub.s32 %v9733, %v9735
        %v9737 = vrot.slane %v9729, %v9736
        %v9739 = vunpack.c.l.s4 1934713408
        %v9740 = vunpack.c.0.s8 %v9739
        %v9741 = vlaneseq
        %v9742 = vshrl.u32 %v9741, 7
        %v9743 = vsub.s32 %v9740, %v9742
        %v9744 = vrot.slane %v9730, %v9743
        %v9745 = vcombine.low %v9680, %v9696
        %v9746 = vcombine.high %v9680, %v9696
        %v9748 = vunpack.c.l.s4 1934713408
        %v9749 = vunpack.c.0.s8 %v9748
        %v9750 = vlaneseq
        %v9751 = vshrl.u32 %v9750, 7
        %v9752 = vsub.s32 %v9749, %v9751
        %v9753 = vrot.slane %v9745, %v9752
        %v9755 = vunpack.c.l.s4 1934713408
        %v9756 = vunpack.c.0.s8 %v9755
        %v9757 = vlaneseq
        %v9758 = vshrl.u32 %v9757, 7
        %v9759 = vsub.s32 %v9756, %v9758
        %v9760 = vrot.slane %v9746, %v9759
        %v9761 = vcombine.low %v9705, %v9721
        %v9762 = vcombine.high %v9705, %v9721
        %v9764 = vunpack.c.l.s4 1934713408
        %v9765 = vunpack.c.0.s8 %v9764
        %v9766 = vlaneseq
        %v9767 = vshrl.u32 %v9766, 7
        %v9768 = vsub.s32 %v9765, %v9767
        %v9769 = vrot.slane %v9761, %v9768
        %v9771 = vunpack.c.l.s4 1934713408
        %v9772 = vunpack.c.0.s8 %v9771
        %v9773 = vlaneseq
        %v9774 = vshrl.u32 %v9773, 7
        %v9775 = vsub.s32 %v9772, %v9774
        %v9776 = vrot.slane %v9762, %v9775
        %v9777 = vcombine.low %v9712, %v9728
        %v9778 = vcombine.high %v9712, %v9728
        %v9780 = vunpack.c.l.s4 1934713408
        %v9781 = vunpack.c.0.s8 %v9780
        %v9782 = vlaneseq
        %v9783 = vshrl.u32 %v9782, 7
        %v9784 = vsub.s32 %v9781, %v9783
        %v9785 = vrot.slane %v9777, %v9784
        %v9787 = vunpack.c.l.s4 1934713408
        %v9788 = vunpack.c.0.s8 %v9787
        %v9789 = vlaneseq
        %v9790 = vshrl.u32 %v9789, 7
        %v9791 = vsub.s32 %v9788, %v9790
        %v9792 = vrot.slane %v9778, %v9791
        %v9793 = vcombine.low %v9737, %v9769
        %v9794 = vcombine.high %v9737, %v9769
        %v9795 = vcombine.low %v9744, %v9776
        %v9796 = vcombine.high %v9744, %v9776
        %v9797 = vcombine.low %v9753, %v9785
        %v9798 = vcombine.high %v9753, %v9785
        %v9799 = vcombine.low %v9760, %v9792
        %v9800 = vcombine.high %v9760, %v9792
        %v9801 = vcombine.low %v8313, %v8321
        %v9802 = vcombine.high %v8313, %v8321
        %v9804 = vunpack.c.l.s4 1983009808
        %v9805 = vunpack.c.0.s8 %v9804
        %v9806 = vlaneseq
        %v9807 = vshrl.u32 %v9806, 7
        %v9808 = vsub.s32 %v9805, %v9807
        %v9809 = vrot.slane %v9801, %v9808
        %v9811 = vunpack.c.l.s4 1983009808
        %v9812 = vunpack.c.0.s8 %v9811
        %v9813 = vlaneseq
        %v9814 = vshrl.u32 %v9813, 7
        %v9815 = vsub.s32 %v9812, %v9814
        %v9816 = vrot.slane %v9802, %v9815
        %v9817 = vcombine.low %v8317, %v8325
        %v9818 = vcombine.high %v8317, %v8325
        %v9820 = vunpack.c.l.s4 1983009808
        %v9821 = vunpack.c.0.s8 %v9820
        %v9822 = vlaneseq
        %v9823 = vshrl.u32 %v9822, 7
        %v9824 = vsub.s32 %v9821, %v9823
        %v9825 = vrot.slane %v9817, %v9824
        %v9827 = vunpack.c.l.s4 1983009808
        %v9828 = vunpack.c.0.s8 %v9827
        %v9829 = vlaneseq
        %v9830 = vshrl.u32 %v9829, 7
        %v9831 = vsub.s32 %v9828, %v9830
        %v9832 = vrot.slane %v9818, %v9831
        %v9833 = vcombine.low %v8329, %v8337
        %v9834 = vcombine.high %v8329, %v8337
        %v9836 = vunpack.c.l.s4 1983009808
        %v9837 = vunpack.c.0.s8 %v9836
        %v9838 = vlaneseq
        %v9839 = vshrl.u32 %v9838, 7
        %v9840 = vsub.s32 %v9837, %v9839
        %v9841 = vrot.slane %v9833, %v9840
        %v9843 = vunpack.c.l.s4 1983009808
        %v9844 = vunpack.c.0.s8 %v9843
        %v9845 = vlaneseq
        %v9846 = vshrl.u32 %v9845, 7
        %v9847 = vsub.s32 %v9844, %v9846
        %v9848 = vrot.slane %v9834, %v9847
        %v9849 = vcombine.low %v8333, %v8341
        %v9850 = vcombine.high %v8333, %v8341
        %v9852 = vunpack.c.l.s4 1983009808
        %v9853 = vunpack.c.0.s8 %v9852
        %v9854 = vlaneseq
        %v9855 = vshrl.u32 %v9854, 7
        %v9856 = vsub.s32 %v9853, %v9855
        %v9857 = vrot.slane %v9849, %v9856
        %v9859 = vunpack.c.l.s4 1983009808
        %v9860 = vunpack.c.0.s8 %v9859
        %v9861 = vlaneseq
        %v9862 = vshrl.u32 %v9861, 7
        %v9863 = vsub.s32 %v9860, %v9862
        %v9864 = vrot.slane %v9850, %v9863
        %v9865 = vcombine.low %v9809, %v9825
        %v9866 = vcombine.high %v9809, %v9825
        %v9868 = vunpack.c.l.s4 1934713408
        %v9869 = vunpack.c.0.s8 %v9868
        %v9870 = vlaneseq
        %v9871 = vshrl.u32 %v9870, 7
        %v9872 = vsub.s32 %v9869, %v9871
        %v9873 = vrot.slane %v9865, %v9872
        %v9875 = vunpack.c.l.s4 1934713408
        %v9876 = vunpack.c.0.s8 %v9875
        %v9877 = vlaneseq
        %v9878 = vshrl.u32 %v9877, 7
        %v9879 = vsub.s32 %v9876, %v9878
        %v9880 = vrot.slane %v9866, %v9879
        %v9881 = vcombine.low %v9816, %v9832
        %v9882 = vcombine.high %v9816, %v9832
        %v9884 = vunpack.c.l.s4 1934713408
        %v9885 = vunpack.c.0.s8 %v9884
        %v9886 = vlaneseq
        %v9887 = vshrl.u32 %v9886, 7
        %v9888 = vsub.s32 %v9885, %v9887
        %v9889 = vrot.slane %v9881, %v9888
        %v9891 = vunpack.c.l.s4 1934713408
        %v9892 = vunpack.c.0.s8 %v9891
        %v9893 = vlaneseq
        %v9894 = vshrl.u32 %v9893, 7
        %v9895 = vsub.s32 %v9892, %v9894
        %v9896 = vrot.slane %v9882, %v9895
        %v9897 = vcombine.low %v9841, %v9857
        %v9898 = vcombine.high %v9841, %v9857
        %v9900 = vunpack.c.l.s4 1934713408
        %v9901 = vunpack.c.0.s8 %v9900
        %v9902 = vlaneseq
        %v9903 = vshrl.u32 %v9902, 7
        %v9904 = vsub.s32 %v9901, %v9903
        %v9905 = vrot.slane %v9897, %v9904
        %v9907 = vunpack.c.l.s4 1934713408
        %v9908 = vunpack.c.0.s8 %v9907
        %v9909 = vlaneseq
        %v9910 = vshrl.u32 %v9909, 7
        %v9911 = vsub.s32 %v9908, %v9910
        %v9912 = vrot.slane %v9898, %v9911
        %v9913 = vcombine.low %v9848, %v9864
        %v9914 = vcombine.high %v9848, %v9864
        %v9916 = vunpack.c.l.s4 1934713408
        %v9917 = vunpack.c.0.s8 %v9916
        %v9918 = vlaneseq
        %v9919 = vshrl.u32 %v9918, 7
        %v9920 = vsub.s32 %v9917, %v9919
        %v9921 = vrot.slane %v9913, %v9920
        %v9923 = vunpack.c.l.s4 1934713408
        %v9924 = vunpack.c.0.s8 %v9923
        %v9925 = vlaneseq
        %v9926 = vshrl.u32 %v9925, 7
        %v9927 = vsub.s32 %v9924, %v9926
        %v9928 = vrot.slane %v9914, %v9927
        %v9929 = vcombine.low %v9873, %v9905
        %v9930 = vcombine.high %v9873, %v9905
        %v9931 = vcombine.low %v9880, %v9912
        %v9932 = vcombine.high %v9880, %v9912
        %v9933 = vcombine.low %v9889, %v9921
        %v9934 = vcombine.high %v9889, %v9921
        %v9935 = vcombine.low %v9896, %v9928
        %v9936 = vcombine.high %v9896, %v9928
        %9941 = vrot.lane.b32.xlu0 %v9522, 8
        %v9942 = vpop.permute.xlu0 %9941
        %9943 = vrot.lane.b32.xlu0 %v9658, 8
        %v9944 = vpop.permute.xlu0 %9943
        %9945 = vrot.lane.b32.xlu0 %v9794, 8
        %v9946 = vpop.permute.xlu0 %9945
        %9947 = vrot.lane.b32.xlu0 %v9930, 8
        %v9948 = vpop.permute.xlu0 %9947
        %9957 = vrot.lane.b32.xlu0 %v9523, 16
        %v9958 = vpop.permute.xlu0 %9957
        %9959 = vrot.lane.b32.xlu0 %v9659, 16
        %v9960 = vpop.permute.xlu0 %9959
        %9961 = vrot.lane.b32.xlu0 %v9795, 16
        %v9962 = vpop.permute.xlu0 %9961
        %9963 = vrot.lane.b32.xlu0 %v9931, 16
        %v9964 = vpop.permute.xlu0 %9963
        %9973 = vrot.lane.b32.xlu0 %v9524, 24
        %v9974 = vpop.permute.xlu0 %9973
        %9975 = vrot.lane.b32.xlu0 %v9660, 24
        %v9976 = vpop.permute.xlu0 %9975
        %9977 = vrot.lane.b32.xlu0 %v9796, 24
        %v9978 = vpop.permute.xlu0 %9977
        %9979 = vrot.lane.b32.xlu0 %v9932, 24
        %v9980 = vpop.permute.xlu0 %9979
        %9989 = vrot.lane.b32.xlu0 %v9525, 32
        %v9990 = vpop.permute.xlu0 %9989
        %9991 = vrot.lane.b32.xlu0 %v9661, 32
        %v9992 = vpop.permute.xlu0 %9991
        %9993 = vrot.lane.b32.xlu0 %v9797, 32
        %v9994 = vpop.permute.xlu0 %9993
        %9995 = vrot.lane.b32.xlu0 %v9933, 32
        %v9996 = vpop.permute.xlu0 %9995
        %10005 = vrot.lane.b32.xlu0 %v9526, 40
        %v10006 = vpop.permute.xlu0 %10005
        %10007 = vrot.lane.b32.xlu0 %v9662, 40
        %v10008 = vpop.permute.xlu0 %10007
        %10009 = vrot.lane.b32.xlu0 %v9798, 40
        %v10010 = vpop.permute.xlu0 %10009
        %10011 = vrot.lane.b32.xlu0 %v9934, 40
        %v10012 = vpop.permute.xlu0 %10011
        %10021 = vrot.lane.b32.xlu0 %v9527, 48
        %v10022 = vpop.permute.xlu0 %10021
        %10023 = vrot.lane.b32.xlu0 %v9663, 48
        %v10024 = vpop.permute.xlu0 %10023
        %10025 = vrot.lane.b32.xlu0 %v9799, 48
        %v10026 = vpop.permute.xlu0 %10025
        %10027 = vrot.lane.b32.xlu0 %v9935, 48
        %v10028 = vpop.permute.xlu0 %10027
        %10037 = vrot.lane.b32.xlu0 %v9528, 56
        %v10038 = vpop.permute.xlu0 %10037
        %10039 = vrot.lane.b32.xlu0 %v9664, 56
        %v10040 = vpop.permute.xlu0 %10039
        %10041 = vrot.lane.b32.xlu0 %v9800, 56
        %v10042 = vpop.permute.xlu0 %10041
        %10043 = vrot.lane.b32.xlu0 %v9936, 56
        %v10044 = vpop.permute.xlu0 %10043
        %10053 = vrot.lane.b32.xlu0 %v9521, 64
        %v10054 = vpop.permute.xlu0 %10053
        %10055 = vrot.lane.b32.xlu0 %v9657, 64
        %v10056 = vpop.permute.xlu0 %10055
        %10057 = vrot.lane.b32.xlu0 %v9793, 64
        %v10058 = vpop.permute.xlu0 %10057
        %10059 = vrot.lane.b32.xlu0 %v9929, 64
        %v10060 = vpop.permute.xlu0 %10059
        %10065 = vrot.lane.b32.xlu0 %v9522, 72
        %v10066 = vpop.permute.xlu0 %10065
        %10067 = vrot.lane.b32.xlu0 %v9658, 72
        %v10068 = vpop.permute.xlu0 %10067
        %10069 = vrot.lane.b32.xlu0 %v9794, 72
        %v10070 = vpop.permute.xlu0 %10069
        %10071 = vrot.lane.b32.xlu0 %v9930, 72
        %v10072 = vpop.permute.xlu0 %10071
        %10077 = vrot.lane.b32.xlu0 %v9523, 80
        %v10078 = vpop.permute.xlu0 %10077
        %10079 = vrot.lane.b32.xlu0 %v9659, 80
        %v10080 = vpop.permute.xlu0 %10079
        %10081 = vrot.lane.b32.xlu0 %v9795, 80
        %v10082 = vpop.permute.xlu0 %10081
        %10083 = vrot.lane.b32.xlu0 %v9931, 80
        %v10084 = vpop.permute.xlu0 %10083
        %10089 = vrot.lane.b32.xlu0 %v9524, 88
        %v10090 = vpop.permute.xlu0 %10089
        %10091 = vrot.lane.b32.xlu0 %v9660, 88
        %v10092 = vpop.permute.xlu0 %10091
        %10093 = vrot.lane.b32.xlu0 %v9796, 88
        %v10094 = vpop.permute.xlu0 %10093
        %10095 = vrot.lane.b32.xlu0 %v9932, 88
        %v10096 = vpop.permute.xlu0 %10095
        %10101 = vrot.lane.b32.xlu0 %v9525, 96
        %v10102 = vpop.permute.xlu0 %10101
        %10103 = vrot.lane.b32.xlu0 %v9661, 96
        %v10104 = vpop.permute.xlu0 %10103
        %10105 = vrot.lane.b32.xlu0 %v9797, 96
        %v10106 = vpop.permute.xlu0 %10105
        %10107 = vrot.lane.b32.xlu0 %v9933, 96
        %v10108 = vpop.permute.xlu0 %10107
        %10113 = vrot.lane.b32.xlu0 %v9526, 104
        %v10114 = vpop.permute.xlu0 %10113
        %10115 = vrot.lane.b32.xlu0 %v9662, 104
        %v10116 = vpop.permute.xlu0 %10115
        %10117 = vrot.lane.b32.xlu0 %v9798, 104
        %v10118 = vpop.permute.xlu0 %10117
        %10119 = vrot.lane.b32.xlu0 %v9934, 104
        %v10120 = vpop.permute.xlu0 %10119
        %10125 = vrot.lane.b32.xlu0 %v9527, 112
        %v10126 = vpop.permute.xlu0 %10125
        %10127 = vrot.lane.b32.xlu0 %v9663, 112
        %v10128 = vpop.permute.xlu0 %10127
        %10129 = vrot.lane.b32.xlu0 %v9799, 112
        %v10130 = vpop.permute.xlu0 %10129
        %10131 = vrot.lane.b32.xlu0 %v9935, 112
        %v10132 = vpop.permute.xlu0 %10131
        %10137 = vrot.lane.b32.xlu0 %v9528, 120
        %v10138 = vpop.permute.xlu0 %10137
        %10139 = vrot.lane.b32.xlu0 %v9664, 120
        %v10140 = vpop.permute.xlu0 %10139
        %10141 = vrot.lane.b32.xlu0 %v9800, 120
        %v10142 = vpop.permute.xlu0 %10141
        %10143 = vrot.lane.b32.xlu0 %v9936, 120
        %v10144 = vpop.permute.xlu0 %10143
        %v10149 = vsel %vm2227, %v9521, %v9942
        %v10150 = vsel %vm2227, %v9657, %v9944
        %v10151 = vsel %vm2227, %v9793, %v9946
        %v10152 = vsel %vm2227, %v9929, %v9948
        %v10153 = vsel %vm4404, %v10149, %v9958
        %v10154 = vsel %vm4404, %v10150, %v9960
        %v10155 = vsel %vm4404, %v10151, %v9962
        %v10156 = vsel %vm4404, %v10152, %v9964
        %v10157 = vsel %vm9344, %v10153, %v9974
        %v10158 = vsel %vm9344, %v10154, %v9976
        %v10159 = vsel %vm9344, %v10155, %v9978
        %v10160 = vsel %vm9344, %v10156, %v9980
        %v10161 = vsel %vm9348, %v10157, %v9990
        %v10162 = vsel %vm9348, %v10158, %v9992
        %v10163 = vsel %vm9348, %v10159, %v9994
        %v10164 = vsel %vm9348, %v10160, %v9996
        %v10165 = vsel %vm1111, %v10161, %v10006
        %v10166 = vsel %vm1111, %v10162, %v10008
        %v10167 = vsel %vm1111, %v10163, %v10010
        %v10168 = vsel %vm1111, %v10164, %v10012
        %v10169 = vsel %vm9355, %v10165, %v10022
        %v10170 = vsel %vm9355, %v10166, %v10024
        %v10171 = vsel %vm9355, %v10167, %v10026
        %v10172 = vsel %vm9355, %v10168, %v10028
        %v10173 = vsel %vm9359, %v10169, %v10038
        %v10174 = vsel %vm9359, %v10170, %v10040
        %v10175 = vsel %vm9359, %v10171, %v10042
        %v10176 = vsel %vm9359, %v10172, %v10044
        %v10177 = vsel %vm9363, %v10173, %v10054
        %v10178 = vsel %vm9363, %v10174, %v10056
        %v10179 = vsel %vm9363, %v10175, %v10058
        %v10180 = vsel %vm9363, %v10176, %v10060
        %v10181 = vsel %vm9367, %v10177, %v10066
        %v10182 = vsel %vm9367, %v10178, %v10068
        %v10183 = vsel %vm9367, %v10179, %v10070
        %v10184 = vsel %vm9367, %v10180, %v10072
        %v10185 = vsel %vm1123, %v10181, %v10078
        %v10186 = vsel %vm1123, %v10182, %v10080
        %v10187 = vsel %vm1123, %v10183, %v10082
        %v10188 = vsel %vm1123, %v10184, %v10084
        %v10189 = vsel %vm9374, %v10185, %v10090
        %v10190 = vsel %vm9374, %v10186, %v10092
        %v10191 = vsel %vm9374, %v10187, %v10094
        %v10192 = vsel %vm9374, %v10188, %v10096
        %v10193 = vsel %vm9378, %v10189, %v10102
        %v10194 = vsel %vm9378, %v10190, %v10104
        %v10195 = vsel %vm9378, %v10191, %v10106
        %v10196 = vsel %vm9378, %v10192, %v10108
        %v10197 = vsel %vm9382, %v10193, %v10114
        %v10198 = vsel %vm9382, %v10194, %v10116
        %v10199 = vsel %vm9382, %v10195, %v10118
        %v10200 = vsel %vm9382, %v10196, %v10120
        %v10201 = vsel %vm9386, %v10197, %v10126
        %v10202 = vsel %vm9386, %v10198, %v10128
        %v10203 = vsel %vm9386, %v10199, %v10130
        %v10204 = vsel %vm9386, %v10200, %v10132
        %v10205 = vsel %vm1135, %v10201, %v10138
        %v10206 = vsel %vm1135, %v10202, %v10140
        %v10207 = vsel %vm1135, %v10203, %v10142
        %v10208 = vsel %vm1135, %v10204, %v10144
        %v10210 = vsel %vm9344, %v8190, 0
        %v10213 = vsel %vm9344, %v8191, 0
        %v10216 = vsel %vm9344, %v8192, 0
        %v10219 = vsel %vm9344, %v8193, 0
        %10221 = vmatprep.subr.mxu0 0.0
        %10222 = vmatpush1.msra.mxu0 0.0
        %10223 = vmatprep.subr.mxu0 0.0
        %10224 = vmatpush1.msra.mxu0 0.0
        %10225 = vmatprep.subr.mxu0 0.0
        %10226 = vmatpush1.msra.mxu0 0.0
        %10227 = vmatprep.subr.mxu0 0.0
        %10228 = vmatpush1.msra.mxu0 0.0
        %10229 = vmatprep.subr.mxu0 0.0
        %10230 = vmatpush1.msra.mxu0 0.0
        %10231 = vmatprep.subr.mxu0 0.0
        %10232 = vmatpush1.msra.mxu0 0.0
        %10233 = vmatprep.subr.mxu0 0.0
        %10234 = vmatpush1.msra.mxu0 0.0
        %10235 = vmatprep.subr.mxu0 0.0
        %10236 = vmatpush1.msra.mxu0 0.0
        %10237 = vmatprep.subr.mxu0 0.0
        %10238 = vmatpush1.msra.mxu0 0.0
        %10239 = vmatprep.subr.mxu0 0.0
        %10240 = vmatpush1.msra.mxu0 0.0
        %10241 = vmatprep.subr.mxu0 0.0
        %10242 = vmatpush1.msra.mxu0 0.0
        %10243 = vmatprep.subr.mxu0 0.0
        %10244 = vmatpush1.msra.mxu0 0.0
        %10245 = vmatprep.subr.mxu0 0.0
        %10246 = vmatpush1.msra.mxu0 0.0
        %10247 = vmatprep.subr.mxu0 0.0
        %10248 = vmatpush1.msra.mxu0 %v9392
        %10249 = vmatprep.subr.mxu0 0.0
        %10250 = vmatpush1.msra.mxu0 %v9391
        %10251 = vmatprep.subr.mxu0 0.0
        %10252 = vmatpush1.msra.mxu0 %v9390
        %10253 = vmatprep.subr.mxu0 0.0
        %10254 = vmatpush2.msra.mxu0 0.0
        %10255 = vmatprep.subr.mxu0 0.0
        %10256 = vmatpush2.msra.mxu0 0.0
        %10257 = vmatprep.subr.mxu0 0.0
        %10258 = vmatpush2.msra.mxu0 0.0
        %10259 = vmatprep.subr.mxu0 0.0
        %10260 = vmatpush2.msra.mxu0 0.0
        %10261 = vmatprep.subr.mxu0 0.0
        %10262 = vmatpush2.msra.mxu0 0.0
        %10263 = vmatprep.subr.mxu0 0.0
        %10264 = vmatpush2.msra.mxu0 0.0
        %10265 = vmatprep.subr.mxu0 0.0
        %10266 = vmatpush2.msra.mxu0 0.0
        %10267 = vmatprep.subr.mxu0 0.0
        %10268 = vmatpush2.msra.mxu0 0.0
        %10269 = vmatprep.subr.mxu0 0.0
        %10270 = vmatpush2.msra.mxu0 0.0
        %10271 = vmatprep.subr.mxu0 0.0
        %10272 = vmatpush2.msra.mxu0 0.0
        %10273 = vmatprep.subr.mxu0 0.0
        %10274 = vmatpush2.msra.mxu0 0.0
        %10275 = vmatprep.subr.mxu0 0.0
        %10276 = vmatpush2.msra.mxu0 0.0
        %10277 = vmatprep.subr.mxu0 0.0
        %10278 = vmatpush2.msra.mxu0 0.0
        %10279 = vmatprep.subr.mxu0 0.0
        %10280 = vmatpush2.msra.mxu0 0.0
        %10281 = vmatprep.subr.mxu0 0.0
        %10282 = vmatpush2.msra.mxu0 0.0
        %10283 = vmatprep.subr.mxu0 0.0
        %10284 = vmatpush2.msra.mxu0 0.0
        %10285 = vmatprep.mubr.f32.mxu0 0.0
        %10286 = vmatmul.mubr.f32.gmra.mxu0 %v10210
        %v10287 = vpop.f32.mrf.mxu0
        %v10288 = vadd.f32 %v10205, %v10287
        %v10289 = vpop.f32.mrf.mxu0
        %10290 = vmatprep.mubr.f32.mxu0 0.0
        %10291 = vmatmul.mubr.f32.gmra.mxu0 %v10213
        %v10292 = vpop.f32.mrf.mxu0
        %v10293 = vadd.f32 %v10206, %v10292
        %v10294 = vpop.f32.mrf.mxu0
        %10295 = vmatprep.mubr.f32.mxu0 0.0
        %10296 = vmatmul.mubr.f32.gmra.mxu0 %v10216
        %v10297 = vpop.f32.mrf.mxu0
        %v10298 = vadd.f32 %v10207, %v10297
        %v10299 = vpop.f32.mrf.mxu0
        %10300 = vmatprep.mubr.f32.mxu0 0.0
        %10301 = vmatmul.mubr.f32.gmra.mxu0 %v10219
        %v10302 = vpop.f32.mrf.mxu0
        %v10303 = vadd.f32 %v10208, %v10302
        %v10304 = vpop.f32.mrf.mxu0
        %10305 = vdwg.mxu0
        %10310 = vrot.lane.b32.xlu0 %v10288, 120
        %v10311 = vpop.permute.xlu0 %10310
        %10312 = vrot.lane.b32.xlu0 %v10293, 120
        %v10313 = vpop.permute.xlu0 %10312
        %10314 = vrot.lane.b32.xlu0 %v10298, 120
        %v10315 = vpop.permute.xlu0 %10314
        %10316 = vrot.lane.b32.xlu0 %v10303, 120
        %v10317 = vpop.permute.xlu0 %10316
        %10322 = vrot.lane.b32.xlu0 %v10288, 112
        %v10323 = vpop.permute.xlu0 %10322
        %10324 = vrot.lane.b32.xlu0 %v10293, 112
        %v10325 = vpop.permute.xlu0 %10324
        %10326 = vrot.lane.b32.xlu0 %v10298, 112
        %v10327 = vpop.permute.xlu0 %10326
        %10328 = vrot.lane.b32.xlu0 %v10303, 112
        %v10329 = vpop.permute.xlu0 %10328
        %10334 = vrot.lane.b32.xlu0 %v10288, 104
        %v10335 = vpop.permute.xlu0 %10334
        %10336 = vrot.lane.b32.xlu0 %v10293, 104
        %v10337 = vpop.permute.xlu0 %10336
        %10338 = vrot.lane.b32.xlu0 %v10298, 104
        %v10339 = vpop.permute.xlu0 %10338
        %10340 = vrot.lane.b32.xlu0 %v10303, 104
        %v10341 = vpop.permute.xlu0 %10340
        %10346 = vrot.lane.b32.xlu0 %v10288, 96
        %v10347 = vpop.permute.xlu0 %10346
        %10348 = vrot.lane.b32.xlu0 %v10293, 96
        %v10349 = vpop.permute.xlu0 %10348
        %10350 = vrot.lane.b32.xlu0 %v10298, 96
        %v10351 = vpop.permute.xlu0 %10350
        %10352 = vrot.lane.b32.xlu0 %v10303, 96
        %v10353 = vpop.permute.xlu0 %10352
        %10358 = vrot.lane.b32.xlu0 %v10288, 88
        %v10359 = vpop.permute.xlu0 %10358
        %10360 = vrot.lane.b32.xlu0 %v10293, 88
        %v10361 = vpop.permute.xlu0 %10360
        %10362 = vrot.lane.b32.xlu0 %v10298, 88
        %v10363 = vpop.permute.xlu0 %10362
        %10364 = vrot.lane.b32.xlu0 %v10303, 88
        %v10365 = vpop.permute.xlu0 %10364
        %10370 = vrot.lane.b32.xlu0 %v10288, 80
        %v10371 = vpop.permute.xlu0 %10370
        %10372 = vrot.lane.b32.xlu0 %v10293, 80
        %v10373 = vpop.permute.xlu0 %10372
        %10374 = vrot.lane.b32.xlu0 %v10298, 80
        %v10375 = vpop.permute.xlu0 %10374
        %10376 = vrot.lane.b32.xlu0 %v10303, 80
        %v10377 = vpop.permute.xlu0 %10376
        %10382 = vrot.lane.b32.xlu0 %v10288, 72
        %v10383 = vpop.permute.xlu0 %10382
        %10384 = vrot.lane.b32.xlu0 %v10293, 72
        %v10385 = vpop.permute.xlu0 %10384
        %10386 = vrot.lane.b32.xlu0 %v10298, 72
        %v10387 = vpop.permute.xlu0 %10386
        %10388 = vrot.lane.b32.xlu0 %v10303, 72
        %v10389 = vpop.permute.xlu0 %10388
        %10394 = vrot.lane.b32.xlu0 %v10288, 64
        %v10395 = vpop.permute.xlu0 %10394
        %10396 = vrot.lane.b32.xlu0 %v10293, 64
        %v10397 = vpop.permute.xlu0 %10396
        %10398 = vrot.lane.b32.xlu0 %v10298, 64
        %v10399 = vpop.permute.xlu0 %10398
        %10400 = vrot.lane.b32.xlu0 %v10303, 64
        %v10401 = vpop.permute.xlu0 %10400
        %10406 = vrot.lane.b32.xlu0 %v10288, 56
        %v10407 = vpop.permute.xlu0 %10406
        %10408 = vrot.lane.b32.xlu0 %v10293, 56
        %v10409 = vpop.permute.xlu0 %10408
        %10410 = vrot.lane.b32.xlu0 %v10298, 56
        %v10411 = vpop.permute.xlu0 %10410
        %10412 = vrot.lane.b32.xlu0 %v10303, 56
        %v10413 = vpop.permute.xlu0 %10412
        %10418 = vrot.lane.b32.xlu0 %v10288, 48
        %v10419 = vpop.permute.xlu0 %10418
        %10420 = vrot.lane.b32.xlu0 %v10293, 48
        %v10421 = vpop.permute.xlu0 %10420
        %10422 = vrot.lane.b32.xlu0 %v10298, 48
        %v10423 = vpop.permute.xlu0 %10422
        %10424 = vrot.lane.b32.xlu0 %v10303, 48
        %v10425 = vpop.permute.xlu0 %10424
        %10430 = vrot.lane.b32.xlu0 %v10288, 40
        %v10431 = vpop.permute.xlu0 %10430
        %10432 = vrot.lane.b32.xlu0 %v10293, 40
        %v10433 = vpop.permute.xlu0 %10432
        %10434 = vrot.lane.b32.xlu0 %v10298, 40
        %v10435 = vpop.permute.xlu0 %10434
        %10436 = vrot.lane.b32.xlu0 %v10303, 40
        %v10437 = vpop.permute.xlu0 %10436
        %10442 = vrot.lane.b32.xlu0 %v10288, 32
        %v10443 = vpop.permute.xlu0 %10442
        %10444 = vrot.lane.b32.xlu0 %v10293, 32
        %v10445 = vpop.permute.xlu0 %10444
        %10446 = vrot.lane.b32.xlu0 %v10298, 32
        %v10447 = vpop.permute.xlu0 %10446
        %10448 = vrot.lane.b32.xlu0 %v10303, 32
        %v10449 = vpop.permute.xlu0 %10448
        %10454 = vrot.lane.b32.xlu0 %v10288, 24
        %v10455 = vpop.permute.xlu0 %10454
        %10456 = vrot.lane.b32.xlu0 %v10293, 24
        %v10457 = vpop.permute.xlu0 %10456
        %10458 = vrot.lane.b32.xlu0 %v10298, 24
        %v10459 = vpop.permute.xlu0 %10458
        %10460 = vrot.lane.b32.xlu0 %v10303, 24
        %v10461 = vpop.permute.xlu0 %10460
        %10466 = vrot.lane.b32.xlu0 %v10288, 16
        %v10467 = vpop.permute.xlu0 %10466
        %10468 = vrot.lane.b32.xlu0 %v10293, 16
        %v10469 = vpop.permute.xlu0 %10468
        %10470 = vrot.lane.b32.xlu0 %v10298, 16
        %v10471 = vpop.permute.xlu0 %10470
        %10472 = vrot.lane.b32.xlu0 %v10303, 16
        %v10473 = vpop.permute.xlu0 %10472
        %10478 = vrot.lane.b32.xlu0 %v10288, 8
        %v10479 = vpop.permute.xlu0 %10478
        %10480 = vrot.lane.b32.xlu0 %v10293, 8
        %v10481 = vpop.permute.xlu0 %10480
        %10482 = vrot.lane.b32.xlu0 %v10298, 8
        %v10483 = vpop.permute.xlu0 %10482
        %10484 = vrot.lane.b32.xlu0 %v10303, 8
        %v10485 = vpop.permute.xlu0 %10484
        %v10490 = vcombine.low %v10288, %v10323
        %v10491 = vcombine.high %v10288, %v10323
        %v10493 = vunpack.c.l.s4 1983009808
        %v10494 = vunpack.c.0.s8 %v10493
        %v10495 = vlaneseq
        %v10496 = vshrl.u32 %v10495, 7
        %v10497 = vsub.s32 %v10494, %v10496
        %v10498 = vrot.slane %v10490, %v10497
        %v10500 = vunpack.c.l.s4 1983009808
        %v10501 = vunpack.c.0.s8 %v10500
        %v10502 = vlaneseq
        %v10503 = vshrl.u32 %v10502, 7
        %v10504 = vsub.s32 %v10501, %v10503
        %v10505 = vrot.slane %v10491, %v10504
        %v10506 = vcombine.low %v10311, %v10335
        %v10507 = vcombine.high %v10311, %v10335
        %v10509 = vunpack.c.l.s4 1983009808
        %v10510 = vunpack.c.0.s8 %v10509
        %v10511 = vlaneseq
        %v10512 = vshrl.u32 %v10511, 7
        %v10513 = vsub.s32 %v10510, %v10512
        %v10514 = vrot.slane %v10506, %v10513
        %v10516 = vunpack.c.l.s4 1983009808
        %v10517 = vunpack.c.0.s8 %v10516
        %v10518 = vlaneseq
        %v10519 = vshrl.u32 %v10518, 7
        %v10520 = vsub.s32 %v10517, %v10519
        %v10521 = vrot.slane %v10507, %v10520
        %v10522 = vcombine.low %v10347, %v10371
        %v10523 = vcombine.high %v10347, %v10371
        %v10525 = vunpack.c.l.s4 1983009808
        %v10526 = vunpack.c.0.s8 %v10525
        %v10527 = vlaneseq
        %v10528 = vshrl.u32 %v10527, 7
        %v10529 = vsub.s32 %v10526, %v10528
        %v10530 = vrot.slane %v10522, %v10529
        %v10532 = vunpack.c.l.s4 1983009808
        %v10533 = vunpack.c.0.s8 %v10532
        %v10534 = vlaneseq
        %v10535 = vshrl.u32 %v10534, 7
        %v10536 = vsub.s32 %v10533, %v10535
        %v10537 = vrot.slane %v10523, %v10536
        %v10538 = vcombine.low %v10359, %v10383
        %v10539 = vcombine.high %v10359, %v10383
        %v10541 = vunpack.c.l.s4 1983009808
        %v10542 = vunpack.c.0.s8 %v10541
        %v10543 = vlaneseq
        %v10544 = vshrl.u32 %v10543, 7
        %v10545 = vsub.s32 %v10542, %v10544
        %v10546 = vrot.slane %v10538, %v10545
        %v10548 = vunpack.c.l.s4 1983009808
        %v10549 = vunpack.c.0.s8 %v10548
        %v10550 = vlaneseq
        %v10551 = vshrl.u32 %v10550, 7
        %v10552 = vsub.s32 %v10549, %v10551
        %v10553 = vrot.slane %v10539, %v10552
        %v10554 = vcombine.low %v10498, %v10514
        %v10555 = vcombine.high %v10498, %v10514
        %v10557 = vunpack.c.l.s4 1934713408
        %v10558 = vunpack.c.0.s8 %v10557
        %v10559 = vlaneseq
        %v10560 = vshrl.u32 %v10559, 7
        %v10561 = vsub.s32 %v10558, %v10560
        %v10562 = vrot.slane %v10554, %v10561
        %v10564 = vunpack.c.l.s4 1934713408
        %v10565 = vunpack.c.0.s8 %v10564
        %v10566 = vlaneseq
        %v10567 = vshrl.u32 %v10566, 7
        %v10568 = vsub.s32 %v10565, %v10567
        %v10569 = vrot.slane %v10555, %v10568
        %v10570 = vcombine.low %v10505, %v10521
        %v10571 = vcombine.high %v10505, %v10521
        %v10573 = vunpack.c.l.s4 1934713408
        %v10574 = vunpack.c.0.s8 %v10573
        %v10575 = vlaneseq
        %v10576 = vshrl.u32 %v10575, 7
        %v10577 = vsub.s32 %v10574, %v10576
        %v10578 = vrot.slane %v10570, %v10577
        %v10580 = vunpack.c.l.s4 1934713408
        %v10581 = vunpack.c.0.s8 %v10580
        %v10582 = vlaneseq
        %v10583 = vshrl.u32 %v10582, 7
        %v10584 = vsub.s32 %v10581, %v10583
        %v10585 = vrot.slane %v10571, %v10584
        %v10586 = vcombine.low %v10530, %v10546
        %v10587 = vcombine.high %v10530, %v10546
        %v10589 = vunpack.c.l.s4 1934713408
        %v10590 = vunpack.c.0.s8 %v10589
        %v10591 = vlaneseq
        %v10592 = vshrl.u32 %v10591, 7
        %v10593 = vsub.s32 %v10590, %v10592
        %v10594 = vrot.slane %v10586, %v10593
        %v10596 = vunpack.c.l.s4 1934713408
        %v10597 = vunpack.c.0.s8 %v10596
        %v10598 = vlaneseq
        %v10599 = vshrl.u32 %v10598, 7
        %v10600 = vsub.s32 %v10597, %v10599
        %v10601 = vrot.slane %v10587, %v10600
        %v10602 = vcombine.low %v10537, %v10553
        %v10603 = vcombine.high %v10537, %v10553
        %v10605 = vunpack.c.l.s4 1934713408
        %v10606 = vunpack.c.0.s8 %v10605
        %v10607 = vlaneseq
        %v10608 = vshrl.u32 %v10607, 7
        %v10609 = vsub.s32 %v10606, %v10608
        %v10610 = vrot.slane %v10602, %v10609
        %v10612 = vunpack.c.l.s4 1934713408
        %v10613 = vunpack.c.0.s8 %v10612
        %v10614 = vlaneseq
        %v10615 = vshrl.u32 %v10614, 7
        %v10616 = vsub.s32 %v10613, %v10615
        %v10617 = vrot.slane %v10603, %v10616
        %v10618 = vcombine.low %v10562, %v10594
        %v10619 = vcombine.high %v10562, %v10594
        %v10620 = vcombine.low %v10569, %v10601
        %v10621 = vcombine.high %v10569, %v10601
        %v10622 = vcombine.low %v10578, %v10610
        %v10623 = vcombine.high %v10578, %v10610
        %v10624 = vcombine.low %v10585, %v10617
        %v10625 = vcombine.high %v10585, %v10617
        %v10626 = vcombine.low %v10395, %v10419
        %v10627 = vcombine.high %v10395, %v10419
        %v10629 = vunpack.c.l.s4 1983009808
        %v10630 = vunpack.c.0.s8 %v10629
        %v10631 = vlaneseq
        %v10632 = vshrl.u32 %v10631, 7
        %v10633 = vsub.s32 %v10630, %v10632
        %v10634 = vrot.slane %v10626, %v10633
        %v10636 = vunpack.c.l.s4 1983009808
        %v10637 = vunpack.c.0.s8 %v10636
        %v10638 = vlaneseq
        %v10639 = vshrl.u32 %v10638, 7
        %v10640 = vsub.s32 %v10637, %v10639
        %v10641 = vrot.slane %v10627, %v10640
        %v10642 = vcombine.low %v10407, %v10431
        %v10643 = vcombine.high %v10407, %v10431
        %v10645 = vunpack.c.l.s4 1983009808
        %v10646 = vunpack.c.0.s8 %v10645
        %v10647 = vlaneseq
        %v10648 = vshrl.u32 %v10647, 7
        %v10649 = vsub.s32 %v10646, %v10648
        %v10650 = vrot.slane %v10642, %v10649
        %v10652 = vunpack.c.l.s4 1983009808
        %v10653 = vunpack.c.0.s8 %v10652
        %v10654 = vlaneseq
        %v10655 = vshrl.u32 %v10654, 7
        %v10656 = vsub.s32 %v10653, %v10655
        %v10657 = vrot.slane %v10643, %v10656
        %v10658 = vcombine.low %v10443, %v10467
        %v10659 = vcombine.high %v10443, %v10467
        %v10661 = vunpack.c.l.s4 1983009808
        %v10662 = vunpack.c.0.s8 %v10661
        %v10663 = vlaneseq
        %v10664 = vshrl.u32 %v10663, 7
        %v10665 = vsub.s32 %v10662, %v10664
        %v10666 = vrot.slane %v10658, %v10665
        %v10668 = vunpack.c.l.s4 1983009808
        %v10669 = vunpack.c.0.s8 %v10668
        %v10670 = vlaneseq
        %v10671 = vshrl.u32 %v10670, 7
        %v10672 = vsub.s32 %v10669, %v10671
        %v10673 = vrot.slane %v10659, %v10672
        %v10674 = vcombine.low %v10455, %v10479
        %v10675 = vcombine.high %v10455, %v10479
        %v10677 = vunpack.c.l.s4 1983009808
        %v10678 = vunpack.c.0.s8 %v10677
        %v10679 = vlaneseq
        %v10680 = vshrl.u32 %v10679, 7
        %v10681 = vsub.s32 %v10678, %v10680
        %v10682 = vrot.slane %v10674, %v10681
        %v10684 = vunpack.c.l.s4 1983009808
        %v10685 = vunpack.c.0.s8 %v10684
        %v10686 = vlaneseq
        %v10687 = vshrl.u32 %v10686, 7
        %v10688 = vsub.s32 %v10685, %v10687
        %v10689 = vrot.slane %v10675, %v10688
        %v10690 = vcombine.low %v10634, %v10650
        %v10691 = vcombine.high %v10634, %v10650
        %v10693 = vunpack.c.l.s4 1934713408
        %v10694 = vunpack.c.0.s8 %v10693
        %v10695 = vlaneseq
        %v10696 = vshrl.u32 %v10695, 7
        %v10697 = vsub.s32 %v10694, %v10696
        %v10698 = vrot.slane %v10690, %v10697
        %v10700 = vunpack.c.l.s4 1934713408
        %v10701 = vunpack.c.0.s8 %v10700
        %v10702 = vlaneseq
        %v10703 = vshrl.u32 %v10702, 7
        %v10704 = vsub.s32 %v10701, %v10703
        %v10705 = vrot.slane %v10691, %v10704
        %v10706 = vcombine.low %v10641, %v10657
        %v10707 = vcombine.high %v10641, %v10657
        %v10709 = vunpack.c.l.s4 1934713408
        %v10710 = vunpack.c.0.s8 %v10709
        %v10711 = vlaneseq
        %v10712 = vshrl.u32 %v10711, 7
        %v10713 = vsub.s32 %v10710, %v10712
        %v10714 = vrot.slane %v10706, %v10713
        %v10716 = vunpack.c.l.s4 1934713408
        %v10717 = vunpack.c.0.s8 %v10716
        %v10718 = vlaneseq
        %v10719 = vshrl.u32 %v10718, 7
        %v10720 = vsub.s32 %v10717, %v10719
        %v10721 = vrot.slane %v10707, %v10720
        %v10722 = vcombine.low %v10666, %v10682
        %v10723 = vcombine.high %v10666, %v10682
        %v10725 = vunpack.c.l.s4 1934713408
        %v10726 = vunpack.c.0.s8 %v10725
        %v10727 = vlaneseq
        %v10728 = vshrl.u32 %v10727, 7
        %v10729 = vsub.s32 %v10726, %v10728
        %v10730 = vrot.slane %v10722, %v10729
        %v10732 = vunpack.c.l.s4 1934713408
        %v10733 = vunpack.c.0.s8 %v10732
        %v10734 = vlaneseq
        %v10735 = vshrl.u32 %v10734, 7
        %v10736 = vsub.s32 %v10733, %v10735
        %v10737 = vrot.slane %v10723, %v10736
        %v10738 = vcombine.low %v10673, %v10689
        %v10739 = vcombine.high %v10673, %v10689
        %v10741 = vunpack.c.l.s4 1934713408
        %v10742 = vunpack.c.0.s8 %v10741
        %v10743 = vlaneseq
        %v10744 = vshrl.u32 %v10743, 7
        %v10745 = vsub.s32 %v10742, %v10744
        %v10746 = vrot.slane %v10738, %v10745
        %v10748 = vunpack.c.l.s4 1934713408
        %v10749 = vunpack.c.0.s8 %v10748
        %v10750 = vlaneseq
        %v10751 = vshrl.u32 %v10750, 7
        %v10752 = vsub.s32 %v10749, %v10751
        %v10753 = vrot.slane %v10739, %v10752
        %v10754 = vcombine.low %v10698, %v10730
        %v10755 = vcombine.high %v10698, %v10730
        %v10756 = vcombine.low %v10705, %v10737
        %v10757 = vcombine.high %v10705, %v10737
        %v10758 = vcombine.low %v10714, %v10746
        %v10759 = vcombine.high %v10714, %v10746
        %v10760 = vcombine.low %v10721, %v10753
        %v10761 = vcombine.high %v10721, %v10753
        %v10762 = vcombine.low %v10293, %v10325
        %v10763 = vcombine.high %v10293, %v10325
        %v10765 = vunpack.c.l.s4 1983009808
        %v10766 = vunpack.c.0.s8 %v10765
        %v10767 = vlaneseq
        %v10768 = vshrl.u32 %v10767, 7
        %v10769 = vsub.s32 %v10766, %v10768
        %v10770 = vrot.slane %v10762, %v10769
        %v10772 = vunpack.c.l.s4 1983009808
        %v10773 = vunpack.c.0.s8 %v10772
        %v10774 = vlaneseq
        %v10775 = vshrl.u32 %v10774, 7
        %v10776 = vsub.s32 %v10773, %v10775
        %v10777 = vrot.slane %v10763, %v10776
        %v10778 = vcombine.low %v10313, %v10337
        %v10779 = vcombine.high %v10313, %v10337
        %v10781 = vunpack.c.l.s4 1983009808
        %v10782 = vunpack.c.0.s8 %v10781
        %v10783 = vlaneseq
        %v10784 = vshrl.u32 %v10783, 7
        %v10785 = vsub.s32 %v10782, %v10784
        %v10786 = vrot.slane %v10778, %v10785
        %v10788 = vunpack.c.l.s4 1983009808
        %v10789 = vunpack.c.0.s8 %v10788
        %v10790 = vlaneseq
        %v10791 = vshrl.u32 %v10790, 7
        %v10792 = vsub.s32 %v10789, %v10791
        %v10793 = vrot.slane %v10779, %v10792
        %v10794 = vcombine.low %v10349, %v10373
        %v10795 = vcombine.high %v10349, %v10373
        %v10797 = vunpack.c.l.s4 1983009808
        %v10798 = vunpack.c.0.s8 %v10797
        %v10799 = vlaneseq
        %v10800 = vshrl.u32 %v10799, 7
        %v10801 = vsub.s32 %v10798, %v10800
        %v10802 = vrot.slane %v10794, %v10801
        %v10804 = vunpack.c.l.s4 1983009808
        %v10805 = vunpack.c.0.s8 %v10804
        %v10806 = vlaneseq
        %v10807 = vshrl.u32 %v10806, 7
        %v10808 = vsub.s32 %v10805, %v10807
        %v10809 = vrot.slane %v10795, %v10808
        %v10810 = vcombine.low %v10361, %v10385
        %v10811 = vcombine.high %v10361, %v10385
        %v10813 = vunpack.c.l.s4 1983009808
        %v10814 = vunpack.c.0.s8 %v10813
        %v10815 = vlaneseq
        %v10816 = vshrl.u32 %v10815, 7
        %v10817 = vsub.s32 %v10814, %v10816
        %v10818 = vrot.slane %v10810, %v10817
        %v10820 = vunpack.c.l.s4 1983009808
        %v10821 = vunpack.c.0.s8 %v10820
        %v10822 = vlaneseq
        %v10823 = vshrl.u32 %v10822, 7
        %v10824 = vsub.s32 %v10821, %v10823
        %v10825 = vrot.slane %v10811, %v10824
        %v10826 = vcombine.low %v10770, %v10786
        %v10827 = vcombine.high %v10770, %v10786
        %v10829 = vunpack.c.l.s4 1934713408
        %v10830 = vunpack.c.0.s8 %v10829
        %v10831 = vlaneseq
        %v10832 = vshrl.u32 %v10831, 7
        %v10833 = vsub.s32 %v10830, %v10832
        %v10834 = vrot.slane %v10826, %v10833
        %v10836 = vunpack.c.l.s4 1934713408
        %v10837 = vunpack.c.0.s8 %v10836
        %v10838 = vlaneseq
        %v10839 = vshrl.u32 %v10838, 7
        %v10840 = vsub.s32 %v10837, %v10839
        %v10841 = vrot.slane %v10827, %v10840
        %v10842 = vcombine.low %v10777, %v10793
        %v10843 = vcombine.high %v10777, %v10793
        %v10845 = vunpack.c.l.s4 1934713408
        %v10846 = vunpack.c.0.s8 %v10845
        %v10847 = vlaneseq
        %v10848 = vshrl.u32 %v10847, 7
        %v10849 = vsub.s32 %v10846, %v10848
        %v10850 = vrot.slane %v10842, %v10849
        %v10852 = vunpack.c.l.s4 1934713408
        %v10853 = vunpack.c.0.s8 %v10852
        %v10854 = vlaneseq
        %v10855 = vshrl.u32 %v10854, 7
        %v10856 = vsub.s32 %v10853, %v10855
        %v10857 = vrot.slane %v10843, %v10856
        %v10858 = vcombine.low %v10802, %v10818
        %v10859 = vcombine.high %v10802, %v10818
        %v10861 = vunpack.c.l.s4 1934713408
        %v10862 = vunpack.c.0.s8 %v10861
        %v10863 = vlaneseq
        %v10864 = vshrl.u32 %v10863, 7
        %v10865 = vsub.s32 %v10862, %v10864
        %v10866 = vrot.slane %v10858, %v10865
        %v10868 = vunpack.c.l.s4 1934713408
        %v10869 = vunpack.c.0.s8 %v10868
        %v10870 = vlaneseq
        %v10871 = vshrl.u32 %v10870, 7
        %v10872 = vsub.s32 %v10869, %v10871
        %v10873 = vrot.slane %v10859, %v10872
        %v10874 = vcombine.low %v10809, %v10825
        %v10875 = vcombine.high %v10809, %v10825
        %v10877 = vunpack.c.l.s4 1934713408
        %v10878 = vunpack.c.0.s8 %v10877
        %v10879 = vlaneseq
        %v10880 = vshrl.u32 %v10879, 7
        %v10881 = vsub.s32 %v10878, %v10880
        %v10882 = vrot.slane %v10874, %v10881
        %v10884 = vunpack.c.l.s4 1934713408
        %v10885 = vunpack.c.0.s8 %v10884
        %v10886 = vlaneseq
        %v10887 = vshrl.u32 %v10886, 7
        %v10888 = vsub.s32 %v10885, %v10887
        %v10889 = vrot.slane %v10875, %v10888
        %v10890 = vcombine.low %v10834, %v10866
        %v10891 = vcombine.high %v10834, %v10866
        %v10892 = vcombine.low %v10841, %v10873
        %v10893 = vcombine.high %v10841, %v10873
        %v10894 = vcombine.low %v10850, %v10882
        %v10895 = vcombine.high %v10850, %v10882
        %v10896 = vcombine.low %v10857, %v10889
        %v10897 = vcombine.high %v10857, %v10889
        %v10898 = vcombine.low %v10397, %v10421
        %v10899 = vcombine.high %v10397, %v10421
        %v10901 = vunpack.c.l.s4 1983009808
        %v10902 = vunpack.c.0.s8 %v10901
        %v10903 = vlaneseq
        %v10904 = vshrl.u32 %v10903, 7
        %v10905 = vsub.s32 %v10902, %v10904
        %v10906 = vrot.slane %v10898, %v10905
        %v10908 = vunpack.c.l.s4 1983009808
        %v10909 = vunpack.c.0.s8 %v10908
        %v10910 = vlaneseq
        %v10911 = vshrl.u32 %v10910, 7
        %v10912 = vsub.s32 %v10909, %v10911
        %v10913 = vrot.slane %v10899, %v10912
        %v10914 = vcombine.low %v10409, %v10433
        %v10915 = vcombine.high %v10409, %v10433
        %v10917 = vunpack.c.l.s4 1983009808
        %v10918 = vunpack.c.0.s8 %v10917
        %v10919 = vlaneseq
        %v10920 = vshrl.u32 %v10919, 7
        %v10921 = vsub.s32 %v10918, %v10920
        %v10922 = vrot.slane %v10914, %v10921
        %v10924 = vunpack.c.l.s4 1983009808
        %v10925 = vunpack.c.0.s8 %v10924
        %v10926 = vlaneseq
        %v10927 = vshrl.u32 %v10926, 7
        %v10928 = vsub.s32 %v10925, %v10927
        %v10929 = vrot.slane %v10915, %v10928
        %v10930 = vcombine.low %v10445, %v10469
        %v10931 = vcombine.high %v10445, %v10469
        %v10933 = vunpack.c.l.s4 1983009808
        %v10934 = vunpack.c.0.s8 %v10933
        %v10935 = vlaneseq
        %v10936 = vshrl.u32 %v10935, 7
        %v10937 = vsub.s32 %v10934, %v10936
        %v10938 = vrot.slane %v10930, %v10937
        %v10940 = vunpack.c.l.s4 1983009808
        %v10941 = vunpack.c.0.s8 %v10940
        %v10942 = vlaneseq
        %v10943 = vshrl.u32 %v10942, 7
        %v10944 = vsub.s32 %v10941, %v10943
        %v10945 = vrot.slane %v10931, %v10944
        %v10946 = vcombine.low %v10457, %v10481
        %v10947 = vcombine.high %v10457, %v10481
        %v10949 = vunpack.c.l.s4 1983009808
        %v10950 = vunpack.c.0.s8 %v10949
        %v10951 = vlaneseq
        %v10952 = vshrl.u32 %v10951, 7
        %v10953 = vsub.s32 %v10950, %v10952
        %v10954 = vrot.slane %v10946, %v10953
        %v10956 = vunpack.c.l.s4 1983009808
        %v10957 = vunpack.c.0.s8 %v10956
        %v10958 = vlaneseq
        %v10959 = vshrl.u32 %v10958, 7
        %v10960 = vsub.s32 %v10957, %v10959
        %v10961 = vrot.slane %v10947, %v10960
        %v10962 = vcombine.low %v10906, %v10922
        %v10963 = vcombine.high %v10906, %v10922
        %v10965 = vunpack.c.l.s4 1934713408
        %v10966 = vunpack.c.0.s8 %v10965
        %v10967 = vlaneseq
        %v10968 = vshrl.u32 %v10967, 7
        %v10969 = vsub.s32 %v10966, %v10968
        %v10970 = vrot.slane %v10962, %v10969
        %v10972 = vunpack.c.l.s4 1934713408
        %v10973 = vunpack.c.0.s8 %v10972
        %v10974 = vlaneseq
        %v10975 = vshrl.u32 %v10974, 7
        %v10976 = vsub.s32 %v10973, %v10975
        %v10977 = vrot.slane %v10963, %v10976
        %v10978 = vcombine.low %v10913, %v10929
        %v10979 = vcombine.high %v10913, %v10929
        %v10981 = vunpack.c.l.s4 1934713408
        %v10982 = vunpack.c.0.s8 %v10981
        %v10983 = vlaneseq
        %v10984 = vshrl.u32 %v10983, 7
        %v10985 = vsub.s32 %v10982, %v10984
        %v10986 = vrot.slane %v10978, %v10985
        %v10988 = vunpack.c.l.s4 1934713408
        %v10989 = vunpack.c.0.s8 %v10988
        %v10990 = vlaneseq
        %v10991 = vshrl.u32 %v10990, 7
        %v10992 = vsub.s32 %v10989, %v10991
        %v10993 = vrot.slane %v10979, %v10992
        %v10994 = vcombine.low %v10938, %v10954
        %v10995 = vcombine.high %v10938, %v10954
        %v10997 = vunpack.c.l.s4 1934713408
        %v10998 = vunpack.c.0.s8 %v10997
        %v10999 = vlaneseq
        %v11000 = vshrl.u32 %v10999, 7
        %v11001 = vsub.s32 %v10998, %v11000
        %v11002 = vrot.slane %v10994, %v11001
        %v11004 = vunpack.c.l.s4 1934713408
        %v11005 = vunpack.c.0.s8 %v11004
        %v11006 = vlaneseq
        %v11007 = vshrl.u32 %v11006, 7
        %v11008 = vsub.s32 %v11005, %v11007
        %v11009 = vrot.slane %v10995, %v11008
        %v11010 = vcombine.low %v10945, %v10961
        %v11011 = vcombine.high %v10945, %v10961
        %v11013 = vunpack.c.l.s4 1934713408
        %v11014 = vunpack.c.0.s8 %v11013
        %v11015 = vlaneseq
        %v11016 = vshrl.u32 %v11015, 7
        %v11017 = vsub.s32 %v11014, %v11016
        %v11018 = vrot.slane %v11010, %v11017
        %v11020 = vunpack.c.l.s4 1934713408
        %v11021 = vunpack.c.0.s8 %v11020
        %v11022 = vlaneseq
        %v11023 = vshrl.u32 %v11022, 7
        %v11024 = vsub.s32 %v11021, %v11023
        %v11025 = vrot.slane %v11011, %v11024
        %v11026 = vcombine.low %v10970, %v11002
        %v11027 = vcombine.high %v10970, %v11002
        %v11028 = vcombine.low %v10977, %v11009
        %v11029 = vcombine.high %v10977, %v11009
        %v11030 = vcombine.low %v10986, %v11018
        %v11031 = vcombine.high %v10986, %v11018
        %v11032 = vcombine.low %v10993, %v11025
        %v11033 = vcombine.high %v10993, %v11025
        %v11034 = vcombine.low %v10298, %v10327
        %v11035 = vcombine.high %v10298, %v10327
        %v11037 = vunpack.c.l.s4 1983009808
        %v11038 = vunpack.c.0.s8 %v11037
        %v11039 = vlaneseq
        %v11040 = vshrl.u32 %v11039, 7
        %v11041 = vsub.s32 %v11038, %v11040
        %v11042 = vrot.slane %v11034, %v11041
        %v11044 = vunpack.c.l.s4 1983009808
        %v11045 = vunpack.c.0.s8 %v11044
        %v11046 = vlaneseq
        %v11047 = vshrl.u32 %v11046, 7
        %v11048 = vsub.s32 %v11045, %v11047
        %v11049 = vrot.slane %v11035, %v11048
        %v11050 = vcombine.low %v10315, %v10339
        %v11051 = vcombine.high %v10315, %v10339
        %v11053 = vunpack.c.l.s4 1983009808
        %v11054 = vunpack.c.0.s8 %v11053
        %v11055 = vlaneseq
        %v11056 = vshrl.u32 %v11055, 7
        %v11057 = vsub.s32 %v11054, %v11056
        %v11058 = vrot.slane %v11050, %v11057
        %v11060 = vunpack.c.l.s4 1983009808
        %v11061 = vunpack.c.0.s8 %v11060
        %v11062 = vlaneseq
        %v11063 = vshrl.u32 %v11062, 7
        %v11064 = vsub.s32 %v11061, %v11063
        %v11065 = vrot.slane %v11051, %v11064
        %v11066 = vcombine.low %v10351, %v10375
        %v11067 = vcombine.high %v10351, %v10375
        %v11069 = vunpack.c.l.s4 1983009808
        %v11070 = vunpack.c.0.s8 %v11069
        %v11071 = vlaneseq
        %v11072 = vshrl.u32 %v11071, 7
        %v11073 = vsub.s32 %v11070, %v11072
        %v11074 = vrot.slane %v11066, %v11073
        %v11076 = vunpack.c.l.s4 1983009808
        %v11077 = vunpack.c.0.s8 %v11076
        %v11078 = vlaneseq
        %v11079 = vshrl.u32 %v11078, 7
        %v11080 = vsub.s32 %v11077, %v11079
        %v11081 = vrot.slane %v11067, %v11080
        %v11082 = vcombine.low %v10363, %v10387
        %v11083 = vcombine.high %v10363, %v10387
        %v11085 = vunpack.c.l.s4 1983009808
        %v11086 = vunpack.c.0.s8 %v11085
        %v11087 = vlaneseq
        %v11088 = vshrl.u32 %v11087, 7
        %v11089 = vsub.s32 %v11086, %v11088
        %v11090 = vrot.slane %v11082, %v11089
        %v11092 = vunpack.c.l.s4 1983009808
        %v11093 = vunpack.c.0.s8 %v11092
        %v11094 = vlaneseq
        %v11095 = vshrl.u32 %v11094, 7
        %v11096 = vsub.s32 %v11093, %v11095
        %v11097 = vrot.slane %v11083, %v11096
        %v11098 = vcombine.low %v11042, %v11058
        %v11099 = vcombine.high %v11042, %v11058
        %v11101 = vunpack.c.l.s4 1934713408
        %v11102 = vunpack.c.0.s8 %v11101
        %v11103 = vlaneseq
        %v11104 = vshrl.u32 %v11103, 7
        %v11105 = vsub.s32 %v11102, %v11104
        %v11106 = vrot.slane %v11098, %v11105
        %v11108 = vunpack.c.l.s4 1934713408
        %v11109 = vunpack.c.0.s8 %v11108
        %v11110 = vlaneseq
        %v11111 = vshrl.u32 %v11110, 7
        %v11112 = vsub.s32 %v11109, %v11111
        %v11113 = vrot.slane %v11099, %v11112
        %v11114 = vcombine.low %v11049, %v11065
        %v11115 = vcombine.high %v11049, %v11065
        %v11117 = vunpack.c.l.s4 1934713408
        %v11118 = vunpack.c.0.s8 %v11117
        %v11119 = vlaneseq
        %v11120 = vshrl.u32 %v11119, 7
        %v11121 = vsub.s32 %v11118, %v11120
        %v11122 = vrot.slane %v11114, %v11121
        %v11124 = vunpack.c.l.s4 1934713408
        %v11125 = vunpack.c.0.s8 %v11124
        %v11126 = vlaneseq
        %v11127 = vshrl.u32 %v11126, 7
        %v11128 = vsub.s32 %v11125, %v11127
        %v11129 = vrot.slane %v11115, %v11128
        %v11130 = vcombine.low %v11074, %v11090
        %v11131 = vcombine.high %v11074, %v11090
        %v11133 = vunpack.c.l.s4 1934713408
        %v11134 = vunpack.c.0.s8 %v11133
        %v11135 = vlaneseq
        %v11136 = vshrl.u32 %v11135, 7
        %v11137 = vsub.s32 %v11134, %v11136
        %v11138 = vrot.slane %v11130, %v11137
        %v11140 = vunpack.c.l.s4 1934713408
        %v11141 = vunpack.c.0.s8 %v11140
        %v11142 = vlaneseq
        %v11143 = vshrl.u32 %v11142, 7
        %v11144 = vsub.s32 %v11141, %v11143
        %v11145 = vrot.slane %v11131, %v11144
        %v11146 = vcombine.low %v11081, %v11097
        %v11147 = vcombine.high %v11081, %v11097
        %v11149 = vunpack.c.l.s4 1934713408
        %v11150 = vunpack.c.0.s8 %v11149
        %v11151 = vlaneseq
        %v11152 = vshrl.u32 %v11151, 7
        %v11153 = vsub.s32 %v11150, %v11152
        %v11154 = vrot.slane %v11146, %v11153
        %v11156 = vunpack.c.l.s4 1934713408
        %v11157 = vunpack.c.0.s8 %v11156
        %v11158 = vlaneseq
        %v11159 = vshrl.u32 %v11158, 7
        %v11160 = vsub.s32 %v11157, %v11159
        %v11161 = vrot.slane %v11147, %v11160
        %v11162 = vcombine.low %v11106, %v11138
        %v11163 = vcombine.high %v11106, %v11138
        %v11164 = vcombine.low %v11113, %v11145
        %v11165 = vcombine.high %v11113, %v11145
        %v11166 = vcombine.low %v11122, %v11154
        %v11167 = vcombine.high %v11122, %v11154
        %v11168 = vcombine.low %v11129, %v11161
        %v11169 = vcombine.high %v11129, %v11161
        %v11170 = vcombine.low %v10399, %v10423
        %v11171 = vcombine.high %v10399, %v10423
        %v11173 = vunpack.c.l.s4 1983009808
        %v11174 = vunpack.c.0.s8 %v11173
        %v11175 = vlaneseq
        %v11176 = vshrl.u32 %v11175, 7
        %v11177 = vsub.s32 %v11174, %v11176
        %v11178 = vrot.slane %v11170, %v11177
        %v11180 = vunpack.c.l.s4 1983009808
        %v11181 = vunpack.c.0.s8 %v11180
        %v11182 = vlaneseq
        %v11183 = vshrl.u32 %v11182, 7
        %v11184 = vsub.s32 %v11181, %v11183
        %v11185 = vrot.slane %v11171, %v11184
        %v11186 = vcombine.low %v10411, %v10435
        %v11187 = vcombine.high %v10411, %v10435
        %v11189 = vunpack.c.l.s4 1983009808
        %v11190 = vunpack.c.0.s8 %v11189
        %v11191 = vlaneseq
        %v11192 = vshrl.u32 %v11191, 7
        %v11193 = vsub.s32 %v11190, %v11192
        %v11194 = vrot.slane %v11186, %v11193
        %v11196 = vunpack.c.l.s4 1983009808
        %v11197 = vunpack.c.0.s8 %v11196
        %v11198 = vlaneseq
        %v11199 = vshrl.u32 %v11198, 7
        %v11200 = vsub.s32 %v11197, %v11199
        %v11201 = vrot.slane %v11187, %v11200
        %v11202 = vcombine.low %v10447, %v10471
        %v11203 = vcombine.high %v10447, %v10471
        %v11205 = vunpack.c.l.s4 1983009808
        %v11206 = vunpack.c.0.s8 %v11205
        %v11207 = vlaneseq
        %v11208 = vshrl.u32 %v11207, 7
        %v11209 = vsub.s32 %v11206, %v11208
        %v11210 = vrot.slane %v11202, %v11209
        %v11212 = vunpack.c.l.s4 1983009808
        %v11213 = vunpack.c.0.s8 %v11212
        %v11214 = vlaneseq
        %v11215 = vshrl.u32 %v11214, 7
        %v11216 = vsub.s32 %v11213, %v11215
        %v11217 = vrot.slane %v11203, %v11216
        %v11218 = vcombine.low %v10459, %v10483
        %v11219 = vcombine.high %v10459, %v10483
        %v11221 = vunpack.c.l.s4 1983009808
        %v11222 = vunpack.c.0.s8 %v11221
        %v11223 = vlaneseq
        %v11224 = vshrl.u32 %v11223, 7
        %v11225 = vsub.s32 %v11222, %v11224
        %v11226 = vrot.slane %v11218, %v11225
        %v11228 = vunpack.c.l.s4 1983009808
        %v11229 = vunpack.c.0.s8 %v11228
        %v11230 = vlaneseq
        %v11231 = vshrl.u32 %v11230, 7
        %v11232 = vsub.s32 %v11229, %v11231
        %v11233 = vrot.slane %v11219, %v11232
        %v11234 = vcombine.low %v11178, %v11194
        %v11235 = vcombine.high %v11178, %v11194
        %v11237 = vunpack.c.l.s4 1934713408
        %v11238 = vunpack.c.0.s8 %v11237
        %v11239 = vlaneseq
        %v11240 = vshrl.u32 %v11239, 7
        %v11241 = vsub.s32 %v11238, %v11240
        %v11242 = vrot.slane %v11234, %v11241
        %v11244 = vunpack.c.l.s4 1934713408
        %v11245 = vunpack.c.0.s8 %v11244
        %v11246 = vlaneseq
        %v11247 = vshrl.u32 %v11246, 7
        %v11248 = vsub.s32 %v11245, %v11247
        %v11249 = vrot.slane %v11235, %v11248
        %v11250 = vcombine.low %v11185, %v11201
        %v11251 = vcombine.high %v11185, %v11201
        %v11253 = vunpack.c.l.s4 1934713408
        %v11254 = vunpack.c.0.s8 %v11253
        %v11255 = vlaneseq
        %v11256 = vshrl.u32 %v11255, 7
        %v11257 = vsub.s32 %v11254, %v11256
        %v11258 = vrot.slane %v11250, %v11257
        %v11260 = vunpack.c.l.s4 1934713408
        %v11261 = vunpack.c.0.s8 %v11260
        %v11262 = vlaneseq
        %v11263 = vshrl.u32 %v11262, 7
        %v11264 = vsub.s32 %v11261, %v11263
        %v11265 = vrot.slane %v11251, %v11264
        %v11266 = vcombine.low %v11210, %v11226
        %v11267 = vcombine.high %v11210, %v11226
        %v11269 = vunpack.c.l.s4 1934713408
        %v11270 = vunpack.c.0.s8 %v11269
        %v11271 = vlaneseq
        %v11272 = vshrl.u32 %v11271, 7
        %v11273 = vsub.s32 %v11270, %v11272
        %v11274 = vrot.slane %v11266, %v11273
        %v11276 = vunpack.c.l.s4 1934713408
        %v11277 = vunpack.c.0.s8 %v11276
        %v11278 = vlaneseq
        %v11279 = vshrl.u32 %v11278, 7
        %v11280 = vsub.s32 %v11277, %v11279
        %v11281 = vrot.slane %v11267, %v11280
        %v11282 = vcombine.low %v11217, %v11233
        %v11283 = vcombine.high %v11217, %v11233
        %v11285 = vunpack.c.l.s4 1934713408
        %v11286 = vunpack.c.0.s8 %v11285
        %v11287 = vlaneseq
        %v11288 = vshrl.u32 %v11287, 7
        %v11289 = vsub.s32 %v11286, %v11288
        %v11290 = vrot.slane %v11282, %v11289
        %v11292 = vunpack.c.l.s4 1934713408
        %v11293 = vunpack.c.0.s8 %v11292
        %v11294 = vlaneseq
        %v11295 = vshrl.u32 %v11294, 7
        %v11296 = vsub.s32 %v11293, %v11295
        %v11297 = vrot.slane %v11283, %v11296
        %v11298 = vcombine.low %v11242, %v11274
        %v11299 = vcombine.high %v11242, %v11274
        %v11300 = vcombine.low %v11249, %v11281
        %v11301 = vcombine.high %v11249, %v11281
        %v11302 = vcombine.low %v11258, %v11290
        %v11303 = vcombine.high %v11258, %v11290
        %v11304 = vcombine.low %v11265, %v11297
        %v11305 = vcombine.high %v11265, %v11297
        %v11306 = vcombine.low %v10303, %v10329
        %v11307 = vcombine.high %v10303, %v10329
        %v11309 = vunpack.c.l.s4 1983009808
        %v11310 = vunpack.c.0.s8 %v11309
        %v11311 = vlaneseq
        %v11312 = vshrl.u32 %v11311, 7
        %v11313 = vsub.s32 %v11310, %v11312
        %v11314 = vrot.slane %v11306, %v11313
        %v11316 = vunpack.c.l.s4 1983009808
        %v11317 = vunpack.c.0.s8 %v11316
        %v11318 = vlaneseq
        %v11319 = vshrl.u32 %v11318, 7
        %v11320 = vsub.s32 %v11317, %v11319
        %v11321 = vrot.slane %v11307, %v11320
        %v11322 = vcombine.low %v10317, %v10341
        %v11323 = vcombine.high %v10317, %v10341
        %v11325 = vunpack.c.l.s4 1983009808
        %v11326 = vunpack.c.0.s8 %v11325
        %v11327 = vlaneseq
        %v11328 = vshrl.u32 %v11327, 7
        %v11329 = vsub.s32 %v11326, %v11328
        %v11330 = vrot.slane %v11322, %v11329
        %v11332 = vunpack.c.l.s4 1983009808
        %v11333 = vunpack.c.0.s8 %v11332
        %v11334 = vlaneseq
        %v11335 = vshrl.u32 %v11334, 7
        %v11336 = vsub.s32 %v11333, %v11335
        %v11337 = vrot.slane %v11323, %v11336
        %v11338 = vcombine.low %v10353, %v10377
        %v11339 = vcombine.high %v10353, %v10377
        %v11341 = vunpack.c.l.s4 1983009808
        %v11342 = vunpack.c.0.s8 %v11341
        %v11343 = vlaneseq
        %v11344 = vshrl.u32 %v11343, 7
        %v11345 = vsub.s32 %v11342, %v11344
        %v11346 = vrot.slane %v11338, %v11345
        %v11348 = vunpack.c.l.s4 1983009808
        %v11349 = vunpack.c.0.s8 %v11348
        %v11350 = vlaneseq
        %v11351 = vshrl.u32 %v11350, 7
        %v11352 = vsub.s32 %v11349, %v11351
        %v11353 = vrot.slane %v11339, %v11352
        %v11354 = vcombine.low %v10365, %v10389
        %v11355 = vcombine.high %v10365, %v10389
        %v11357 = vunpack.c.l.s4 1983009808
        %v11358 = vunpack.c.0.s8 %v11357
        %v11359 = vlaneseq
        %v11360 = vshrl.u32 %v11359, 7
        %v11361 = vsub.s32 %v11358, %v11360
        %v11362 = vrot.slane %v11354, %v11361
        %v11364 = vunpack.c.l.s4 1983009808
        %v11365 = vunpack.c.0.s8 %v11364
        %v11366 = vlaneseq
        %v11367 = vshrl.u32 %v11366, 7
        %v11368 = vsub.s32 %v11365, %v11367
        %v11369 = vrot.slane %v11355, %v11368
        %v11370 = vcombine.low %v11314, %v11330
        %v11371 = vcombine.high %v11314, %v11330
        %v11373 = vunpack.c.l.s4 1934713408
        %v11374 = vunpack.c.0.s8 %v11373
        %v11375 = vlaneseq
        %v11376 = vshrl.u32 %v11375, 7
        %v11377 = vsub.s32 %v11374, %v11376
        %v11378 = vrot.slane %v11370, %v11377
        %v11380 = vunpack.c.l.s4 1934713408
        %v11381 = vunpack.c.0.s8 %v11380
        %v11382 = vlaneseq
        %v11383 = vshrl.u32 %v11382, 7
        %v11384 = vsub.s32 %v11381, %v11383
        %v11385 = vrot.slane %v11371, %v11384
        %v11386 = vcombine.low %v11321, %v11337
        %v11387 = vcombine.high %v11321, %v11337
        %v11389 = vunpack.c.l.s4 1934713408
        %v11390 = vunpack.c.0.s8 %v11389
        %v11391 = vlaneseq
        %v11392 = vshrl.u32 %v11391, 7
        %v11393 = vsub.s32 %v11390, %v11392
        %v11394 = vrot.slane %v11386, %v11393
        %v11396 = vunpack.c.l.s4 1934713408
        %v11397 = vunpack.c.0.s8 %v11396
        %v11398 = vlaneseq
        %v11399 = vshrl.u32 %v11398, 7
        %v11400 = vsub.s32 %v11397, %v11399
        %v11401 = vrot.slane %v11387, %v11400
        %v11402 = vcombine.low %v11346, %v11362
        %v11403 = vcombine.high %v11346, %v11362
        %v11405 = vunpack.c.l.s4 1934713408
        %v11406 = vunpack.c.0.s8 %v11405
        %v11407 = vlaneseq
        %v11408 = vshrl.u32 %v11407, 7
        %v11409 = vsub.s32 %v11406, %v11408
        %v11410 = vrot.slane %v11402, %v11409
        %v11412 = vunpack.c.l.s4 1934713408
        %v11413 = vunpack.c.0.s8 %v11412
        %v11414 = vlaneseq
        %v11415 = vshrl.u32 %v11414, 7
        %v11416 = vsub.s32 %v11413, %v11415
        %v11417 = vrot.slane %v11403, %v11416
        %v11418 = vcombine.low %v11353, %v11369
        %v11419 = vcombine.high %v11353, %v11369
        %v11421 = vunpack.c.l.s4 1934713408
        %v11422 = vunpack.c.0.s8 %v11421
        %v11423 = vlaneseq
        %v11424 = vshrl.u32 %v11423, 7
        %v11425 = vsub.s32 %v11422, %v11424
        %v11426 = vrot.slane %v11418, %v11425
        %v11428 = vunpack.c.l.s4 1934713408
        %v11429 = vunpack.c.0.s8 %v11428
        %v11430 = vlaneseq
        %v11431 = vshrl.u32 %v11430, 7
        %v11432 = vsub.s32 %v11429, %v11431
        %v11433 = vrot.slane %v11419, %v11432
        %v11434 = vcombine.low %v11378, %v11410
        %v11435 = vcombine.high %v11378, %v11410
        %v11436 = vcombine.low %v11385, %v11417
        %v11437 = vcombine.high %v11385, %v11417
        %v11438 = vcombine.low %v11394, %v11426
        %v11439 = vcombine.high %v11394, %v11426
        %v11440 = vcombine.low %v11401, %v11433
        %v11441 = vcombine.high %v11401, %v11433
        %v11442 = vcombine.low %v10401, %v10425
        %v11443 = vcombine.high %v10401, %v10425
        %v11445 = vunpack.c.l.s4 1983009808
        %v11446 = vunpack.c.0.s8 %v11445
        %v11447 = vlaneseq
        %v11448 = vshrl.u32 %v11447, 7
        %v11449 = vsub.s32 %v11446, %v11448
        %v11450 = vrot.slane %v11442, %v11449
        %v11452 = vunpack.c.l.s4 1983009808
        %v11453 = vunpack.c.0.s8 %v11452
        %v11454 = vlaneseq
        %v11455 = vshrl.u32 %v11454, 7
        %v11456 = vsub.s32 %v11453, %v11455
        %v11457 = vrot.slane %v11443, %v11456
        %v11458 = vcombine.low %v10413, %v10437
        %v11459 = vcombine.high %v10413, %v10437
        %v11461 = vunpack.c.l.s4 1983009808
        %v11462 = vunpack.c.0.s8 %v11461
        %v11463 = vlaneseq
        %v11464 = vshrl.u32 %v11463, 7
        %v11465 = vsub.s32 %v11462, %v11464
        %v11466 = vrot.slane %v11458, %v11465
        %v11468 = vunpack.c.l.s4 1983009808
        %v11469 = vunpack.c.0.s8 %v11468
        %v11470 = vlaneseq
        %v11471 = vshrl.u32 %v11470, 7
        %v11472 = vsub.s32 %v11469, %v11471
        %v11473 = vrot.slane %v11459, %v11472
        %v11474 = vcombine.low %v10449, %v10473
        %v11475 = vcombine.high %v10449, %v10473
        %v11477 = vunpack.c.l.s4 1983009808
        %v11478 = vunpack.c.0.s8 %v11477
        %v11479 = vlaneseq
        %v11480 = vshrl.u32 %v11479, 7
        %v11481 = vsub.s32 %v11478, %v11480
        %v11482 = vrot.slane %v11474, %v11481
        %v11484 = vunpack.c.l.s4 1983009808
        %v11485 = vunpack.c.0.s8 %v11484
        %v11486 = vlaneseq
        %v11487 = vshrl.u32 %v11486, 7
        %v11488 = vsub.s32 %v11485, %v11487
        %v11489 = vrot.slane %v11475, %v11488
        %v11490 = vcombine.low %v10461, %v10485
        %v11491 = vcombine.high %v10461, %v10485
        %v11493 = vunpack.c.l.s4 1983009808
        %v11494 = vunpack.c.0.s8 %v11493
        %v11495 = vlaneseq
        %v11496 = vshrl.u32 %v11495, 7
        %v11497 = vsub.s32 %v11494, %v11496
        %v11498 = vrot.slane %v11490, %v11497
        %v11500 = vunpack.c.l.s4 1983009808
        %v11501 = vunpack.c.0.s8 %v11500
        %v11502 = vlaneseq
        %v11503 = vshrl.u32 %v11502, 7
        %v11504 = vsub.s32 %v11501, %v11503
        %v11505 = vrot.slane %v11491, %v11504
        %v11506 = vcombine.low %v11450, %v11466
        %v11507 = vcombine.high %v11450, %v11466
        %v11509 = vunpack.c.l.s4 1934713408
        %v11510 = vunpack.c.0.s8 %v11509
        %v11511 = vlaneseq
        %v11512 = vshrl.u32 %v11511, 7
        %v11513 = vsub.s32 %v11510, %v11512
        %v11514 = vrot.slane %v11506, %v11513
        %v11516 = vunpack.c.l.s4 1934713408
        %v11517 = vunpack.c.0.s8 %v11516
        %v11518 = vlaneseq
        %v11519 = vshrl.u32 %v11518, 7
        %v11520 = vsub.s32 %v11517, %v11519
        %v11521 = vrot.slane %v11507, %v11520
        %v11522 = vcombine.low %v11457, %v11473
        %v11523 = vcombine.high %v11457, %v11473
        %v11525 = vunpack.c.l.s4 1934713408
        %v11526 = vunpack.c.0.s8 %v11525
        %v11527 = vlaneseq
        %v11528 = vshrl.u32 %v11527, 7
        %v11529 = vsub.s32 %v11526, %v11528
        %v11530 = vrot.slane %v11522, %v11529
        %v11532 = vunpack.c.l.s4 1934713408
        %v11533 = vunpack.c.0.s8 %v11532
        %v11534 = vlaneseq
        %v11535 = vshrl.u32 %v11534, 7
        %v11536 = vsub.s32 %v11533, %v11535
        %v11537 = vrot.slane %v11523, %v11536
        %v11538 = vcombine.low %v11482, %v11498
        %v11539 = vcombine.high %v11482, %v11498
        %v11541 = vunpack.c.l.s4 1934713408
        %v11542 = vunpack.c.0.s8 %v11541
        %v11543 = vlaneseq
        %v11544 = vshrl.u32 %v11543, 7
        %v11545 = vsub.s32 %v11542, %v11544
        %v11546 = vrot.slane %v11538, %v11545
        %v11548 = vunpack.c.l.s4 1934713408
        %v11549 = vunpack.c.0.s8 %v11548
        %v11550 = vlaneseq
        %v11551 = vshrl.u32 %v11550, 7
        %v11552 = vsub.s32 %v11549, %v11551
        %v11553 = vrot.slane %v11539, %v11552
        %v11554 = vcombine.low %v11489, %v11505
        %v11555 = vcombine.high %v11489, %v11505
        %v11557 = vunpack.c.l.s4 1934713408
        %v11558 = vunpack.c.0.s8 %v11557
        %v11559 = vlaneseq
        %v11560 = vshrl.u32 %v11559, 7
        %v11561 = vsub.s32 %v11558, %v11560
        %v11562 = vrot.slane %v11554, %v11561
        %v11564 = vunpack.c.l.s4 1934713408
        %v11565 = vunpack.c.0.s8 %v11564
        %v11566 = vlaneseq
        %v11567 = vshrl.u32 %v11566, 7
        %v11568 = vsub.s32 %v11565, %v11567
        %v11569 = vrot.slane %v11555, %v11568
        %v11570 = vcombine.low %v11514, %v11546
        %v11571 = vcombine.high %v11514, %v11546
        %v11572 = vcombine.low %v11521, %v11553
        %v11573 = vcombine.high %v11521, %v11553
        %v11574 = vcombine.low %v11530, %v11562
        %v11575 = vcombine.high %v11530, %v11562
        %v11576 = vcombine.low %v11537, %v11569
        %v11577 = vcombine.high %v11537, %v11569
        %v11578 = vxor.u32 %v11162, 2147483648
        %v11579 = vxor.u32 %v11298, 2147483648
        %v11580 = vxor.u32 %v11163, 2147483648
        %v11581 = vxor.u32 %v11299, 2147483648
        %v11582 = vxor.u32 %v11164, 2147483648
        %v11583 = vxor.u32 %v11300, 2147483648
        %v11584 = vxor.u32 %v11165, 2147483648
        %v11585 = vxor.u32 %v11301, 2147483648
        %v11586 = vxor.u32 %v11166, 2147483648
        %v11587 = vxor.u32 %v11302, 2147483648
        %v11588 = vxor.u32 %v11167, 2147483648
        %v11589 = vxor.u32 %v11303, 2147483648
        %v11590 = vxor.u32 %v11168, 2147483648
        %v11591 = vxor.u32 %v11304, 2147483648
        %v11592 = vxor.u32 %v11169, 2147483648
        %v11593 = vxor.u32 %v11305, 2147483648
        %v11594 = vxor.u32 %v11434, 2147483648
        %v11595 = vxor.u32 %v11570, 2147483648
        %v11596 = vxor.u32 %v11435, 2147483648
        %v11597 = vxor.u32 %v11571, 2147483648
        %v11598 = vxor.u32 %v11436, 2147483648
        %v11599 = vxor.u32 %v11572, 2147483648
        %v11600 = vxor.u32 %v11437, 2147483648
        %v11601 = vxor.u32 %v11573, 2147483648
        %v11602 = vxor.u32 %v11438, 2147483648
        %v11603 = vxor.u32 %v11574, 2147483648
        %v11604 = vxor.u32 %v11439, 2147483648
        %v11605 = vxor.u32 %v11575, 2147483648
        %v11606 = vxor.u32 %v11440, 2147483648
        %v11607 = vxor.u32 %v11576, 2147483648
        %v11608 = vxor.u32 %v11441, 2147483648
        %v11609 = vxor.u32 %v11577, 2147483648
        %v11610 = vmul.f32 %v11578, 1.442695
        %v11611 = vpow.pop %v11610
        %v11612 = vmul.f32 %v11579, 1.442695
        %v11613 = vpow.pop %v11612
        %v11614 = vmul.f32 %v11580, 1.442695
        %v11615 = vpow.pop %v11614
        %v11616 = vmul.f32 %v11581, 1.442695
        %v11617 = vpow.pop %v11616
        %v11618 = vmul.f32 %v11582, 1.442695
        %v11619 = vpow.pop %v11618
        %v11620 = vmul.f32 %v11583, 1.442695
        %v11621 = vpow.pop %v11620
        %v11622 = vmul.f32 %v11584, 1.442695
        %v11623 = vpow.pop %v11622
        %v11624 = vmul.f32 %v11585, 1.442695
        %v11625 = vpow.pop %v11624
        %v11626 = vmul.f32 %v11586, 1.442695
        %v11627 = vpow.pop %v11626
        %v11628 = vmul.f32 %v11587, 1.442695
        %v11629 = vpow.pop %v11628
        %v11630 = vmul.f32 %v11588, 1.442695
        %v11631 = vpow.pop %v11630
        %v11632 = vmul.f32 %v11589, 1.442695
        %v11633 = vpow.pop %v11632
        %v11634 = vmul.f32 %v11590, 1.442695
        %v11635 = vpow.pop %v11634
        %v11636 = vmul.f32 %v11591, 1.442695
        %v11637 = vpow.pop %v11636
        %v11638 = vmul.f32 %v11592, 1.442695
        %v11639 = vpow.pop %v11638
        %v11640 = vmul.f32 %v11593, 1.442695
        %v11641 = vpow.pop %v11640
        %v11642 = vmul.f32 %v11594, 1.442695
        %v11643 = vpow.pop %v11642
        %v11644 = vmul.f32 %v11595, 1.442695
        %v11645 = vpow.pop %v11644
        %v11646 = vmul.f32 %v11596, 1.442695
        %v11647 = vpow.pop %v11646
        %v11648 = vmul.f32 %v11597, 1.442695
        %v11649 = vpow.pop %v11648
        %v11650 = vmul.f32 %v11598, 1.442695
        %v11651 = vpow.pop %v11650
        %v11652 = vmul.f32 %v11599, 1.442695
        %v11653 = vpow.pop %v11652
        %v11654 = vmul.f32 %v11600, 1.442695
        %v11655 = vpow.pop %v11654
        %v11656 = vmul.f32 %v11601, 1.442695
        %v11657 = vpow.pop %v11656
        %v11658 = vmul.f32 %v11602, 1.442695
        %v11659 = vpow.pop %v11658
        %v11660 = vmul.f32 %v11603, 1.442695
        %v11661 = vpow.pop %v11660
        %v11662 = vmul.f32 %v11604, 1.442695
        %v11663 = vpow.pop %v11662
        %v11664 = vmul.f32 %v11605, 1.442695
        %v11665 = vpow.pop %v11664
        %v11666 = vmul.f32 %v11606, 1.442695
        %v11667 = vpow.pop %v11666
        %v11668 = vmul.f32 %v11607, 1.442695
        %v11669 = vpow.pop %v11668
        %v11670 = vmul.f32 %v11608, 1.442695
        %v11671 = vpow.pop %v11670
        %v11672 = vmul.f32 %v11609, 1.442695
        %v11673 = vpow.pop %v11672
        %v11674 = vadd.f32 %v11611, 1.0
        %v11675 = vadd.f32 %v11613, 1.0
        %v11676 = vadd.f32 %v11615, 1.0
        %v11677 = vadd.f32 %v11617, 1.0
        %v11678 = vadd.f32 %v11619, 1.0
        %v11679 = vadd.f32 %v11621, 1.0
        %v11680 = vadd.f32 %v11623, 1.0
        %v11681 = vadd.f32 %v11625, 1.0
        %v11682 = vadd.f32 %v11627, 1.0
        %v11683 = vadd.f32 %v11629, 1.0
        %v11684 = vadd.f32 %v11631, 1.0
        %v11685 = vadd.f32 %v11633, 1.0
        %v11686 = vadd.f32 %v11635, 1.0
        %v11687 = vadd.f32 %v11637, 1.0
        %v11688 = vadd.f32 %v11639, 1.0
        %v11689 = vadd.f32 %v11641, 1.0
        %v11690 = vadd.f32 %v11643, 1.0
        %v11691 = vadd.f32 %v11645, 1.0
        %v11692 = vadd.f32 %v11647, 1.0
        %v11693 = vadd.f32 %v11649, 1.0
        %v11694 = vadd.f32 %v11651, 1.0
        %v11695 = vadd.f32 %v11653, 1.0
        %v11696 = vadd.f32 %v11655, 1.0
        %v11697 = vadd.f32 %v11657, 1.0
        %v11698 = vadd.f32 %v11659, 1.0
        %v11699 = vadd.f32 %v11661, 1.0
        %v11700 = vadd.f32 %v11663, 1.0
        %v11701 = vadd.f32 %v11665, 1.0
        %v11702 = vadd.f32 %v11667, 1.0
        %v11703 = vadd.f32 %v11669, 1.0
        %v11704 = vadd.f32 %v11671, 1.0
        %v11705 = vadd.f32 %v11673, 1.0
        %v11706 = vrcp.pop %v11674
        %v11707 = vmul.f32 1.0, %v11706
        %v11708 = vrcp.pop %v11675
        %v11709 = vmul.f32 1.0, %v11708
        %v11710 = vrcp.pop %v11676
        %v11711 = vmul.f32 1.0, %v11710
        %v11712 = vrcp.pop %v11677
        %v11713 = vmul.f32 1.0, %v11712
        %v11714 = vrcp.pop %v11678
        %v11715 = vmul.f32 1.0, %v11714
        %v11716 = vrcp.pop %v11679
        %v11717 = vmul.f32 1.0, %v11716
        %v11718 = vrcp.pop %v11680
        %v11719 = vmul.f32 1.0, %v11718
        %v11720 = vrcp.pop %v11681
        %v11721 = vmul.f32 1.0, %v11720
        %v11722 = vrcp.pop %v11682
        %v11723 = vmul.f32 1.0, %v11722
        %v11724 = vrcp.pop %v11683
        %v11725 = vmul.f32 1.0, %v11724
        %v11726 = vrcp.pop %v11684
        %v11727 = vmul.f32 1.0, %v11726
        %v11728 = vrcp.pop %v11685
        %v11729 = vmul.f32 1.0, %v11728
        %v11730 = vrcp.pop %v11686
        %v11731 = vmul.f32 1.0, %v11730
        %v11732 = vrcp.pop %v11687
        %v11733 = vmul.f32 1.0, %v11732
        %v11734 = vrcp.pop %v11688
        %v11735 = vmul.f32 1.0, %v11734
        %v11736 = vrcp.pop %v11689
        %v11737 = vmul.f32 1.0, %v11736
        %v11738 = vrcp.pop %v11690
        %v11739 = vmul.f32 1.0, %v11738
        %v11740 = vrcp.pop %v11691
        %v11741 = vmul.f32 1.0, %v11740
        %v11742 = vrcp.pop %v11692
        %v11743 = vmul.f32 1.0, %v11742
        %v11744 = vrcp.pop %v11693
        %v11745 = vmul.f32 1.0, %v11744
        %v11746 = vrcp.pop %v11694
        %v11747 = vmul.f32 1.0, %v11746
        %v11748 = vrcp.pop %v11695
        %v11749 = vmul.f32 1.0, %v11748
        %v11750 = vrcp.pop %v11696
        %v11751 = vmul.f32 1.0, %v11750
        %v11752 = vrcp.pop %v11697
        %v11753 = vmul.f32 1.0, %v11752
        %v11754 = vrcp.pop %v11698
        %v11755 = vmul.f32 1.0, %v11754
        %v11756 = vrcp.pop %v11699
        %v11757 = vmul.f32 1.0, %v11756
        %v11758 = vrcp.pop %v11700
        %v11759 = vmul.f32 1.0, %v11758
        %v11760 = vrcp.pop %v11701
        %v11761 = vmul.f32 1.0, %v11760
        %v11762 = vrcp.pop %v11702
        %v11763 = vmul.f32 1.0, %v11762
        %v11764 = vrcp.pop %v11703
        %v11765 = vmul.f32 1.0, %v11764
        %v11766 = vrcp.pop %v11704
        %v11767 = vmul.f32 1.0, %v11766
        %v11768 = vrcp.pop %v11705
        %v11769 = vmul.f32 1.0, %v11768
        %v11770 = vmul.f32 %v10618, %v11707
        %v11771 = vmul.f32 %v10754, %v11709
        %v11772 = vmul.f32 %v10619, %v11711
        %v11773 = vmul.f32 %v10755, %v11713
        %v11774 = vmul.f32 %v10620, %v11715
        %v11775 = vmul.f32 %v10756, %v11717
        %v11776 = vmul.f32 %v10621, %v11719
        %v11777 = vmul.f32 %v10757, %v11721
        %v11778 = vmul.f32 %v10622, %v11723
        %v11779 = vmul.f32 %v10758, %v11725
        %v11780 = vmul.f32 %v10623, %v11727
        %v11781 = vmul.f32 %v10759, %v11729
        %v11782 = vmul.f32 %v10624, %v11731
        %v11783 = vmul.f32 %v10760, %v11733
        %v11784 = vmul.f32 %v10625, %v11735
        %v11785 = vmul.f32 %v10761, %v11737
        %v11786 = vmul.f32 %v10890, %v11739
        %v11787 = vmul.f32 %v11026, %v11741
        %v11788 = vmul.f32 %v10891, %v11743
        %v11789 = vmul.f32 %v11027, %v11745
        %v11790 = vmul.f32 %v10892, %v11747
        %v11791 = vmul.f32 %v11028, %v11749
        %v11792 = vmul.f32 %v10893, %v11751
        %v11793 = vmul.f32 %v11029, %v11753
        %v11794 = vmul.f32 %v10894, %v11755
        %v11795 = vmul.f32 %v11030, %v11757
        %v11796 = vmul.f32 %v10895, %v11759
        %v11797 = vmul.f32 %v11031, %v11761
        %v11798 = vmul.f32 %v10896, %v11763
        %v11799 = vmul.f32 %v11032, %v11765
        %v11800 = vmul.f32 %v10897, %v11767
        %v11801 = vmul.f32 %v11033, %v11769
        %v11802 = vcombine.low %v11770, %v11774
        %v11803 = vcombine.high %v11770, %v11774
        %v11805 = vunpack.c.l.s4 1983009808
        %v11806 = vunpack.c.0.s8 %v11805
        %v11807 = vlaneseq
        %v11808 = vshrl.u32 %v11807, 7
        %v11809 = vsub.s32 %v11806, %v11808
        %v11810 = vrot.slane %v11802, %v11809
        %v11812 = vunpack.c.l.s4 1983009808
        %v11813 = vunpack.c.0.s8 %v11812
        %v11814 = vlaneseq
        %v11815 = vshrl.u32 %v11814, 7
        %v11816 = vsub.s32 %v11813, %v11815
        %v11817 = vrot.slane %v11803, %v11816
        %v11818 = vcombine.low %v11772, %v11776
        %v11819 = vcombine.high %v11772, %v11776
        %v11821 = vunpack.c.l.s4 1983009808
        %v11822 = vunpack.c.0.s8 %v11821
        %v11823 = vlaneseq
        %v11824 = vshrl.u32 %v11823, 7
        %v11825 = vsub.s32 %v11822, %v11824
        %v11826 = vrot.slane %v11818, %v11825
        %v11828 = vunpack.c.l.s4 1983009808
        %v11829 = vunpack.c.0.s8 %v11828
        %v11830 = vlaneseq
        %v11831 = vshrl.u32 %v11830, 7
        %v11832 = vsub.s32 %v11829, %v11831
        %v11833 = vrot.slane %v11819, %v11832
        %v11834 = vcombine.low %v11778, %v11782
        %v11835 = vcombine.high %v11778, %v11782
        %v11837 = vunpack.c.l.s4 1983009808
        %v11838 = vunpack.c.0.s8 %v11837
        %v11839 = vlaneseq
        %v11840 = vshrl.u32 %v11839, 7
        %v11841 = vsub.s32 %v11838, %v11840
        %v11842 = vrot.slane %v11834, %v11841
        %v11844 = vunpack.c.l.s4 1983009808
        %v11845 = vunpack.c.0.s8 %v11844
        %v11846 = vlaneseq
        %v11847 = vshrl.u32 %v11846, 7
        %v11848 = vsub.s32 %v11845, %v11847
        %v11849 = vrot.slane %v11835, %v11848
        %v11850 = vcombine.low %v11780, %v11784
        %v11851 = vcombine.high %v11780, %v11784
        %v11853 = vunpack.c.l.s4 1983009808
        %v11854 = vunpack.c.0.s8 %v11853
        %v11855 = vlaneseq
        %v11856 = vshrl.u32 %v11855, 7
        %v11857 = vsub.s32 %v11854, %v11856
        %v11858 = vrot.slane %v11850, %v11857
        %v11860 = vunpack.c.l.s4 1983009808
        %v11861 = vunpack.c.0.s8 %v11860
        %v11862 = vlaneseq
        %v11863 = vshrl.u32 %v11862, 7
        %v11864 = vsub.s32 %v11861, %v11863
        %v11865 = vrot.slane %v11851, %v11864
        %v11866 = vcombine.low %v11810, %v11826
        %v11867 = vcombine.high %v11810, %v11826
        %v11869 = vunpack.c.l.s4 1934713408
        %v11870 = vunpack.c.0.s8 %v11869
        %v11871 = vlaneseq
        %v11872 = vshrl.u32 %v11871, 7
        %v11873 = vsub.s32 %v11870, %v11872
        %v11874 = vrot.slane %v11866, %v11873
        %v11876 = vunpack.c.l.s4 1934713408
        %v11877 = vunpack.c.0.s8 %v11876
        %v11878 = vlaneseq
        %v11879 = vshrl.u32 %v11878, 7
        %v11880 = vsub.s32 %v11877, %v11879
        %v11881 = vrot.slane %v11867, %v11880
        %v11882 = vcombine.low %v11817, %v11833
        %v11883 = vcombine.high %v11817, %v11833
        %v11885 = vunpack.c.l.s4 1934713408
        %v11886 = vunpack.c.0.s8 %v11885
        %v11887 = vlaneseq
        %v11888 = vshrl.u32 %v11887, 7
        %v11889 = vsub.s32 %v11886, %v11888
        %v11890 = vrot.slane %v11882, %v11889
        %v11892 = vunpack.c.l.s4 1934713408
        %v11893 = vunpack.c.0.s8 %v11892
        %v11894 = vlaneseq
        %v11895 = vshrl.u32 %v11894, 7
        %v11896 = vsub.s32 %v11893, %v11895
        %v11897 = vrot.slane %v11883, %v11896
        %v11898 = vcombine.low %v11842, %v11858
        %v11899 = vcombine.high %v11842, %v11858
        %v11901 = vunpack.c.l.s4 1934713408
        %v11902 = vunpack.c.0.s8 %v11901
        %v11903 = vlaneseq
        %v11904 = vshrl.u32 %v11903, 7
        %v11905 = vsub.s32 %v11902, %v11904
        %v11906 = vrot.slane %v11898, %v11905
        %v11908 = vunpack.c.l.s4 1934713408
        %v11909 = vunpack.c.0.s8 %v11908
        %v11910 = vlaneseq
        %v11911 = vshrl.u32 %v11910, 7
        %v11912 = vsub.s32 %v11909, %v11911
        %v11913 = vrot.slane %v11899, %v11912
        %v11914 = vcombine.low %v11849, %v11865
        %v11915 = vcombine.high %v11849, %v11865
        %v11917 = vunpack.c.l.s4 1934713408
        %v11918 = vunpack.c.0.s8 %v11917
        %v11919 = vlaneseq
        %v11920 = vshrl.u32 %v11919, 7
        %v11921 = vsub.s32 %v11918, %v11920
        %v11922 = vrot.slane %v11914, %v11921
        %v11924 = vunpack.c.l.s4 1934713408
        %v11925 = vunpack.c.0.s8 %v11924
        %v11926 = vlaneseq
        %v11927 = vshrl.u32 %v11926, 7
        %v11928 = vsub.s32 %v11925, %v11927
        %v11929 = vrot.slane %v11915, %v11928
        %v11930 = vcombine.low %v11874, %v11906
        %v11931 = vcombine.high %v11874, %v11906
        %v11932 = vcombine.low %v11881, %v11913
        %v11933 = vcombine.high %v11881, %v11913
        %v11934 = vcombine.low %v11890, %v11922
        %v11935 = vcombine.high %v11890, %v11922
        %v11936 = vcombine.low %v11897, %v11929
        %v11937 = vcombine.high %v11897, %v11929
        %v11938 = vcombine.low %v11786, %v11790
        %v11939 = vcombine.high %v11786, %v11790
        %v11941 = vunpack.c.l.s4 1983009808
        %v11942 = vunpack.c.0.s8 %v11941
        %v11943 = vlaneseq
        %v11944 = vshrl.u32 %v11943, 7
        %v11945 = vsub.s32 %v11942, %v11944
        %v11946 = vrot.slane %v11938, %v11945
        %v11948 = vunpack.c.l.s4 1983009808
        %v11949 = vunpack.c.0.s8 %v11948
        %v11950 = vlaneseq
        %v11951 = vshrl.u32 %v11950, 7
        %v11952 = vsub.s32 %v11949, %v11951
        %v11953 = vrot.slane %v11939, %v11952
        %v11954 = vcombine.low %v11788, %v11792
        %v11955 = vcombine.high %v11788, %v11792
        %v11957 = vunpack.c.l.s4 1983009808
        %v11958 = vunpack.c.0.s8 %v11957
        %v11959 = vlaneseq
        %v11960 = vshrl.u32 %v11959, 7
        %v11961 = vsub.s32 %v11958, %v11960
        %v11962 = vrot.slane %v11954, %v11961
        %v11964 = vunpack.c.l.s4 1983009808
        %v11965 = vunpack.c.0.s8 %v11964
        %v11966 = vlaneseq
        %v11967 = vshrl.u32 %v11966, 7
        %v11968 = vsub.s32 %v11965, %v11967
        %v11969 = vrot.slane %v11955, %v11968
        %v11970 = vcombine.low %v11794, %v11798
        %v11971 = vcombine.high %v11794, %v11798
        %v11973 = vunpack.c.l.s4 1983009808
        %v11974 = vunpack.c.0.s8 %v11973
        %v11975 = vlaneseq
        %v11976 = vshrl.u32 %v11975, 7
        %v11977 = vsub.s32 %v11974, %v11976
        %v11978 = vrot.slane %v11970, %v11977
        %v11980 = vunpack.c.l.s4 1983009808
        %v11981 = vunpack.c.0.s8 %v11980
        %v11982 = vlaneseq
        %v11983 = vshrl.u32 %v11982, 7
        %v11984 = vsub.s32 %v11981, %v11983
        %v11985 = vrot.slane %v11971, %v11984
        %v11986 = vcombine.low %v11796, %v11800
        %v11987 = vcombine.high %v11796, %v11800
        %v11989 = vunpack.c.l.s4 1983009808
        %v11990 = vunpack.c.0.s8 %v11989
        %v11991 = vlaneseq
        %v11992 = vshrl.u32 %v11991, 7
        %v11993 = vsub.s32 %v11990, %v11992
        %v11994 = vrot.slane %v11986, %v11993
        %v11996 = vunpack.c.l.s4 1983009808
        %v11997 = vunpack.c.0.s8 %v11996
        %v11998 = vlaneseq
        %v11999 = vshrl.u32 %v11998, 7
        %v12000 = vsub.s32 %v11997, %v11999
        %v12001 = vrot.slane %v11987, %v12000
        %v12002 = vcombine.low %v11946, %v11962
        %v12003 = vcombine.high %v11946, %v11962
        %v12005 = vunpack.c.l.s4 1934713408
        %v12006 = vunpack.c.0.s8 %v12005
        %v12007 = vlaneseq
        %v12008 = vshrl.u32 %v12007, 7
        %v12009 = vsub.s32 %v12006, %v12008
        %v12010 = vrot.slane %v12002, %v12009
        %v12012 = vunpack.c.l.s4 1934713408
        %v12013 = vunpack.c.0.s8 %v12012
        %v12014 = vlaneseq
        %v12015 = vshrl.u32 %v12014, 7
        %v12016 = vsub.s32 %v12013, %v12015
        %v12017 = vrot.slane %v12003, %v12016
        %v12018 = vcombine.low %v11953, %v11969
        %v12019 = vcombine.high %v11953, %v11969
        %v12021 = vunpack.c.l.s4 1934713408
        %v12022 = vunpack.c.0.s8 %v12021
        %v12023 = vlaneseq
        %v12024 = vshrl.u32 %v12023, 7
        %v12025 = vsub.s32 %v12022, %v12024
        %v12026 = vrot.slane %v12018, %v12025
        %v12028 = vunpack.c.l.s4 1934713408
        %v12029 = vunpack.c.0.s8 %v12028
        %v12030 = vlaneseq
        %v12031 = vshrl.u32 %v12030, 7
        %v12032 = vsub.s32 %v12029, %v12031
        %v12033 = vrot.slane %v12019, %v12032
        %v12034 = vcombine.low %v11978, %v11994
        %v12035 = vcombine.high %v11978, %v11994
        %v12037 = vunpack.c.l.s4 1934713408
        %v12038 = vunpack.c.0.s8 %v12037
        %v12039 = vlaneseq
        %v12040 = vshrl.u32 %v12039, 7
        %v12041 = vsub.s32 %v12038, %v12040
        %v12042 = vrot.slane %v12034, %v12041
        %v12044 = vunpack.c.l.s4 1934713408
        %v12045 = vunpack.c.0.s8 %v12044
        %v12046 = vlaneseq
        %v12047 = vshrl.u32 %v12046, 7
        %v12048 = vsub.s32 %v12045, %v12047
        %v12049 = vrot.slane %v12035, %v12048
        %v12050 = vcombine.low %v11985, %v12001
        %v12051 = vcombine.high %v11985, %v12001
        %v12053 = vunpack.c.l.s4 1934713408
        %v12054 = vunpack.c.0.s8 %v12053
        %v12055 = vlaneseq
        %v12056 = vshrl.u32 %v12055, 7
        %v12057 = vsub.s32 %v12054, %v12056
        %v12058 = vrot.slane %v12050, %v12057
        %v12060 = vunpack.c.l.s4 1934713408
        %v12061 = vunpack.c.0.s8 %v12060
        %v12062 = vlaneseq
        %v12063 = vshrl.u32 %v12062, 7
        %v12064 = vsub.s32 %v12061, %v12063
        %v12065 = vrot.slane %v12051, %v12064
        %v12066 = vcombine.low %v12010, %v12042
        %v12067 = vcombine.high %v12010, %v12042
        %v12068 = vcombine.low %v12017, %v12049
        %v12069 = vcombine.high %v12017, %v12049
        %v12070 = vcombine.low %v12026, %v12058
        %v12071 = vcombine.high %v12026, %v12058
        %v12072 = vcombine.low %v12033, %v12065
        %v12073 = vcombine.high %v12033, %v12065
        %v12074 = vcombine.low %v11771, %v11775
        %v12075 = vcombine.high %v11771, %v11775
        %v12077 = vunpack.c.l.s4 1983009808
        %v12078 = vunpack.c.0.s8 %v12077
        %v12079 = vlaneseq
        %v12080 = vshrl.u32 %v12079, 7
        %v12081 = vsub.s32 %v12078, %v12080
        %v12082 = vrot.slane %v12074, %v12081
        %v12084 = vunpack.c.l.s4 1983009808
        %v12085 = vunpack.c.0.s8 %v12084
        %v12086 = vlaneseq
        %v12087 = vshrl.u32 %v12086, 7
        %v12088 = vsub.s32 %v12085, %v12087
        %v12089 = vrot.slane %v12075, %v12088
        %v12090 = vcombine.low %v11773, %v11777
        %v12091 = vcombine.high %v11773, %v11777
        %v12093 = vunpack.c.l.s4 1983009808
        %v12094 = vunpack.c.0.s8 %v12093
        %v12095 = vlaneseq
        %v12096 = vshrl.u32 %v12095, 7
        %v12097 = vsub.s32 %v12094, %v12096
        %v12098 = vrot.slane %v12090, %v12097
        %v12100 = vunpack.c.l.s4 1983009808
        %v12101 = vunpack.c.0.s8 %v12100
        %v12102 = vlaneseq
        %v12103 = vshrl.u32 %v12102, 7
        %v12104 = vsub.s32 %v12101, %v12103
        %v12105 = vrot.slane %v12091, %v12104
        %v12106 = vcombine.low %v11779, %v11783
        %v12107 = vcombine.high %v11779, %v11783
        %v12109 = vunpack.c.l.s4 1983009808
        %v12110 = vunpack.c.0.s8 %v12109
        %v12111 = vlaneseq
        %v12112 = vshrl.u32 %v12111, 7
        %v12113 = vsub.s32 %v12110, %v12112
        %v12114 = vrot.slane %v12106, %v12113
        %v12116 = vunpack.c.l.s4 1983009808
        %v12117 = vunpack.c.0.s8 %v12116
        %v12118 = vlaneseq
        %v12119 = vshrl.u32 %v12118, 7
        %v12120 = vsub.s32 %v12117, %v12119
        %v12121 = vrot.slane %v12107, %v12120
        %v12122 = vcombine.low %v11781, %v11785
        %v12123 = vcombine.high %v11781, %v11785
        %v12125 = vunpack.c.l.s4 1983009808
        %v12126 = vunpack.c.0.s8 %v12125
        %v12127 = vlaneseq
        %v12128 = vshrl.u32 %v12127, 7
        %v12129 = vsub.s32 %v12126, %v12128
        %v12130 = vrot.slane %v12122, %v12129
        %v12132 = vunpack.c.l.s4 1983009808
        %v12133 = vunpack.c.0.s8 %v12132
        %v12134 = vlaneseq
        %v12135 = vshrl.u32 %v12134, 7
        %v12136 = vsub.s32 %v12133, %v12135
        %v12137 = vrot.slane %v12123, %v12136
        %v12138 = vcombine.low %v12082, %v12098
        %v12139 = vcombine.high %v12082, %v12098
        %v12141 = vunpack.c.l.s4 1934713408
        %v12142 = vunpack.c.0.s8 %v12141
        %v12143 = vlaneseq
        %v12144 = vshrl.u32 %v12143, 7
        %v12145 = vsub.s32 %v12142, %v12144
        %v12146 = vrot.slane %v12138, %v12145
        %v12148 = vunpack.c.l.s4 1934713408
        %v12149 = vunpack.c.0.s8 %v12148
        %v12150 = vlaneseq
        %v12151 = vshrl.u32 %v12150, 7
        %v12152 = vsub.s32 %v12149, %v12151
        %v12153 = vrot.slane %v12139, %v12152
        %v12154 = vcombine.low %v12089, %v12105
        %v12155 = vcombine.high %v12089, %v12105
        %v12157 = vunpack.c.l.s4 1934713408
        %v12158 = vunpack.c.0.s8 %v12157
        %v12159 = vlaneseq
        %v12160 = vshrl.u32 %v12159, 7
        %v12161 = vsub.s32 %v12158, %v12160
        %v12162 = vrot.slane %v12154, %v12161
        %v12164 = vunpack.c.l.s4 1934713408
        %v12165 = vunpack.c.0.s8 %v12164
        %v12166 = vlaneseq
        %v12167 = vshrl.u32 %v12166, 7
        %v12168 = vsub.s32 %v12165, %v12167
        %v12169 = vrot.slane %v12155, %v12168
        %v12170 = vcombine.low %v12114, %v12130
        %v12171 = vcombine.high %v12114, %v12130
        %v12173 = vunpack.c.l.s4 1934713408
        %v12174 = vunpack.c.0.s8 %v12173
        %v12175 = vlaneseq
        %v12176 = vshrl.u32 %v12175, 7
        %v12177 = vsub.s32 %v12174, %v12176
        %v12178 = vrot.slane %v12170, %v12177
        %v12180 = vunpack.c.l.s4 1934713408
        %v12181 = vunpack.c.0.s8 %v12180
        %v12182 = vlaneseq
        %v12183 = vshrl.u32 %v12182, 7
        %v12184 = vsub.s32 %v12181, %v12183
        %v12185 = vrot.slane %v12171, %v12184
        %v12186 = vcombine.low %v12121, %v12137
        %v12187 = vcombine.high %v12121, %v12137
        %v12189 = vunpack.c.l.s4 1934713408
        %v12190 = vunpack.c.0.s8 %v12189
        %v12191 = vlaneseq
        %v12192 = vshrl.u32 %v12191, 7
        %v12193 = vsub.s32 %v12190, %v12192
        %v12194 = vrot.slane %v12186, %v12193
        %v12196 = vunpack.c.l.s4 1934713408
        %v12197 = vunpack.c.0.s8 %v12196
        %v12198 = vlaneseq
        %v12199 = vshrl.u32 %v12198, 7
        %v12200 = vsub.s32 %v12197, %v12199
        %v12201 = vrot.slane %v12187, %v12200
        %v12202 = vcombine.low %v12146, %v12178
        %v12203 = vcombine.high %v12146, %v12178
        %v12204 = vcombine.low %v12153, %v12185
        %v12205 = vcombine.high %v12153, %v12185
        %v12206 = vcombine.low %v12162, %v12194
        %v12207 = vcombine.high %v12162, %v12194
        %v12208 = vcombine.low %v12169, %v12201
        %v12209 = vcombine.high %v12169, %v12201
        %v12210 = vcombine.low %v11787, %v11791
        %v12211 = vcombine.high %v11787, %v11791
        %v12213 = vunpack.c.l.s4 1983009808
        %v12214 = vunpack.c.0.s8 %v12213
        %v12215 = vlaneseq
        %v12216 = vshrl.u32 %v12215, 7
        %v12217 = vsub.s32 %v12214, %v12216
        %v12218 = vrot.slane %v12210, %v12217
        %v12220 = vunpack.c.l.s4 1983009808
        %v12221 = vunpack.c.0.s8 %v12220
        %v12222 = vlaneseq
        %v12223 = vshrl.u32 %v12222, 7
        %v12224 = vsub.s32 %v12221, %v12223
        %v12225 = vrot.slane %v12211, %v12224
        %v12226 = vcombine.low %v11789, %v11793
        %v12227 = vcombine.high %v11789, %v11793
        %v12229 = vunpack.c.l.s4 1983009808
        %v12230 = vunpack.c.0.s8 %v12229
        %v12231 = vlaneseq
        %v12232 = vshrl.u32 %v12231, 7
        %v12233 = vsub.s32 %v12230, %v12232
        %v12234 = vrot.slane %v12226, %v12233
        %v12236 = vunpack.c.l.s4 1983009808
        %v12237 = vunpack.c.0.s8 %v12236
        %v12238 = vlaneseq
        %v12239 = vshrl.u32 %v12238, 7
        %v12240 = vsub.s32 %v12237, %v12239
        %v12241 = vrot.slane %v12227, %v12240
        %v12242 = vcombine.low %v11795, %v11799
        %v12243 = vcombine.high %v11795, %v11799
        %v12245 = vunpack.c.l.s4 1983009808
        %v12246 = vunpack.c.0.s8 %v12245
        %v12247 = vlaneseq
        %v12248 = vshrl.u32 %v12247, 7
        %v12249 = vsub.s32 %v12246, %v12248
        %v12250 = vrot.slane %v12242, %v12249
        %v12252 = vunpack.c.l.s4 1983009808
        %v12253 = vunpack.c.0.s8 %v12252
        %v12254 = vlaneseq
        %v12255 = vshrl.u32 %v12254, 7
        %v12256 = vsub.s32 %v12253, %v12255
        %v12257 = vrot.slane %v12243, %v12256
        %v12258 = vcombine.low %v11797, %v11801
        %v12259 = vcombine.high %v11797, %v11801
        %v12261 = vunpack.c.l.s4 1983009808
        %v12262 = vunpack.c.0.s8 %v12261
        %v12263 = vlaneseq
        %v12264 = vshrl.u32 %v12263, 7
        %v12265 = vsub.s32 %v12262, %v12264
        %v12266 = vrot.slane %v12258, %v12265
        %v12268 = vunpack.c.l.s4 1983009808
        %v12269 = vunpack.c.0.s8 %v12268
        %v12270 = vlaneseq
        %v12271 = vshrl.u32 %v12270, 7
        %v12272 = vsub.s32 %v12269, %v12271
        %v12273 = vrot.slane %v12259, %v12272
        %v12274 = vcombine.low %v12218, %v12234
        %v12275 = vcombine.high %v12218, %v12234
        %v12277 = vunpack.c.l.s4 1934713408
        %v12278 = vunpack.c.0.s8 %v12277
        %v12279 = vlaneseq
        %v12280 = vshrl.u32 %v12279, 7
        %v12281 = vsub.s32 %v12278, %v12280
        %v12282 = vrot.slane %v12274, %v12281
        %v12284 = vunpack.c.l.s4 1934713408
        %v12285 = vunpack.c.0.s8 %v12284
        %v12286 = vlaneseq
        %v12287 = vshrl.u32 %v12286, 7
        %v12288 = vsub.s32 %v12285, %v12287
        %v12289 = vrot.slane %v12275, %v12288
        %v12290 = vcombine.low %v12225, %v12241
        %v12291 = vcombine.high %v12225, %v12241
        %v12293 = vunpack.c.l.s4 1934713408
        %v12294 = vunpack.c.0.s8 %v12293
        %v12295 = vlaneseq
        %v12296 = vshrl.u32 %v12295, 7
        %v12297 = vsub.s32 %v12294, %v12296
        %v12298 = vrot.slane %v12290, %v12297
        %v12300 = vunpack.c.l.s4 1934713408
        %v12301 = vunpack.c.0.s8 %v12300
        %v12302 = vlaneseq
        %v12303 = vshrl.u32 %v12302, 7
        %v12304 = vsub.s32 %v12301, %v12303
        %v12305 = vrot.slane %v12291, %v12304
        %v12306 = vcombine.low %v12250, %v12266
        %v12307 = vcombine.high %v12250, %v12266
        %v12309 = vunpack.c.l.s4 1934713408
        %v12310 = vunpack.c.0.s8 %v12309
        %v12311 = vlaneseq
        %v12312 = vshrl.u32 %v12311, 7
        %v12313 = vsub.s32 %v12310, %v12312
        %v12314 = vrot.slane %v12306, %v12313
        %v12316 = vunpack.c.l.s4 1934713408
        %v12317 = vunpack.c.0.s8 %v12316
        %v12318 = vlaneseq
        %v12319 = vshrl.u32 %v12318, 7
        %v12320 = vsub.s32 %v12317, %v12319
        %v12321 = vrot.slane %v12307, %v12320
        %v12322 = vcombine.low %v12257, %v12273
        %v12323 = vcombine.high %v12257, %v12273
        %v12325 = vunpack.c.l.s4 1934713408
        %v12326 = vunpack.c.0.s8 %v12325
        %v12327 = vlaneseq
        %v12328 = vshrl.u32 %v12327, 7
        %v12329 = vsub.s32 %v12326, %v12328
        %v12330 = vrot.slane %v12322, %v12329
        %v12332 = vunpack.c.l.s4 1934713408
        %v12333 = vunpack.c.0.s8 %v12332
        %v12334 = vlaneseq
        %v12335 = vshrl.u32 %v12334, 7
        %v12336 = vsub.s32 %v12333, %v12335
        %v12337 = vrot.slane %v12323, %v12336
        %v12338 = vcombine.low %v12282, %v12314
        %v12339 = vcombine.high %v12282, %v12314
        %v12340 = vcombine.low %v12289, %v12321
        %v12341 = vcombine.high %v12289, %v12321
        %v12342 = vcombine.low %v12298, %v12330
        %v12343 = vcombine.high %v12298, %v12330
        %v12344 = vcombine.low %v12305, %v12337
        %v12345 = vcombine.high %v12305, %v12337
        %12348 = vrot.lane.b32.xlu0 %v11931, 8
        %v12349 = vpop.permute.xlu0 %12348
        %12350 = vrot.lane.b32.xlu0 %v12067, 8
        %v12351 = vpop.permute.xlu0 %12350
        %12356 = vrot.lane.b32.xlu0 %v11932, 16
        %v12357 = vpop.permute.xlu0 %12356
        %12358 = vrot.lane.b32.xlu0 %v12068, 16
        %v12359 = vpop.permute.xlu0 %12358
        %12364 = vrot.lane.b32.xlu0 %v11933, 24
        %v12365 = vpop.permute.xlu0 %12364
        %12366 = vrot.lane.b32.xlu0 %v12069, 24
        %v12367 = vpop.permute.xlu0 %12366
        %12372 = vrot.lane.b32.xlu0 %v11934, 32
        %v12373 = vpop.permute.xlu0 %12372
        %12374 = vrot.lane.b32.xlu0 %v12070, 32
        %v12375 = vpop.permute.xlu0 %12374
        %12380 = vrot.lane.b32.xlu0 %v11935, 40
        %v12381 = vpop.permute.xlu0 %12380
        %12382 = vrot.lane.b32.xlu0 %v12071, 40
        %v12383 = vpop.permute.xlu0 %12382
        %12388 = vrot.lane.b32.xlu0 %v11936, 48
        %v12389 = vpop.permute.xlu0 %12388
        %12390 = vrot.lane.b32.xlu0 %v12072, 48
        %v12391 = vpop.permute.xlu0 %12390
        %12396 = vrot.lane.b32.xlu0 %v11937, 56
        %v12397 = vpop.permute.xlu0 %12396
        %12398 = vrot.lane.b32.xlu0 %v12073, 56
        %v12399 = vpop.permute.xlu0 %12398
        %12404 = vrot.lane.b32.xlu0 %v12202, 64
        %v12405 = vpop.permute.xlu0 %12404
        %12406 = vrot.lane.b32.xlu0 %v12338, 64
        %v12407 = vpop.permute.xlu0 %12406
        %12412 = vrot.lane.b32.xlu0 %v12203, 72
        %v12413 = vpop.permute.xlu0 %12412
        %12414 = vrot.lane.b32.xlu0 %v12339, 72
        %v12415 = vpop.permute.xlu0 %12414
        %12420 = vrot.lane.b32.xlu0 %v12204, 80
        %v12421 = vpop.permute.xlu0 %12420
        %12422 = vrot.lane.b32.xlu0 %v12340, 80
        %v12423 = vpop.permute.xlu0 %12422
        %12428 = vrot.lane.b32.xlu0 %v12205, 88
        %v12429 = vpop.permute.xlu0 %12428
        %12430 = vrot.lane.b32.xlu0 %v12341, 88
        %v12431 = vpop.permute.xlu0 %12430
        %12436 = vrot.lane.b32.xlu0 %v12206, 96
        %v12437 = vpop.permute.xlu0 %12436
        %12438 = vrot.lane.b32.xlu0 %v12342, 96
        %v12439 = vpop.permute.xlu0 %12438
        %12444 = vrot.lane.b32.xlu0 %v12207, 104
        %v12445 = vpop.permute.xlu0 %12444
        %12446 = vrot.lane.b32.xlu0 %v12343, 104
        %v12447 = vpop.permute.xlu0 %12446
        %12452 = vrot.lane.b32.xlu0 %v12208, 112
        %v12453 = vpop.permute.xlu0 %12452
        %12454 = vrot.lane.b32.xlu0 %v12344, 112
        %v12455 = vpop.permute.xlu0 %12454
        %12460 = vrot.lane.b32.xlu0 %v12209, 120
        %v12461 = vpop.permute.xlu0 %12460
        %12462 = vrot.lane.b32.xlu0 %v12345, 120
        %v12463 = vpop.permute.xlu0 %12462
        %v12466 = vsel %vm2227, %v11930, %v12349
        %v12467 = vsel %vm2227, %v12066, %v12351
        %v12468 = vsel %vm4404, %v12466, %v12357
        %v12469 = vsel %vm4404, %v12467, %v12359
        %v12470 = vsel %vm9344, %v12468, %v12365
        %v12471 = vsel %vm9344, %v12469, %v12367
        %v12472 = vsel %vm9348, %v12470, %v12373
        %v12473 = vsel %vm9348, %v12471, %v12375
        %v12474 = vsel %vm1111, %v12472, %v12381
        %v12475 = vsel %vm1111, %v12473, %v12383
        %v12476 = vsel %vm9355, %v12474, %v12389
        %v12477 = vsel %vm9355, %v12475, %v12391
        %v12478 = vsel %vm9359, %v12476, %v12397
        %v12479 = vsel %vm9359, %v12477, %v12399
        %v12480 = vsel %vm9363, %v12478, %v12405
        %v12481 = vsel %vm9363, %v12479, %v12407
        %v12482 = vsel %vm9367, %v12480, %v12413
        %v12483 = vsel %vm9367, %v12481, %v12415
        %v12484 = vsel %vm1123, %v12482, %v12421
        %v12485 = vsel %vm1123, %v12483, %v12423
        %v12486 = vsel %vm9374, %v12484, %v12429
        %v12487 = vsel %vm9374, %v12485, %v12431
        %v12488 = vsel %vm9378, %v12486, %v12437
        %v12489 = vsel %vm9378, %v12487, %v12439
        %v12490 = vsel %vm9382, %v12488, %v12445
        %v12491 = vsel %vm9382, %v12489, %v12447
        %v12492 = vsel %vm9386, %v12490, %v12453
        %v12493 = vsel %vm9386, %v12491, %v12455
        %v12494 = vsel %vm1135, %v12492, %v12461
        %v12495 = vsel %vm1135, %v12493, %v12463
        %v12496 = vadd.f32 %v12494, %v12495
        %12497 = vadd.xlane.f32.xlu0 %v12496
        %v12498 = vpop.xlane.xlu0 %12497
        %v12499 = vrot.slane %v12498, 4
        %v12500 = vadd.f32 %v12498, %v12499
        %v12501 = vrot.slane %v12500, 2
        %v12502 = vadd.f32 %v12500, %v12501
        %v12503 = vrot.slane %v12502, 1
        %v12504 = vadd.f32 %v12502, %v12503
        %s12505 = vtos %v12504
        %v12506 = vrcp.pop 2048.0
        %s12507 = vtos %v12506
        %s12508 = smul.f32 %s12505, %s12507
        %v12509 = vstv %s12508
        %v12510 = vsub.f32 %v12494, %v12509
        %v12511 = vsub.f32 %v12495, %v12509
        %v12512 = vmul.f32 %v12510, %v12510
        %v12513 = vmul.f32 %v12511, %v12511
        %v12514 = vadd.f32 %v12512, %v12513
        %12515 = vadd.xlane.f32.xlu0 %v12514
        %v12516 = vpop.xlane.xlu0 %12515
        %v12517 = vrot.slane %v12516, 4
        %v12518 = vadd.f32 %v12516, %v12517
        %v12519 = vrot.slane %v12518, 2
        %v12520 = vadd.f32 %v12518, %v12519
        %v12521 = vrot.slane %v12520, 1
        %v12522 = vadd.f32 %v12520, %v12521
        %s12523 = vtos %v12522
        %v12524 = vrcp.pop 2048.0
        %s12525 = vtos %v12524
        %s12526 = smul.f32 %s12523, %s12525
        %s12527 = sadd.f32 %s12526, 1e-05
        %v12528 = vstv %s12527
        %v12529 = vrsqrt.pop %v12528
        %s12530 = vtos %v12529
        %v12531 = vstv %s12530
        %v12532 = vmul.f32 %v12510, %v12531
        %v12533 = vmul.f32 %v12511, %v12531
        %v12534 = vld [vmem:[%s8] sm:$0xff]
        %v12535 = vld [vmem:[%s8 + $0x8] sm:$0xff]
        %v12536 = vmul.f32 %v12532, %v12534
        %v12537 = vmul.f32 %v12533, %v12535
        %v12538 = vld [vmem:[%s9] sm:$0xff]
        %v12539 = vld [vmem:[%s9 + $0x8] sm:$0xff]
        %v12540 = vadd.f32 %v12536, %v12538
        %v12541 = vadd.f32 %v12537, %v12539
        %12542 = vst [vmem:[%s352] sm:$0xff] %v12540
        %12543 = vst [vmem:[%s352 + $0x8] sm:$0xff] %v12541
        %s12544 = sand.u32 %s247, 1
        %s12545 = scalar_lea.sflag [#allocation3], %s12544
        %s12546 = sand.u32 %s247, 1
        %s12547 = smul.addr %s12546, 16
        %s12548 = scalar_lea.vmem [#allocation2], %s12547
        // Predicated region
        $region61: #{tpu_custom_call.1} parent=59 // pred_check
          %p12549 = pneg %p257
        $region62: #{tpu_custom_call.1} parent=59 // pred_check_branch
          %12551 = sbr.rel (%p12549) target = $region64
        $region63: #{tpu_custom_call.1} parent=59 // pred_region
          %s12553 = ssub.s32 256, 256
          %12554 = vsyncadd %s12545, %s12553
          %s12555 = smul.addr %s24, 2
          %s12556 = smul.addr %s12555, 128
          %s12557 = scalar_lea.hbm %s10, %s12556
          %s12558 = sshll.u32 %s12548, 4
          %s12559 = int_to_ptr.vmem [resolvable:$true] %s12558
          %12564 = dma.vmem_to_hbm [thread:$0]  %s12559, 256, %s12557, %s12545, 128, 128, 8
        $region64: #{tpu_custom_call.1} parent=59 // pred_fallthru
          _
      $region60: #{tpu_custom_call.1} parent=5 // pred_fallthru
        _
      %p12565 = scmp.le.s32.totalorder 2, %s19
      // Predicated region
      $region65: #{tpu_custom_call.1} parent=5 // pred_check
        %p12566 = pneg %p12565
      $region66: #{tpu_custom_call.1} parent=5 // pred_check_branch
        %12568 = sbr.rel (%p12566) target = $region68
      $region67: #{tpu_custom_call.1} parent=5 // pred_region
        %s12569 = ssub.s32 %s19, 2
        // Predicated region
        $region69: #{tpu_custom_call.1} parent=67 // pred_check
          %p12570 = pneg %p263
        $region70: #{tpu_custom_call.1} parent=67 // pred_check_branch
          %12572 = sbr.rel (%p12570) target = $region72
        $region71: #{tpu_custom_call.1} parent=67 // pred_region
          %s12573 = sand.u32 %s248, 1
          %s12574 = scalar_lea.sflag [#allocation3], %s12573
          %s12575 = sand.u32 %s248, 1
          %s12576 = smul.addr %s12575, 16
          %s12577 = scalar_lea.vmem [#allocation2], %s12576
          %12578 = dma.done %s12574, 256
        $region72: #{tpu_custom_call.1} parent=67 // pred_fallthru
          _
      $region68: #{tpu_custom_call.1} parent=5 // pred_fallthru
        _
    $region6: #{tpu_custom_call.1} parent=1 // loop_footer
      %s23 = sadd.s32 1, %s19
    $region7: #{tpu_custom_call.1} parent=1 // loop_footer_branch
      %18 = sbr.rel target = $region3
    $region8: #{tpu_custom_call.1} parent=1 // loop_exit
      _
    %12579 = vsyncpa [#allocation3], 1
    %s12580 = scalar_lea.sflag [#allocation3], 1
    %12581 = vsyncpa %s12580, 1

</llo_original>
